<compile_context>
chip_gen: v5e
topology: v5e:2x2
jax: 0.10.0
libtpu: 0.0.40
codegen_flags: <defaults>
</compile_context>

<pallas_src>
import functools

import numpy as np

import jax
import jax.numpy as jnp
from jax.experimental import pallas as pl
from jax.experimental.pallas import tpu as pltpu


# ------------------------------------------------------------------
# Pallas kernels
# ------------------------------------------------------------------
def _conv_relu_pool_kernel(x_ref, w_ref, b_ref, s_ref, o_ref, a_ref, *,
                           cin, kh, kw, wp, hpwp):
    """Fused conv(5x5, stride 1, pad 2) + bias + ReLU + 2x2 max-pool, one image.

    x_ref: (1, cin, L)        bf16  flattened zero-padded image (+ tail zeros)
    w_ref: (cout, K)          bf16  weight, K = kh*kw*cin, (dy, dx, ci)-major
    b_ref: (cout, 1)          f32   bias
    s_ref: (hpwp-wp-1, howo)  bf16  0/1 pool anchor-selection matrix
    o_ref: (1, cout, howo)    f32   pooled output, flat NCHW
    a_ref: (K, hpwp)          VMEM scratch: on-chip im2col matrix
    """
    xv = x_ref[0]                                            # (cin, L)
    # Build the im2col matrix in VMEM from statically shifted slices of the
    # flattened padded image.  Row (dy*kw+dx)*cin + ci = image shifted by
    # (dy, dx).  Invalid (padded-grid) output columns are dropped by s_ref.
    for dy in range(kh):
        for dx in range(kw):
            tap = dy * kw + dx
            off = dy * wp + dx
            a_ref[tap * cin:(tap + 1) * cin, :] = (
                xv[:, off:off + hpwp].astype(a_ref.dtype))
    # One lane-dense MXU matmul: (cout, K) @ (K, hpwp) -> spatial dim on lanes.
    acc = jnp.dot(w_ref[...], a_ref[...],
                  preferred_element_type=jnp.float32)        # (cout, hpwp) f32
    acc = jnp.maximum(acc + b_ref[...], 0.0)                 # bias + ReLU (f32)
    # Fused 2x2 max-pool: horizontal then vertical neighbour max via shifted
    # slices (VPU work hidden under the MXU), then gather the stride-2 pool
    # anchors with a tiny 0/1 selection matmul.
    u = jnp.maximum(acc[:, :-1], acc[:, 1:])                 # (cout, hpwp-1)
    v = jnp.maximum(u[:, :-wp], u[:, wp:])                   # (cout, hpwp-wp-1)
    o_ref[0] = jnp.dot(v.astype(jnp.bfloat16), s_ref[...],
                       preferred_element_type=jnp.float32)   # (cout, howo)


def _linear_kernel(a_ref, w_ref, b_ref, o_ref):
    # a_ref: (tm, K) bf16, w_ref: (K, N) bf16, b_ref: (1, N) f32 -> (tm, N) f32
    o_ref[...] = (jnp.dot(a_ref[...], w_ref[...],
                          preferred_element_type=jnp.float32) + b_ref[...])


# ------------------------------------------------------------------
# Wrappers
# ------------------------------------------------------------------
def _pool_select_matrix(h, w, wp, srows):
    """0/1 matrix S with (v @ S)[:, yo*wo + xo] = v[:, 2*yo*wp + 2*xo]."""
    ho, wo = h // 2, w // 2
    s = np.zeros((srows, ho * wo), np.float32)
    yo, xo = np.meshgrid(np.arange(ho), np.arange(wo), indexing="ij")
    s[(2 * yo * wp + 2 * xo).reshape(-1), (yo * wo + xo).reshape(-1)] = 1.0
    return s


def conv_relu_pool(x, wmat, bias, *, kh=5, kw=5, pad=2):
    """x: (B, Cin, H, W), wmat: (Cout, KH*KW*Cin) bf16 ((dy,dx,ci)-major),
    bias: (Cout, 1) f32.  Returns (B, Cout, H//2, W//2) f32 (conv+ReLU+pool)."""
    B, cin, h, w = x.shape
    cout, K = wmat.shape
    assert K == kh * kw * cin
    hp, wp = h + 2 * pad, w + 2 * pad
    hpwp = hp * wp
    ho, wo = h // 2, w // 2
    ext = (kh - 1) * wp + (kw - 1)       # tail zeros so every tap slice is in-bounds
    srows = hpwp - wp - 1

    # Cheap XLA prep (~1.4x input bytes): zero-pad + flatten the image.  The
    # 25x im2col expansion itself happens on-chip inside the kernel.
    xp = jnp.pad(x.astype(jnp.bfloat16),
                 ((0, 0), (0, 0), (pad, pad), (pad, pad)))
    xf = jnp.pad(xp.reshape(B, cin, hpwp), ((0, 0), (0, 0), (0, ext)))

    sel = jnp.asarray(_pool_select_matrix(h, w, wp, srows), dtype=jnp.bfloat16)

    # bf16 scratch when the per-tap row blocks are packing-aligned (cin even);
    # otherwise f32 (conv1, cin=3).  The MXU accumulates in f32 either way.
    a_dtype = jnp.bfloat16 if cin % 2 == 0 else jnp.float32

    kern = functools.partial(_conv_relu_pool_kernel,
                             cin=cin, kh=kh, kw=kw, wp=wp, hpwp=hpwp)
    out = pl.pallas_call(
        kern,
        out_shape=jax.ShapeDtypeStruct((B, cout, ho * wo), jnp.float32),
        grid=(B,),
        in_specs=[
            pl.BlockSpec((1, cin, hpwp + ext), lambda b: (b, 0, 0)),
            pl.BlockSpec((cout, K), lambda b: (0, 0)),
            pl.BlockSpec((cout, 1), lambda b: (0, 0)),
            pl.BlockSpec((srows, ho * wo), lambda b: (0, 0)),
        ],
        out_specs=pl.BlockSpec((1, cout, ho * wo), lambda b: (b, 0, 0)),
        scratch_shapes=[pltpu.VMEM((K, hpwp), a_dtype)],
        compiler_params=pltpu.CompilerParams(
            dimension_semantics=("parallel",),
            vmem_limit_bytes=32 * 1024 * 1024),
    )(xf, wmat, bias, sel)
    return out.reshape(B, cout, ho, wo)


def _pick_tile_m(m, max_t=1024):
    """Biggest block along M that divides M and is a multiple of 8 (cap 1024)."""
    if m % 8 != 0:
        return m
    for cand in range(min(max_t, m), 7, -8):
        if m % cand == 0:
            return cand
    return m


def linear(a, w, b):
    """a: (M, K) bf16, w: (K, N) bf16, b: (1, N) f32 -> (M, N) f32 (fused bias)."""
    M, K = a.shape
    K2, N = w.shape
    assert K == K2
    tm = _pick_tile_m(M)
    return pl.pallas_call(
        _linear_kernel,
        out_shape=jax.ShapeDtypeStruct((M, N), jnp.float32),
        grid=(M // tm,),
        in_specs=[
            pl.BlockSpec((tm, K), lambda i: (i, 0)),
            pl.BlockSpec((K, N), lambda i: (0, 0)),
            pl.BlockSpec((1, N), lambda i: (0, 0)),
        ],
        out_specs=pl.BlockSpec((tm, N), lambda i: (i, 0)),
        compiler_params=pltpu.CompilerParams(
            dimension_semantics=("parallel",),
            vmem_limit_bytes=32 * 1024 * 1024),
    )(a, w, b)


# ------------------------------------------------------------------
# Model
# ------------------------------------------------------------------
def init_params(key):
    ks = jax.random.split(key, 6)

    def uinit(k, shape, fan_in):
        bound = 1.0 / jnp.sqrt(fan_in)
        return jax.random.uniform(k, shape, jnp.float32, -bound, bound)

    return {
        "conv1_w": uinit(ks[0], (16, 3, 5, 5), 3 * 25),
        "conv1_b": uinit(ks[1], (16,), 3 * 25),
        "conv2_w": uinit(ks[2], (32, 16, 5, 5), 16 * 25),
        "conv2_b": uinit(ks[3], (32,), 16 * 25),
        "fc_w": uinit(ks[4], (10, 32 * 7 * 7), 32 * 7 * 7),  # PyTorch Linear: (out, in)
        "fc_b": uinit(ks[5], (10,), 32 * 7 * 7),
    }


def prepare_params(p):
    """One-time re-layout/cast of PyTorch-style params into kernel layout."""
    def conv_wmat(wt):  # (Cout, Cin, KH, KW) -> (Cout, KH*KW*Cin), (dy,dx,ci)-major
        co, ci, r, s = wt.shape
        return jnp.transpose(wt, (0, 2, 3, 1)).reshape(co, r * s * ci).astype(jnp.bfloat16)

    return {
        "conv1_w": conv_wmat(p["conv1_w"]),
        "conv1_b": p["conv1_b"].reshape(-1, 1).astype(jnp.float32),
        "conv2_w": conv_wmat(p["conv2_w"]),
        "conv2_b": p["conv2_b"].reshape(-1, 1).astype(jnp.float32),
        "fc_w": jnp.transpose(p["fc_w"]).astype(jnp.bfloat16),   # (1568, 10)
        "fc_b": p["fc_b"].reshape(1, -1).astype(jnp.float32),
    }


@jax.jit
def cnn_forward(params, x):
    # x: (B, 3, 28, 28) float32  (28x28 required by the 32*7*7 Linear input)
    h = conv_relu_pool(x, params["conv1_w"], params["conv1_b"])   # (B, 16, 14, 14)
    h = conv_relu_pool(h, params["conv2_w"], params["conv2_b"])   # (B, 32, 7, 7)
    B = h.shape[0]
    feat = h.reshape(B, -1)                                       # (B, 1568), matches .view(B, -1)
    logits = linear(feat.astype(jnp.bfloat16),
                    params["fc_w"], params["fc_b"])               # (B, 10)
    return logits, feat


if __name__ == "__main__":
    key = jax.random.PRNGKey(0)
    pkey, xkey = jax.random.split(key)
    params = prepare_params(init_params(pkey))
    x = jax.random.normal(xkey, (2, 3, 28, 28), dtype=jnp.float32)

    logits, feat = cnn_forward(params, x)
    jax.block_until_ready((logits, feat))

    assert logits.shape == (2, 10) and feat.shape == (2, 32 * 7 * 7)
    print("KERNEL_OK")
</pallas_src>

<mosaic_0001>
module attributes {stable_mosaic.version = 11 : i64} {
  func.func @_conv_relu_pool_kernel(%arg0: i32, %arg1: memref<1x3x1156xbf16, #tpu.memory_space<vmem>>, %arg2: memref<16x75xbf16, #tpu.memory_space<vmem>>, %arg3: memref<16x1xf32, #tpu.memory_space<vmem>>, %arg4: memref<991x196xbf16, #tpu.memory_space<vmem>>, %arg5: memref<1x16x196xf32, #tpu.memory_space<vmem>>, %arg6: memref<75x1024xf32, #tpu.memory_space<vmem>>) attributes {dimension_semantics = [#tpu.dimension_semantics<parallel>], iteration_bounds = array<i64: 2>, scalar_prefetch = 0 : i64, scratch_operands = 1 : i64, tpu.core_type = #tpu.core_type<tc>, window_params = [{transform_indices = @transform_0, window_bounds = array<i64: 1, 3, 1156>}, {pipeline_mode = #tpu.pipeline_mode<synchronous>, transform_indices = @transform_1, window_bounds = array<i64: 16, 75>}, {pipeline_mode = #tpu.pipeline_mode<synchronous>, transform_indices = @transform_2, window_bounds = array<i64: 16, 1>}, {pipeline_mode = #tpu.pipeline_mode<synchronous>, transform_indices = @transform_3, window_bounds = array<i64: 991, 196>}, {transform_indices = @transform_4, window_bounds = array<i64: 1, 16, 196>}]} {
    %c0 = arith.constant 0 : index
    %c0_0 = arith.constant 0 : index
    %c0_1 = arith.constant 0 : index
    %0 = vector.load %arg1[%c0, %c0_0, %c0_1] : memref<1x3x1156xbf16, #tpu.memory_space<vmem>>, vector<1x3x1156xbf16>
    %1 = vector.shape_cast %0 : vector<1x3x1156xbf16> to vector<3x1156xbf16>
    %2 = vector.extract_strided_slice %1 {offsets = [0, 0], sizes = [3, 1024], strides = [1, 1]} : vector<3x1156xbf16> to vector<3x1024xbf16>
    %3 = arith.extf %2 : vector<3x1024xbf16> to vector<3x1024xf32>
    %c0_2 = arith.constant 0 : index
    %c0_3 = arith.constant 0 : index
    %4 = vector.load %arg6[%c0_2, %c0_3] : memref<75x1024xf32, #tpu.memory_space<vmem>>, vector<3x1024xf32>
    tpu.vector_store %arg6[%c0_2, %c0_3], %3 {strides = array<i32>} : memref<75x1024xf32, #tpu.memory_space<vmem>>, vector<3x1024xf32>,
    %5 = vector.extract_strided_slice %1 {offsets = [0, 1], sizes = [3, 1024], strides = [1, 1]} : vector<3x1156xbf16> to vector<3x1024xbf16>
    %6 = arith.extf %5 : vector<3x1024xbf16> to vector<3x1024xf32>
    %c3 = arith.constant 3 : index
    %c0_4 = arith.constant 0 : index
    %7 = vector.load %arg6[%c3, %c0_4] : memref<75x1024xf32, #tpu.memory_space<vmem>>, vector<3x1024xf32>
    tpu.vector_store %arg6[%c3, %c0_4], %6 {strides = array<i32>} : memref<75x1024xf32, #tpu.memory_space<vmem>>, vector<3x1024xf32>,
    %8 = vector.extract_strided_slice %1 {offsets = [0, 2], sizes = [3, 1024], strides = [1, 1]} : vector<3x1156xbf16> to vector<3x1024xbf16>
    %9 = arith.extf %8 : vector<3x1024xbf16> to vector<3x1024xf32>
    %c6 = arith.constant 6 : index
    %c0_5 = arith.constant 0 : index
    %10 = vector.load %arg6[%c6, %c0_5] : memref<75x1024xf32, #tpu.memory_space<vmem>>, vector<3x1024xf32>
    tpu.vector_store %arg6[%c6, %c0_5], %9 {strides = array<i32>} : memref<75x1024xf32, #tpu.memory_space<vmem>>, vector<3x1024xf32>,
    %11 = vector.extract_strided_slice %1 {offsets = [0, 3], sizes = [3, 1024], strides = [1, 1]} : vector<3x1156xbf16> to vector<3x1024xbf16>
    %12 = arith.extf %11 : vector<3x1024xbf16> to vector<3x1024xf32>
    %c9 = arith.constant 9 : index
    %c0_6 = arith.constant 0 : index
    %13 = vector.load %arg6[%c9, %c0_6] : memref<75x1024xf32, #tpu.memory_space<vmem>>, vector<3x1024xf32>
    tpu.vector_store %arg6[%c9, %c0_6], %12 {strides = array<i32>} : memref<75x1024xf32, #tpu.memory_space<vmem>>, vector<3x1024xf32>,
    %14 = vector.extract_strided_slice %1 {offsets = [0, 4], sizes = [3, 1024], strides = [1, 1]} : vector<3x1156xbf16> to vector<3x1024xbf16>
    %15 = arith.extf %14 : vector<3x1024xbf16> to vector<3x1024xf32>
    %c12 = arith.constant 12 : index
    %c0_7 = arith.constant 0 : index
    %16 = vector.load %arg6[%c12, %c0_7] : memref<75x1024xf32, #tpu.memory_space<vmem>>, vector<3x1024xf32>
    tpu.vector_store %arg6[%c12, %c0_7], %15 {strides = array<i32>} : memref<75x1024xf32, #tpu.memory_space<vmem>>, vector<3x1024xf32>,
    %17 = vector.extract_strided_slice %1 {offsets = [0, 32], sizes = [3, 1024], strides = [1, 1]} : vector<3x1156xbf16> to vector<3x1024xbf16>
    %18 = arith.extf %17 : vector<3x1024xbf16> to vector<3x1024xf32>
    %c15 = arith.constant 15 : index
    %c0_8 = arith.constant 0 : index
    %19 = vector.load %arg6[%c15, %c0_8] : memref<75x1024xf32, #tpu.memory_space<vmem>>, vector<3x1024xf32>
    tpu.vector_store %arg6[%c15, %c0_8], %18 {strides = array<i32>} : memref<75x1024xf32, #tpu.memory_space<vmem>>, vector<3x1024xf32>,
    %20 = vector.extract_strided_slice %1 {offsets = [0, 33], sizes = [3, 1024], strides = [1, 1]} : vector<3x1156xbf16> to vector<3x1024xbf16>
    %21 = arith.extf %20 : vector<3x1024xbf16> to vector<3x1024xf32>
    %c18 = arith.constant 18 : index
    %c0_9 = arith.constant 0 : index
    %22 = vector.load %arg6[%c18, %c0_9] : memref<75x1024xf32, #tpu.memory_space<vmem>>, vector<3x1024xf32>
    tpu.vector_store %arg6[%c18, %c0_9], %21 {strides = array<i32>} : memref<75x1024xf32, #tpu.memory_space<vmem>>, vector<3x1024xf32>,
    %23 = vector.extract_strided_slice %1 {offsets = [0, 34], sizes = [3, 1024], strides = [1, 1]} : vector<3x1156xbf16> to vector<3x1024xbf16>
    %24 = arith.extf %23 : vector<3x1024xbf16> to vector<3x1024xf32>
    %c21 = arith.constant 21 : index
    %c0_10 = arith.constant 0 : index
    %25 = vector.load %arg6[%c21, %c0_10] : memref<75x1024xf32, #tpu.memory_space<vmem>>, vector<3x1024xf32>
    tpu.vector_store %arg6[%c21, %c0_10], %24 {strides = array<i32>} : memref<75x1024xf32, #tpu.memory_space<vmem>>, vector<3x1024xf32>,
    %26 = vector.extract_strided_slice %1 {offsets = [0, 35], sizes = [3, 1024], strides = [1, 1]} : vector<3x1156xbf16> to vector<3x1024xbf16>
    %27 = arith.extf %26 : vector<3x1024xbf16> to vector<3x1024xf32>
    %c24 = arith.constant 24 : index
    %c0_11 = arith.constant 0 : index
    %28 = vector.load %arg6[%c24, %c0_11] : memref<75x1024xf32, #tpu.memory_space<vmem>>, vector<3x1024xf32>
    tpu.vector_store %arg6[%c24, %c0_11], %27 {strides = array<i32>} : memref<75x1024xf32, #tpu.memory_space<vmem>>, vector<3x1024xf32>,
    %29 = vector.extract_strided_slice %1 {offsets = [0, 36], sizes = [3, 1024], strides = [1, 1]} : vector<3x1156xbf16> to vector<3x1024xbf16>
    %30 = arith.extf %29 : vector<3x1024xbf16> to vector<3x1024xf32>
    %c27 = arith.constant 27 : index
    %c0_12 = arith.constant 0 : index
    %31 = vector.load %arg6[%c27, %c0_12] : memref<75x1024xf32, #tpu.memory_space<vmem>>, vector<3x1024xf32>
    tpu.vector_store %arg6[%c27, %c0_12], %30 {strides = array<i32>} : memref<75x1024xf32, #tpu.memory_space<vmem>>, vector<3x1024xf32>,
    %32 = vector.extract_strided_slice %1 {offsets = [0, 64], sizes = [3, 1024], strides = [1, 1]} : vector<3x1156xbf16> to vector<3x1024xbf16>
    %33 = arith.extf %32 : vector<3x1024xbf16> to vector<3x1024xf32>
    %c30 = arith.constant 30 : index
    %c0_13 = arith.constant 0 : index
    %34 = vector.load %arg6[%c30, %c0_13] : memref<75x1024xf32, #tpu.memory_space<vmem>>, vector<3x1024xf32>
    tpu.vector_store %arg6[%c30, %c0_13], %33 {strides = array<i32>} : memref<75x1024xf32, #tpu.memory_space<vmem>>, vector<3x1024xf32>,
    %35 = vector.extract_strided_slice %1 {offsets = [0, 65], sizes = [3, 1024], strides = [1, 1]} : vector<3x1156xbf16> to vector<3x1024xbf16>
    %36 = arith.extf %35 : vector<3x1024xbf16> to vector<3x1024xf32>
    %c33 = arith.constant 33 : index
    %c0_14 = arith.constant 0 : index
    %37 = vector.load %arg6[%c33, %c0_14] : memref<75x1024xf32, #tpu.memory_space<vmem>>, vector<3x1024xf32>
    tpu.vector_store %arg6[%c33, %c0_14], %36 {strides = array<i32>} : memref<75x1024xf32, #tpu.memory_space<vmem>>, vector<3x1024xf32>,
    %38 = vector.extract_strided_slice %1 {offsets = [0, 66], sizes = [3, 1024], strides = [1, 1]} : vector<3x1156xbf16> to vector<3x1024xbf16>
    %39 = arith.extf %38 : vector<3x1024xbf16> to vector<3x1024xf32>
    %c36 = arith.constant 36 : index
    %c0_15 = arith.constant 0 : index
    %40 = vector.load %arg6[%c36, %c0_15] : memref<75x1024xf32, #tpu.memory_space<vmem>>, vector<3x1024xf32>
    tpu.vector_store %arg6[%c36, %c0_15], %39 {strides = array<i32>} : memref<75x1024xf32, #tpu.memory_space<vmem>>, vector<3x1024xf32>,
    %41 = vector.extract_strided_slice %1 {offsets = [0, 67], sizes = [3, 1024], strides = [1, 1]} : vector<3x1156xbf16> to vector<3x1024xbf16>
    %42 = arith.extf %41 : vector<3x1024xbf16> to vector<3x1024xf32>
    %c39 = arith.constant 39 : index
    %c0_16 = arith.constant 0 : index
    %43 = vector.load %arg6[%c39, %c0_16] : memref<75x1024xf32, #tpu.memory_space<vmem>>, vector<3x1024xf32>
    tpu.vector_store %arg6[%c39, %c0_16], %42 {strides = array<i32>} : memref<75x1024xf32, #tpu.memory_space<vmem>>, vector<3x1024xf32>,
    %44 = vector.extract_strided_slice %1 {offsets = [0, 68], sizes = [3, 1024], strides = [1, 1]} : vector<3x1156xbf16> to vector<3x1024xbf16>
    %45 = arith.extf %44 : vector<3x1024xbf16> to vector<3x1024xf32>
    %c42 = arith.constant 42 : index
    %c0_17 = arith.constant 0 : index
    %46 = vector.load %arg6[%c42, %c0_17] : memref<75x1024xf32, #tpu.memory_space<vmem>>, vector<3x1024xf32>
    tpu.vector_store %arg6[%c42, %c0_17], %45 {strides = array<i32>} : memref<75x1024xf32, #tpu.memory_space<vmem>>, vector<3x1024xf32>,
    %47 = vector.extract_strided_slice %1 {offsets = [0, 96], sizes = [3, 1024], strides = [1, 1]} : vector<3x1156xbf16> to vector<3x1024xbf16>
    %48 = arith.extf %47 : vector<3x1024xbf16> to vector<3x1024xf32>
    %c45 = arith.constant 45 : index
    %c0_18 = arith.constant 0 : index
    %49 = vector.load %arg6[%c45, %c0_18] : memref<75x1024xf32, #tpu.memory_space<vmem>>, vector<3x1024xf32>
    tpu.vector_store %arg6[%c45, %c0_18], %48 {strides = array<i32>} : memref<75x1024xf32, #tpu.memory_space<vmem>>, vector<3x1024xf32>,
    %50 = vector.extract_strided_slice %1 {offsets = [0, 97], sizes = [3, 1024], strides = [1, 1]} : vector<3x1156xbf16> to vector<3x1024xbf16>
    %51 = arith.extf %50 : vector<3x1024xbf16> to vector<3x1024xf32>
    %c48 = arith.constant 48 : index
    %c0_19 = arith.constant 0 : index
    %52 = vector.load %arg6[%c48, %c0_19] : memref<75x1024xf32, #tpu.memory_space<vmem>>, vector<3x1024xf32>
    tpu.vector_store %arg6[%c48, %c0_19], %51 {strides = array<i32>} : memref<75x1024xf32, #tpu.memory_space<vmem>>, vector<3x1024xf32>,
    %53 = vector.extract_strided_slice %1 {offsets = [0, 98], sizes = [3, 1024], strides = [1, 1]} : vector<3x1156xbf16> to vector<3x1024xbf16>
    %54 = arith.extf %53 : vector<3x1024xbf16> to vector<3x1024xf32>
    %c51 = arith.constant 51 : index
    %c0_20 = arith.constant 0 : index
    %55 = vector.load %arg6[%c51, %c0_20] : memref<75x1024xf32, #tpu.memory_space<vmem>>, vector<3x1024xf32>
    tpu.vector_store %arg6[%c51, %c0_20], %54 {strides = array<i32>} : memref<75x1024xf32, #tpu.memory_space<vmem>>, vector<3x1024xf32>,
    %56 = vector.extract_strided_slice %1 {offsets = [0, 99], sizes = [3, 1024], strides = [1, 1]} : vector<3x1156xbf16> to vector<3x1024xbf16>
    %57 = arith.extf %56 : vector<3x1024xbf16> to vector<3x1024xf32>
    %c54 = arith.constant 54 : index
    %c0_21 = arith.constant 0 : index
    %58 = vector.load %arg6[%c54, %c0_21] : memref<75x1024xf32, #tpu.memory_space<vmem>>, vector<3x1024xf32>
    tpu.vector_store %arg6[%c54, %c0_21], %57 {strides = array<i32>} : memref<75x1024xf32, #tpu.memory_space<vmem>>, vector<3x1024xf32>,
    %59 = vector.extract_strided_slice %1 {offsets = [0, 100], sizes = [3, 1024], strides = [1, 1]} : vector<3x1156xbf16> to vector<3x1024xbf16>
    %60 = arith.extf %59 : vector<3x1024xbf16> to vector<3x1024xf32>
    %c57 = arith.constant 57 : index
    %c0_22 = arith.constant 0 : index
    %61 = vector.load %arg6[%c57, %c0_22] : memref<75x1024xf32, #tpu.memory_space<vmem>>, vector<3x1024xf32>
    tpu.vector_store %arg6[%c57, %c0_22], %60 {strides = array<i32>} : memref<75x1024xf32, #tpu.memory_space<vmem>>, vector<3x1024xf32>,
    %62 = vector.extract_strided_slice %1 {offsets = [0, 128], sizes = [3, 1024], strides = [1, 1]} : vector<3x1156xbf16> to vector<3x1024xbf16>
    %63 = arith.extf %62 : vector<3x1024xbf16> to vector<3x1024xf32>
    %c60 = arith.constant 60 : index
    %c0_23 = arith.constant 0 : index
    %64 = vector.load %arg6[%c60, %c0_23] : memref<75x1024xf32, #tpu.memory_space<vmem>>, vector<3x1024xf32>
    tpu.vector_store %arg6[%c60, %c0_23], %63 {strides = array<i32>} : memref<75x1024xf32, #tpu.memory_space<vmem>>, vector<3x1024xf32>,
    %65 = vector.extract_strided_slice %1 {offsets = [0, 129], sizes = [3, 1024], strides = [1, 1]} : vector<3x1156xbf16> to vector<3x1024xbf16>
    %66 = arith.extf %65 : vector<3x1024xbf16> to vector<3x1024xf32>
    %c63 = arith.constant 63 : index
    %c0_24 = arith.constant 0 : index
    %67 = vector.load %arg6[%c63, %c0_24] : memref<75x1024xf32, #tpu.memory_space<vmem>>, vector<3x1024xf32>
    tpu.vector_store %arg6[%c63, %c0_24], %66 {strides = array<i32>} : memref<75x1024xf32, #tpu.memory_space<vmem>>, vector<3x1024xf32>,
    %68 = vector.extract_strided_slice %1 {offsets = [0, 130], sizes = [3, 1024], strides = [1, 1]} : vector<3x1156xbf16> to vector<3x1024xbf16>
    %69 = arith.extf %68 : vector<3x1024xbf16> to vector<3x1024xf32>
    %c66 = arith.constant 66 : index
    %c0_25 = arith.constant 0 : index
    %70 = vector.load %arg6[%c66, %c0_25] : memref<75x1024xf32, #tpu.memory_space<vmem>>, vector<3x1024xf32>
    tpu.vector_store %arg6[%c66, %c0_25], %69 {strides = array<i32>} : memref<75x1024xf32, #tpu.memory_space<vmem>>, vector<3x1024xf32>,
    %71 = vector.extract_strided_slice %1 {offsets = [0, 131], sizes = [3, 1024], strides = [1, 1]} : vector<3x1156xbf16> to vector<3x1024xbf16>
    %72 = arith.extf %71 : vector<3x1024xbf16> to vector<3x1024xf32>
    %c69 = arith.constant 69 : index
    %c0_26 = arith.constant 0 : index
    %73 = vector.load %arg6[%c69, %c0_26] : memref<75x1024xf32, #tpu.memory_space<vmem>>, vector<3x1024xf32>
    tpu.vector_store %arg6[%c69, %c0_26], %72 {strides = array<i32>} : memref<75x1024xf32, #tpu.memory_space<vmem>>, vector<3x1024xf32>,
    %74 = vector.extract_strided_slice %1 {offsets = [0, 132], sizes = [3, 1024], strides = [1, 1]} : vector<3x1156xbf16> to vector<3x1024xbf16>
    %75 = arith.extf %74 : vector<3x1024xbf16> to vector<3x1024xf32>
    %c72 = arith.constant 72 : index
    %c0_27 = arith.constant 0 : index
    %76 = vector.load %arg6[%c72, %c0_27] : memref<75x1024xf32, #tpu.memory_space<vmem>>, vector<3x1024xf32>
    tpu.vector_store %arg6[%c72, %c0_27], %75 {strides = array<i32>} : memref<75x1024xf32, #tpu.memory_space<vmem>>, vector<3x1024xf32>,
    %c0_28 = arith.constant 0 : index
    %c0_29 = arith.constant 0 : index
    %77 = vector.load %arg2[%c0_28, %c0_29] : memref<16x75xbf16, #tpu.memory_space<vmem>>, vector<16x75xbf16>
    %c0_30 = arith.constant 0 : index
    %c0_31 = arith.constant 0 : index
    %78 = vector.load %arg6[%c0_30, %c0_31] : memref<75x1024xf32, #tpu.memory_space<vmem>>, vector<75x1024xf32>
    %cst = arith.constant dense<0.000000e+00> : vector<16x1024xf32>
    %79 = tpu.matmul %77, %78, %cst {dimension_numbers = #tpu.dot_dimension_numbers<[1], [0], [0], [1], [0, 0, 1, 1], [], []>} : vector<16x75xbf16>, vector<75x1024xf32>, vector<16x1024xf32> -> vector<16x1024xf32>
    %c0_32 = arith.constant 0 : index
    %c0_33 = arith.constant 0 : index
    %80 = vector.load %arg3[%c0_32, %c0_33] : memref<16x1xf32, #tpu.memory_space<vmem>>, vector<16x1xf32>
    %81 = vector.broadcast %80 : vector<16x1xf32> to vector<16x1024xf32>
    %82 = arith.addf %79, %81 : vector<16x1024xf32>
    %cst_34 = arith.constant 0.000000e+00 : f32
    %83 = vector.broadcast %cst_34 : f32 to vector<16x1024xf32>
    %84 = arith.maximumf %82, %83 : vector<16x1024xf32>
    %85 = vector.extract_strided_slice %84 {offsets = [0, 0], sizes = [16, 1023], strides = [1, 1]} : vector<16x1024xf32> to vector<16x1023xf32>
    %86 = vector.extract_strided_slice %84 {offsets = [0, 1], sizes = [16, 1023], strides = [1, 1]} : vector<16x1024xf32> to vector<16x1023xf32>
    %87 = arith.maximumf %85, %86 : vector<16x1023xf32>
    %88 = vector.extract_strided_slice %87 {offsets = [0, 0], sizes = [16, 991], strides = [1, 1]} : vector<16x1023xf32> to vector<16x991xf32>
    %89 = vector.extract_strided_slice %87 {offsets = [0, 32], sizes = [16, 991], strides = [1, 1]} : vector<16x1023xf32> to vector<16x991xf32>
    %90 = arith.maximumf %88, %89 : vector<16x991xf32>
    %91 = arith.truncf %90 : vector<16x991xf32> to vector<16x991xbf16>
    %c0_35 = arith.constant 0 : index
    %c0_36 = arith.constant 0 : index
    %92 = vector.load %arg4[%c0_35, %c0_36] : memref<991x196xbf16, #tpu.memory_space<vmem>>, vector<991x196xbf16>
    %cst_37 = arith.constant dense<0.000000e+00> : vector<16x196xf32>
    %93 = tpu.matmul %91, %92, %cst_37 {dimension_numbers = #tpu.dot_dimension_numbers<[1], [0], [0], [1], [0, 0, 1, 1], [], []>} : vector<16x991xbf16>, vector<991x196xbf16>, vector<16x196xf32> -> vector<16x196xf32>
    %c0_38 = arith.constant 0 : index
    %c0_39 = arith.constant 0 : index
    %c0_40 = arith.constant 0 : index
    %94 = vector.load %arg5[%c0_38, %c0_39, %c0_40] : memref<1x16x196xf32, #tpu.memory_space<vmem>>, vector<1x16x196xf32>
    %95 = vector.shape_cast %94 : vector<1x16x196xf32> to vector<16x196xf32>
    %96 = vector.shape_cast %93 : vector<16x196xf32> to vector<1x16x196xf32>
    tpu.vector_store %arg5[%c0_38, %c0_39, %c0_40], %96 {strides = array<i32>} : memref<1x16x196xf32, #tpu.memory_space<vmem>>, vector<1x16x196xf32>,
    return
  }
  func.func @transform_0(%arg0: i32) -> (i32, i32, i32) {
    %c0_i32 = arith.constant 0 : i32
    %c0_i32_0 = arith.constant 0 : i32
    %c0_i32_1 = arith.constant 0 : i32
    return %arg0, %c0_i32, %c0_i32_0 : i32, i32, i32
  }
  func.func @transform_1(%arg0: i32) -> (i32, i32) {
    %c0_i32 = arith.constant 0 : i32
    %c0_i32_0 = arith.constant 0 : i32
    %c0_i32_1 = arith.constant 0 : i32
    return %c0_i32, %c0_i32_0 : i32, i32
  }
  func.func @transform_2(%arg0: i32) -> (i32, i32) {
    %c0_i32 = arith.constant 0 : i32
    %c0_i32_0 = arith.constant 0 : i32
    %c0_i32_1 = arith.constant 0 : i32
    return %c0_i32, %c0_i32_0 : i32, i32
  }
  func.func @transform_3(%arg0: i32) -> (i32, i32) {
    %c0_i32 = arith.constant 0 : i32
    %c0_i32_0 = arith.constant 0 : i32
    %c0_i32_1 = arith.constant 0 : i32
    return %c0_i32, %c0_i32_0 : i32, i32
  }
  func.func @transform_4(%arg0: i32) -> (i32, i32, i32) {
    %c0_i32 = arith.constant 0 : i32
    %c0_i32_0 = arith.constant 0 : i32
    %c0_i32_1 = arith.constant 0 : i32
    return %arg0, %c0_i32, %c0_i32_0 : i32, i32, i32
  }
}

module attributes {stable_mosaic.version = 11 : i64} {
  func.func @_conv_relu_pool_kernel(%arg0: i32, %arg1: memref<1x16x400xbf16, #tpu.memory_space<vmem>>, %arg2: memref<32x400xbf16, #tpu.memory_space<vmem>>, %arg3: memref<32x1xf32, #tpu.memory_space<vmem>>, %arg4: memref<305x49xbf16, #tpu.memory_space<vmem>>, %arg5: memref<1x32x49xf32, #tpu.memory_space<vmem>>, %arg6: memref<400x324xbf16, #tpu.memory_space<vmem>>) attributes {dimension_semantics = [#tpu.dimension_semantics<parallel>], iteration_bounds = array<i64: 2>, scalar_prefetch = 0 : i64, scratch_operands = 1 : i64, tpu.core_type = #tpu.core_type<tc>, window_params = [{transform_indices = @transform_0, window_bounds = array<i64: 1, 16, 400>}, {pipeline_mode = #tpu.pipeline_mode<synchronous>, transform_indices = @transform_1, window_bounds = array<i64: 32, 400>}, {pipeline_mode = #tpu.pipeline_mode<synchronous>, transform_indices = @transform_2, window_bounds = array<i64: 32, 1>}, {pipeline_mode = #tpu.pipeline_mode<synchronous>, transform_indices = @transform_3, window_bounds = array<i64: 305, 49>}, {transform_indices = @transform_4, window_bounds = array<i64: 1, 32, 49>}]} {
    %c0 = arith.constant 0 : index
    %c0_0 = arith.constant 0 : index
    %c0_1 = arith.constant 0 : index
    %0 = vector.load %arg1[%c0, %c0_0, %c0_1] : memref<1x16x400xbf16, #tpu.memory_space<vmem>>, vector<1x16x400xbf16>
    %1 = vector.shape_cast %0 : vector<1x16x400xbf16> to vector<16x400xbf16>
    %2 = vector.extract_strided_slice %1 {offsets = [0, 0], sizes = [16, 324], strides = [1, 1]} : vector<16x400xbf16> to vector<16x324xbf16>
    %c0_2 = arith.constant 0 : index
    %c0_3 = arith.constant 0 : index
    %3 = vector.load %arg6[%c0_2, %c0_3] : memref<400x324xbf16, #tpu.memory_space<vmem>>, vector<16x324xbf16>
    tpu.vector_store %arg6[%c0_2, %c0_3], %2 {strides = array<i32>} : memref<400x324xbf16, #tpu.memory_space<vmem>>, vector<16x324xbf16>,
    %4 = vector.extract_strided_slice %1 {offsets = [0, 1], sizes = [16, 324], strides = [1, 1]} : vector<16x400xbf16> to vector<16x324xbf16>
    %c16 = arith.constant 16 : index
    %c0_4 = arith.constant 0 : index
    %5 = vector.load %arg6[%c16, %c0_4] : memref<400x324xbf16, #tpu.memory_space<vmem>>, vector<16x324xbf16>
    tpu.vector_store %arg6[%c16, %c0_4], %4 {strides = array<i32>} : memref<400x324xbf16, #tpu.memory_space<vmem>>, vector<16x324xbf16>,
    %6 = vector.extract_strided_slice %1 {offsets = [0, 2], sizes = [16, 324], strides = [1, 1]} : vector<16x400xbf16> to vector<16x324xbf16>
    %c32 = arith.constant 32 : index
    %c0_5 = arith.constant 0 : index
    %7 = vector.load %arg6[%c32, %c0_5] : memref<400x324xbf16, #tpu.memory_space<vmem>>, vector<16x324xbf16>
    tpu.vector_store %arg6[%c32, %c0_5], %6 {strides = array<i32>} : memref<400x324xbf16, #tpu.memory_space<vmem>>, vector<16x324xbf16>,
    %8 = vector.extract_strided_slice %1 {offsets = [0, 3], sizes = [16, 324], strides = [1, 1]} : vector<16x400xbf16> to vector<16x324xbf16>
    %c48 = arith.constant 48 : index
    %c0_6 = arith.constant 0 : index
    %9 = vector.load %arg6[%c48, %c0_6] : memref<400x324xbf16, #tpu.memory_space<vmem>>, vector<16x324xbf16>
    tpu.vector_store %arg6[%c48, %c0_6], %8 {strides = array<i32>} : memref<400x324xbf16, #tpu.memory_space<vmem>>, vector<16x324xbf16>,
    %10 = vector.extract_strided_slice %1 {offsets = [0, 4], sizes = [16, 324], strides = [1, 1]} : vector<16x400xbf16> to vector<16x324xbf16>
    %c64 = arith.constant 64 : index
    %c0_7 = arith.constant 0 : index
    %11 = vector.load %arg6[%c64, %c0_7] : memref<400x324xbf16, #tpu.memory_space<vmem>>, vector<16x324xbf16>
    tpu.vector_store %arg6[%c64, %c0_7], %10 {strides = array<i32>} : memref<400x324xbf16, #tpu.memory_space<vmem>>, vector<16x324xbf16>,
    %12 = vector.extract_strided_slice %1 {offsets = [0, 18], sizes = [16, 324], strides = [1, 1]} : vector<16x400xbf16> to vector<16x324xbf16>
    %c80 = arith.constant 80 : index
    %c0_8 = arith.constant 0 : index
    %13 = vector.load %arg6[%c80, %c0_8] : memref<400x324xbf16, #tpu.memory_space<vmem>>, vector<16x324xbf16>
    tpu.vector_store %arg6[%c80, %c0_8], %12 {strides = array<i32>} : memref<400x324xbf16, #tpu.memory_space<vmem>>, vector<16x324xbf16>,
    %14 = vector.extract_strided_slice %1 {offsets = [0, 19], sizes = [16, 324], strides = [1, 1]} : vector<16x400xbf16> to vector<16x324xbf16>
    %c96 = arith.constant 96 : index
    %c0_9 = arith.constant 0 : index
    %15 = vector.load %arg6[%c96, %c0_9] : memref<400x324xbf16, #tpu.memory_space<vmem>>, vector<16x324xbf16>
    tpu.vector_store %arg6[%c96, %c0_9], %14 {strides = array<i32>} : memref<400x324xbf16, #tpu.memory_space<vmem>>, vector<16x324xbf16>,
    %16 = vector.extract_strided_slice %1 {offsets = [0, 20], sizes = [16, 324], strides = [1, 1]} : vector<16x400xbf16> to vector<16x324xbf16>
    %c112 = arith.constant 112 : index
    %c0_10 = arith.constant 0 : index
    %17 = vector.load %arg6[%c112, %c0_10] : memref<400x324xbf16, #tpu.memory_space<vmem>>, vector<16x324xbf16>
    tpu.vector_store %arg6[%c112, %c0_10], %16 {strides = array<i32>} : memref<400x324xbf16, #tpu.memory_space<vmem>>, vector<16x324xbf16>,
    %18 = vector.extract_strided_slice %1 {offsets = [0, 21], sizes = [16, 324], strides = [1, 1]} : vector<16x400xbf16> to vector<16x324xbf16>
    %c128 = arith.constant 128 : index
    %c0_11 = arith.constant 0 : index
    %19 = vector.load %arg6[%c128, %c0_11] : memref<400x324xbf16, #tpu.memory_space<vmem>>, vector<16x324xbf16>
    tpu.vector_store %arg6[%c128, %c0_11], %18 {strides = array<i32>} : memref<400x324xbf16, #tpu.memory_space<vmem>>, vector<16x324xbf16>,
    %20 = vector.extract_strided_slice %1 {offsets = [0, 22], sizes = [16, 324], strides = [1, 1]} : vector<16x400xbf16> to vector<16x324xbf16>
    %c144 = arith.constant 144 : index
    %c0_12 = arith.constant 0 : index
    %21 = vector.load %arg6[%c144, %c0_12] : memref<400x324xbf16, #tpu.memory_space<vmem>>, vector<16x324xbf16>
    tpu.vector_store %arg6[%c144, %c0_12], %20 {strides = array<i32>} : memref<400x324xbf16, #tpu.memory_space<vmem>>, vector<16x324xbf16>,
    %22 = vector.extract_strided_slice %1 {offsets = [0, 36], sizes = [16, 324], strides = [1, 1]} : vector<16x400xbf16> to vector<16x324xbf16>
    %c160 = arith.constant 160 : index
    %c0_13 = arith.constant 0 : index
    %23 = vector.load %arg6[%c160, %c0_13] : memref<400x324xbf16, #tpu.memory_space<vmem>>, vector<16x324xbf16>
    tpu.vector_store %arg6[%c160, %c0_13], %22 {strides = array<i32>} : memref<400x324xbf16, #tpu.memory_space<vmem>>, vector<16x324xbf16>,
    %24 = vector.extract_strided_slice %1 {offsets = [0, 37], sizes = [16, 324], strides = [1, 1]} : vector<16x400xbf16> to vector<16x324xbf16>
    %c176 = arith.constant 176 : index
    %c0_14 = arith.constant 0 : index
    %25 = vector.load %arg6[%c176, %c0_14] : memref<400x324xbf16, #tpu.memory_space<vmem>>, vector<16x324xbf16>
    tpu.vector_store %arg6[%c176, %c0_14], %24 {strides = array<i32>} : memref<400x324xbf16, #tpu.memory_space<vmem>>, vector<16x324xbf16>,
    %26 = vector.extract_strided_slice %1 {offsets = [0, 38], sizes = [16, 324], strides = [1, 1]} : vector<16x400xbf16> to vector<16x324xbf16>
    %c192 = arith.constant 192 : index
    %c0_15 = arith.constant 0 : index
    %27 = vector.load %arg6[%c192, %c0_15] : memref<400x324xbf16, #tpu.memory_space<vmem>>, vector<16x324xbf16>
    tpu.vector_store %arg6[%c192, %c0_15], %26 {strides = array<i32>} : memref<400x324xbf16, #tpu.memory_space<vmem>>, vector<16x324xbf16>,
    %28 = vector.extract_strided_slice %1 {offsets = [0, 39], sizes = [16, 324], strides = [1, 1]} : vector<16x400xbf16> to vector<16x324xbf16>
    %c208 = arith.constant 208 : index
    %c0_16 = arith.constant 0 : index
    %29 = vector.load %arg6[%c208, %c0_16] : memref<400x324xbf16, #tpu.memory_space<vmem>>, vector<16x324xbf16>
    tpu.vector_store %arg6[%c208, %c0_16], %28 {strides = array<i32>} : memref<400x324xbf16, #tpu.memory_space<vmem>>, vector<16x324xbf16>,
    %30 = vector.extract_strided_slice %1 {offsets = [0, 40], sizes = [16, 324], strides = [1, 1]} : vector<16x400xbf16> to vector<16x324xbf16>
    %c224 = arith.constant 224 : index
    %c0_17 = arith.constant 0 : index
    %31 = vector.load %arg6[%c224, %c0_17] : memref<400x324xbf16, #tpu.memory_space<vmem>>, vector<16x324xbf16>
    tpu.vector_store %arg6[%c224, %c0_17], %30 {strides = array<i32>} : memref<400x324xbf16, #tpu.memory_space<vmem>>, vector<16x324xbf16>,
    %32 = vector.extract_strided_slice %1 {offsets = [0, 54], sizes = [16, 324], strides = [1, 1]} : vector<16x400xbf16> to vector<16x324xbf16>
    %c240 = arith.constant 240 : index
    %c0_18 = arith.constant 0 : index
    %33 = vector.load %arg6[%c240, %c0_18] : memref<400x324xbf16, #tpu.memory_space<vmem>>, vector<16x324xbf16>
    tpu.vector_store %arg6[%c240, %c0_18], %32 {strides = array<i32>} : memref<400x324xbf16, #tpu.memory_space<vmem>>, vector<16x324xbf16>,
    %34 = vector.extract_strided_slice %1 {offsets = [0, 55], sizes = [16, 324], strides = [1, 1]} : vector<16x400xbf16> to vector<16x324xbf16>
    %c256 = arith.constant 256 : index
    %c0_19 = arith.constant 0 : index
    %35 = vector.load %arg6[%c256, %c0_19] : memref<400x324xbf16, #tpu.memory_space<vmem>>, vector<16x324xbf16>
    tpu.vector_store %arg6[%c256, %c0_19], %34 {strides = array<i32>} : memref<400x324xbf16, #tpu.memory_space<vmem>>, vector<16x324xbf16>,
    %36 = vector.extract_strided_slice %1 {offsets = [0, 56], sizes = [16, 324], strides = [1, 1]} : vector<16x400xbf16> to vector<16x324xbf16>
    %c272 = arith.constant 272 : index
    %c0_20 = arith.constant 0 : index
    %37 = vector.load %arg6[%c272, %c0_20] : memref<400x324xbf16, #tpu.memory_space<vmem>>, vector<16x324xbf16>
    tpu.vector_store %arg6[%c272, %c0_20], %36 {strides = array<i32>} : memref<400x324xbf16, #tpu.memory_space<vmem>>, vector<16x324xbf16>,
    %38 = vector.extract_strided_slice %1 {offsets = [0, 57], sizes = [16, 324], strides = [1, 1]} : vector<16x400xbf16> to vector<16x324xbf16>
    %c288 = arith.constant 288 : index
    %c0_21 = arith.constant 0 : index
    %39 = vector.load %arg6[%c288, %c0_21] : memref<400x324xbf16, #tpu.memory_space<vmem>>, vector<16x324xbf16>
    tpu.vector_store %arg6[%c288, %c0_21], %38 {strides = array<i32>} : memref<400x324xbf16, #tpu.memory_space<vmem>>, vector<16x324xbf16>,
    %40 = vector.extract_strided_slice %1 {offsets = [0, 58], sizes = [16, 324], strides = [1, 1]} : vector<16x400xbf16> to vector<16x324xbf16>
    %c304 = arith.constant 304 : index
    %c0_22 = arith.constant 0 : index
    %41 = vector.load %arg6[%c304, %c0_22] : memref<400x324xbf16, #tpu.memory_space<vmem>>, vector<16x324xbf16>
    tpu.vector_store %arg6[%c304, %c0_22], %40 {strides = array<i32>} : memref<400x324xbf16, #tpu.memory_space<vmem>>, vector<16x324xbf16>,
    %42 = vector.extract_strided_slice %1 {offsets = [0, 72], sizes = [16, 324], strides = [1, 1]} : vector<16x400xbf16> to vector<16x324xbf16>
    %c320 = arith.constant 320 : index
    %c0_23 = arith.constant 0 : index
    %43 = vector.load %arg6[%c320, %c0_23] : memref<400x324xbf16, #tpu.memory_space<vmem>>, vector<16x324xbf16>
    tpu.vector_store %arg6[%c320, %c0_23], %42 {strides = array<i32>} : memref<400x324xbf16, #tpu.memory_space<vmem>>, vector<16x324xbf16>,
    %44 = vector.extract_strided_slice %1 {offsets = [0, 73], sizes = [16, 324], strides = [1, 1]} : vector<16x400xbf16> to vector<16x324xbf16>
    %c336 = arith.constant 336 : index
    %c0_24 = arith.constant 0 : index
    %45 = vector.load %arg6[%c336, %c0_24] : memref<400x324xbf16, #tpu.memory_space<vmem>>, vector<16x324xbf16>
    tpu.vector_store %arg6[%c336, %c0_24], %44 {strides = array<i32>} : memref<400x324xbf16, #tpu.memory_space<vmem>>, vector<16x324xbf16>,
    %46 = vector.extract_strided_slice %1 {offsets = [0, 74], sizes = [16, 324], strides = [1, 1]} : vector<16x400xbf16> to vector<16x324xbf16>
    %c352 = arith.constant 352 : index
    %c0_25 = arith.constant 0 : index
    %47 = vector.load %arg6[%c352, %c0_25] : memref<400x324xbf16, #tpu.memory_space<vmem>>, vector<16x324xbf16>
    tpu.vector_store %arg6[%c352, %c0_25], %46 {strides = array<i32>} : memref<400x324xbf16, #tpu.memory_space<vmem>>, vector<16x324xbf16>,
    %48 = vector.extract_strided_slice %1 {offsets = [0, 75], sizes = [16, 324], strides = [1, 1]} : vector<16x400xbf16> to vector<16x324xbf16>
    %c368 = arith.constant 368 : index
    %c0_26 = arith.constant 0 : index
    %49 = vector.load %arg6[%c368, %c0_26] : memref<400x324xbf16, #tpu.memory_space<vmem>>, vector<16x324xbf16>
    tpu.vector_store %arg6[%c368, %c0_26], %48 {strides = array<i32>} : memref<400x324xbf16, #tpu.memory_space<vmem>>, vector<16x324xbf16>,
    %50 = vector.extract_strided_slice %1 {offsets = [0, 76], sizes = [16, 324], strides = [1, 1]} : vector<16x400xbf16> to vector<16x324xbf16>
    %c384 = arith.constant 384 : index
    %c0_27 = arith.constant 0 : index
    %51 = vector.load %arg6[%c384, %c0_27] : memref<400x324xbf16, #tpu.memory_space<vmem>>, vector<16x324xbf16>
    tpu.vector_store %arg6[%c384, %c0_27], %50 {strides = array<i32>} : memref<400x324xbf16, #tpu.memory_space<vmem>>, vector<16x324xbf16>,
    %c0_28 = arith.constant 0 : index
    %c0_29 = arith.constant 0 : index
    %52 = vector.load %arg2[%c0_28, %c0_29] : memref<32x400xbf16, #tpu.memory_space<vmem>>, vector<32x400xbf16>
    %c0_30 = arith.constant 0 : index
    %c0_31 = arith.constant 0 : index
    %53 = vector.load %arg6[%c0_30, %c0_31] : memref<400x324xbf16, #tpu.memory_space<vmem>>, vector<400x324xbf16>
    %cst = arith.constant dense<0.000000e+00> : vector<32x324xf32>
    %54 = tpu.matmul %52, %53, %cst {dimension_numbers = #tpu.dot_dimension_numbers<[1], [0], [0], [1], [0, 0, 1, 1], [], []>} : vector<32x400xbf16>, vector<400x324xbf16>, vector<32x324xf32> -> vector<32x324xf32>
    %c0_32 = arith.constant 0 : index
    %c0_33 = arith.constant 0 : index
    %55 = vector.load %arg3[%c0_32, %c0_33] : memref<32x1xf32, #tpu.memory_space<vmem>>, vector<32x1xf32>
    %56 = vector.broadcast %55 : vector<32x1xf32> to vector<32x324xf32>
    %57 = arith.addf %54, %56 : vector<32x324xf32>
    %cst_34 = arith.constant 0.000000e+00 : f32
    %58 = vector.broadcast %cst_34 : f32 to vector<32x324xf32>
    %59 = arith.maximumf %57, %58 : vector<32x324xf32>
    %60 = vector.extract_strided_slice %59 {offsets = [0, 0], sizes = [32, 323], strides = [1, 1]} : vector<32x324xf32> to vector<32x323xf32>
    %61 = vector.extract_strided_slice %59 {offsets = [0, 1], sizes = [32, 323], strides = [1, 1]} : vector<32x324xf32> to vector<32x323xf32>
    %62 = arith.maximumf %60, %61 : vector<32x323xf32>
    %63 = vector.extract_strided_slice %62 {offsets = [0, 0], sizes = [32, 305], strides = [1, 1]} : vector<32x323xf32> to vector<32x305xf32>
    %64 = vector.extract_strided_slice %62 {offsets = [0, 18], sizes = [32, 305], strides = [1, 1]} : vector<32x323xf32> to vector<32x305xf32>
    %65 = arith.maximumf %63, %64 : vector<32x305xf32>
    %66 = arith.truncf %65 : vector<32x305xf32> to vector<32x305xbf16>
    %c0_35 = arith.constant 0 : index
    %c0_36 = arith.constant 0 : index
    %67 = vector.load %arg4[%c0_35, %c0_36] : memref<305x49xbf16, #tpu.memory_space<vmem>>, vector<305x49xbf16>
    %cst_37 = arith.constant dense<0.000000e+00> : vector<32x49xf32>
    %68 = tpu.matmul %66, %67, %cst_37 {dimension_numbers = #tpu.dot_dimension_numbers<[1], [0], [0], [1], [0, 0, 1, 1], [], []>} : vector<32x305xbf16>, vector<305x49xbf16>, vector<32x49xf32> -> vector<32x49xf32>
    %c0_38 = arith.constant 0 : index
    %c0_39 = arith.constant 0 : index
    %c0_40 = arith.constant 0 : index
    %69 = vector.load %arg5[%c0_38, %c0_39, %c0_40] : memref<1x32x49xf32, #tpu.memory_space<vmem>>, vector<1x32x49xf32>
    %70 = vector.shape_cast %69 : vector<1x32x49xf32> to vector<32x49xf32>
    %71 = vector.shape_cast %68 : vector<32x49xf32> to vector<1x32x49xf32>
    tpu.vector_store %arg5[%c0_38, %c0_39, %c0_40], %71 {strides = array<i32>} : memref<1x32x49xf32, #tpu.memory_space<vmem>>, vector<1x32x49xf32>,
    return
  }
  func.func @transform_0(%arg0: i32) -> (i32, i32, i32) {
    %c0_i32 = arith.constant 0 : i32
    %c0_i32_0 = arith.constant 0 : i32
    %c0_i32_1 = arith.constant 0 : i32
    return %arg0, %c0_i32, %c0_i32_0 : i32, i32, i32
  }
  func.func @transform_1(%arg0: i32) -> (i32, i32) {
    %c0_i32 = arith.constant 0 : i32
    %c0_i32_0 = arith.constant 0 : i32
    %c0_i32_1 = arith.constant 0 : i32
    return %c0_i32, %c0_i32_0 : i32, i32
  }
  func.func @transform_2(%arg0: i32) -> (i32, i32) {
    %c0_i32 = arith.constant 0 : i32
    %c0_i32_0 = arith.constant 0 : i32
    %c0_i32_1 = arith.constant 0 : i32
    return %c0_i32, %c0_i32_0 : i32, i32
  }
  func.func @transform_3(%arg0: i32) -> (i32, i32) {
    %c0_i32 = arith.constant 0 : i32
    %c0_i32_0 = arith.constant 0 : i32
    %c0_i32_1 = arith.constant 0 : i32
    return %c0_i32, %c0_i32_0 : i32, i32
  }
  func.func @transform_4(%arg0: i32) -> (i32, i32, i32) {
    %c0_i32 = arith.constant 0 : i32
    %c0_i32_0 = arith.constant 0 : i32
    %c0_i32_1 = arith.constant 0 : i32
    return %arg0, %c0_i32, %c0_i32_0 : i32, i32, i32
  }
}

module attributes {stable_mosaic.version = 11 : i64} {
  func.func @_linear_kernel(%arg0: i32, %arg1: memref<2x1568xbf16, #tpu.memory_space<vmem>>, %arg2: memref<1568x10xbf16, #tpu.memory_space<vmem>>, %arg3: memref<1x10xf32, #tpu.memory_space<vmem>>, %arg4: memref<2x10xf32, #tpu.memory_space<vmem>>) attributes {dimension_semantics = [#tpu.dimension_semantics<parallel>], iteration_bounds = array<i64: 1>, scalar_prefetch = 0 : i64, scratch_operands = 0 : i64, tpu.core_type = #tpu.core_type<tc>, window_params = [{transform_indices = @transform_0, window_bounds = array<i64: 2, 1568>}, {pipeline_mode = #tpu.pipeline_mode<synchronous>, transform_indices = @transform_1, window_bounds = array<i64: 1568, 10>}, {pipeline_mode = #tpu.pipeline_mode<synchronous>, transform_indices = @transform_2, window_bounds = array<i64: 1, 10>}, {transform_indices = @transform_3, window_bounds = array<i64: 2, 10>}]} {
    %c0 = arith.constant 0 : index
    %c0_0 = arith.constant 0 : index
    %0 = vector.load %arg1[%c0, %c0_0] : memref<2x1568xbf16, #tpu.memory_space<vmem>>, vector<2x1568xbf16>
    %c0_1 = arith.constant 0 : index
    %c0_2 = arith.constant 0 : index
    %1 = vector.load %arg2[%c0_1, %c0_2] : memref<1568x10xbf16, #tpu.memory_space<vmem>>, vector<1568x10xbf16>
    %cst = arith.constant dense<0.000000e+00> : vector<2x10xf32>
    %2 = tpu.matmul %0, %1, %cst {dimension_numbers = #tpu.dot_dimension_numbers<[1], [0], [0], [1], [0, 0, 1, 1], [], []>} : vector<2x1568xbf16>, vector<1568x10xbf16>, vector<2x10xf32> -> vector<2x10xf32>
    %c0_3 = arith.constant 0 : index
    %c0_4 = arith.constant 0 : index
    %3 = vector.load %arg3[%c0_3, %c0_4] : memref<1x10xf32, #tpu.memory_space<vmem>>, vector<1x10xf32>
    %4 = vector.broadcast %3 : vector<1x10xf32> to vector<2x10xf32>
    %5 = arith.addf %2, %4 : vector<2x10xf32>
    %c0_5 = arith.constant 0 : index
    %c0_6 = arith.constant 0 : index
    %6 = vector.load %arg4[%c0_5, %c0_6] : memref<2x10xf32, #tpu.memory_space<vmem>>, vector<2x10xf32>
    tpu.vector_store %arg4[%c0_5, %c0_6], %5 {strides = array<i32>} : memref<2x10xf32, #tpu.memory_space<vmem>>, vector<2x10xf32>,
    return
  }
  func.func @transform_0(%arg0: i32) -> (i32, i32) {
    %c0_i32 = arith.constant 0 : i32
    %c0_i32_0 = arith.constant 0 : i32
    return %arg0, %c0_i32 : i32, i32
  }
  func.func @transform_1(%arg0: i32) -> (i32, i32) {
    %c0_i32 = arith.constant 0 : i32
    %c0_i32_0 = arith.constant 0 : i32
    %c0_i32_1 = arith.constant 0 : i32
    return %c0_i32, %c0_i32_0 : i32, i32
  }
  func.func @transform_2(%arg0: i32) -> (i32, i32) {
    %c0_i32 = arith.constant 0 : i32
    %c0_i32_0 = arith.constant 0 : i32
    %c0_i32_1 = arith.constant 0 : i32
    return %c0_i32, %c0_i32_0 : i32, i32
  }
  func.func @transform_3(%arg0: i32) -> (i32, i32) {
    %c0_i32 = arith.constant 0 : i32
    %c0_i32_0 = arith.constant 0 : i32
    return %arg0, %c0_i32 : i32, i32
  }
}

</mosaic_0001>

<llo_original>
// kernel: cnn_forward.5
$region0: #{cnn_forward.5}
  #allocation0 [shape = 'u32[]', space=smem, size = 0x4, offset = 0x4, fixed_abs, tag = 'smem constant byte address 0x4 - core index']
  #allocation1 [shape = 'u32[72,128]{1,0:T(1,128)}', space=vmem, size = 0x9000, scoped, tag = 'internal scratch']
  %s0 = inlined_call_operand.vmem [shape: bf16[2,1568], index: 0, kind: input, shape index: {}]
  %s1 = inlined_call_operand.vmem [shape: bf16[1568,10], index: 1, kind: input, shape index: {}]
  %s2 = inlined_call_operand.vmem [shape: f32[1,10], index: 2, kind: input, shape index: {}]
  %s3 = inlined_call_operand.hbm [shape: f32[2,10], index: 3, kind: output, shape index: {}]
  %s4 = sld [smem:[#allocation0]]
  $region22: #{cnn_forward.5} parent=0
    _
  %s6 = ssub.s32 1, %s4
  %s7 = scalar_select 0, %s6, %s4
  $region1: #{cnn_forward.5} parent=0
    #allocation2 [shape = 'u8[1024]{0}', space=vmem, size = 0x400, scoped, tag = 'output window, operand 0, single buffered']
    #allocation3 [shape = 's32[1]{0}', space=sflag, size = 0x4, scoped, tag = 'scoped memory for cnn_forward.5']
    %8 = vsyncpa [#allocation3], 0
    // Predicated region
    $region2: #{cnn_forward.5} parent=1 // pred_check
      _
    $region3: #{cnn_forward.5} parent=1 // pred_check_branch
      %10 = sbr.rel (0) target = $region5
    $region4: #{cnn_forward.5} parent=1 // pred_region
      _
    $region5: #{cnn_forward.5} parent=1 // pred_fallthru
      _
    // Predicated region
    $region6: #{cnn_forward.5} parent=1 // pred_check
      _
    $region7: #{cnn_forward.5} parent=1 // pred_check_branch
      %12 = sbr.rel (0) target = $region9
    $region8: #{cnn_forward.5} parent=1 // pred_region
      _
    $region9: #{cnn_forward.5} parent=1 // pred_fallthru
      _
    // Predicated region
    $region10: #{cnn_forward.5} parent=1 // pred_check
      _
    $region11: #{cnn_forward.5} parent=1 // pred_check_branch
      %14 = sbr.rel (0) target = $region13
    $region12: #{cnn_forward.5} parent=1 // pred_region
      _
    $region13: #{cnn_forward.5} parent=1 // pred_fallthru
      _
    %v16 = vld [vmem:[%s0] sm:$0xff]
    %v17 = vld [vmem:[%s0 + $0x8] sm:$0x1f]
    %v18 = vld [vmem:[%s1] sm:$0xf]
    %v19 = vld [vmem:[%s1 + $0x4] sm:$0xf]
    %v20 = vld [vmem:[%s1 + $0x8] sm:$0xf]
    %v21 = vld [vmem:[%s1 + $0xc] sm:$0xf]
    %v22 = vld [vmem:[%s1 + $0x10] sm:$0xf]
    %v23 = vld [vmem:[%s1 + $0x14] sm:$0xf]
    %v24 = vld [vmem:[%s1 + $0x18] sm:$0xf]
    %v25 = vld [vmem:[%s1 + $0x1c] sm:$0xf]
    %v26 = vld [vmem:[%s1 + $0x20] sm:$0xf]
    %v27 = vld [vmem:[%s1 + $0x24] sm:$0xf]
    %v28 = vld [vmem:[%s1 + $0x28] sm:$0xf]
    %v29 = vld [vmem:[%s1 + $0x2c] sm:$0xf]
    %v30 = vld [vmem:[%s1 + $0x30] sm:$0xf]
    %v31 = vld [vmem:[%s1 + $0x34] sm:$0xf]
    %v32 = vld [vmem:[%s1 + $0x38] sm:$0xf]
    %v33 = vld [vmem:[%s1 + $0x3c] sm:$0xf]
    %v34 = vld [vmem:[%s1 + $0x40] sm:$0xf]
    %v35 = vld [vmem:[%s1 + $0x44] sm:$0xf]
    %v36 = vld [vmem:[%s1 + $0x48] sm:$0xf]
    %v37 = vld [vmem:[%s1 + $0x4c] sm:$0xf]
    %v38 = vld [vmem:[%s1 + $0x50] sm:$0xf]
    %v39 = vld [vmem:[%s1 + $0x54] sm:$0xf]
    %v40 = vld [vmem:[%s1 + $0x58] sm:$0xf]
    %v41 = vld [vmem:[%s1 + $0x5c] sm:$0xf]
    %v42 = vld [vmem:[%s1 + $0x60] sm:$0xf]
    %v43 = vld [vmem:[%s1 + $0x64] sm:$0xf]
    %v44 = vld [vmem:[%s1 + $0x68] sm:$0xf]
    %v45 = vld [vmem:[%s1 + $0x6c] sm:$0xf]
    %v46 = vld [vmem:[%s1 + $0x70] sm:$0xf]
    %v47 = vld [vmem:[%s1 + $0x74] sm:$0xf]
    %v48 = vld [vmem:[%s1 + $0x78] sm:$0xf]
    %v49 = vld [vmem:[%s1 + $0x7c] sm:$0xf]
    %v50 = vld [vmem:[%s1 + $0x80] sm:$0xf]
    %v51 = vld [vmem:[%s1 + $0x84] sm:$0xf]
    %v52 = vld [vmem:[%s1 + $0x88] sm:$0xf]
    %v53 = vld [vmem:[%s1 + $0x8c] sm:$0xf]
    %v54 = vld [vmem:[%s1 + $0x90] sm:$0xf]
    %v55 = vld [vmem:[%s1 + $0x94] sm:$0xf]
    %v56 = vld [vmem:[%s1 + $0x98] sm:$0xf]
    %v57 = vld [vmem:[%s1 + $0x9c] sm:$0xf]
    %v58 = vld [vmem:[%s1 + $0xa0] sm:$0xf]
    %v59 = vld [vmem:[%s1 + $0xa4] sm:$0xf]
    %v60 = vld [vmem:[%s1 + $0xa8] sm:$0xf]
    %v61 = vld [vmem:[%s1 + $0xac] sm:$0xf]
    %v62 = vld [vmem:[%s1 + $0xb0] sm:$0xf]
    %v63 = vld [vmem:[%s1 + $0xb4] sm:$0xf]
    %v64 = vld [vmem:[%s1 + $0xb8] sm:$0xf]
    %v65 = vld [vmem:[%s1 + $0xbc] sm:$0xf]
    %v66 = vld [vmem:[%s1 + $0xc0] sm:$0xf]
    %v67 = vld [vmem:[%s1 + $0xc4] sm:$0xf]
    %v68 = vld [vmem:[%s1 + $0xc8] sm:$0xf]
    %v69 = vld [vmem:[%s1 + $0xcc] sm:$0xf]
    %v70 = vld [vmem:[%s1 + $0xd0] sm:$0xf]
    %v71 = vld [vmem:[%s1 + $0xd4] sm:$0xf]
    %v72 = vld [vmem:[%s1 + $0xd8] sm:$0xf]
    %v73 = vld [vmem:[%s1 + $0xdc] sm:$0xf]
    %v74 = vld [vmem:[%s1 + $0xe0] sm:$0xf]
    %v75 = vld [vmem:[%s1 + $0xe4] sm:$0xf]
    %v76 = vld [vmem:[%s1 + $0xe8] sm:$0xf]
    %v77 = vld [vmem:[%s1 + $0xec] sm:$0xf]
    %v78 = vld [vmem:[%s1 + $0xf0] sm:$0xf]
    %v79 = vld [vmem:[%s1 + $0xf4] sm:$0xf]
    %v80 = vld [vmem:[%s1 + $0xf8] sm:$0xf]
    %v81 = vld [vmem:[%s1 + $0xfc] sm:$0xf]
    %v82 = vld [vmem:[%s1 + $0x100] sm:$0xf]
    %v83 = vld [vmem:[%s1 + $0x104] sm:$0xf]
    %v84 = vld [vmem:[%s1 + $0x108] sm:$0xf]
    %v85 = vld [vmem:[%s1 + $0x10c] sm:$0xf]
    %v86 = vld [vmem:[%s1 + $0x110] sm:$0xf]
    %v87 = vld [vmem:[%s1 + $0x114] sm:$0xf]
    %v88 = vld [vmem:[%s1 + $0x118] sm:$0xf]
    %v89 = vld [vmem:[%s1 + $0x11c] sm:$0xf]
    %v90 = vld [vmem:[%s1 + $0x120] sm:$0xf]
    %v91 = vld [vmem:[%s1 + $0x124] sm:$0xf]
    %v92 = vld [vmem:[%s1 + $0x128] sm:$0xf]
    %v93 = vld [vmem:[%s1 + $0x12c] sm:$0xf]
    %v94 = vld [vmem:[%s1 + $0x130] sm:$0xf]
    %v95 = vld [vmem:[%s1 + $0x134] sm:$0xf]
    %v96 = vld [vmem:[%s1 + $0x138] sm:$0xf]
    %v97 = vld [vmem:[%s1 + $0x13c] sm:$0xf]
    %v98 = vld [vmem:[%s1 + $0x140] sm:$0xf]
    %v99 = vld [vmem:[%s1 + $0x144] sm:$0xf]
    %v100 = vld [vmem:[%s1 + $0x148] sm:$0xf]
    %v101 = vld [vmem:[%s1 + $0x14c] sm:$0xf]
    %v102 = vld [vmem:[%s1 + $0x150] sm:$0xf]
    %v103 = vld [vmem:[%s1 + $0x154] sm:$0xf]
    %v104 = vld [vmem:[%s1 + $0x158] sm:$0xf]
    %v105 = vld [vmem:[%s1 + $0x15c] sm:$0xf]
    %v106 = vld [vmem:[%s1 + $0x160] sm:$0xf]
    %v107 = vld [vmem:[%s1 + $0x164] sm:$0xf]
    %v108 = vld [vmem:[%s1 + $0x168] sm:$0xf]
    %v109 = vld [vmem:[%s1 + $0x16c] sm:$0xf]
    %v110 = vld [vmem:[%s1 + $0x170] sm:$0xf]
    %v111 = vld [vmem:[%s1 + $0x174] sm:$0xf]
    %v112 = vld [vmem:[%s1 + $0x178] sm:$0xf]
    %v113 = vld [vmem:[%s1 + $0x17c] sm:$0xf]
    %v114 = vld [vmem:[%s1 + $0x180] sm:$0xf]
    %v115 = vld [vmem:[%s1 + $0x184] sm:$0xf]
    %v116 = vld [vmem:[%s1 + $0x188] sm:$0xf]
    %v117 = vld [vmem:[%s1 + $0x18c] sm:$0xf]
    %v118 = vld [vmem:[%s1 + $0x190] sm:$0xf]
    %v119 = vld [vmem:[%s1 + $0x194] sm:$0xf]
    %v120 = vld [vmem:[%s1 + $0x198] sm:$0xf]
    %v121 = vld [vmem:[%s1 + $0x19c] sm:$0xf]
    %v122 = vld [vmem:[%s1 + $0x1a0] sm:$0xf]
    %v123 = vld [vmem:[%s1 + $0x1a4] sm:$0xf]
    %v124 = vld [vmem:[%s1 + $0x1a8] sm:$0xf]
    %v125 = vld [vmem:[%s1 + $0x1ac] sm:$0xf]
    %v126 = vld [vmem:[%s1 + $0x1b0] sm:$0xf]
    %v127 = vld [vmem:[%s1 + $0x1b4] sm:$0xf]
    %v128 = vld [vmem:[%s1 + $0x1b8] sm:$0xf]
    %v129 = vld [vmem:[%s1 + $0x1bc] sm:$0xf]
    %v130 = vld [vmem:[%s1 + $0x1c0] sm:$0xf]
    %v131 = vld [vmem:[%s1 + $0x1c4] sm:$0xf]
    %v132 = vld [vmem:[%s1 + $0x1c8] sm:$0xf]
    %v133 = vld [vmem:[%s1 + $0x1cc] sm:$0xf]
    %v134 = vld [vmem:[%s1 + $0x1d0] sm:$0xf]
    %v135 = vld [vmem:[%s1 + $0x1d4] sm:$0xf]
    %v136 = vld [vmem:[%s1 + $0x1d8] sm:$0xf]
    %v137 = vld [vmem:[%s1 + $0x1dc] sm:$0xf]
    %v138 = vld [vmem:[%s1 + $0x1e0] sm:$0xf]
    %v139 = vld [vmem:[%s1 + $0x1e4] sm:$0xf]
    %v140 = vld [vmem:[%s1 + $0x1e8] sm:$0xf]
    %v141 = vld [vmem:[%s1 + $0x1ec] sm:$0xf]
    %v142 = vld [vmem:[%s1 + $0x1f0] sm:$0xf]
    %v143 = vld [vmem:[%s1 + $0x1f4] sm:$0xf]
    %v144 = vld [vmem:[%s1 + $0x1f8] sm:$0xf]
    %v145 = vld [vmem:[%s1 + $0x1fc] sm:$0xf]
    %v146 = vld [vmem:[%s1 + $0x200] sm:$0xf]
    %v147 = vld [vmem:[%s1 + $0x204] sm:$0xf]
    %v148 = vld [vmem:[%s1 + $0x208] sm:$0xf]
    %v149 = vld [vmem:[%s1 + $0x20c] sm:$0xf]
    %v150 = vld [vmem:[%s1 + $0x210] sm:$0xf]
    %v151 = vld [vmem:[%s1 + $0x214] sm:$0xf]
    %v152 = vld [vmem:[%s1 + $0x218] sm:$0xf]
    %v153 = vld [vmem:[%s1 + $0x21c] sm:$0xf]
    %v154 = vld [vmem:[%s1 + $0x220] sm:$0xf]
    %v155 = vld [vmem:[%s1 + $0x224] sm:$0xf]
    %v156 = vld [vmem:[%s1 + $0x228] sm:$0xf]
    %v157 = vld [vmem:[%s1 + $0x22c] sm:$0xf]
    %v158 = vld [vmem:[%s1 + $0x230] sm:$0xf]
    %v159 = vld [vmem:[%s1 + $0x234] sm:$0xf]
    %v160 = vld [vmem:[%s1 + $0x238] sm:$0xf]
    %v161 = vld [vmem:[%s1 + $0x23c] sm:$0xf]
    %v162 = vld [vmem:[%s1 + $0x240] sm:$0xf]
    %v163 = vld [vmem:[%s1 + $0x244] sm:$0xf]
    %v164 = vld [vmem:[%s1 + $0x248] sm:$0xf]
    %v165 = vld [vmem:[%s1 + $0x24c] sm:$0xf]
    %v166 = vld [vmem:[%s1 + $0x250] sm:$0xf]
    %v167 = vld [vmem:[%s1 + $0x254] sm:$0xf]
    %v168 = vld [vmem:[%s1 + $0x258] sm:$0xf]
    %v169 = vld [vmem:[%s1 + $0x25c] sm:$0xf]
    %v170 = vld [vmem:[%s1 + $0x260] sm:$0xf]
    %v171 = vld [vmem:[%s1 + $0x264] sm:$0xf]
    %v172 = vld [vmem:[%s1 + $0x268] sm:$0xf]
    %v173 = vld [vmem:[%s1 + $0x26c] sm:$0xf]
    %v174 = vld [vmem:[%s1 + $0x270] sm:$0xf]
    %v175 = vld [vmem:[%s1 + $0x274] sm:$0xf]
    %v176 = vld [vmem:[%s1 + $0x278] sm:$0xf]
    %v177 = vld [vmem:[%s1 + $0x27c] sm:$0xf]
    %v178 = vld [vmem:[%s1 + $0x280] sm:$0xf]
    %v179 = vld [vmem:[%s1 + $0x284] sm:$0xf]
    %v180 = vld [vmem:[%s1 + $0x288] sm:$0xf]
    %v181 = vld [vmem:[%s1 + $0x28c] sm:$0xf]
    %v182 = vld [vmem:[%s1 + $0x290] sm:$0xf]
    %v183 = vld [vmem:[%s1 + $0x294] sm:$0xf]
    %v184 = vld [vmem:[%s1 + $0x298] sm:$0xf]
    %v185 = vld [vmem:[%s1 + $0x29c] sm:$0xf]
    %v186 = vld [vmem:[%s1 + $0x2a0] sm:$0xf]
    %v187 = vld [vmem:[%s1 + $0x2a4] sm:$0xf]
    %v188 = vld [vmem:[%s1 + $0x2a8] sm:$0xf]
    %v189 = vld [vmem:[%s1 + $0x2ac] sm:$0xf]
    %v190 = vld [vmem:[%s1 + $0x2b0] sm:$0xf]
    %v191 = vld [vmem:[%s1 + $0x2b4] sm:$0xf]
    %v192 = vld [vmem:[%s1 + $0x2b8] sm:$0xf]
    %v193 = vld [vmem:[%s1 + $0x2bc] sm:$0xf]
    %v194 = vld [vmem:[%s1 + $0x2c0] sm:$0xf]
    %v195 = vld [vmem:[%s1 + $0x2c4] sm:$0xf]
    %v196 = vld [vmem:[%s1 + $0x2c8] sm:$0xf]
    %v197 = vld [vmem:[%s1 + $0x2cc] sm:$0xf]
    %v198 = vld [vmem:[%s1 + $0x2d0] sm:$0xf]
    %v199 = vld [vmem:[%s1 + $0x2d4] sm:$0xf]
    %v200 = vld [vmem:[%s1 + $0x2d8] sm:$0xf]
    %v201 = vld [vmem:[%s1 + $0x2dc] sm:$0xf]
    %v202 = vld [vmem:[%s1 + $0x2e0] sm:$0xf]
    %v203 = vld [vmem:[%s1 + $0x2e4] sm:$0xf]
    %v204 = vld [vmem:[%s1 + $0x2e8] sm:$0xf]
    %v205 = vld [vmem:[%s1 + $0x2ec] sm:$0xf]
    %v206 = vld [vmem:[%s1 + $0x2f0] sm:$0xf]
    %v207 = vld [vmem:[%s1 + $0x2f4] sm:$0xf]
    %v208 = vld [vmem:[%s1 + $0x2f8] sm:$0xf]
    %v209 = vld [vmem:[%s1 + $0x2fc] sm:$0xf]
    %v210 = vld [vmem:[%s1 + $0x300] sm:$0xf]
    %v211 = vld [vmem:[%s1 + $0x304] sm:$0xf]
    %v212 = vld [vmem:[%s1 + $0x308] sm:$0xf]
    %v213 = vld [vmem:[%s1 + $0x30c] sm:$0xf]
    %v214 = vld [vmem:[%s2] sm:$0x1]
    %v216 = vperm.slane %v214, 0
    %219 = vst [vmem:[#allocation1] ss:$9 sm:$0xff] %v16
    %v220 = vld [vmem:[#allocation1] sm:$0xff]
    %v221 = vld [vmem:[#allocation1 + $0x9] sm:$0xff]
    %v222 = vld [vmem:[#allocation1 + $0x12] sm:$0xff]
    %v223 = vld [vmem:[#allocation1 + $0x1b] sm:$0xff]
    %v224 = vld [vmem:[#allocation1 + $0x24] sm:$0xff]
    %v225 = vld [vmem:[#allocation1 + $0x2d] sm:$0xff]
    %v226 = vld [vmem:[#allocation1 + $0x36] sm:$0xff]
    %v227 = vld [vmem:[#allocation1 + $0x3f] sm:$0xff]
    %229 = vst [vmem:[#allocation1] ss:$9 sm:$0xff] %v17
    %v230 = vld [vmem:[#allocation1] sm:$0xff]
    %v231 = vld [vmem:[#allocation1 + $0x9] sm:$0xff]
    %v232 = vld [vmem:[#allocation1 + $0x12] sm:$0xff]
    %v233 = vld [vmem:[#allocation1 + $0x1b] sm:$0xff]
    %v234 = vld [vmem:[#allocation1 + $0x24] sm:$0xff]
    %v443 = vunpack.c.l.b16 %v18
    %v444 = vunpack.c.l.b16 %v19
    %v445 = vunpack.c.l.b16 %v20
    %v446 = vunpack.c.l.b16 %v21
    %v447 = vunpack.c.l.b16 %v22
    %v448 = vunpack.c.l.b16 %v23
    %v449 = vunpack.c.l.b16 %v24
    %v450 = vunpack.c.l.b16 %v25
    %v451 = vunpack.c.l.b16 %v26
    %v452 = vunpack.c.l.b16 %v27
    %v453 = vunpack.c.l.b16 %v28
    %v454 = vunpack.c.l.b16 %v29
    %v455 = vunpack.c.l.b16 %v30
    %v456 = vunpack.c.l.b16 %v31
    %v457 = vunpack.c.l.b16 %v32
    %v458 = vunpack.c.l.b16 %v33
    %v459 = vunpack.c.l.b16 %v34
    %v460 = vunpack.c.l.b16 %v35
    %v461 = vunpack.c.l.b16 %v36
    %v462 = vunpack.c.l.b16 %v37
    %v463 = vunpack.c.l.b16 %v38
    %v464 = vunpack.c.l.b16 %v39
    %v465 = vunpack.c.l.b16 %v40
    %v466 = vunpack.c.l.b16 %v41
    %v467 = vunpack.c.l.b16 %v42
    %v468 = vunpack.c.l.b16 %v43
    %v469 = vunpack.c.l.b16 %v44
    %v470 = vunpack.c.l.b16 %v45
    %v471 = vunpack.c.l.b16 %v46
    %v472 = vunpack.c.l.b16 %v47
    %v473 = vunpack.c.l.b16 %v48
    %v474 = vunpack.c.l.b16 %v49
    %v475 = vunpack.c.l.b16 %v50
    %v476 = vunpack.c.l.b16 %v51
    %v477 = vunpack.c.l.b16 %v52
    %v478 = vunpack.c.l.b16 %v53
    %v479 = vunpack.c.l.b16 %v54
    %v480 = vunpack.c.l.b16 %v55
    %v481 = vunpack.c.l.b16 %v56
    %v482 = vunpack.c.l.b16 %v57
    %v483 = vunpack.c.l.b16 %v58
    %v484 = vunpack.c.l.b16 %v59
    %v485 = vunpack.c.l.b16 %v60
    %v486 = vunpack.c.l.b16 %v61
    %v487 = vunpack.c.l.b16 %v62
    %v488 = vunpack.c.l.b16 %v63
    %v489 = vunpack.c.l.b16 %v64
    %v490 = vunpack.c.l.b16 %v65
    %v491 = vunpack.c.l.b16 %v66
    %v492 = vunpack.c.l.b16 %v67
    %v493 = vunpack.c.l.b16 %v68
    %v494 = vunpack.c.l.b16 %v69
    %v495 = vunpack.c.l.b16 %v70
    %v496 = vunpack.c.l.b16 %v71
    %v497 = vunpack.c.l.b16 %v72
    %v498 = vunpack.c.l.b16 %v73
    %v499 = vunpack.c.l.b16 %v74
    %v500 = vunpack.c.l.b16 %v75
    %v501 = vunpack.c.l.b16 %v76
    %v502 = vunpack.c.l.b16 %v77
    %v503 = vunpack.c.l.b16 %v78
    %v504 = vunpack.c.l.b16 %v79
    %v505 = vunpack.c.l.b16 %v80
    %v506 = vunpack.c.l.b16 %v81
    %v507 = vunpack.c.l.b16 %v82
    %v508 = vunpack.c.l.b16 %v83
    %v509 = vunpack.c.l.b16 %v84
    %v510 = vunpack.c.l.b16 %v85
    %v511 = vunpack.c.l.b16 %v86
    %v512 = vunpack.c.l.b16 %v87
    %v513 = vunpack.c.l.b16 %v88
    %v514 = vunpack.c.l.b16 %v89
    %v515 = vunpack.c.l.b16 %v90
    %v516 = vunpack.c.l.b16 %v91
    %v517 = vunpack.c.l.b16 %v92
    %v518 = vunpack.c.l.b16 %v93
    %v519 = vunpack.c.l.b16 %v94
    %v520 = vunpack.c.l.b16 %v95
    %v521 = vunpack.c.l.b16 %v96
    %v522 = vunpack.c.l.b16 %v97
    %v523 = vunpack.c.l.b16 %v98
    %v524 = vunpack.c.l.b16 %v99
    %v525 = vunpack.c.l.b16 %v100
    %v526 = vunpack.c.l.b16 %v101
    %v527 = vunpack.c.l.b16 %v102
    %v528 = vunpack.c.l.b16 %v103
    %v529 = vunpack.c.l.b16 %v104
    %v530 = vunpack.c.l.b16 %v105
    %v531 = vunpack.c.l.b16 %v106
    %v532 = vunpack.c.l.b16 %v107
    %v533 = vunpack.c.l.b16 %v108
    %v534 = vunpack.c.l.b16 %v109
    %v535 = vunpack.c.l.b16 %v110
    %v536 = vunpack.c.l.b16 %v111
    %v537 = vunpack.c.l.b16 %v112
    %v538 = vunpack.c.l.b16 %v113
    %v539 = vunpack.c.l.b16 %v114
    %v540 = vunpack.c.l.b16 %v115
    %v541 = vunpack.c.l.b16 %v116
    %v542 = vunpack.c.l.b16 %v117
    %v543 = vunpack.c.l.b16 %v118
    %v544 = vunpack.c.l.b16 %v119
    %v545 = vunpack.c.l.b16 %v120
    %v546 = vunpack.c.l.b16 %v121
    %v547 = vunpack.c.l.b16 %v122
    %v548 = vunpack.c.l.b16 %v123
    %v549 = vunpack.c.l.b16 %v124
    %v550 = vunpack.c.l.b16 %v125
    %v551 = vunpack.c.l.b16 %v126
    %v552 = vunpack.c.l.b16 %v127
    %v553 = vunpack.c.l.b16 %v128
    %v554 = vunpack.c.l.b16 %v129
    %v555 = vunpack.c.l.b16 %v130
    %v556 = vunpack.c.l.b16 %v131
    %v557 = vunpack.c.l.b16 %v132
    %v558 = vunpack.c.l.b16 %v133
    %v559 = vunpack.c.l.b16 %v134
    %v560 = vunpack.c.l.b16 %v135
    %v561 = vunpack.c.l.b16 %v136
    %v562 = vunpack.c.l.b16 %v137
    %v563 = vunpack.c.l.b16 %v138
    %v564 = vunpack.c.l.b16 %v139
    %v565 = vunpack.c.l.b16 %v140
    %v566 = vunpack.c.l.b16 %v141
    %v567 = vunpack.c.l.b16 %v142
    %v568 = vunpack.c.l.b16 %v143
    %v569 = vunpack.c.l.b16 %v144
    %v570 = vunpack.c.l.b16 %v145
    %v571 = vunpack.c.l.b16 %v146
    %v572 = vunpack.c.l.b16 %v147
    %v573 = vunpack.c.l.b16 %v148
    %v574 = vunpack.c.l.b16 %v149
    %v575 = vunpack.c.l.b16 %v150
    %v576 = vunpack.c.l.b16 %v151
    %v577 = vunpack.c.l.b16 %v152
    %v578 = vunpack.c.l.b16 %v153
    %v579 = vunpack.c.l.b16 %v154
    %v580 = vunpack.c.l.b16 %v155
    %v581 = vunpack.c.l.b16 %v156
    %v582 = vunpack.c.l.b16 %v157
    %v583 = vunpack.c.l.b16 %v158
    %v584 = vunpack.c.l.b16 %v159
    %v585 = vunpack.c.l.b16 %v160
    %v586 = vunpack.c.l.b16 %v161
    %v587 = vunpack.c.l.b16 %v162
    %v588 = vunpack.c.l.b16 %v163
    %v589 = vunpack.c.l.b16 %v164
    %v590 = vunpack.c.l.b16 %v165
    %v591 = vunpack.c.l.b16 %v166
    %v592 = vunpack.c.l.b16 %v167
    %v593 = vunpack.c.l.b16 %v168
    %v594 = vunpack.c.l.b16 %v169
    %v595 = vunpack.c.l.b16 %v170
    %v596 = vunpack.c.l.b16 %v171
    %v597 = vunpack.c.l.b16 %v172
    %v598 = vunpack.c.l.b16 %v173
    %v599 = vunpack.c.l.b16 %v174
    %v600 = vunpack.c.l.b16 %v175
    %v601 = vunpack.c.l.b16 %v176
    %v602 = vunpack.c.l.b16 %v177
    %v603 = vunpack.c.l.b16 %v178
    %v604 = vunpack.c.l.b16 %v179
    %v605 = vunpack.c.l.b16 %v180
    %v606 = vunpack.c.l.b16 %v181
    %v607 = vunpack.c.l.b16 %v182
    %v608 = vunpack.c.l.b16 %v183
    %v609 = vunpack.c.l.b16 %v184
    %v610 = vunpack.c.l.b16 %v185
    %v611 = vunpack.c.l.b16 %v186
    %v612 = vunpack.c.l.b16 %v187
    %v613 = vunpack.c.l.b16 %v188
    %v614 = vunpack.c.l.b16 %v189
    %v615 = vunpack.c.l.b16 %v190
    %v616 = vunpack.c.l.b16 %v191
    %v617 = vunpack.c.l.b16 %v192
    %v618 = vunpack.c.l.b16 %v193
    %v619 = vunpack.c.l.b16 %v194
    %v620 = vunpack.c.l.b16 %v195
    %v621 = vunpack.c.l.b16 %v196
    %v622 = vunpack.c.l.b16 %v197
    %v623 = vunpack.c.l.b16 %v198
    %v624 = vunpack.c.l.b16 %v199
    %v625 = vunpack.c.l.b16 %v200
    %v626 = vunpack.c.l.b16 %v201
    %v627 = vunpack.c.l.b16 %v202
    %v628 = vunpack.c.l.b16 %v203
    %v629 = vunpack.c.l.b16 %v204
    %v630 = vunpack.c.l.b16 %v205
    %v631 = vunpack.c.l.b16 %v206
    %v632 = vunpack.c.l.b16 %v207
    %v633 = vunpack.c.l.b16 %v208
    %v634 = vunpack.c.l.b16 %v209
    %v635 = vunpack.c.l.b16 %v210
    %v636 = vunpack.c.l.b16 %v211
    %v637 = vunpack.c.l.b16 %v212
    %v638 = vunpack.c.l.b16 %v213
    %v639 = vpack.c.b16 %v444, %v443
    %v640 = vpack.c.b16 %v446, %v445
    %v641 = vpack.c.b16 %v448, %v447
    %v642 = vpack.c.b16 %v450, %v449
    %v643 = vpack.c.b16 %v452, %v451
    %v644 = vpack.c.b16 %v454, %v453
    %v645 = vpack.c.b16 %v456, %v455
    %v646 = vpack.c.b16 %v458, %v457
    %v647 = vpack.c.b16 %v460, %v459
    %v648 = vpack.c.b16 %v462, %v461
    %v649 = vpack.c.b16 %v464, %v463
    %v650 = vpack.c.b16 %v466, %v465
    %v651 = vpack.c.b16 %v468, %v467
    %v652 = vpack.c.b16 %v470, %v469
    %v653 = vpack.c.b16 %v472, %v471
    %v654 = vpack.c.b16 %v474, %v473
    %v655 = vpack.c.b16 %v476, %v475
    %v656 = vpack.c.b16 %v478, %v477
    %v657 = vpack.c.b16 %v480, %v479
    %v658 = vpack.c.b16 %v482, %v481
    %v659 = vpack.c.b16 %v484, %v483
    %v660 = vpack.c.b16 %v486, %v485
    %v661 = vpack.c.b16 %v488, %v487
    %v662 = vpack.c.b16 %v490, %v489
    %v663 = vpack.c.b16 %v492, %v491
    %v664 = vpack.c.b16 %v494, %v493
    %v665 = vpack.c.b16 %v496, %v495
    %v666 = vpack.c.b16 %v498, %v497
    %v667 = vpack.c.b16 %v500, %v499
    %v668 = vpack.c.b16 %v502, %v501
    %v669 = vpack.c.b16 %v504, %v503
    %v670 = vpack.c.b16 %v506, %v505
    %v671 = vpack.c.b16 %v508, %v507
    %v672 = vpack.c.b16 %v510, %v509
    %v673 = vpack.c.b16 %v512, %v511
    %v674 = vpack.c.b16 %v514, %v513
    %v675 = vpack.c.b16 %v516, %v515
    %v676 = vpack.c.b16 %v518, %v517
    %v677 = vpack.c.b16 %v520, %v519
    %v678 = vpack.c.b16 %v522, %v521
    %v679 = vpack.c.b16 %v524, %v523
    %v680 = vpack.c.b16 %v526, %v525
    %v681 = vpack.c.b16 %v528, %v527
    %v682 = vpack.c.b16 %v530, %v529
    %v683 = vpack.c.b16 %v532, %v531
    %v684 = vpack.c.b16 %v534, %v533
    %v685 = vpack.c.b16 %v536, %v535
    %v686 = vpack.c.b16 %v538, %v537
    %v687 = vpack.c.b16 %v540, %v539
    %v688 = vpack.c.b16 %v542, %v541
    %v689 = vpack.c.b16 %v544, %v543
    %v690 = vpack.c.b16 %v546, %v545
    %v691 = vpack.c.b16 %v548, %v547
    %v692 = vpack.c.b16 %v550, %v549
    %v693 = vpack.c.b16 %v552, %v551
    %v694 = vpack.c.b16 %v554, %v553
    %v695 = vpack.c.b16 %v556, %v555
    %v696 = vpack.c.b16 %v558, %v557
    %v697 = vpack.c.b16 %v560, %v559
    %v698 = vpack.c.b16 %v562, %v561
    %v699 = vpack.c.b16 %v564, %v563
    %v700 = vpack.c.b16 %v566, %v565
    %v701 = vpack.c.b16 %v568, %v567
    %v702 = vpack.c.b16 %v570, %v569
    %v703 = vpack.c.b16 %v572, %v571
    %v704 = vpack.c.b16 %v574, %v573
    %v705 = vpack.c.b16 %v576, %v575
    %v706 = vpack.c.b16 %v578, %v577
    %v707 = vpack.c.b16 %v580, %v579
    %v708 = vpack.c.b16 %v582, %v581
    %v709 = vpack.c.b16 %v584, %v583
    %v710 = vpack.c.b16 %v586, %v585
    %v711 = vpack.c.b16 %v588, %v587
    %v712 = vpack.c.b16 %v590, %v589
    %v713 = vpack.c.b16 %v592, %v591
    %v714 = vpack.c.b16 %v594, %v593
    %v715 = vpack.c.b16 %v596, %v595
    %v716 = vpack.c.b16 %v598, %v597
    %v717 = vpack.c.b16 %v600, %v599
    %v718 = vpack.c.b16 %v602, %v601
    %v719 = vpack.c.b16 %v604, %v603
    %v720 = vpack.c.b16 %v606, %v605
    %v721 = vpack.c.b16 %v608, %v607
    %v722 = vpack.c.b16 %v610, %v609
    %v723 = vpack.c.b16 %v612, %v611
    %v724 = vpack.c.b16 %v614, %v613
    %v725 = vpack.c.b16 %v616, %v615
    %v726 = vpack.c.b16 %v618, %v617
    %v727 = vpack.c.b16 %v620, %v619
    %v728 = vpack.c.b16 %v622, %v621
    %v729 = vpack.c.b16 %v624, %v623
    %v730 = vpack.c.b16 %v626, %v625
    %v731 = vpack.c.b16 %v628, %v627
    %v732 = vpack.c.b16 %v630, %v629
    %v733 = vpack.c.b16 %v632, %v631
    %v734 = vpack.c.b16 %v634, %v633
    %v735 = vpack.c.b16 %v636, %v635
    %v736 = vpack.c.b16 %v638, %v637
    %vm835 = vcmask 261120
    %v836 = vsel %vm835, %v234, 0
    %838 = vmatpush.bf16.msra.mxu0 %v646
    %839 = vmatpush.bf16.msra.mxu0 %v645
    %840 = vmatpush.bf16.msra.mxu0 %v644
    %841 = vmatpush.bf16.msra.mxu0 %v643
    %842 = vmatpush.bf16.msra.mxu0 %v642
    %843 = vmatpush.bf16.msra.mxu0 %v641
    %844 = vmatpush.bf16.msra.mxu0 %v640
    %845 = vmatpush.bf16.msra.mxu0 %v639
    %846 = vmatmul.bf16.gmra.mxu0 %v220
    %v847 = vpop.f32.mrf.mxu0
    %v848 = vadd.f32 %v216, %v847
    %v849 = vpop.f32.mrf.mxu0
    %850 = vdwg.mxu0
    %851 = vmatpush.bf16.msra.mxu0 %v654
    %852 = vmatpush.bf16.msra.mxu0 %v653
    %853 = vmatpush.bf16.msra.mxu0 %v652
    %854 = vmatpush.bf16.msra.mxu0 %v651
    %855 = vmatpush.bf16.msra.mxu0 %v650
    %856 = vmatpush.bf16.msra.mxu0 %v649
    %857 = vmatpush.bf16.msra.mxu0 %v648
    %858 = vmatpush.bf16.msra.mxu0 %v647
    %859 = vmatmul.bf16.gmra.mxu0 %v221
    %v860 = vpop.f32.mrf.mxu0
    %v861 = vadd.f32 %v848, %v860
    %v862 = vpop.f32.mrf.mxu0
    %863 = vdwg.mxu0
    %864 = vmatpush.bf16.msra.mxu0 %v662
    %865 = vmatpush.bf16.msra.mxu0 %v661
    %866 = vmatpush.bf16.msra.mxu0 %v660
    %867 = vmatpush.bf16.msra.mxu0 %v659
    %868 = vmatpush.bf16.msra.mxu0 %v658
    %869 = vmatpush.bf16.msra.mxu0 %v657
    %870 = vmatpush.bf16.msra.mxu0 %v656
    %871 = vmatpush.bf16.msra.mxu0 %v655
    %872 = vmatmul.bf16.gmra.mxu0 %v222
    %v873 = vpop.f32.mrf.mxu0
    %v874 = vadd.f32 %v861, %v873
    %v875 = vpop.f32.mrf.mxu0
    %876 = vdwg.mxu0
    %877 = vmatpush.bf16.msra.mxu0 %v670
    %878 = vmatpush.bf16.msra.mxu0 %v669
    %879 = vmatpush.bf16.msra.mxu0 %v668
    %880 = vmatpush.bf16.msra.mxu0 %v667
    %881 = vmatpush.bf16.msra.mxu0 %v666
    %882 = vmatpush.bf16.msra.mxu0 %v665
    %883 = vmatpush.bf16.msra.mxu0 %v664
    %884 = vmatpush.bf16.msra.mxu0 %v663
    %885 = vmatmul.bf16.gmra.mxu0 %v223
    %v886 = vpop.f32.mrf.mxu0
    %v887 = vadd.f32 %v874, %v886
    %v888 = vpop.f32.mrf.mxu0
    %889 = vdwg.mxu0
    %890 = vmatpush.bf16.msra.mxu0 %v678
    %891 = vmatpush.bf16.msra.mxu0 %v677
    %892 = vmatpush.bf16.msra.mxu0 %v676
    %893 = vmatpush.bf16.msra.mxu0 %v675
    %894 = vmatpush.bf16.msra.mxu0 %v674
    %895 = vmatpush.bf16.msra.mxu0 %v673
    %896 = vmatpush.bf16.msra.mxu0 %v672
    %897 = vmatpush.bf16.msra.mxu0 %v671
    %898 = vmatmul.bf16.gmra.mxu0 %v224
    %v899 = vpop.f32.mrf.mxu0
    %v900 = vadd.f32 %v887, %v899
    %v901 = vpop.f32.mrf.mxu0
    %902 = vdwg.mxu0
    %903 = vmatpush.bf16.msra.mxu0 %v686
    %904 = vmatpush.bf16.msra.mxu0 %v685
    %905 = vmatpush.bf16.msra.mxu0 %v684
    %906 = vmatpush.bf16.msra.mxu0 %v683
    %907 = vmatpush.bf16.msra.mxu0 %v682
    %908 = vmatpush.bf16.msra.mxu0 %v681
    %909 = vmatpush.bf16.msra.mxu0 %v680
    %910 = vmatpush.bf16.msra.mxu0 %v679
    %911 = vmatmul.bf16.gmra.mxu0 %v225
    %v912 = vpop.f32.mrf.mxu0
    %v913 = vadd.f32 %v900, %v912
    %v914 = vpop.f32.mrf.mxu0
    %915 = vdwg.mxu0
    %916 = vmatpush.bf16.msra.mxu0 %v694
    %917 = vmatpush.bf16.msra.mxu0 %v693
    %918 = vmatpush.bf16.msra.mxu0 %v692
    %919 = vmatpush.bf16.msra.mxu0 %v691
    %920 = vmatpush.bf16.msra.mxu0 %v690
    %921 = vmatpush.bf16.msra.mxu0 %v689
    %922 = vmatpush.bf16.msra.mxu0 %v688
    %923 = vmatpush.bf16.msra.mxu0 %v687
    %924 = vmatmul.bf16.gmra.mxu0 %v226
    %v925 = vpop.f32.mrf.mxu0
    %v926 = vadd.f32 %v913, %v925
    %v927 = vpop.f32.mrf.mxu0
    %928 = vdwg.mxu0
    %929 = vmatpush.bf16.msra.mxu0 %v702
    %930 = vmatpush.bf16.msra.mxu0 %v701
    %931 = vmatpush.bf16.msra.mxu0 %v700
    %932 = vmatpush.bf16.msra.mxu0 %v699
    %933 = vmatpush.bf16.msra.mxu0 %v698
    %934 = vmatpush.bf16.msra.mxu0 %v697
    %935 = vmatpush.bf16.msra.mxu0 %v696
    %936 = vmatpush.bf16.msra.mxu0 %v695
    %937 = vmatmul.bf16.gmra.mxu0 %v227
    %v938 = vpop.f32.mrf.mxu0
    %v939 = vadd.f32 %v926, %v938
    %v940 = vpop.f32.mrf.mxu0
    %941 = vdwg.mxu0
    %942 = vmatpush.bf16.msra.mxu0 %v710
    %943 = vmatpush.bf16.msra.mxu0 %v709
    %944 = vmatpush.bf16.msra.mxu0 %v708
    %945 = vmatpush.bf16.msra.mxu0 %v707
    %946 = vmatpush.bf16.msra.mxu0 %v706
    %947 = vmatpush.bf16.msra.mxu0 %v705
    %948 = vmatpush.bf16.msra.mxu0 %v704
    %949 = vmatpush.bf16.msra.mxu0 %v703
    %950 = vmatmul.bf16.gmra.mxu0 %v230
    %v951 = vpop.f32.mrf.mxu0
    %v952 = vadd.f32 %v939, %v951
    %v953 = vpop.f32.mrf.mxu0
    %954 = vdwg.mxu0
    %955 = vmatpush.bf16.msra.mxu0 %v718
    %956 = vmatpush.bf16.msra.mxu0 %v717
    %957 = vmatpush.bf16.msra.mxu0 %v716
    %958 = vmatpush.bf16.msra.mxu0 %v715
    %959 = vmatpush.bf16.msra.mxu0 %v714
    %960 = vmatpush.bf16.msra.mxu0 %v713
    %961 = vmatpush.bf16.msra.mxu0 %v712
    %962 = vmatpush.bf16.msra.mxu0 %v711
    %963 = vmatmul.bf16.gmra.mxu0 %v231
    %v964 = vpop.f32.mrf.mxu0
    %v965 = vadd.f32 %v952, %v964
    %v966 = vpop.f32.mrf.mxu0
    %967 = vdwg.mxu0
    %968 = vmatpush.bf16.msra.mxu0 %v726
    %969 = vmatpush.bf16.msra.mxu0 %v725
    %970 = vmatpush.bf16.msra.mxu0 %v724
    %971 = vmatpush.bf16.msra.mxu0 %v723
    %972 = vmatpush.bf16.msra.mxu0 %v722
    %973 = vmatpush.bf16.msra.mxu0 %v721
    %974 = vmatpush.bf16.msra.mxu0 %v720
    %975 = vmatpush.bf16.msra.mxu0 %v719
    %976 = vmatmul.bf16.gmra.mxu0 %v232
    %v977 = vpop.f32.mrf.mxu0
    %v978 = vadd.f32 %v965, %v977
    %v979 = vpop.f32.mrf.mxu0
    %980 = vdwg.mxu0
    %981 = vmatpush.bf16.msra.mxu0 %v734
    %982 = vmatpush.bf16.msra.mxu0 %v733
    %983 = vmatpush.bf16.msra.mxu0 %v732
    %984 = vmatpush.bf16.msra.mxu0 %v731
    %985 = vmatpush.bf16.msra.mxu0 %v730
    %986 = vmatpush.bf16.msra.mxu0 %v729
    %987 = vmatpush.bf16.msra.mxu0 %v728
    %988 = vmatpush.bf16.msra.mxu0 %v727
    %989 = vmatmul.bf16.gmra.mxu0 %v233
    %v990 = vpop.f32.mrf.mxu0
    %v991 = vadd.f32 %v978, %v990
    %v992 = vpop.f32.mrf.mxu0
    %993 = vdwg.mxu0
    %994 = vmatpush.bf16.msra.mxu0 0
    %995 = vmatpush.bf16.msra.mxu0 0
    %996 = vmatpush.bf16.msra.mxu0 0
    %997 = vmatpush.bf16.msra.mxu0 0
    %998 = vmatpush.bf16.msra.mxu0 0
    %999 = vmatpush.bf16.msra.mxu0 0
    %1000 = vmatpush.bf16.msra.mxu0 %v736
    %1001 = vmatpush.bf16.msra.mxu0 %v735
    %1002 = vmatmul.bf16.gmra.mxu0 %v836
    %v1003 = vpop.f32.mrf.mxu0
    %v1004 = vadd.f32 %v991, %v1003
    %v1005 = vpop.f32.mrf.mxu0
    %1006 = vdwg.mxu0
    %vm1007 = vcmask 74752
    %1008 = vst.msk [vmem:[#allocation2] sm:$0x3] %vm1007, %v1004
    // Predicated region
    $region14: #{cnn_forward.5} parent=1 // pred_check
      _
    $region15: #{cnn_forward.5} parent=1 // pred_check_branch
      %1010 = sbr.rel (0) target = $region17
    $region16: #{cnn_forward.5} parent=1 // pred_region
      %1012 = vsyncadd [#allocation3], 0
      %s1014 = sshll.u32 [#allocation2], 4
      %s1015 = int_to_ptr.vmem [resolvable:$true] %s1014
      %s1016 = sshll.u32 %s3, 4
      %s1017 = int_to_ptr.hbm [resolvable:$true] %s1016
      %1019 = dma.vmem_to_hbm [thread:$0]  %s1015, 32, %s1017, [#allocation3]
    $region17: #{cnn_forward.5} parent=1 // pred_fallthru
      _
    // Predicated region
    $region18: #{cnn_forward.5} parent=1 // pred_check
      _
    $region19: #{cnn_forward.5} parent=1 // pred_check_branch
      %1021 = sbr.rel (0) target = $region21
    $region20: #{cnn_forward.5} parent=1 // pred_region
      %1023 = dma.done [#allocation3], 32
    $region21: #{cnn_forward.5} parent=1 // pred_fallthru
      _
    %1024 = vsyncpa [#allocation3], 1

// kernel: cnn_forward.4
$region0: #{cnn_forward.4}
  #allocation0 [shape = 'u32[]', space=smem, size = 0x4, offset = 0x4, fixed_abs, tag = 'smem constant byte address 0x4 - core index']
  #allocation1 [shape = 'u32[72,128]{1,0:T(1,128)}', space=vmem, size = 0x9000, scoped, tag = 'internal scratch']
  #allocation2 [shape = 'bf16[400,324]{1,0:T(8,128)(2,1)}', space=vmem, size = 0x4b000, scoped, tag = 'scratch operand']
  %s0 = inlined_call_operand.vmem [shape: bf16[2,16,400], index: 0, kind: input, shape index: {}]
  %s1 = inlined_call_operand.vmem [shape: bf16[32,400], index: 1, kind: input, shape index: {}]
  %s2 = inlined_call_operand.vmem [shape: f32[32,1], index: 2, kind: input, shape index: {}]
  %s3 = inlined_call_operand.vmem [shape: bf16[305,49], index: 3, kind: input, shape index: {}]
  %s4 = inlined_call_operand.vmem [shape: f32[2,32,49], index: 4, kind: output, shape index: {}]
  %s5 = sld [smem:[#allocation0]]
  $region49: #{cnn_forward.4} parent=0
    _
  %s7 = ssub.s32 1, %s5
  %s8 = scalar_select 0, %s7, %s5
  loop: start=0, step=1, limit=4
  $region2: #{cnn_forward.4} parent=0 // loop_pre_header
    _
  $region3: #{cnn_forward.4} parent=0 // loop_header
    %s10 = sphi 0, %s14
    %p11 = scmp.ge.s32.totalorder %s10, 4
    %s20 = sphi 0, %s22
    %s23 = sphi 0, %s20
    %s24 = sphi 0, %s23
    %s40 = sphi 0, %s24
    %s44 = sphi 0, %s44
    %s46 = sphi 0, %s44
    %s47 = sphi 0, %s46
    %s61 = sphi 0, %s47
    %s65 = sphi 0, %s65
    %s67 = sphi 0, %s65
    %s68 = sphi 0, %s67
    %s82 = sphi 0, %s68
    %s86 = sphi 0, %s86
    %s88 = sphi 0, %s86
    %s89 = sphi 0, %s88
    %s103 = sphi 0, %s89
    %s109 = sphi 0, %s111
    %s112 = sphi 0, %s109
    %s113 = sphi 0, %s112
    %s129 = sphi 0, %s113
  $region4: #{cnn_forward.4} parent=0 // loop_header_branch
    %13 = sbr.rel (%p11) target = $region8
  $region5: #{cnn_forward.4} parent=0 // loop_body
    %s15 = ssub.s32 %s10, 1
    %s16 = ssub.s32 %s10, 2
    %s17 = sadd.s32 %s10, 1
    %s18 = ssub.s32 %s10, %s17
    %p19 = scmp.eq.s32.totalorder %s18, 0
    %s21 = sadd.s32 %s20, 1
    %s22 = scalar_select %p19, %s20, %s21
    %p25 = pneg %p19
    %p26 = scmp.eq.s32.totalorder %s10, 1
    %p27 = por %p25, %p26
    %p28 = scmp.ne.s32.totalorder %s20, %s23
    %p29 = scmp.eq.s32.totalorder %s10, 0
    %p30 = por %p28, %p29
    %p31 = scmp.ne.s32.totalorder %s20, %s23
    %p32 = scmp.eq.s32.totalorder %s15, 1
    %p33 = por %p31, %p32
    %p34 = scmp.ne.s32.totalorder %s23, %s24
    %p35 = scmp.eq.s32.totalorder %s15, 0
    %p36 = por %p34, %p35
    %p37 = scmp.ne.s32.totalorder %s23, %s24
    %p38 = scmp.eq.s32.totalorder %s16, 1
    %p39 = por %p37, %p38
    %p41 = scmp.ne.s32.totalorder %s24, %s40
    %p42 = scmp.eq.s32.totalorder %s16, 0
    %p43 = por %p41, %p42
    %s45 = sadd.s32 %s44, 1
    %p48 = scmp.eq.s32.totalorder %s10, 1
    %p49 = scmp.ne.s32.totalorder %s44, %s46
    %p50 = scmp.eq.s32.totalorder %s10, 0
    %p51 = por %p49, %p50
    %p52 = scmp.ne.s32.totalorder %s44, %s46
    %p53 = scmp.eq.s32.totalorder %s15, 1
    %p54 = por %p52, %p53
    %p55 = scmp.ne.s32.totalorder %s46, %s47
    %p56 = scmp.eq.s32.totalorder %s15, 0
    %p57 = por %p55, %p56
    %p58 = scmp.ne.s32.totalorder %s46, %s47
    %p59 = scmp.eq.s32.totalorder %s16, 1
    %p60 = por %p58, %p59
    %p62 = scmp.ne.s32.totalorder %s47, %s61
    %p63 = scmp.eq.s32.totalorder %s16, 0
    %p64 = por %p62, %p63
    %s66 = sadd.s32 %s65, 1
    %p69 = scmp.eq.s32.totalorder %s10, 1
    %p70 = scmp.ne.s32.totalorder %s65, %s67
    %p71 = scmp.eq.s32.totalorder %s10, 0
    %p72 = por %p70, %p71
    %p73 = scmp.ne.s32.totalorder %s65, %s67
    %p74 = scmp.eq.s32.totalorder %s15, 1
    %p75 = por %p73, %p74
    %p76 = scmp.ne.s32.totalorder %s67, %s68
    %p77 = scmp.eq.s32.totalorder %s15, 0
    %p78 = por %p76, %p77
    %p79 = scmp.ne.s32.totalorder %s67, %s68
    %p80 = scmp.eq.s32.totalorder %s16, 1
    %p81 = por %p79, %p80
    %p83 = scmp.ne.s32.totalorder %s68, %s82
    %p84 = scmp.eq.s32.totalorder %s16, 0
    %p85 = por %p83, %p84
    %s87 = sadd.s32 %s86, 1
    %p90 = scmp.eq.s32.totalorder %s10, 1
    %p91 = scmp.ne.s32.totalorder %s86, %s88
    %p92 = scmp.eq.s32.totalorder %s10, 0
    %p93 = por %p91, %p92
    %p94 = scmp.ne.s32.totalorder %s86, %s88
    %p95 = scmp.eq.s32.totalorder %s15, 1
    %p96 = por %p94, %p95
    %p97 = scmp.ne.s32.totalorder %s88, %s89
    %p98 = scmp.eq.s32.totalorder %s15, 0
    %p99 = por %p97, %p98
    %p100 = scmp.ne.s32.totalorder %s88, %s89
    %p101 = scmp.eq.s32.totalorder %s16, 1
    %p102 = por %p100, %p101
    %p104 = scmp.ne.s32.totalorder %s89, %s103
    %p105 = scmp.eq.s32.totalorder %s16, 0
    %p106 = por %p104, %p105
    %s107 = ssub.s32 %s10, %s17
    %p108 = scmp.eq.s32.totalorder %s107, 0
    %s110 = sadd.s32 %s109, 1
    %s111 = scalar_select %p108, %s109, %s110
    %p114 = pneg %p108
    %p115 = scmp.eq.s32.totalorder %s10, 1
    %p116 = por %p114, %p115
    %p117 = scmp.ne.s32.totalorder %s109, %s112
    %p118 = scmp.eq.s32.totalorder %s10, 0
    %p119 = por %p117, %p118
    %p120 = scmp.ne.s32.totalorder %s109, %s112
    %p121 = scmp.eq.s32.totalorder %s15, 1
    %p122 = por %p120, %p121
    %p123 = scmp.ne.s32.totalorder %s112, %s113
    %p124 = scmp.eq.s32.totalorder %s15, 0
    %p125 = por %p123, %p124
    %p126 = scmp.ne.s32.totalorder %s112, %s113
    %p127 = scmp.eq.s32.totalorder %s16, 1
    %p128 = por %p126, %p127
    %p130 = scmp.ne.s32.totalorder %s113, %s129
    %p131 = scmp.eq.s32.totalorder %s16, 0
    %p132 = por %p130, %p131
    %p133 = scmp.le.s32.totalorder 1, %s10
    %p134 = scmp.lt.s32.totalorder %s10, 3
    %p135 = pnand %p133, %p134
    %p136 = pneg %p135
    // Predicated region
    $region9: #{cnn_forward.4} parent=5 // pred_check
      _
    $region10: #{cnn_forward.4} parent=5 // pred_check_branch
      %138 = sbr.rel (%p135) target = $region12
    $region11: #{cnn_forward.4} parent=5 // pred_region
      %s139 = ssub.s32 %s10, 1
      // Predicated region
      $region13: #{cnn_forward.4} parent=11 // pred_check
        %p140 = pneg %p57
      $region14: #{cnn_forward.4} parent=11 // pred_check_branch
        %142 = sbr.rel (%p140) target = $region16
      $region15: #{cnn_forward.4} parent=11 // pred_region
        _
      $region16: #{cnn_forward.4} parent=11 // pred_fallthru
        _
      // Predicated region
      $region17: #{cnn_forward.4} parent=11 // pred_check
        %p143 = pneg %p78
      $region18: #{cnn_forward.4} parent=11 // pred_check_branch
        %145 = sbr.rel (%p143) target = $region20
      $region19: #{cnn_forward.4} parent=11 // pred_region
        _
      $region20: #{cnn_forward.4} parent=11 // pred_fallthru
        _
      // Predicated region
      $region21: #{cnn_forward.4} parent=11 // pred_check
        %p146 = pneg %p99
      $region22: #{cnn_forward.4} parent=11 // pred_check_branch
        %148 = sbr.rel (%p146) target = $region24
      $region23: #{cnn_forward.4} parent=11 // pred_region
        _
      $region24: #{cnn_forward.4} parent=11 // pred_fallthru
        _
    $region12: #{cnn_forward.4} parent=5 // pred_fallthru
      _
    %p149 = scmp.lt.s32.totalorder %s10, 2
    // Predicated region
    $region25: #{cnn_forward.4} parent=5 // pred_check
      %p150 = pneg %p149
    $region26: #{cnn_forward.4} parent=5 // pred_check_branch
      %152 = sbr.rel (%p150) target = $region28
    $region27: #{cnn_forward.4} parent=5 // pred_region
      // Predicated region
      $region29: #{cnn_forward.4} parent=27 // pred_check
        %p153 = pneg %p30
      $region30: #{cnn_forward.4} parent=27 // pred_check_branch
        %155 = sbr.rel (%p153) target = $region32
      $region31: #{cnn_forward.4} parent=27 // pred_region
        %p156 = scmp.lt.s32.totalorder %s10, 1
        %s157 = scalar_select %p156, %s10, 1
        %s158 = smul.addr %s157, 8
        %s159 = smul.addr %s158, 4
        %s160 = scalar_lea.vmem %s0, %s159
      $region32: #{cnn_forward.4} parent=27 // pred_fallthru
        _
    $region28: #{cnn_forward.4} parent=5 // pred_fallthru
      _
    %p161 = scmp.le.s32.totalorder 1, %s10
    %p162 = scmp.lt.s32.totalorder %s10, 3
    %p163 = pnand %p161, %p162
    %p164 = pneg %p163
    // Predicated region
    $region33: #{cnn_forward.4} parent=5 // pred_check
      _
    $region34: #{cnn_forward.4} parent=5 // pred_check_branch
      %166 = sbr.rel (%p163) target = $region36
    $region35: #{cnn_forward.4} parent=5 // pred_region
      %s167 = ssub.s32 %s10, 1
      %p168 = scmp.lt.s32.totalorder %s15, 1
      %s169 = scalar_select %p168, %s15, 1
      %s170 = smul.addr %s169, 8
      %s171 = smul.addr %s170, 4
      %s172 = scalar_lea.vmem %s0, %s171
      %p173 = pneg %p36
      %p174 = pneg %p33
      %p175 = pneg %p57
      %p176 = pneg %p54
      %p177 = pneg %p78
      %p178 = pneg %p75
      %p179 = pneg %p99
      %p180 = pneg %p96
      %p181 = pneg %p125
      %p182 = pneg %p122
      %p183 = scmp.lt.s32.totalorder %s15, 1
      %s184 = scalar_select %p183, %s15, 1
      %s185 = smul.addr %s184, 4
      %s186 = smul.addr %s185, 8
      %s187 = scalar_lea.vmem %s4, %s186
      %p188 = scmp.lt.s32.totalorder %s15, 1
      %s189 = scalar_select %p188, %s15, 1
      %s190 = smul.addr %s189, 8
      %s191 = smul.addr %s190, 4
      %s192 = scalar_lea.vmem %s0, %s191
      %p193 = scmp.lt.s32.totalorder %s15, 1
      %s194 = scalar_select %p193, %s15, 1
      %s195 = smul.addr %s194, 4
      %s196 = smul.addr %s195, 8
      %s197 = scalar_lea.vmem %s4, %s196
      %v199 = vld [vmem:[%s192] sm:$0xff]
      %v200 = vld [vmem:[%s192 + $0x8] sm:$0xff]
      %v201 = vld [vmem:[%s192 + $0x10] sm:$0xff]
      %v202 = vld [vmem:[%s192 + $0x18] sm:$0xff]
      %203 = vst [vmem:[#allocation2] sm:$0xff] %v199
      %vm204 = vcmask 551936
      %205 = vst.msk [vmem:[#allocation2 + $0x8] sm:$0xf] %vm204, %v200
      %206 = vst [vmem:[#allocation2 + $0xc] sm:$0xff] %v201
      %207 = vst.msk [vmem:[#allocation2 + $0x14] sm:$0xf] %vm204, %v202
      %212 = vrot.lane.b32.xlu0 %v199, 127
      %v213 = vpop.permute.xlu0 %212
      %214 = vrot.lane.b32.xlu0 %v200, 127
      %v215 = vpop.permute.xlu0 %214
      %216 = vrot.lane.b32.xlu0 %v201, 127
      %v217 = vpop.permute.xlu0 %216
      %218 = vrot.lane.b32.xlu0 %v202, 127
      %v219 = vpop.permute.xlu0 %218
      %v220 = vrot.slane %v213, 4
      %v221 = vrot.slane %v215, 4
      %v222 = vrot.slane %v217, 4
      %v223 = vrot.slane %v219, 4
      %vm224 = vcmask 1043456
      %v225 = vsel %vm224, %v220, %v221
      %vm226 = vcmask 1039360
      %v227 = vsel %vm226, %v213, %v225
      %v228 = vsel %vm224, %v222, %v223
      %v229 = vsel %vm226, %v217, %v228
      %234 = vst [vmem:[#allocation2 + $0x18] sm:$0xff] %v227
      %235 = vst.msk [vmem:[#allocation2 + $0x20] sm:$0xf] %vm204, %v215
      %236 = vst [vmem:[#allocation2 + $0x24] sm:$0xff] %v229
      %237 = vst.msk [vmem:[#allocation2 + $0x2c] sm:$0xf] %vm204, %v219
      %238 = vrot.lane.b32.xlu0 %v199, 126
      %v239 = vpop.permute.xlu0 %238
      %240 = vrot.lane.b32.xlu0 %v200, 126
      %v241 = vpop.permute.xlu0 %240
      %242 = vrot.lane.b32.xlu0 %v201, 126
      %v243 = vpop.permute.xlu0 %242
      %244 = vrot.lane.b32.xlu0 %v202, 126
      %v245 = vpop.permute.xlu0 %244
      %v246 = vrot.slane %v239, 4
      %v247 = vrot.slane %v241, 4
      %v248 = vrot.slane %v243, 4
      %v249 = vrot.slane %v245, 4
      %v250 = vsel %vm224, %v246, %v247
      %vm251 = vcmask 1031168
      %v252 = vsel %vm251, %v239, %v250
      %v253 = vsel %vm224, %v248, %v249
      %v254 = vsel %vm251, %v243, %v253
      %259 = vst [vmem:[#allocation2 + $0x30] sm:$0xff] %v252
      %260 = vst.msk [vmem:[#allocation2 + $0x38] sm:$0xf] %vm204, %v241
      %261 = vst [vmem:[#allocation2 + $0x3c] sm:$0xff] %v254
      %262 = vst.msk [vmem:[#allocation2 + $0x44] sm:$0xf] %vm204, %v245
      %263 = vrot.lane.b32.xlu0 %v199, 125
      %v264 = vpop.permute.xlu0 %263
      %265 = vrot.lane.b32.xlu0 %v200, 125
      %v266 = vpop.permute.xlu0 %265
      %267 = vrot.lane.b32.xlu0 %v201, 125
      %v268 = vpop.permute.xlu0 %267
      %269 = vrot.lane.b32.xlu0 %v202, 125
      %v270 = vpop.permute.xlu0 %269
      %v271 = vrot.slane %v264, 4
      %v272 = vrot.slane %v266, 4
      %v273 = vrot.slane %v268, 4
      %v274 = vrot.slane %v270, 4
      %v275 = vsel %vm224, %v271, %v272
      %vm276 = vcmask 1022976
      %v277 = vsel %vm276, %v264, %v275
      %v278 = vsel %vm224, %v273, %v274
      %v279 = vsel %vm276, %v268, %v278
      %284 = vst [vmem:[#allocation2 + $0x48] sm:$0xff] %v277
      %285 = vst.msk [vmem:[#allocation2 + $0x50] sm:$0xf] %vm204, %v266
      %286 = vst [vmem:[#allocation2 + $0x54] sm:$0xff] %v279
      %287 = vst.msk [vmem:[#allocation2 + $0x5c] sm:$0xf] %vm204, %v270
      %288 = vrot.lane.b32.xlu0 %v199, 124
      %v289 = vpop.permute.xlu0 %288
      %290 = vrot.lane.b32.xlu0 %v200, 124
      %v291 = vpop.permute.xlu0 %290
      %292 = vrot.lane.b32.xlu0 %v201, 124
      %v293 = vpop.permute.xlu0 %292
      %294 = vrot.lane.b32.xlu0 %v202, 124
      %v295 = vpop.permute.xlu0 %294
      %v296 = vrot.slane %v289, 4
      %v297 = vrot.slane %v291, 4
      %v298 = vrot.slane %v293, 4
      %v299 = vrot.slane %v295, 4
      %v300 = vsel %vm224, %v296, %v297
      %vm301 = vcmask 1014784
      %v302 = vsel %vm301, %v289, %v300
      %v303 = vsel %vm224, %v298, %v299
      %v304 = vsel %vm301, %v293, %v303
      %309 = vst [vmem:[#allocation2 + $0x60] sm:$0xff] %v302
      %310 = vst.msk [vmem:[#allocation2 + $0x68] sm:$0xf] %vm204, %v291
      %311 = vst [vmem:[#allocation2 + $0x6c] sm:$0xff] %v304
      %312 = vst.msk [vmem:[#allocation2 + $0x74] sm:$0xf] %vm204, %v295
      %313 = vrot.lane.b32.xlu0 %v199, 110
      %v314 = vpop.permute.xlu0 %313
      %315 = vrot.lane.b32.xlu0 %v200, 110
      %v316 = vpop.permute.xlu0 %315
      %317 = vrot.lane.b32.xlu0 %v201, 110
      %v318 = vpop.permute.xlu0 %317
      %319 = vrot.lane.b32.xlu0 %v202, 110
      %v320 = vpop.permute.xlu0 %319
      %v321 = vrot.slane %v314, 4
      %v322 = vrot.slane %v316, 4
      %v323 = vrot.slane %v318, 4
      %v324 = vrot.slane %v320, 4
      %v325 = vsel %vm224, %v321, %v322
      %vm326 = vcmask 900096
      %v327 = vsel %vm326, %v314, %v325
      %v328 = vsel %vm224, %v323, %v324
      %v329 = vsel %vm326, %v318, %v328
      %334 = vst [vmem:[#allocation2 + $0x78] sm:$0xff] %v327
      %335 = vst.msk [vmem:[#allocation2 + $0x80] sm:$0xf] %vm204, %v316
      %336 = vst [vmem:[#allocation2 + $0x84] sm:$0xff] %v329
      %337 = vst.msk [vmem:[#allocation2 + $0x8c] sm:$0xf] %vm204, %v320
      %338 = vrot.lane.b32.xlu0 %v199, 109
      %v339 = vpop.permute.xlu0 %338
      %340 = vrot.lane.b32.xlu0 %v200, 109
      %v341 = vpop.permute.xlu0 %340
      %342 = vrot.lane.b32.xlu0 %v201, 109
      %v343 = vpop.permute.xlu0 %342
      %344 = vrot.lane.b32.xlu0 %v202, 109
      %v345 = vpop.permute.xlu0 %344
      %v346 = vrot.slane %v339, 4
      %v347 = vrot.slane %v341, 4
      %v348 = vrot.slane %v343, 4
      %v349 = vrot.slane %v345, 4
      %v350 = vsel %vm224, %v346, %v347
      %vm351 = vcmask 891904
      %v352 = vsel %vm351, %v339, %v350
      %v353 = vsel %vm224, %v348, %v349
      %v354 = vsel %vm351, %v343, %v353
      %359 = vst [vmem:[#allocation2 + $0x90] sm:$0xff] %v352
      %360 = vst.msk [vmem:[#allocation2 + $0x98] sm:$0xf] %vm204, %v341
      %361 = vst [vmem:[#allocation2 + $0x9c] sm:$0xff] %v354
      %362 = vst.msk [vmem:[#allocation2 + $0xa4] sm:$0xf] %vm204, %v345
      %363 = vrot.lane.b32.xlu0 %v199, 108
      %v364 = vpop.permute.xlu0 %363
      %365 = vrot.lane.b32.xlu0 %v200, 108
      %v366 = vpop.permute.xlu0 %365
      %367 = vrot.lane.b32.xlu0 %v201, 108
      %v368 = vpop.permute.xlu0 %367
      %369 = vrot.lane.b32.xlu0 %v202, 108
      %v370 = vpop.permute.xlu0 %369
      %v371 = vrot.slane %v364, 4
      %v372 = vrot.slane %v366, 4
      %v373 = vrot.slane %v368, 4
      %v374 = vrot.slane %v370, 4
      %v375 = vsel %vm224, %v371, %v372
      %vm376 = vcmask 883712
      %v377 = vsel %vm376, %v364, %v375
      %v378 = vsel %vm224, %v373, %v374
      %v379 = vsel %vm376, %v368, %v378
      %384 = vst [vmem:[#allocation2 + $0xa8] sm:$0xff] %v377
      %385 = vst.msk [vmem:[#allocation2 + $0xb0] sm:$0xf] %vm204, %v366
      %386 = vst [vmem:[#allocation2 + $0xb4] sm:$0xff] %v379
      %387 = vst.msk [vmem:[#allocation2 + $0xbc] sm:$0xf] %vm204, %v370
      %388 = vrot.lane.b32.xlu0 %v199, 107
      %v389 = vpop.permute.xlu0 %388
      %390 = vrot.lane.b32.xlu0 %v200, 107
      %v391 = vpop.permute.xlu0 %390
      %392 = vrot.lane.b32.xlu0 %v201, 107
      %v393 = vpop.permute.xlu0 %392
      %394 = vrot.lane.b32.xlu0 %v202, 107
      %v395 = vpop.permute.xlu0 %394
      %v396 = vrot.slane %v389, 4
      %v397 = vrot.slane %v391, 4
      %v398 = vrot.slane %v393, 4
      %v399 = vrot.slane %v395, 4
      %v400 = vsel %vm224, %v396, %v397
      %vm401 = vcmask 875520
      %v402 = vsel %vm401, %v389, %v400
      %v403 = vsel %vm224, %v398, %v399
      %v404 = vsel %vm401, %v393, %v403
      %409 = vst [vmem:[#allocation2 + $0xc0] sm:$0xff] %v402
      %410 = vst.msk [vmem:[#allocation2 + $0xc8] sm:$0xf] %vm204, %v391
      %411 = vst [vmem:[#allocation2 + $0xcc] sm:$0xff] %v404
      %412 = vst.msk [vmem:[#allocation2 + $0xd4] sm:$0xf] %vm204, %v395
      %413 = vrot.lane.b32.xlu0 %v199, 106
      %v414 = vpop.permute.xlu0 %413
      %415 = vrot.lane.b32.xlu0 %v200, 106
      %v416 = vpop.permute.xlu0 %415
      %417 = vrot.lane.b32.xlu0 %v201, 106
      %v418 = vpop.permute.xlu0 %417
      %419 = vrot.lane.b32.xlu0 %v202, 106
      %v420 = vpop.permute.xlu0 %419
      %v421 = vrot.slane %v414, 4
      %v422 = vrot.slane %v416, 4
      %v423 = vrot.slane %v418, 4
      %v424 = vrot.slane %v420, 4
      %v425 = vsel %vm224, %v421, %v422
      %vm426 = vcmask 867328
      %v427 = vsel %vm426, %v414, %v425
      %v428 = vsel %vm224, %v423, %v424
      %v429 = vsel %vm426, %v418, %v428
      %434 = vst [vmem:[#allocation2 + $0xd8] sm:$0xff] %v427
      %435 = vst.msk [vmem:[#allocation2 + $0xe0] sm:$0xf] %vm204, %v416
      %436 = vst [vmem:[#allocation2 + $0xe4] sm:$0xff] %v429
      %437 = vst.msk [vmem:[#allocation2 + $0xec] sm:$0xf] %vm204, %v420
      %438 = vrot.lane.b32.xlu0 %v199, 92
      %v439 = vpop.permute.xlu0 %438
      %440 = vrot.lane.b32.xlu0 %v200, 92
      %v441 = vpop.permute.xlu0 %440
      %442 = vrot.lane.b32.xlu0 %v201, 92
      %v443 = vpop.permute.xlu0 %442
      %444 = vrot.lane.b32.xlu0 %v202, 92
      %v445 = vpop.permute.xlu0 %444
      %v446 = vrot.slane %v439, 4
      %v447 = vrot.slane %v441, 4
      %v448 = vrot.slane %v443, 4
      %v449 = vrot.slane %v445, 4
      %v450 = vsel %vm224, %v446, %v447
      %vm451 = vcmask 752640
      %v452 = vsel %vm451, %v439, %v450
      %v453 = vsel %vm224, %v448, %v449
      %v454 = vsel %vm451, %v443, %v453
      %459 = vst [vmem:[#allocation2 + $0xf0] sm:$0xff] %v452
      %460 = vst.msk [vmem:[#allocation2 + $0xf8] sm:$0xf] %vm204, %v441
      %461 = vst [vmem:[#allocation2 + $0xfc] sm:$0xff] %v454
      %462 = vst.msk [vmem:[#allocation2 + $0x104] sm:$0xf] %vm204, %v445
      %463 = vrot.lane.b32.xlu0 %v199, 91
      %v464 = vpop.permute.xlu0 %463
      %465 = vrot.lane.b32.xlu0 %v200, 91
      %v466 = vpop.permute.xlu0 %465
      %467 = vrot.lane.b32.xlu0 %v201, 91
      %v468 = vpop.permute.xlu0 %467
      %469 = vrot.lane.b32.xlu0 %v202, 91
      %v470 = vpop.permute.xlu0 %469
      %v471 = vrot.slane %v464, 4
      %v472 = vrot.slane %v466, 4
      %v473 = vrot.slane %v468, 4
      %v474 = vrot.slane %v470, 4
      %v475 = vsel %vm224, %v471, %v472
      %vm476 = vcmask 744448
      %v477 = vsel %vm476, %v464, %v475
      %v478 = vsel %vm224, %v473, %v474
      %v479 = vsel %vm476, %v468, %v478
      %484 = vst [vmem:[#allocation2 + $0x108] sm:$0xff] %v477
      %485 = vst.msk [vmem:[#allocation2 + $0x110] sm:$0xf] %vm204, %v466
      %486 = vst [vmem:[#allocation2 + $0x114] sm:$0xff] %v479
      %487 = vst.msk [vmem:[#allocation2 + $0x11c] sm:$0xf] %vm204, %v470
      %488 = vrot.lane.b32.xlu0 %v199, 90
      %v489 = vpop.permute.xlu0 %488
      %490 = vrot.lane.b32.xlu0 %v200, 90
      %v491 = vpop.permute.xlu0 %490
      %492 = vrot.lane.b32.xlu0 %v201, 90
      %v493 = vpop.permute.xlu0 %492
      %494 = vrot.lane.b32.xlu0 %v202, 90
      %v495 = vpop.permute.xlu0 %494
      %v496 = vrot.slane %v489, 4
      %v497 = vrot.slane %v491, 4
      %v498 = vrot.slane %v493, 4
      %v499 = vrot.slane %v495, 4
      %v500 = vsel %vm224, %v496, %v497
      %vm501 = vcmask 736256
      %v502 = vsel %vm501, %v489, %v500
      %v503 = vsel %vm224, %v498, %v499
      %v504 = vsel %vm501, %v493, %v503
      %509 = vst [vmem:[#allocation2 + $0x120] sm:$0xff] %v502
      %510 = vst.msk [vmem:[#allocation2 + $0x128] sm:$0xf] %vm204, %v491
      %511 = vst [vmem:[#allocation2 + $0x12c] sm:$0xff] %v504
      %512 = vst.msk [vmem:[#allocation2 + $0x134] sm:$0xf] %vm204, %v495
      %513 = vrot.lane.b32.xlu0 %v199, 89
      %v514 = vpop.permute.xlu0 %513
      %515 = vrot.lane.b32.xlu0 %v200, 89
      %v516 = vpop.permute.xlu0 %515
      %517 = vrot.lane.b32.xlu0 %v201, 89
      %v518 = vpop.permute.xlu0 %517
      %519 = vrot.lane.b32.xlu0 %v202, 89
      %v520 = vpop.permute.xlu0 %519
      %v521 = vrot.slane %v514, 4
      %v522 = vrot.slane %v516, 4
      %v523 = vrot.slane %v518, 4
      %v524 = vrot.slane %v520, 4
      %v525 = vsel %vm224, %v521, %v522
      %vm526 = vcmask 728064
      %v527 = vsel %vm526, %v514, %v525
      %v528 = vsel %vm224, %v523, %v524
      %v529 = vsel %vm526, %v518, %v528
      %534 = vst [vmem:[#allocation2 + $0x138] sm:$0xff] %v527
      %535 = vst.msk [vmem:[#allocation2 + $0x140] sm:$0xf] %vm204, %v516
      %536 = vst [vmem:[#allocation2 + $0x144] sm:$0xff] %v529
      %537 = vst.msk [vmem:[#allocation2 + $0x14c] sm:$0xf] %vm204, %v520
      %538 = vrot.lane.b32.xlu0 %v199, 88
      %v539 = vpop.permute.xlu0 %538
      %540 = vrot.lane.b32.xlu0 %v200, 88
      %v541 = vpop.permute.xlu0 %540
      %542 = vrot.lane.b32.xlu0 %v201, 88
      %v543 = vpop.permute.xlu0 %542
      %544 = vrot.lane.b32.xlu0 %v202, 88
      %v545 = vpop.permute.xlu0 %544
      %v546 = vrot.slane %v539, 4
      %v547 = vrot.slane %v541, 4
      %v548 = vrot.slane %v543, 4
      %v549 = vrot.slane %v545, 4
      %v550 = vsel %vm224, %v546, %v547
      %vm551 = vcmask 719872
      %v552 = vsel %vm551, %v539, %v550
      %v553 = vsel %vm224, %v548, %v549
      %v554 = vsel %vm551, %v543, %v553
      %559 = vst [vmem:[#allocation2 + $0x150] sm:$0xff] %v552
      %560 = vst.msk [vmem:[#allocation2 + $0x158] sm:$0xf] %vm204, %v541
      %561 = vst [vmem:[#allocation2 + $0x15c] sm:$0xff] %v554
      %562 = vst.msk [vmem:[#allocation2 + $0x164] sm:$0xf] %vm204, %v545
      %563 = vrot.lane.b32.xlu0 %v199, 74
      %v564 = vpop.permute.xlu0 %563
      %565 = vrot.lane.b32.xlu0 %v200, 74
      %v566 = vpop.permute.xlu0 %565
      %567 = vrot.lane.b32.xlu0 %v201, 74
      %v568 = vpop.permute.xlu0 %567
      %569 = vrot.lane.b32.xlu0 %v202, 74
      %v570 = vpop.permute.xlu0 %569
      %v571 = vrot.slane %v564, 4
      %v572 = vrot.slane %v566, 4
      %v573 = vrot.slane %v568, 4
      %v574 = vrot.slane %v570, 4
      %v575 = vsel %vm224, %v571, %v572
      %vm576 = vcmask 605184
      %v577 = vsel %vm576, %v564, %v575
      %v578 = vsel %vm224, %v573, %v574
      %v579 = vsel %vm576, %v568, %v578
      %584 = vst [vmem:[#allocation2 + $0x168] sm:$0xff] %v577
      %585 = vst.msk [vmem:[#allocation2 + $0x170] sm:$0xf] %vm204, %v566
      %586 = vst [vmem:[#allocation2 + $0x174] sm:$0xff] %v579
      %587 = vst.msk [vmem:[#allocation2 + $0x17c] sm:$0xf] %vm204, %v570
      %588 = vrot.lane.b32.xlu0 %v199, 73
      %v589 = vpop.permute.xlu0 %588
      %590 = vrot.lane.b32.xlu0 %v200, 73
      %v591 = vpop.permute.xlu0 %590
      %592 = vrot.lane.b32.xlu0 %v201, 73
      %v593 = vpop.permute.xlu0 %592
      %594 = vrot.lane.b32.xlu0 %v202, 73
      %v595 = vpop.permute.xlu0 %594
      %v596 = vrot.slane %v589, 4
      %v597 = vrot.slane %v591, 4
      %v598 = vrot.slane %v593, 4
      %v599 = vrot.slane %v595, 4
      %v600 = vsel %vm224, %v596, %v597
      %vm601 = vcmask 596992
      %v602 = vsel %vm601, %v589, %v600
      %v603 = vsel %vm224, %v598, %v599
      %v604 = vsel %vm601, %v593, %v603
      %609 = vst [vmem:[#allocation2 + $0x180] sm:$0xff] %v602
      %610 = vst.msk [vmem:[#allocation2 + $0x188] sm:$0xf] %vm204, %v591
      %611 = vst [vmem:[#allocation2 + $0x18c] sm:$0xff] %v604
      %612 = vst.msk [vmem:[#allocation2 + $0x194] sm:$0xf] %vm204, %v595
      %613 = vrot.lane.b32.xlu0 %v199, 72
      %v614 = vpop.permute.xlu0 %613
      %615 = vrot.lane.b32.xlu0 %v200, 72
      %v616 = vpop.permute.xlu0 %615
      %617 = vrot.lane.b32.xlu0 %v201, 72
      %v618 = vpop.permute.xlu0 %617
      %619 = vrot.lane.b32.xlu0 %v202, 72
      %v620 = vpop.permute.xlu0 %619
      %v621 = vrot.slane %v614, 4
      %v622 = vrot.slane %v616, 4
      %v623 = vrot.slane %v618, 4
      %v624 = vrot.slane %v620, 4
      %v625 = vsel %vm224, %v621, %v622
      %vm626 = vcmask 588800
      %v627 = vsel %vm626, %v614, %v625
      %v628 = vsel %vm224, %v623, %v624
      %v629 = vsel %vm626, %v618, %v628
      %634 = vst [vmem:[#allocation2 + $0x198] sm:$0xff] %v627
      %635 = vst.msk [vmem:[#allocation2 + $0x1a0] sm:$0xf] %vm204, %v616
      %636 = vst [vmem:[#allocation2 + $0x1a4] sm:$0xff] %v629
      %637 = vst.msk [vmem:[#allocation2 + $0x1ac] sm:$0xf] %vm204, %v620
      %638 = vrot.lane.b32.xlu0 %v199, 71
      %v639 = vpop.permute.xlu0 %638
      %640 = vrot.lane.b32.xlu0 %v200, 71
      %v641 = vpop.permute.xlu0 %640
      %642 = vrot.lane.b32.xlu0 %v201, 71
      %v643 = vpop.permute.xlu0 %642
      %644 = vrot.lane.b32.xlu0 %v202, 71
      %v645 = vpop.permute.xlu0 %644
      %v646 = vrot.slane %v639, 4
      %v647 = vrot.slane %v641, 4
      %v648 = vrot.slane %v643, 4
      %v649 = vrot.slane %v645, 4
      %v650 = vsel %vm224, %v646, %v647
      %vm651 = vcmask 580608
      %v652 = vsel %vm651, %v639, %v650
      %v653 = vsel %vm224, %v648, %v649
      %v654 = vsel %vm651, %v643, %v653
      %659 = vst [vmem:[#allocation2 + $0x1b0] sm:$0xff] %v652
      %660 = vst.msk [vmem:[#allocation2 + $0x1b8] sm:$0xf] %vm204, %v641
      %661 = vst [vmem:[#allocation2 + $0x1bc] sm:$0xff] %v654
      %662 = vst.msk [vmem:[#allocation2 + $0x1c4] sm:$0xf] %vm204, %v645
      %663 = vrot.lane.b32.xlu0 %v199, 70
      %v664 = vpop.permute.xlu0 %663
      %665 = vrot.lane.b32.xlu0 %v200, 70
      %v666 = vpop.permute.xlu0 %665
      %667 = vrot.lane.b32.xlu0 %v201, 70
      %v668 = vpop.permute.xlu0 %667
      %669 = vrot.lane.b32.xlu0 %v202, 70
      %v670 = vpop.permute.xlu0 %669
      %v671 = vrot.slane %v664, 4
      %v672 = vrot.slane %v666, 4
      %v673 = vrot.slane %v668, 4
      %v674 = vrot.slane %v670, 4
      %v675 = vsel %vm224, %v671, %v672
      %vm676 = vcmask 572416
      %v677 = vsel %vm676, %v664, %v675
      %v678 = vsel %vm224, %v673, %v674
      %v679 = vsel %vm676, %v668, %v678
      %684 = vst [vmem:[#allocation2 + $0x1c8] sm:$0xff] %v677
      %685 = vst.msk [vmem:[#allocation2 + $0x1d0] sm:$0xf] %vm204, %v666
      %686 = vst [vmem:[#allocation2 + $0x1d4] sm:$0xff] %v679
      %687 = vst.msk [vmem:[#allocation2 + $0x1dc] sm:$0xf] %vm204, %v670
      %688 = vrot.lane.b32.xlu0 %v199, 56
      %v689 = vpop.permute.xlu0 %688
      %690 = vrot.lane.b32.xlu0 %v200, 56
      %v691 = vpop.permute.xlu0 %690
      %692 = vrot.lane.b32.xlu0 %v201, 56
      %v693 = vpop.permute.xlu0 %692
      %694 = vrot.lane.b32.xlu0 %v202, 56
      %v695 = vpop.permute.xlu0 %694
      %v696 = vrot.slane %v689, 4
      %v697 = vrot.slane %v691, 4
      %v698 = vrot.slane %v693, 4
      %v699 = vrot.slane %v695, 4
      %v700 = vsel %vm224, %v696, %v697
      %vm701 = vcmask 457728
      %v702 = vsel %vm701, %v689, %v700
      %v703 = vsel %vm701, %v691, %v697
      %v704 = vsel %vm224, %v698, %v699
      %v705 = vsel %vm701, %v693, %v704
      %v706 = vsel %vm701, %v695, %v699
      %711 = vst [vmem:[#allocation2 + $0x1e0] sm:$0xff] %v702
      %712 = vst.msk [vmem:[#allocation2 + $0x1e8] sm:$0xf] %vm204, %v703
      %713 = vst [vmem:[#allocation2 + $0x1ec] sm:$0xff] %v705
      %714 = vst.msk [vmem:[#allocation2 + $0x1f4] sm:$0xf] %vm204, %v706
      %715 = vrot.lane.b32.xlu0 %v199, 55
      %v716 = vpop.permute.xlu0 %715
      %717 = vrot.lane.b32.xlu0 %v200, 55
      %v718 = vpop.permute.xlu0 %717
      %719 = vrot.lane.b32.xlu0 %v201, 55
      %v720 = vpop.permute.xlu0 %719
      %721 = vrot.lane.b32.xlu0 %v202, 55
      %v722 = vpop.permute.xlu0 %721
      %v723 = vrot.slane %v716, 4
      %v724 = vrot.slane %v718, 4
      %v725 = vrot.slane %v720, 4
      %v726 = vrot.slane %v722, 4
      %v727 = vsel %vm224, %v723, %v724
      %vm728 = vcmask 449536
      %v729 = vsel %vm728, %v716, %v727
      %v730 = vsel %vm728, %v718, %v724
      %v731 = vsel %vm224, %v725, %v726
      %v732 = vsel %vm728, %v720, %v731
      %v733 = vsel %vm728, %v722, %v726
      %738 = vst [vmem:[#allocation2 + $0x1f8] sm:$0xff] %v729
      %739 = vst.msk [vmem:[#allocation2 + $0x200] sm:$0xf] %vm204, %v730
      %740 = vst [vmem:[#allocation2 + $0x204] sm:$0xff] %v732
      %741 = vst.msk [vmem:[#allocation2 + $0x20c] sm:$0xf] %vm204, %v733
      %742 = vrot.lane.b32.xlu0 %v199, 54
      %v743 = vpop.permute.xlu0 %742
      %744 = vrot.lane.b32.xlu0 %v200, 54
      %v745 = vpop.permute.xlu0 %744
      %746 = vrot.lane.b32.xlu0 %v201, 54
      %v747 = vpop.permute.xlu0 %746
      %748 = vrot.lane.b32.xlu0 %v202, 54
      %v749 = vpop.permute.xlu0 %748
      %v750 = vrot.slane %v743, 4
      %v751 = vrot.slane %v745, 4
      %v752 = vrot.slane %v747, 4
      %v753 = vrot.slane %v749, 4
      %v754 = vsel %vm224, %v750, %v751
      %vm755 = vcmask 441344
      %v756 = vsel %vm755, %v743, %v754
      %v757 = vsel %vm755, %v745, %v751
      %v758 = vsel %vm224, %v752, %v753
      %v759 = vsel %vm755, %v747, %v758
      %v760 = vsel %vm755, %v749, %v753
      %765 = vst [vmem:[#allocation2 + $0x210] sm:$0xff] %v756
      %766 = vst.msk [vmem:[#allocation2 + $0x218] sm:$0xf] %vm204, %v757
      %767 = vst [vmem:[#allocation2 + $0x21c] sm:$0xff] %v759
      %768 = vst.msk [vmem:[#allocation2 + $0x224] sm:$0xf] %vm204, %v760
      %769 = vrot.lane.b32.xlu0 %v199, 53
      %v770 = vpop.permute.xlu0 %769
      %771 = vrot.lane.b32.xlu0 %v200, 53
      %v772 = vpop.permute.xlu0 %771
      %773 = vrot.lane.b32.xlu0 %v201, 53
      %v774 = vpop.permute.xlu0 %773
      %775 = vrot.lane.b32.xlu0 %v202, 53
      %v776 = vpop.permute.xlu0 %775
      %v777 = vrot.slane %v770, 4
      %v778 = vrot.slane %v772, 4
      %v779 = vrot.slane %v774, 4
      %v780 = vrot.slane %v776, 4
      %v781 = vsel %vm224, %v777, %v778
      %vm782 = vcmask 433152
      %v783 = vsel %vm782, %v770, %v781
      %v784 = vsel %vm782, %v772, %v778
      %v785 = vsel %vm224, %v779, %v780
      %v786 = vsel %vm782, %v774, %v785
      %v787 = vsel %vm782, %v776, %v780
      %792 = vst [vmem:[#allocation2 + $0x228] sm:$0xff] %v783
      %793 = vst.msk [vmem:[#allocation2 + $0x230] sm:$0xf] %vm204, %v784
      %794 = vst [vmem:[#allocation2 + $0x234] sm:$0xff] %v786
      %795 = vst.msk [vmem:[#allocation2 + $0x23c] sm:$0xf] %vm204, %v787
      %796 = vrot.lane.b32.xlu0 %v199, 52
      %v797 = vpop.permute.xlu0 %796
      %798 = vrot.lane.b32.xlu0 %v200, 52
      %v799 = vpop.permute.xlu0 %798
      %800 = vrot.lane.b32.xlu0 %v201, 52
      %v801 = vpop.permute.xlu0 %800
      %802 = vrot.lane.b32.xlu0 %v202, 52
      %v803 = vpop.permute.xlu0 %802
      %v804 = vrot.slane %v797, 4
      %v805 = vrot.slane %v799, 4
      %v806 = vrot.slane %v801, 4
      %v807 = vrot.slane %v803, 4
      %v808 = vsel %vm224, %v804, %v805
      %vm809 = vcmask 424960
      %v810 = vsel %vm809, %v797, %v808
      %v811 = vsel %vm809, %v799, %v805
      %v812 = vsel %vm224, %v806, %v807
      %v813 = vsel %vm809, %v801, %v812
      %v814 = vsel %vm809, %v803, %v807
      %819 = vst [vmem:[#allocation2 + $0x240] sm:$0xff] %v810
      %820 = vst.msk [vmem:[#allocation2 + $0x248] sm:$0xf] %vm204, %v811
      %821 = vst [vmem:[#allocation2 + $0x24c] sm:$0xff] %v813
      %822 = vst.msk [vmem:[#allocation2 + $0x254] sm:$0xf] %vm204, %v814
      %v823 = vld [vmem:[%s1] sm:$0xff]
      %v824 = vld [vmem:[%s1 + $0x8] sm:$0xff]
      %v825 = vld [vmem:[%s1 + $0x10] sm:$0xff]
      %v826 = vld [vmem:[%s1 + $0x18] sm:$0xff]
      %v827 = vld [vmem:[%s1 + $0x20] sm:$0xff]
      %v828 = vld [vmem:[%s1 + $0x28] sm:$0xff]
      %v829 = vld [vmem:[%s1 + $0x30] sm:$0xff]
      %v830 = vld [vmem:[%s1 + $0x38] sm:$0xff]
      %v831 = vld [vmem:[#allocation2] sm:$0xff]
      %v832 = vld [vmem:[#allocation2 + $0x8] sm:$0xf]
      %v833 = vld [vmem:[#allocation2 + $0xc] sm:$0xff]
      %v834 = vld [vmem:[#allocation2 + $0x14] sm:$0xf]
      %v835 = vld [vmem:[#allocation2 + $0x18] sm:$0xff]
      %v836 = vld [vmem:[#allocation2 + $0x20] sm:$0xf]
      %v837 = vld [vmem:[#allocation2 + $0x24] sm:$0xff]
      %v838 = vld [vmem:[#allocation2 + $0x2c] sm:$0xf]
      %v839 = vld [vmem:[#allocation2 + $0x30] sm:$0xff]
      %v840 = vld [vmem:[#allocation2 + $0x38] sm:$0xf]
      %v841 = vld [vmem:[#allocation2 + $0x3c] sm:$0xff]
      %v842 = vld [vmem:[#allocation2 + $0x44] sm:$0xf]
      %v843 = vld [vmem:[#allocation2 + $0x48] sm:$0xff]
      %v844 = vld [vmem:[#allocation2 + $0x50] sm:$0xf]
      %v845 = vld [vmem:[#allocation2 + $0x54] sm:$0xff]
      %v846 = vld [vmem:[#allocation2 + $0x5c] sm:$0xf]
      %v847 = vld [vmem:[#allocation2 + $0x60] sm:$0xff]
      %v848 = vld [vmem:[#allocation2 + $0x68] sm:$0xf]
      %v849 = vld [vmem:[#allocation2 + $0x6c] sm:$0xff]
      %v850 = vld [vmem:[#allocation2 + $0x74] sm:$0xf]
      %v851 = vld [vmem:[#allocation2 + $0x78] sm:$0xff]
      %v852 = vld [vmem:[#allocation2 + $0x80] sm:$0xf]
      %v853 = vld [vmem:[#allocation2 + $0x84] sm:$0xff]
      %v854 = vld [vmem:[#allocation2 + $0x8c] sm:$0xf]
      %v855 = vld [vmem:[#allocation2 + $0x90] sm:$0xff]
      %v856 = vld [vmem:[#allocation2 + $0x98] sm:$0xf]
      %v857 = vld [vmem:[#allocation2 + $0x9c] sm:$0xff]
      %v858 = vld [vmem:[#allocation2 + $0xa4] sm:$0xf]
      %v859 = vld [vmem:[#allocation2 + $0xa8] sm:$0xff]
      %v860 = vld [vmem:[#allocation2 + $0xb0] sm:$0xf]
      %v861 = vld [vmem:[#allocation2 + $0xb4] sm:$0xff]
      %v862 = vld [vmem:[#allocation2 + $0xbc] sm:$0xf]
      %v863 = vld [vmem:[#allocation2 + $0xc0] sm:$0xff]
      %v864 = vld [vmem:[#allocation2 + $0xc8] sm:$0xf]
      %v865 = vld [vmem:[#allocation2 + $0xcc] sm:$0xff]
      %v866 = vld [vmem:[#allocation2 + $0xd4] sm:$0xf]
      %v867 = vld [vmem:[#allocation2 + $0xd8] sm:$0xff]
      %v868 = vld [vmem:[#allocation2 + $0xe0] sm:$0xf]
      %v869 = vld [vmem:[#allocation2 + $0xe4] sm:$0xff]
      %v870 = vld [vmem:[#allocation2 + $0xec] sm:$0xf]
      %v871 = vld [vmem:[#allocation2 + $0xf0] sm:$0xff]
      %v872 = vld [vmem:[#allocation2 + $0xf8] sm:$0xf]
      %v873 = vld [vmem:[#allocation2 + $0xfc] sm:$0xff]
      %v874 = vld [vmem:[#allocation2 + $0x104] sm:$0xf]
      %v875 = vld [vmem:[#allocation2 + $0x108] sm:$0xff]
      %v876 = vld [vmem:[#allocation2 + $0x110] sm:$0xf]
      %v877 = vld [vmem:[#allocation2 + $0x114] sm:$0xff]
      %v878 = vld [vmem:[#allocation2 + $0x11c] sm:$0xf]
      %v879 = vld [vmem:[#allocation2 + $0x120] sm:$0xff]
      %v880 = vld [vmem:[#allocation2 + $0x128] sm:$0xf]
      %v881 = vld [vmem:[#allocation2 + $0x12c] sm:$0xff]
      %v882 = vld [vmem:[#allocation2 + $0x134] sm:$0xf]
      %v883 = vld [vmem:[#allocation2 + $0x138] sm:$0xff]
      %v884 = vld [vmem:[#allocation2 + $0x140] sm:$0xf]
      %v885 = vld [vmem:[#allocation2 + $0x144] sm:$0xff]
      %v886 = vld [vmem:[#allocation2 + $0x14c] sm:$0xf]
      %v887 = vld [vmem:[#allocation2 + $0x150] sm:$0xff]
      %v888 = vld [vmem:[#allocation2 + $0x158] sm:$0xf]
      %v889 = vld [vmem:[#allocation2 + $0x15c] sm:$0xff]
      %v890 = vld [vmem:[#allocation2 + $0x164] sm:$0xf]
      %v891 = vld [vmem:[#allocation2 + $0x168] sm:$0xff]
      %v892 = vld [vmem:[#allocation2 + $0x170] sm:$0xf]
      %v893 = vld [vmem:[#allocation2 + $0x174] sm:$0xff]
      %v894 = vld [vmem:[#allocation2 + $0x17c] sm:$0xf]
      %v895 = vld [vmem:[#allocation2 + $0x180] sm:$0xff]
      %v896 = vld [vmem:[#allocation2 + $0x188] sm:$0xf]
      %v897 = vld [vmem:[#allocation2 + $0x18c] sm:$0xff]
      %v898 = vld [vmem:[#allocation2 + $0x194] sm:$0xf]
      %v899 = vld [vmem:[#allocation2 + $0x198] sm:$0xff]
      %v900 = vld [vmem:[#allocation2 + $0x1a0] sm:$0xf]
      %v901 = vld [vmem:[#allocation2 + $0x1a4] sm:$0xff]
      %v902 = vld [vmem:[#allocation2 + $0x1ac] sm:$0xf]
      %v903 = vld [vmem:[#allocation2 + $0x1b0] sm:$0xff]
      %v904 = vld [vmem:[#allocation2 + $0x1b8] sm:$0xf]
      %v905 = vld [vmem:[#allocation2 + $0x1bc] sm:$0xff]
      %v906 = vld [vmem:[#allocation2 + $0x1c4] sm:$0xf]
      %v907 = vld [vmem:[#allocation2 + $0x1c8] sm:$0xff]
      %v908 = vld [vmem:[#allocation2 + $0x1d0] sm:$0xf]
      %v909 = vld [vmem:[#allocation2 + $0x1d4] sm:$0xff]
      %v910 = vld [vmem:[#allocation2 + $0x1dc] sm:$0xf]
      %v911 = vld [vmem:[#allocation2 + $0x1e0] sm:$0xff]
      %v912 = vld [vmem:[#allocation2 + $0x1e8] sm:$0xf]
      %v913 = vld [vmem:[#allocation2 + $0x1ec] sm:$0xff]
      %v914 = vld [vmem:[#allocation2 + $0x1f4] sm:$0xf]
      %v915 = vld [vmem:[#allocation2 + $0x1f8] sm:$0xff]
      %v916 = vld [vmem:[#allocation2 + $0x200] sm:$0xf]
      %v917 = vld [vmem:[#allocation2 + $0x204] sm:$0xff]
      %v918 = vld [vmem:[#allocation2 + $0x20c] sm:$0xf]
      %v919 = vld [vmem:[#allocation2 + $0x210] sm:$0xff]
      %v920 = vld [vmem:[#allocation2 + $0x218] sm:$0xf]
      %v921 = vld [vmem:[#allocation2 + $0x21c] sm:$0xff]
      %v922 = vld [vmem:[#allocation2 + $0x224] sm:$0xf]
      %v923 = vld [vmem:[#allocation2 + $0x228] sm:$0xff]
      %v924 = vld [vmem:[#allocation2 + $0x230] sm:$0xf]
      %v925 = vld [vmem:[#allocation2 + $0x234] sm:$0xff]
      %v926 = vld [vmem:[#allocation2 + $0x23c] sm:$0xf]
      %v927 = vld [vmem:[#allocation2 + $0x240] sm:$0xff]
      %v928 = vld [vmem:[#allocation2 + $0x248] sm:$0xf]
      %v929 = vld [vmem:[#allocation2 + $0x24c] sm:$0xff]
      %v930 = vld [vmem:[#allocation2 + $0x254] sm:$0xf]
      %v931 = vld [vmem:[%s2] sm:$0xff]
      %v932 = vld [vmem:[%s2 + $0x8] sm:$0xff]
      %v933 = vld [vmem:[%s2 + $0x10] sm:$0xff]
      %v934 = vld [vmem:[%s2 + $0x18] sm:$0xff]
      %936 = vset.pattern.permute.xlu0 0
      %937 = vperm.xlu0 %936, %v931
      %v938 = vpop.permute.xlu0 %937
      %941 = vset.pattern.permute.xlu0 0
      %942 = vperm.xlu0 %941, %v932
      %v943 = vpop.permute.xlu0 %942
      %946 = vset.pattern.permute.xlu0 0
      %947 = vperm.xlu0 %946, %v933
      %v948 = vpop.permute.xlu0 %947
      %951 = vset.pattern.permute.xlu0 0
      %952 = vperm.xlu0 %951, %v934
      %v953 = vpop.permute.xlu0 %952
      %v963 = vunpack.c.l.b16 %v823
      %v964 = vunpack.c.h.b16 %v823
      %v965 = vunpack.c.l.b16 %v824
      %v966 = vunpack.c.h.b16 %v824
      %v967 = vunpack.c.l.b16 %v825
      %v968 = vunpack.c.h.b16 %v825
      %v969 = vunpack.c.l.b16 %v826
      %v970 = vunpack.c.h.b16 %v826
      %v971 = vunpack.c.l.b16 %v827
      %v972 = vunpack.c.h.b16 %v827
      %v973 = vunpack.c.l.b16 %v828
      %v974 = vunpack.c.h.b16 %v828
      %v975 = vunpack.c.l.b16 %v829
      %v976 = vunpack.c.h.b16 %v829
      %v977 = vunpack.c.l.b16 %v830
      %v978 = vunpack.c.h.b16 %v830
      %v979 = vpack.c.b16 %v967, %v963
      %v980 = vpack.c.b16 %v968, %v964
      %v981 = vpack.c.b16 %v969, %v965
      %v982 = vpack.c.b16 %v970, %v966
      %v983 = vpack.c.b16 %v975, %v971
      %v984 = vpack.c.b16 %v976, %v972
      %v985 = vpack.c.b16 %v977, %v973
      %v986 = vpack.c.b16 %v978, %v974
      %v1093 = vunpack.c.l.b16 %v831
      %v1094 = vunpack.c.h.b16 %v831
      %v1095 = vunpack.c.l.b16 %v832
      %v1096 = vunpack.c.l.b16 %v833
      %v1097 = vunpack.c.h.b16 %v833
      %v1098 = vunpack.c.l.b16 %v834
      %v1099 = vunpack.c.l.b16 %v835
      %v1100 = vunpack.c.h.b16 %v835
      %v1101 = vunpack.c.l.b16 %v836
      %v1102 = vunpack.c.l.b16 %v837
      %v1103 = vunpack.c.h.b16 %v837
      %v1104 = vunpack.c.l.b16 %v838
      %v1105 = vunpack.c.l.b16 %v839
      %v1106 = vunpack.c.h.b16 %v839
      %v1107 = vunpack.c.l.b16 %v840
      %v1108 = vunpack.c.l.b16 %v841
      %v1109 = vunpack.c.h.b16 %v841
      %v1110 = vunpack.c.l.b16 %v842
      %v1111 = vunpack.c.l.b16 %v843
      %v1112 = vunpack.c.h.b16 %v843
      %v1113 = vunpack.c.l.b16 %v844
      %v1114 = vunpack.c.l.b16 %v845
      %v1115 = vunpack.c.h.b16 %v845
      %v1116 = vunpack.c.l.b16 %v846
      %v1117 = vunpack.c.l.b16 %v847
      %v1118 = vunpack.c.h.b16 %v847
      %v1119 = vunpack.c.l.b16 %v848
      %v1120 = vunpack.c.l.b16 %v849
      %v1121 = vunpack.c.h.b16 %v849
      %v1122 = vunpack.c.l.b16 %v850
      %v1123 = vunpack.c.l.b16 %v851
      %v1124 = vunpack.c.h.b16 %v851
      %v1125 = vunpack.c.l.b16 %v852
      %v1126 = vunpack.c.l.b16 %v853
      %v1127 = vunpack.c.h.b16 %v853
      %v1128 = vunpack.c.l.b16 %v854
      %v1129 = vunpack.c.l.b16 %v855
      %v1130 = vunpack.c.h.b16 %v855
      %v1131 = vunpack.c.l.b16 %v856
      %v1132 = vunpack.c.l.b16 %v857
      %v1133 = vunpack.c.h.b16 %v857
      %v1134 = vunpack.c.l.b16 %v858
      %v1135 = vunpack.c.l.b16 %v859
      %v1136 = vunpack.c.h.b16 %v859
      %v1137 = vunpack.c.l.b16 %v860
      %v1138 = vunpack.c.l.b16 %v861
      %v1139 = vunpack.c.h.b16 %v861
      %v1140 = vunpack.c.l.b16 %v862
      %v1141 = vunpack.c.l.b16 %v863
      %v1142 = vunpack.c.h.b16 %v863
      %v1143 = vunpack.c.l.b16 %v864
      %v1144 = vunpack.c.l.b16 %v865
      %v1145 = vunpack.c.h.b16 %v865
      %v1146 = vunpack.c.l.b16 %v866
      %v1147 = vunpack.c.l.b16 %v867
      %v1148 = vunpack.c.h.b16 %v867
      %v1149 = vunpack.c.l.b16 %v868
      %v1150 = vunpack.c.l.b16 %v869
      %v1151 = vunpack.c.h.b16 %v869
      %v1152 = vunpack.c.l.b16 %v870
      %v1153 = vunpack.c.l.b16 %v871
      %v1154 = vunpack.c.h.b16 %v871
      %v1155 = vunpack.c.l.b16 %v872
      %v1156 = vunpack.c.l.b16 %v873
      %v1157 = vunpack.c.h.b16 %v873
      %v1158 = vunpack.c.l.b16 %v874
      %v1159 = vunpack.c.l.b16 %v875
      %v1160 = vunpack.c.h.b16 %v875
      %v1161 = vunpack.c.l.b16 %v876
      %v1162 = vunpack.c.l.b16 %v877
      %v1163 = vunpack.c.h.b16 %v877
      %v1164 = vunpack.c.l.b16 %v878
      %v1165 = vunpack.c.l.b16 %v879
      %v1166 = vunpack.c.h.b16 %v879
      %v1167 = vunpack.c.l.b16 %v880
      %v1168 = vunpack.c.l.b16 %v881
      %v1169 = vunpack.c.h.b16 %v881
      %v1170 = vunpack.c.l.b16 %v882
      %v1171 = vunpack.c.l.b16 %v883
      %v1172 = vunpack.c.h.b16 %v883
      %v1173 = vunpack.c.l.b16 %v884
      %v1174 = vunpack.c.l.b16 %v885
      %v1175 = vunpack.c.h.b16 %v885
      %v1176 = vunpack.c.l.b16 %v886
      %v1177 = vunpack.c.l.b16 %v887
      %v1178 = vunpack.c.h.b16 %v887
      %v1179 = vunpack.c.l.b16 %v888
      %v1180 = vunpack.c.l.b16 %v889
      %v1181 = vunpack.c.h.b16 %v889
      %v1182 = vunpack.c.l.b16 %v890
      %v1183 = vunpack.c.l.b16 %v891
      %v1184 = vunpack.c.h.b16 %v891
      %v1185 = vunpack.c.l.b16 %v892
      %v1186 = vunpack.c.l.b16 %v893
      %v1187 = vunpack.c.h.b16 %v893
      %v1188 = vunpack.c.l.b16 %v894
      %v1189 = vunpack.c.l.b16 %v895
      %v1190 = vunpack.c.h.b16 %v895
      %v1191 = vunpack.c.l.b16 %v896
      %v1192 = vunpack.c.l.b16 %v897
      %v1193 = vunpack.c.h.b16 %v897
      %v1194 = vunpack.c.l.b16 %v898
      %v1195 = vunpack.c.l.b16 %v899
      %v1196 = vunpack.c.h.b16 %v899
      %v1197 = vunpack.c.l.b16 %v900
      %v1198 = vunpack.c.l.b16 %v901
      %v1199 = vunpack.c.h.b16 %v901
      %v1200 = vunpack.c.l.b16 %v902
      %v1201 = vunpack.c.l.b16 %v903
      %v1202 = vunpack.c.h.b16 %v903
      %v1203 = vunpack.c.l.b16 %v904
      %v1204 = vunpack.c.l.b16 %v905
      %v1205 = vunpack.c.h.b16 %v905
      %v1206 = vunpack.c.l.b16 %v906
      %v1207 = vunpack.c.l.b16 %v907
      %v1208 = vunpack.c.h.b16 %v907
      %v1209 = vunpack.c.l.b16 %v908
      %v1210 = vunpack.c.l.b16 %v909
      %v1211 = vunpack.c.h.b16 %v909
      %v1212 = vunpack.c.l.b16 %v910
      %v1213 = vunpack.c.l.b16 %v911
      %v1214 = vunpack.c.h.b16 %v911
      %v1215 = vunpack.c.l.b16 %v912
      %v1216 = vunpack.c.l.b16 %v913
      %v1217 = vunpack.c.h.b16 %v913
      %v1218 = vunpack.c.l.b16 %v914
      %v1219 = vunpack.c.l.b16 %v915
      %v1220 = vunpack.c.h.b16 %v915
      %v1221 = vunpack.c.l.b16 %v916
      %v1222 = vunpack.c.l.b16 %v917
      %v1223 = vunpack.c.h.b16 %v917
      %v1224 = vunpack.c.l.b16 %v918
      %v1225 = vunpack.c.l.b16 %v919
      %v1226 = vunpack.c.h.b16 %v919
      %v1227 = vunpack.c.l.b16 %v920
      %v1228 = vunpack.c.l.b16 %v921
      %v1229 = vunpack.c.h.b16 %v921
      %v1230 = vunpack.c.l.b16 %v922
      %v1231 = vunpack.c.l.b16 %v923
      %v1232 = vunpack.c.h.b16 %v923
      %v1233 = vunpack.c.l.b16 %v924
      %v1234 = vunpack.c.l.b16 %v925
      %v1235 = vunpack.c.h.b16 %v925
      %v1236 = vunpack.c.l.b16 %v926
      %v1237 = vunpack.c.l.b16 %v927
      %v1238 = vunpack.c.h.b16 %v927
      %v1239 = vunpack.c.l.b16 %v928
      %v1240 = vunpack.c.l.b16 %v929
      %v1241 = vunpack.c.h.b16 %v929
      %v1242 = vunpack.c.l.b16 %v930
      %v1243 = vpack.c.b16 %v1096, %v1093
      %v1244 = vpack.c.b16 %v1097, %v1094
      %v1245 = vpack.c.b16 %v1098, %v1095
      %v1246 = vpack.c.b16 %v1102, %v1099
      %v1247 = vpack.c.b16 %v1103, %v1100
      %v1248 = vpack.c.b16 %v1104, %v1101
      %v1249 = vpack.c.b16 %v1108, %v1105
      %v1250 = vpack.c.b16 %v1109, %v1106
      %v1251 = vpack.c.b16 %v1110, %v1107
      %v1252 = vpack.c.b16 %v1114, %v1111
      %v1253 = vpack.c.b16 %v1115, %v1112
      %v1254 = vpack.c.b16 %v1116, %v1113
      %v1255 = vpack.c.b16 %v1120, %v1117
      %v1256 = vpack.c.b16 %v1121, %v1118
      %v1257 = vpack.c.b16 %v1122, %v1119
      %v1258 = vpack.c.b16 %v1126, %v1123
      %v1259 = vpack.c.b16 %v1127, %v1124
      %v1260 = vpack.c.b16 %v1128, %v1125
      %v1261 = vpack.c.b16 %v1132, %v1129
      %v1262 = vpack.c.b16 %v1133, %v1130
      %v1263 = vpack.c.b16 %v1134, %v1131
      %v1264 = vpack.c.b16 %v1138, %v1135
      %v1265 = vpack.c.b16 %v1139, %v1136
      %v1266 = vpack.c.b16 %v1140, %v1137
      %v1267 = vpack.c.b16 %v1144, %v1141
      %v1268 = vpack.c.b16 %v1145, %v1142
      %v1269 = vpack.c.b16 %v1146, %v1143
      %v1270 = vpack.c.b16 %v1150, %v1147
      %v1271 = vpack.c.b16 %v1151, %v1148
      %v1272 = vpack.c.b16 %v1152, %v1149
      %v1273 = vpack.c.b16 %v1156, %v1153
      %v1274 = vpack.c.b16 %v1157, %v1154
      %v1275 = vpack.c.b16 %v1158, %v1155
      %v1276 = vpack.c.b16 %v1162, %v1159
      %v1277 = vpack.c.b16 %v1163, %v1160
      %v1278 = vpack.c.b16 %v1164, %v1161
      %v1279 = vpack.c.b16 %v1168, %v1165
      %v1280 = vpack.c.b16 %v1169, %v1166
      %v1281 = vpack.c.b16 %v1170, %v1167
      %v1282 = vpack.c.b16 %v1174, %v1171
      %v1283 = vpack.c.b16 %v1175, %v1172
      %v1284 = vpack.c.b16 %v1176, %v1173
      %v1285 = vpack.c.b16 %v1180, %v1177
      %v1286 = vpack.c.b16 %v1181, %v1178
      %v1287 = vpack.c.b16 %v1182, %v1179
      %v1288 = vpack.c.b16 %v1186, %v1183
      %v1289 = vpack.c.b16 %v1187, %v1184
      %v1290 = vpack.c.b16 %v1188, %v1185
      %v1291 = vpack.c.b16 %v1192, %v1189
      %v1292 = vpack.c.b16 %v1193, %v1190
      %v1293 = vpack.c.b16 %v1194, %v1191
      %v1294 = vpack.c.b16 %v1198, %v1195
      %v1295 = vpack.c.b16 %v1199, %v1196
      %v1296 = vpack.c.b16 %v1200, %v1197
      %v1297 = vpack.c.b16 %v1204, %v1201
      %v1298 = vpack.c.b16 %v1205, %v1202
      %v1299 = vpack.c.b16 %v1206, %v1203
      %v1300 = vpack.c.b16 %v1210, %v1207
      %v1301 = vpack.c.b16 %v1211, %v1208
      %v1302 = vpack.c.b16 %v1212, %v1209
      %v1303 = vpack.c.b16 %v1216, %v1213
      %v1304 = vpack.c.b16 %v1217, %v1214
      %v1305 = vpack.c.b16 %v1218, %v1215
      %v1306 = vpack.c.b16 %v1222, %v1219
      %v1307 = vpack.c.b16 %v1223, %v1220
      %v1308 = vpack.c.b16 %v1224, %v1221
      %v1309 = vpack.c.b16 %v1228, %v1225
      %v1310 = vpack.c.b16 %v1229, %v1226
      %v1311 = vpack.c.b16 %v1230, %v1227
      %v1312 = vpack.c.b16 %v1234, %v1231
      %v1313 = vpack.c.b16 %v1235, %v1232
      %v1314 = vpack.c.b16 %v1236, %v1233
      %v1315 = vpack.c.b16 %v1240, %v1237
      %v1316 = vpack.c.b16 %v1241, %v1238
      %v1317 = vpack.c.b16 %v1242, %v1239
      %vm1393 = vcmask 130048
      %v1395 = vsel %vm1393, %v982, 0
      %v1398 = vsel %vm1393, %v986, 0
      %1400 = vmatpush.bf16.msra.mxu0 %v1264
      %1401 = vmatpush.bf16.msra.mxu0 %v1261
      %1402 = vmatpush.bf16.msra.mxu0 %v1258
      %1403 = vmatpush.bf16.msra.mxu0 %v1255
      %1404 = vmatpush.bf16.msra.mxu0 %v1252
      %1405 = vmatpush.bf16.msra.mxu0 %v1249
      %1406 = vmatpush.bf16.msra.mxu0 %v1246
      %1407 = vmatpush.bf16.msra.mxu0 %v1243
      %1408 = vmatmul.bf16.gmra.mxu0 %v979
      %v1409 = vpop.f32.mrf.mxu0
      %v1410 = vadd.f32 %v938, %v1409
      %v1411 = vpop.f32.mrf.mxu0
      %v1412 = vadd.f32 %v943, %v1411
      %1413 = vmatmul.bf16.gmra.mxu0 %v983
      %v1414 = vpop.f32.mrf.mxu0
      %v1415 = vadd.f32 %v948, %v1414
      %v1416 = vpop.f32.mrf.mxu0
      %v1417 = vadd.f32 %v953, %v1416
      %1418 = vdwg.mxu0
      %1419 = vmatpush.bf16.msra.mxu0 %v1288
      %1420 = vmatpush.bf16.msra.mxu0 %v1285
      %1421 = vmatpush.bf16.msra.mxu0 %v1282
      %1422 = vmatpush.bf16.msra.mxu0 %v1279
      %1423 = vmatpush.bf16.msra.mxu0 %v1276
      %1424 = vmatpush.bf16.msra.mxu0 %v1273
      %1425 = vmatpush.bf16.msra.mxu0 %v1270
      %1426 = vmatpush.bf16.msra.mxu0 %v1267
      %1427 = vmatmul.bf16.gmra.mxu0 %v980
      %v1428 = vpop.f32.mrf.mxu0
      %v1429 = vadd.f32 %v1410, %v1428
      %v1430 = vpop.f32.mrf.mxu0
      %v1431 = vadd.f32 %v1412, %v1430
      %1432 = vmatmul.bf16.gmra.mxu0 %v984
      %v1433 = vpop.f32.mrf.mxu0
      %v1434 = vadd.f32 %v1415, %v1433
      %v1435 = vpop.f32.mrf.mxu0
      %v1436 = vadd.f32 %v1417, %v1435
      %1437 = vdwg.mxu0
      %1438 = vmatpush.bf16.msra.mxu0 %v1312
      %1439 = vmatpush.bf16.msra.mxu0 %v1309
      %1440 = vmatpush.bf16.msra.mxu0 %v1306
      %1441 = vmatpush.bf16.msra.mxu0 %v1303
      %1442 = vmatpush.bf16.msra.mxu0 %v1300
      %1443 = vmatpush.bf16.msra.mxu0 %v1297
      %1444 = vmatpush.bf16.msra.mxu0 %v1294
      %1445 = vmatpush.bf16.msra.mxu0 %v1291
      %1446 = vmatmul.bf16.gmra.mxu0 %v981
      %v1447 = vpop.f32.mrf.mxu0
      %v1448 = vadd.f32 %v1429, %v1447
      %v1449 = vpop.f32.mrf.mxu0
      %v1450 = vadd.f32 %v1431, %v1449
      %1451 = vmatmul.bf16.gmra.mxu0 %v985
      %v1452 = vpop.f32.mrf.mxu0
      %v1453 = vadd.f32 %v1434, %v1452
      %v1454 = vpop.f32.mrf.mxu0
      %v1455 = vadd.f32 %v1436, %v1454
      %1456 = vdwg.mxu0
      %1457 = vmatpush.bf16.msra.mxu0 0
      %1458 = vmatpush.bf16.msra.mxu0 0
      %1459 = vmatpush.bf16.msra.mxu0 0
      %1460 = vmatpush.bf16.msra.mxu0 0
      %1461 = vmatpush.bf16.msra.mxu0 0
      %1462 = vmatpush.bf16.msra.mxu0 0
      %1463 = vmatpush.bf16.msra.mxu0 0
      %1464 = vmatpush.bf16.msra.mxu0 %v1315
      %1465 = vmatmul.bf16.gmra.mxu0 %v1395
      %v1466 = vpop.f32.mrf.mxu0
      %v1467 = vadd.f32 %v1448, %v1466
      %v1468 = vpop.f32.mrf.mxu0
      %v1469 = vadd.f32 %v1450, %v1468
      %1470 = vmatmul.bf16.gmra.mxu0 %v1398
      %v1471 = vpop.f32.mrf.mxu0
      %v1472 = vadd.f32 %v1453, %v1471
      %v1473 = vpop.f32.mrf.mxu0
      %v1474 = vadd.f32 %v1455, %v1473
      %1475 = vdwg.mxu0
      %1476 = vmatpush.bf16.msra.mxu0 %v1265
      %1477 = vmatpush.bf16.msra.mxu0 %v1262
      %1478 = vmatpush.bf16.msra.mxu0 %v1259
      %1479 = vmatpush.bf16.msra.mxu0 %v1256
      %1480 = vmatpush.bf16.msra.mxu0 %v1253
      %1481 = vmatpush.bf16.msra.mxu0 %v1250
      %1482 = vmatpush.bf16.msra.mxu0 %v1247
      %1483 = vmatpush.bf16.msra.mxu0 %v1244
      %1484 = vmatmul.bf16.gmra.mxu0 %v979
      %v1485 = vpop.f32.mrf.mxu0
      %v1486 = vadd.f32 %v938, %v1485
      %v1487 = vpop.f32.mrf.mxu0
      %v1488 = vadd.f32 %v943, %v1487
      %1489 = vmatmul.bf16.gmra.mxu0 %v983
      %v1490 = vpop.f32.mrf.mxu0
      %v1491 = vadd.f32 %v948, %v1490
      %v1492 = vpop.f32.mrf.mxu0
      %v1493 = vadd.f32 %v953, %v1492
      %1494 = vdwg.mxu0
      %1495 = vmatpush.bf16.msra.mxu0 %v1289
      %1496 = vmatpush.bf16.msra.mxu0 %v1286
      %1497 = vmatpush.bf16.msra.mxu0 %v1283
      %1498 = vmatpush.bf16.msra.mxu0 %v1280
      %1499 = vmatpush.bf16.msra.mxu0 %v1277
      %1500 = vmatpush.bf16.msra.mxu0 %v1274
      %1501 = vmatpush.bf16.msra.mxu0 %v1271
      %1502 = vmatpush.bf16.msra.mxu0 %v1268
      %1503 = vmatmul.bf16.gmra.mxu0 %v980
      %v1504 = vpop.f32.mrf.mxu0
      %v1505 = vadd.f32 %v1486, %v1504
      %v1506 = vpop.f32.mrf.mxu0
      %v1507 = vadd.f32 %v1488, %v1506
      %1508 = vmatmul.bf16.gmra.mxu0 %v984
      %v1509 = vpop.f32.mrf.mxu0
      %v1510 = vadd.f32 %v1491, %v1509
      %v1511 = vpop.f32.mrf.mxu0
      %v1512 = vadd.f32 %v1493, %v1511
      %1513 = vdwg.mxu0
      %1514 = vmatpush.bf16.msra.mxu0 %v1313
      %1515 = vmatpush.bf16.msra.mxu0 %v1310
      %1516 = vmatpush.bf16.msra.mxu0 %v1307
      %1517 = vmatpush.bf16.msra.mxu0 %v1304
      %1518 = vmatpush.bf16.msra.mxu0 %v1301
      %1519 = vmatpush.bf16.msra.mxu0 %v1298
      %1520 = vmatpush.bf16.msra.mxu0 %v1295
      %1521 = vmatpush.bf16.msra.mxu0 %v1292
      %1522 = vmatmul.bf16.gmra.mxu0 %v981
      %v1523 = vpop.f32.mrf.mxu0
      %v1524 = vadd.f32 %v1505, %v1523
      %v1525 = vpop.f32.mrf.mxu0
      %v1526 = vadd.f32 %v1507, %v1525
      %1527 = vmatmul.bf16.gmra.mxu0 %v985
      %v1528 = vpop.f32.mrf.mxu0
      %v1529 = vadd.f32 %v1510, %v1528
      %v1530 = vpop.f32.mrf.mxu0
      %v1531 = vadd.f32 %v1512, %v1530
      %1532 = vdwg.mxu0
      %1533 = vmatpush.bf16.msra.mxu0 0
      %1534 = vmatpush.bf16.msra.mxu0 0
      %1535 = vmatpush.bf16.msra.mxu0 0
      %1536 = vmatpush.bf16.msra.mxu0 0
      %1537 = vmatpush.bf16.msra.mxu0 0
      %1538 = vmatpush.bf16.msra.mxu0 0
      %1539 = vmatpush.bf16.msra.mxu0 0
      %1540 = vmatpush.bf16.msra.mxu0 %v1316
      %1541 = vmatmul.bf16.gmra.mxu0 %v1395
      %v1542 = vpop.f32.mrf.mxu0
      %v1543 = vadd.f32 %v1524, %v1542
      %v1544 = vpop.f32.mrf.mxu0
      %v1545 = vadd.f32 %v1526, %v1544
      %1546 = vmatmul.bf16.gmra.mxu0 %v1398
      %v1547 = vpop.f32.mrf.mxu0
      %v1548 = vadd.f32 %v1529, %v1547
      %v1549 = vpop.f32.mrf.mxu0
      %v1550 = vadd.f32 %v1531, %v1549
      %1551 = vdwg.mxu0
      %1552 = vmatpush.bf16.msra.mxu0 %v1266
      %1553 = vmatpush.bf16.msra.mxu0 %v1263
      %1554 = vmatpush.bf16.msra.mxu0 %v1260
      %1555 = vmatpush.bf16.msra.mxu0 %v1257
      %1556 = vmatpush.bf16.msra.mxu0 %v1254
      %1557 = vmatpush.bf16.msra.mxu0 %v1251
      %1558 = vmatpush.bf16.msra.mxu0 %v1248
      %1559 = vmatpush.bf16.msra.mxu0 %v1245
      %1560 = vmatmul.bf16.gmra.mxu0 %v979
      %v1561 = vpop.f32.mrf.mxu0
      %v1562 = vadd.f32 %v938, %v1561
      %v1563 = vpop.f32.mrf.mxu0
      %v1564 = vadd.f32 %v943, %v1563
      %1565 = vmatmul.bf16.gmra.mxu0 %v983
      %v1566 = vpop.f32.mrf.mxu0
      %v1567 = vadd.f32 %v948, %v1566
      %v1568 = vpop.f32.mrf.mxu0
      %v1569 = vadd.f32 %v953, %v1568
      %1570 = vdwg.mxu0
      %1571 = vmatpush.bf16.msra.mxu0 %v1290
      %1572 = vmatpush.bf16.msra.mxu0 %v1287
      %1573 = vmatpush.bf16.msra.mxu0 %v1284
      %1574 = vmatpush.bf16.msra.mxu0 %v1281
      %1575 = vmatpush.bf16.msra.mxu0 %v1278
      %1576 = vmatpush.bf16.msra.mxu0 %v1275
      %1577 = vmatpush.bf16.msra.mxu0 %v1272
      %1578 = vmatpush.bf16.msra.mxu0 %v1269
      %1579 = vmatmul.bf16.gmra.mxu0 %v980
      %v1580 = vpop.f32.mrf.mxu0
      %v1581 = vadd.f32 %v1562, %v1580
      %v1582 = vpop.f32.mrf.mxu0
      %v1583 = vadd.f32 %v1564, %v1582
      %1584 = vmatmul.bf16.gmra.mxu0 %v984
      %v1585 = vpop.f32.mrf.mxu0
      %v1586 = vadd.f32 %v1567, %v1585
      %v1587 = vpop.f32.mrf.mxu0
      %v1588 = vadd.f32 %v1569, %v1587
      %1589 = vdwg.mxu0
      %1590 = vmatpush.bf16.msra.mxu0 %v1314
      %1591 = vmatpush.bf16.msra.mxu0 %v1311
      %1592 = vmatpush.bf16.msra.mxu0 %v1308
      %1593 = vmatpush.bf16.msra.mxu0 %v1305
      %1594 = vmatpush.bf16.msra.mxu0 %v1302
      %1595 = vmatpush.bf16.msra.mxu0 %v1299
      %1596 = vmatpush.bf16.msra.mxu0 %v1296
      %1597 = vmatpush.bf16.msra.mxu0 %v1293
      %1598 = vmatmul.bf16.gmra.mxu0 %v981
      %v1599 = vpop.f32.mrf.mxu0
      %v1600 = vadd.f32 %v1581, %v1599
      %v1601 = vpop.f32.mrf.mxu0
      %v1602 = vadd.f32 %v1583, %v1601
      %1603 = vmatmul.bf16.gmra.mxu0 %v985
      %v1604 = vpop.f32.mrf.mxu0
      %v1605 = vadd.f32 %v1586, %v1604
      %v1606 = vpop.f32.mrf.mxu0
      %v1607 = vadd.f32 %v1588, %v1606
      %1608 = vdwg.mxu0
      %1609 = vmatpush.bf16.msra.mxu0 0
      %1610 = vmatpush.bf16.msra.mxu0 0
      %1611 = vmatpush.bf16.msra.mxu0 0
      %1612 = vmatpush.bf16.msra.mxu0 0
      %1613 = vmatpush.bf16.msra.mxu0 0
      %1614 = vmatpush.bf16.msra.mxu0 0
      %1615 = vmatpush.bf16.msra.mxu0 0
      %1616 = vmatpush.bf16.msra.mxu0 %v1317
      %1617 = vmatmul.bf16.gmra.mxu0 %v1395
      %v1618 = vpop.f32.mrf.mxu0
      %v1619 = vadd.f32 %v1600, %v1618
      %v1620 = vpop.f32.mrf.mxu0
      %v1621 = vadd.f32 %v1602, %v1620
      %1622 = vmatmul.bf16.gmra.mxu0 %v1398
      %v1623 = vpop.f32.mrf.mxu0
      %v1624 = vadd.f32 %v1605, %v1623
      %v1625 = vpop.f32.mrf.mxu0
      %v1626 = vadd.f32 %v1607, %v1625
      %1627 = vdwg.mxu0
      %v1628 = vmax.f32 %v1467, 0.0
      %v1629 = vmax.f32 %v1543, 0.0
      %v1630 = vmax.f32 %v1619, 0.0
      %v1631 = vmax.f32 %v1469, 0.0
      %v1632 = vmax.f32 %v1545, 0.0
      %v1633 = vmax.f32 %v1621, 0.0
      %v1634 = vmax.f32 %v1472, 0.0
      %v1635 = vmax.f32 %v1548, 0.0
      %v1636 = vmax.f32 %v1624, 0.0
      %v1637 = vmax.f32 %v1474, 0.0
      %v1638 = vmax.f32 %v1550, 0.0
      %v1639 = vmax.f32 %v1626, 0.0
      %1652 = vrot.lane.b32.xlu0 %v1628, 127
      %v1653 = vpop.permute.xlu0 %1652
      %1654 = vrot.lane.b32.xlu0 %v1629, 127
      %v1655 = vpop.permute.xlu0 %1654
      %1656 = vrot.lane.b32.xlu0 %v1630, 127
      %v1657 = vpop.permute.xlu0 %1656
      %1658 = vrot.lane.b32.xlu0 %v1631, 127
      %v1659 = vpop.permute.xlu0 %1658
      %1660 = vrot.lane.b32.xlu0 %v1632, 127
      %v1661 = vpop.permute.xlu0 %1660
      %1662 = vrot.lane.b32.xlu0 %v1633, 127
      %v1663 = vpop.permute.xlu0 %1662
      %1664 = vrot.lane.b32.xlu0 %v1634, 127
      %v1665 = vpop.permute.xlu0 %1664
      %1666 = vrot.lane.b32.xlu0 %v1635, 127
      %v1667 = vpop.permute.xlu0 %1666
      %1668 = vrot.lane.b32.xlu0 %v1636, 127
      %v1669 = vpop.permute.xlu0 %1668
      %1670 = vrot.lane.b32.xlu0 %v1637, 127
      %v1671 = vpop.permute.xlu0 %1670
      %1672 = vrot.lane.b32.xlu0 %v1638, 127
      %v1673 = vpop.permute.xlu0 %1672
      %1674 = vrot.lane.b32.xlu0 %v1639, 127
      %v1675 = vpop.permute.xlu0 %1674
      %vm1676 = vcmask 1039360
      %v1677 = vsel %vm1676, %v1653, %v1655
      %v1678 = vsel %vm1676, %v1655, %v1657
      %v1679 = vsel %vm1676, %v1659, %v1661
      %v1680 = vsel %vm1676, %v1661, %v1663
      %v1681 = vsel %vm1676, %v1665, %v1667
      %v1682 = vsel %vm1676, %v1667, %v1669
      %v1683 = vsel %vm1676, %v1671, %v1673
      %v1684 = vsel %vm1676, %v1673, %v1675
      %v1697 = vmax.f32 %v1628, %v1677
      %v1698 = vmax.f32 %v1629, %v1678
      %v1699 = vmax.f32 %v1630, %v1657
      %v1700 = vmax.f32 %v1631, %v1679
      %v1701 = vmax.f32 %v1632, %v1680
      %v1702 = vmax.f32 %v1633, %v1663
      %v1703 = vmax.f32 %v1634, %v1681
      %v1704 = vmax.f32 %v1635, %v1682
      %v1705 = vmax.f32 %v1636, %v1669
      %v1706 = vmax.f32 %v1637, %v1683
      %v1707 = vmax.f32 %v1638, %v1684
      %v1708 = vmax.f32 %v1639, %v1675
      %1721 = vrot.lane.b32.xlu0 %v1697, 110
      %v1722 = vpop.permute.xlu0 %1721
      %1723 = vrot.lane.b32.xlu0 %v1698, 110
      %v1724 = vpop.permute.xlu0 %1723
      %1725 = vrot.lane.b32.xlu0 %v1699, 110
      %v1726 = vpop.permute.xlu0 %1725
      %1727 = vrot.lane.b32.xlu0 %v1700, 110
      %v1728 = vpop.permute.xlu0 %1727
      %1729 = vrot.lane.b32.xlu0 %v1701, 110
      %v1730 = vpop.permute.xlu0 %1729
      %1731 = vrot.lane.b32.xlu0 %v1702, 110
      %v1732 = vpop.permute.xlu0 %1731
      %1733 = vrot.lane.b32.xlu0 %v1703, 110
      %v1734 = vpop.permute.xlu0 %1733
      %1735 = vrot.lane.b32.xlu0 %v1704, 110
      %v1736 = vpop.permute.xlu0 %1735
      %1737 = vrot.lane.b32.xlu0 %v1705, 110
      %v1738 = vpop.permute.xlu0 %1737
      %1739 = vrot.lane.b32.xlu0 %v1706, 110
      %v1740 = vpop.permute.xlu0 %1739
      %1741 = vrot.lane.b32.xlu0 %v1707, 110
      %v1742 = vpop.permute.xlu0 %1741
      %1743 = vrot.lane.b32.xlu0 %v1708, 110
      %v1744 = vpop.permute.xlu0 %1743
      %vm1745 = vcmask 900096
      %v1746 = vsel %vm1745, %v1722, %v1724
      %v1747 = vsel %vm1745, %v1724, %v1726
      %v1748 = vsel %vm1745, %v1728, %v1730
      %v1749 = vsel %vm1745, %v1730, %v1732
      %v1750 = vsel %vm1745, %v1734, %v1736
      %v1751 = vsel %vm1745, %v1736, %v1738
      %v1752 = vsel %vm1745, %v1740, %v1742
      %v1753 = vsel %vm1745, %v1742, %v1744
      %v1766 = vmax.f32 %v1697, %v1746
      %v1767 = vmax.f32 %v1698, %v1747
      %v1768 = vmax.f32 %v1699, %v1726
      %v1769 = vmax.f32 %v1700, %v1748
      %v1770 = vmax.f32 %v1701, %v1749
      %v1771 = vmax.f32 %v1702, %v1732
      %v1772 = vmax.f32 %v1703, %v1750
      %v1773 = vmax.f32 %v1704, %v1751
      %v1774 = vmax.f32 %v1705, %v1738
      %v1775 = vmax.f32 %v1706, %v1752
      %v1776 = vmax.f32 %v1707, %v1753
      %v1777 = vmax.f32 %v1708, %v1744
      %v1778 = vpack.c.bf16 %v1769, %v1766
      %v1779 = vpack.c.bf16 %v1770, %v1767
      %v1780 = vpack.c.bf16 %v1771, %v1768
      %v1781 = vpack.c.bf16 %v1775, %v1772
      %v1782 = vpack.c.bf16 %v1776, %v1773
      %v1783 = vpack.c.bf16 %v1777, %v1774
      %v1784 = vld [vmem:[%s3] sm:$0xf]
      %v1785 = vld [vmem:[%s3 + $0x4] sm:$0xf]
      %v1786 = vld [vmem:[%s3 + $0x8] sm:$0xf]
      %v1787 = vld [vmem:[%s3 + $0xc] sm:$0xf]
      %v1788 = vld [vmem:[%s3 + $0x10] sm:$0xf]
      %v1789 = vld [vmem:[%s3 + $0x14] sm:$0xf]
      %v1790 = vld [vmem:[%s3 + $0x18] sm:$0xf]
      %v1791 = vld [vmem:[%s3 + $0x1c] sm:$0xf]
      %v1792 = vld [vmem:[%s3 + $0x20] sm:$0xf]
      %v1793 = vld [vmem:[%s3 + $0x24] sm:$0xf]
      %v1794 = vld [vmem:[%s3 + $0x28] sm:$0xf]
      %v1795 = vld [vmem:[%s3 + $0x2c] sm:$0xf]
      %v1796 = vld [vmem:[%s3 + $0x30] sm:$0xf]
      %v1797 = vld [vmem:[%s3 + $0x34] sm:$0xf]
      %v1798 = vld [vmem:[%s3 + $0x38] sm:$0xf]
      %v1799 = vld [vmem:[%s3 + $0x3c] sm:$0xf]
      %v1800 = vld [vmem:[%s3 + $0x40] sm:$0xf]
      %v1801 = vld [vmem:[%s3 + $0x44] sm:$0xf]
      %v1802 = vld [vmem:[%s3 + $0x48] sm:$0xf]
      %v1803 = vld [vmem:[%s3 + $0x4c] sm:$0xf]
      %v1804 = vld [vmem:[%s3 + $0x50] sm:$0xf]
      %v1805 = vld [vmem:[%s3 + $0x54] sm:$0xf]
      %v1806 = vld [vmem:[%s3 + $0x58] sm:$0xf]
      %v1807 = vld [vmem:[%s3 + $0x5c] sm:$0xf]
      %v1808 = vld [vmem:[%s3 + $0x60] sm:$0xf]
      %v1809 = vld [vmem:[%s3 + $0x64] sm:$0xf]
      %v1810 = vld [vmem:[%s3 + $0x68] sm:$0xf]
      %v1811 = vld [vmem:[%s3 + $0x6c] sm:$0xf]
      %v1812 = vld [vmem:[%s3 + $0x70] sm:$0xf]
      %v1813 = vld [vmem:[%s3 + $0x74] sm:$0xf]
      %v1814 = vld [vmem:[%s3 + $0x78] sm:$0xf]
      %v1815 = vld [vmem:[%s3 + $0x7c] sm:$0xf]
      %v1816 = vld [vmem:[%s3 + $0x80] sm:$0xf]
      %v1817 = vld [vmem:[%s3 + $0x84] sm:$0xf]
      %v1818 = vld [vmem:[%s3 + $0x88] sm:$0xf]
      %v1819 = vld [vmem:[%s3 + $0x8c] sm:$0xf]
      %v1820 = vld [vmem:[%s3 + $0x90] sm:$0xf]
      %v1821 = vld [vmem:[%s3 + $0x94] sm:$0xf]
      %v1822 = vld [vmem:[%s3 + $0x98] sm:$0x1]
      %v1862 = vunpack.c.l.b16 %v1784
      %v1863 = vunpack.c.l.b16 %v1785
      %v1864 = vunpack.c.l.b16 %v1786
      %v1865 = vunpack.c.l.b16 %v1787
      %v1866 = vunpack.c.l.b16 %v1788
      %v1867 = vunpack.c.l.b16 %v1789
      %v1868 = vunpack.c.l.b16 %v1790
      %v1869 = vunpack.c.l.b16 %v1791
      %v1870 = vunpack.c.l.b16 %v1792
      %v1871 = vunpack.c.l.b16 %v1793
      %v1872 = vunpack.c.l.b16 %v1794
      %v1873 = vunpack.c.l.b16 %v1795
      %v1874 = vunpack.c.l.b16 %v1796
      %v1875 = vunpack.c.l.b16 %v1797
      %v1876 = vunpack.c.l.b16 %v1798
      %v1877 = vunpack.c.l.b16 %v1799
      %v1878 = vunpack.c.l.b16 %v1800
      %v1879 = vunpack.c.l.b16 %v1801
      %v1880 = vunpack.c.l.b16 %v1802
      %v1881 = vunpack.c.l.b16 %v1803
      %v1882 = vunpack.c.l.b16 %v1804
      %v1883 = vunpack.c.l.b16 %v1805
      %v1884 = vunpack.c.l.b16 %v1806
      %v1885 = vunpack.c.l.b16 %v1807
      %v1886 = vunpack.c.l.b16 %v1808
      %v1887 = vunpack.c.l.b16 %v1809
      %v1888 = vunpack.c.l.b16 %v1810
      %v1889 = vunpack.c.l.b16 %v1811
      %v1890 = vunpack.c.l.b16 %v1812
      %v1891 = vunpack.c.l.b16 %v1813
      %v1892 = vunpack.c.l.b16 %v1814
      %v1893 = vunpack.c.l.b16 %v1815
      %v1894 = vunpack.c.l.b16 %v1816
      %v1895 = vunpack.c.l.b16 %v1817
      %v1896 = vunpack.c.l.b16 %v1818
      %v1897 = vunpack.c.l.b16 %v1819
      %v1898 = vunpack.c.l.b16 %v1820
      %v1899 = vunpack.c.l.b16 %v1821
      %v1900 = vunpack.c.l.b16 %v1822
      %v1901 = vpack.c.b16 %v1863, %v1862
      %v1902 = vpack.c.b16 %v1865, %v1864
      %v1903 = vpack.c.b16 %v1867, %v1866
      %v1904 = vpack.c.b16 %v1869, %v1868
      %v1905 = vpack.c.b16 %v1871, %v1870
      %v1906 = vpack.c.b16 %v1873, %v1872
      %v1907 = vpack.c.b16 %v1875, %v1874
      %v1908 = vpack.c.b16 %v1877, %v1876
      %v1909 = vpack.c.b16 %v1879, %v1878
      %v1910 = vpack.c.b16 %v1881, %v1880
      %v1911 = vpack.c.b16 %v1883, %v1882
      %v1912 = vpack.c.b16 %v1885, %v1884
      %v1913 = vpack.c.b16 %v1887, %v1886
      %v1914 = vpack.c.b16 %v1889, %v1888
      %v1915 = vpack.c.b16 %v1891, %v1890
      %v1916 = vpack.c.b16 %v1893, %v1892
      %v1917 = vpack.c.b16 %v1895, %v1894
      %v1918 = vpack.c.b16 %v1897, %v1896
      %v1919 = vpack.c.b16 %v1899, %v1898
      %v1920 = vpack.c.b16 %v1900, %v1900
      %vm1940 = vcmask 400384
      %v1942 = vsel %vm1940, %v1780, 0
      %v1945 = vsel %vm1940, %v1783, 0
      %vm1947 = vcmask 1040384
      %v1948 = vsel 0, 4294967295, 65535
      %v1949 = vsel %vm1947, %v1948, 0
      %v1951 = vand.u32 %v1920, %v1949
      %1953 = vmatpush.bf16.msra.mxu0 %v1908
      %1954 = vmatpush.bf16.msra.mxu0 %v1907
      %1955 = vmatpush.bf16.msra.mxu0 %v1906
      %1956 = vmatpush.bf16.msra.mxu0 %v1905
      %1957 = vmatpush.bf16.msra.mxu0 %v1904
      %1958 = vmatpush.bf16.msra.mxu0 %v1903
      %1959 = vmatpush.bf16.msra.mxu0 %v1902
      %1960 = vmatpush.bf16.msra.mxu0 %v1901
      %1961 = vmatmul.bf16.gmra.mxu0 %v1778
      %v1962 = vpop.f32.mrf.mxu0
      %v1963 = vadd.f32 0.0, %v1962
      %v1964 = vpop.f32.mrf.mxu0
      %v1965 = vadd.f32 0.0, %v1964
      %1966 = vmatmul.bf16.gmra.mxu0 %v1781
      %v1967 = vpop.f32.mrf.mxu0
      %v1968 = vadd.f32 0.0, %v1967
      %v1969 = vpop.f32.mrf.mxu0
      %v1970 = vadd.f32 0.0, %v1969
      %1971 = vdwg.mxu0
      %1972 = vmatpush.bf16.msra.mxu0 %v1916
      %1973 = vmatpush.bf16.msra.mxu0 %v1915
      %1974 = vmatpush.bf16.msra.mxu0 %v1914
      %1975 = vmatpush.bf16.msra.mxu0 %v1913
      %1976 = vmatpush.bf16.msra.mxu0 %v1912
      %1977 = vmatpush.bf16.msra.mxu0 %v1911
      %1978 = vmatpush.bf16.msra.mxu0 %v1910
      %1979 = vmatpush.bf16.msra.mxu0 %v1909
      %1980 = vmatmul.bf16.gmra.mxu0 %v1779
      %v1981 = vpop.f32.mrf.mxu0
      %v1982 = vadd.f32 %v1963, %v1981
      %v1983 = vpop.f32.mrf.mxu0
      %v1984 = vadd.f32 %v1965, %v1983
      %1985 = vmatmul.bf16.gmra.mxu0 %v1782
      %v1986 = vpop.f32.mrf.mxu0
      %v1987 = vadd.f32 %v1968, %v1986
      %v1988 = vpop.f32.mrf.mxu0
      %v1989 = vadd.f32 %v1970, %v1988
      %1990 = vdwg.mxu0
      %1991 = vmatpush.bf16.msra.mxu0 0
      %1992 = vmatpush.bf16.msra.mxu0 0
      %1993 = vmatpush.bf16.msra.mxu0 0
      %1994 = vmatpush.bf16.msra.mxu0 0
      %1995 = vmatpush.bf16.msra.mxu0 %v1951
      %1996 = vmatpush.bf16.msra.mxu0 %v1919
      %1997 = vmatpush.bf16.msra.mxu0 %v1918
      %1998 = vmatpush.bf16.msra.mxu0 %v1917
      %1999 = vmatmul.bf16.gmra.mxu0 %v1942
      %v2000 = vpop.f32.mrf.mxu0
      %v2001 = vadd.f32 %v1982, %v2000
      %v2002 = vpop.f32.mrf.mxu0
      %v2003 = vadd.f32 %v1984, %v2002
      %2004 = vmatmul.bf16.gmra.mxu0 %v1945
      %v2005 = vpop.f32.mrf.mxu0
      %v2006 = vadd.f32 %v1987, %v2005
      %v2007 = vpop.f32.mrf.mxu0
      %v2008 = vadd.f32 %v1989, %v2007
      %2009 = vdwg.mxu0
      %2010 = vst.msk [vmem:[%s197] sm:$0xff] %vm1940, %v2001
      %2011 = vst.msk [vmem:[%s197 + $0x8] sm:$0xff] %vm1940, %v2003
      %2012 = vst.msk [vmem:[%s197 + $0x10] sm:$0xff] %vm1940, %v2006
      %2013 = vst.msk [vmem:[%s197 + $0x18] sm:$0xff] %vm1940, %v2008
      %p2014 = scmp.lt.s32.totalorder %s15, 1
      %s2015 = scalar_select %p2014, %s15, 1
      %s2016 = smul.addr %s2015, 4
      %s2017 = smul.addr %s2016, 8
      %s2018 = scalar_lea.vmem %s4, %s2017
      // Predicated region
      $region37: #{cnn_forward.4} parent=35 // pred_check
        %p2019 = pneg %p122
      $region38: #{cnn_forward.4} parent=35 // pred_check_branch
        %2021 = sbr.rel (%p2019) target = $region40
      $region39: #{cnn_forward.4} parent=35 // pred_region
        _
      $region40: #{cnn_forward.4} parent=35 // pred_fallthru
        _
    $region36: #{cnn_forward.4} parent=5 // pred_fallthru
      _
    %p2022 = scmp.le.s32.totalorder 2, %s10
    // Predicated region
    $region41: #{cnn_forward.4} parent=5 // pred_check
      %p2023 = pneg %p2022
    $region42: #{cnn_forward.4} parent=5 // pred_check_branch
      %2025 = sbr.rel (%p2023) target = $region44
    $region43: #{cnn_forward.4} parent=5 // pred_region
      %s2026 = ssub.s32 %s10, 2
      // Predicated region
      $region45: #{cnn_forward.4} parent=43 // pred_check
        %p2027 = pneg %p128
      $region46: #{cnn_forward.4} parent=43 // pred_check_branch
        %2029 = sbr.rel (%p2027) target = $region48
      $region47: #{cnn_forward.4} parent=43 // pred_region
        %p2030 = scmp.lt.s32.totalorder %s16, 1
        %s2031 = scalar_select %p2030, %s16, 1
        %s2032 = smul.addr %s2031, 4
        %s2033 = smul.addr %s2032, 8
        %s2034 = scalar_lea.vmem %s4, %s2033
      $region48: #{cnn_forward.4} parent=43 // pred_fallthru
        _
    $region44: #{cnn_forward.4} parent=5 // pred_fallthru
      _
  $region6: #{cnn_forward.4} parent=0 // loop_footer
    %s14 = sadd.s32 1, %s10
  $region7: #{cnn_forward.4} parent=0 // loop_footer_branch
    %9 = sbr.rel target = $region3
  $region8: #{cnn_forward.4} parent=0 // loop_exit
    _

// kernel: cnn_forward.3
$region0: #{cnn_forward.3}
  #allocation0 [shape = 'u32[]', space=smem, size = 0x4, offset = 0x4, fixed_abs, tag = 'smem constant byte address 0x4 - core index']
  #allocation1 [shape = 'u32[72,128]{1,0:T(1,128)}', space=vmem, size = 0x9000, scoped, tag = 'internal scratch']
  #allocation2 [shape = 'f32[75,1024]{1,0:T(8,128)}', space=vmem, size = 0x50000, scoped, tag = 'scratch operand']
  %s0 = inlined_call_operand.vmem [shape: bf16[2,3,1156], index: 0, kind: input, shape index: {}]
  %s1 = inlined_call_operand.vmem [shape: bf16[16,75], index: 1, kind: input, shape index: {}]
  %s2 = inlined_call_operand.vmem [shape: f32[16,1], index: 2, kind: input, shape index: {}]
  %s3 = inlined_call_operand.hbm [shape: bf16[991,196], index: 3, kind: input, shape index: {}]
  %s4 = inlined_call_operand.vmem [shape: f32[2,16,196], index: 4, kind: output, shape index: {}]
  %s5 = sld [smem:[#allocation0]]
  $region53: #{cnn_forward.3} parent=0
    _
  %s7 = ssub.s32 1, %s5
  %s8 = scalar_select 0, %s7, %s5
  $region1: #{cnn_forward.3} parent=0
    #allocation3 [shape = 'u8[507904]{0}', space=vmem, size = 0x7c000, scoped, tag = 'input window, operand 3, single buffered']
    #allocation4 [shape = 's32[2]{0}', space=sflag, size = 0x8, scoped, tag = 'scoped memory for cnn_forward.3']
    %9 = vsyncpa [#allocation4], 0
    loop: start=0, step=1, limit=4
    $region2: #{cnn_forward.3} parent=1 // loop_pre_header
      _
    $region3: #{cnn_forward.3} parent=1 // loop_header
      %s11 = sphi 0, %s15
      %p12 = scmp.ge.s32.totalorder %s11, 4
      %s21 = sphi 0, %s23
      %s24 = sphi 0, %s21
      %s25 = sphi 0, %s24
      %s41 = sphi 0, %s25
      %s45 = sphi 0, %s45
      %s47 = sphi 0, %s45
      %s48 = sphi 0, %s47
      %s62 = sphi 0, %s48
      %s66 = sphi 0, %s66
      %s68 = sphi 0, %s66
      %s69 = sphi 0, %s68
      %s83 = sphi 0, %s69
      %s87 = sphi 0, %s87
      %s89 = sphi 0, %s87
      %s90 = sphi 0, %s89
      %s104 = sphi 0, %s90
      %s110 = sphi 0, %s112
      %s113 = sphi 0, %s110
      %s114 = sphi 0, %s113
      %s130 = sphi 0, %s114
    $region4: #{cnn_forward.3} parent=1 // loop_header_branch
      %14 = sbr.rel (%p12) target = $region8
    $region5: #{cnn_forward.3} parent=1 // loop_body
      %s16 = ssub.s32 %s11, 1
      %s17 = ssub.s32 %s11, 2
      %s18 = sadd.s32 %s11, 1
      %s19 = ssub.s32 %s11, %s18
      %p20 = scmp.eq.s32.totalorder %s19, 0
      %s22 = sadd.s32 %s21, 1
      %s23 = scalar_select %p20, %s21, %s22
      %p26 = pneg %p20
      %p27 = scmp.eq.s32.totalorder %s11, 1
      %p28 = por %p26, %p27
      %p29 = scmp.ne.s32.totalorder %s21, %s24
      %p30 = scmp.eq.s32.totalorder %s11, 0
      %p31 = por %p29, %p30
      %p32 = scmp.ne.s32.totalorder %s21, %s24
      %p33 = scmp.eq.s32.totalorder %s16, 1
      %p34 = por %p32, %p33
      %p35 = scmp.ne.s32.totalorder %s24, %s25
      %p36 = scmp.eq.s32.totalorder %s16, 0
      %p37 = por %p35, %p36
      %p38 = scmp.ne.s32.totalorder %s24, %s25
      %p39 = scmp.eq.s32.totalorder %s17, 1
      %p40 = por %p38, %p39
      %p42 = scmp.ne.s32.totalorder %s25, %s41
      %p43 = scmp.eq.s32.totalorder %s17, 0
      %p44 = por %p42, %p43
      %s46 = sadd.s32 %s45, 1
      %p49 = scmp.eq.s32.totalorder %s11, 1
      %p50 = scmp.ne.s32.totalorder %s45, %s47
      %p51 = scmp.eq.s32.totalorder %s11, 0
      %p52 = por %p50, %p51
      %p53 = scmp.ne.s32.totalorder %s45, %s47
      %p54 = scmp.eq.s32.totalorder %s16, 1
      %p55 = por %p53, %p54
      %p56 = scmp.ne.s32.totalorder %s47, %s48
      %p57 = scmp.eq.s32.totalorder %s16, 0
      %p58 = por %p56, %p57
      %p59 = scmp.ne.s32.totalorder %s47, %s48
      %p60 = scmp.eq.s32.totalorder %s17, 1
      %p61 = por %p59, %p60
      %p63 = scmp.ne.s32.totalorder %s48, %s62
      %p64 = scmp.eq.s32.totalorder %s17, 0
      %p65 = por %p63, %p64
      %s67 = sadd.s32 %s66, 1
      %p70 = scmp.eq.s32.totalorder %s11, 1
      %p71 = scmp.ne.s32.totalorder %s66, %s68
      %p72 = scmp.eq.s32.totalorder %s11, 0
      %p73 = por %p71, %p72
      %p74 = scmp.ne.s32.totalorder %s66, %s68
      %p75 = scmp.eq.s32.totalorder %s16, 1
      %p76 = por %p74, %p75
      %p77 = scmp.ne.s32.totalorder %s68, %s69
      %p78 = scmp.eq.s32.totalorder %s16, 0
      %p79 = por %p77, %p78
      %p80 = scmp.ne.s32.totalorder %s68, %s69
      %p81 = scmp.eq.s32.totalorder %s17, 1
      %p82 = por %p80, %p81
      %p84 = scmp.ne.s32.totalorder %s69, %s83
      %p85 = scmp.eq.s32.totalorder %s17, 0
      %p86 = por %p84, %p85
      %s88 = sadd.s32 %s87, 1
      %p91 = scmp.eq.s32.totalorder %s11, 1
      %p92 = scmp.ne.s32.totalorder %s87, %s89
      %p93 = scmp.eq.s32.totalorder %s11, 0
      %p94 = por %p92, %p93
      %p95 = scmp.ne.s32.totalorder %s87, %s89
      %p96 = scmp.eq.s32.totalorder %s16, 1
      %p97 = por %p95, %p96
      %p98 = scmp.ne.s32.totalorder %s89, %s90
      %p99 = scmp.eq.s32.totalorder %s16, 0
      %p100 = por %p98, %p99
      %p101 = scmp.ne.s32.totalorder %s89, %s90
      %p102 = scmp.eq.s32.totalorder %s17, 1
      %p103 = por %p101, %p102
      %p105 = scmp.ne.s32.totalorder %s90, %s104
      %p106 = scmp.eq.s32.totalorder %s17, 0
      %p107 = por %p105, %p106
      %s108 = ssub.s32 %s11, %s18
      %p109 = scmp.eq.s32.totalorder %s108, 0
      %s111 = sadd.s32 %s110, 1
      %s112 = scalar_select %p109, %s110, %s111
      %p115 = pneg %p109
      %p116 = scmp.eq.s32.totalorder %s11, 1
      %p117 = por %p115, %p116
      %p118 = scmp.ne.s32.totalorder %s110, %s113
      %p119 = scmp.eq.s32.totalorder %s11, 0
      %p120 = por %p118, %p119
      %p121 = scmp.ne.s32.totalorder %s110, %s113
      %p122 = scmp.eq.s32.totalorder %s16, 1
      %p123 = por %p121, %p122
      %p124 = scmp.ne.s32.totalorder %s113, %s114
      %p125 = scmp.eq.s32.totalorder %s16, 0
      %p126 = por %p124, %p125
      %p127 = scmp.ne.s32.totalorder %s113, %s114
      %p128 = scmp.eq.s32.totalorder %s17, 1
      %p129 = por %p127, %p128
      %p131 = scmp.ne.s32.totalorder %s114, %s130
      %p132 = scmp.eq.s32.totalorder %s17, 0
      %p133 = por %p131, %p132
      %p134 = scmp.le.s32.totalorder 1, %s11
      %p135 = scmp.lt.s32.totalorder %s11, 3
      %p136 = pnand %p134, %p135
      %p137 = pneg %p136
      // Predicated region
      $region9: #{cnn_forward.3} parent=5 // pred_check
        _
      $region10: #{cnn_forward.3} parent=5 // pred_check_branch
        %139 = sbr.rel (%p136) target = $region12
      $region11: #{cnn_forward.3} parent=5 // pred_region
        %s140 = ssub.s32 %s11, 1
        // Predicated region
        $region13: #{cnn_forward.3} parent=11 // pred_check
          %p141 = pneg %p58
        $region14: #{cnn_forward.3} parent=11 // pred_check_branch
          %143 = sbr.rel (%p141) target = $region16
        $region15: #{cnn_forward.3} parent=11 // pred_region
          _
        $region16: #{cnn_forward.3} parent=11 // pred_fallthru
          _
        // Predicated region
        $region17: #{cnn_forward.3} parent=11 // pred_check
          %p144 = pneg %p79
        $region18: #{cnn_forward.3} parent=11 // pred_check_branch
          %146 = sbr.rel (%p144) target = $region20
        $region19: #{cnn_forward.3} parent=11 // pred_region
          _
        $region20: #{cnn_forward.3} parent=11 // pred_fallthru
          _
        // Predicated region
        $region21: #{cnn_forward.3} parent=11 // pred_check
          %p147 = pneg %p100
        $region22: #{cnn_forward.3} parent=11 // pred_check_branch
          %149 = sbr.rel (%p147) target = $region24
        $region23: #{cnn_forward.3} parent=11 // pred_region
          %151 = vsyncadd [#allocation4], 0
          %s152 = sshll.u32 %s3, 4
          %s153 = int_to_ptr.hbm [resolvable:$true] %s152
          %s154 = sshll.u32 [#allocation3], 4
          %s155 = int_to_ptr.vmem [resolvable:$true] %s154
          %160 = dma.hbm_to_vmem [thread:$0]  %s153, 15872, %s155, [#allocation4], 128, 128, 8
        $region24: #{cnn_forward.3} parent=11 // pred_fallthru
          _
      $region12: #{cnn_forward.3} parent=5 // pred_fallthru
        _
      %p161 = scmp.lt.s32.totalorder %s11, 2
      // Predicated region
      $region25: #{cnn_forward.3} parent=5 // pred_check
        %p162 = pneg %p161
      $region26: #{cnn_forward.3} parent=5 // pred_check_branch
        %164 = sbr.rel (%p162) target = $region28
      $region27: #{cnn_forward.3} parent=5 // pred_region
        // Predicated region
        $region29: #{cnn_forward.3} parent=27 // pred_check
          %p165 = pneg %p31
        $region30: #{cnn_forward.3} parent=27 // pred_check_branch
          %167 = sbr.rel (%p165) target = $region32
        $region31: #{cnn_forward.3} parent=27 // pred_region
          %p168 = scmp.lt.s32.totalorder %s11, 1
          %s169 = scalar_select %p168, %s11, 1
          %s170 = smul.addr %s169, 10
          %s171 = smul.addr %s170, 2
          %s172 = scalar_lea.vmem %s0, %s171
        $region32: #{cnn_forward.3} parent=27 // pred_fallthru
          _
      $region28: #{cnn_forward.3} parent=5 // pred_fallthru
        _
      %p173 = scmp.le.s32.totalorder 1, %s11
      %p174 = scmp.lt.s32.totalorder %s11, 3
      %p175 = pnand %p173, %p174
      %p176 = pneg %p175
      // Predicated region
      $region33: #{cnn_forward.3} parent=5 // pred_check
        _
      $region34: #{cnn_forward.3} parent=5 // pred_check_branch
        %178 = sbr.rel (%p175) target = $region36
      $region35: #{cnn_forward.3} parent=5 // pred_region
        %s179 = ssub.s32 %s11, 1
        // Predicated region
        $region37: #{cnn_forward.3} parent=35 // pred_check
          %p180 = pneg %p100
        $region38: #{cnn_forward.3} parent=35 // pred_check_branch
          %182 = sbr.rel (%p180) target = $region40
        $region39: #{cnn_forward.3} parent=35 // pred_region
          %184 = dma.done [#allocation4], 15872
        $region40: #{cnn_forward.3} parent=35 // pred_fallthru
          _
        %p185 = scmp.lt.s32.totalorder %s16, 1
        %s186 = scalar_select %p185, %s16, 1
        %s187 = smul.addr %s186, 10
        %s188 = smul.addr %s187, 2
        %s189 = scalar_lea.vmem %s0, %s188
        %p190 = pneg %p37
        %p191 = pneg %p34
        %p192 = pneg %p58
        %p193 = pneg %p55
        %p194 = pneg %p79
        %p195 = pneg %p76
        %p196 = pneg %p100
        %p197 = pneg %p97
        %p198 = pneg %p126
        %p199 = pneg %p123
        %p200 = scmp.lt.s32.totalorder %s16, 1
        %s201 = scalar_select %p200, %s16, 1
        %s202 = smul.addr %s201, 4
        %s203 = smul.addr %s202, 8
        %s204 = scalar_lea.vmem %s4, %s203
        %p205 = scmp.lt.s32.totalorder %s16, 1
        %s206 = scalar_select %p205, %s16, 1
        %s207 = smul.addr %s206, 10
        %s208 = smul.addr %s207, 2
        %s209 = scalar_lea.vmem %s0, %s208
        %p210 = scmp.lt.s32.totalorder %s16, 1
        %s211 = scalar_select %p210, %s16, 1
        %s212 = smul.addr %s211, 4
        %s213 = smul.addr %s212, 8
        %s214 = scalar_lea.vmem %s4, %s213
        %v216 = vld [vmem:[%s209] sm:$0xff]
        %v217 = vld [vmem:[%s209 + $0x8] sm:$0xff]
        %v218 = vld [vmem:[%s209 + $0x10] sm:$0xf]
        %v219 = vunpack.c.l.bf16 %v216
        %v220 = vunpack.c.h.bf16 %v216
        %v221 = vunpack.c.l.bf16 %v217
        %v222 = vunpack.c.h.bf16 %v217
        %227 = vst [vmem:[#allocation1] ss:$2 sm:$0xff] %v219
        %s228 = scalar_lea.vmem [#allocation1], 16
        %229 = vst [vmem:[%s228] ss:$2 sm:$0xff] %v220
        %s230 = scalar_lea.vmem [#allocation1], 32
        %231 = vst [vmem:[%s230] ss:$2 sm:$0xff] %v221
        %s232 = scalar_lea.vmem [#allocation1], 48
        %233 = vst [vmem:[%s232] ss:$2 sm:$0xff] %v222
        %v234 = vld.sshfl [vmem:[#allocation1] sm:$0xff pattern:$0x75316420]
        %v235 = vld.sshfl [vmem:[#allocation1 + $0x8] sm:$0xff pattern:$0x75316420]
        %v236 = vld.sshfl [vmem:[#allocation1 + $0x10] sm:$0xff pattern:$0x75316420]
        %v237 = vld.sshfl [vmem:[#allocation1 + $0x18] sm:$0xff pattern:$0x75316420]
        %v238 = vld.sshfl [vmem:[#allocation1 + $0x20] sm:$0xff pattern:$0x75316420]
        %v239 = vld.sshfl [vmem:[#allocation1 + $0x28] sm:$0xff pattern:$0x75316420]
        %v240 = vld.sshfl [vmem:[#allocation1 + $0x30] sm:$0xff pattern:$0x75316420]
        %v241 = vld.sshfl [vmem:[#allocation1 + $0x38] sm:$0xff pattern:$0x75316420]
        %250 = vst [vmem:[#allocation2] sm:$0x7] %v234
        %251 = vst [vmem:[#allocation2 + $0x8] sm:$0x7] %v235
        %252 = vst [vmem:[#allocation2 + $0x10] sm:$0x7] %v236
        %253 = vst [vmem:[#allocation2 + $0x18] sm:$0x7] %v237
        %254 = vst [vmem:[#allocation2 + $0x20] sm:$0x7] %v238
        %255 = vst [vmem:[#allocation2 + $0x28] sm:$0x7] %v239
        %256 = vst [vmem:[#allocation2 + $0x30] sm:$0x7] %v240
        %257 = vst [vmem:[#allocation2 + $0x38] sm:$0x7] %v241
        %v258 = vunpack.c.l.bf16 %v218
        %260 = vst [vmem:[#allocation1] ss:$2 sm:$0xff] %v219
        %s261 = scalar_lea.vmem [#allocation1], 16
        %262 = vst [vmem:[%s261] ss:$2 sm:$0xff] %v220
        %s263 = scalar_lea.vmem [#allocation1], 32
        %264 = vst [vmem:[%s263] ss:$2 sm:$0xff] %v221
        %s265 = scalar_lea.vmem [#allocation1], 48
        %266 = vst [vmem:[%s265] ss:$2 sm:$0xff] %v222
        %v267 = vld.sshfl [vmem:[#allocation1] sm:$0xff pattern:$0x75316420]
        %v268 = vld.sshfl [vmem:[#allocation1 + $0x8] sm:$0xff pattern:$0x75316420]
        %v269 = vld.sshfl [vmem:[#allocation1 + $0x10] sm:$0xff pattern:$0x75316420]
        %v270 = vld.sshfl [vmem:[#allocation1 + $0x18] sm:$0xff pattern:$0x75316420]
        %v271 = vld.sshfl [vmem:[#allocation1 + $0x20] sm:$0xff pattern:$0x75316420]
        %v272 = vld.sshfl [vmem:[#allocation1 + $0x28] sm:$0xff pattern:$0x75316420]
        %v273 = vld.sshfl [vmem:[#allocation1 + $0x30] sm:$0xff pattern:$0x75316420]
        %v274 = vld.sshfl [vmem:[#allocation1 + $0x38] sm:$0xff pattern:$0x75316420]
        %275 = vst [vmem:[#allocation1] ss:$2 sm:$0xff] %v258
        %v276 = vld.sshfl [vmem:[#allocation1] sm:$0xff pattern:$0x75316420]
        %v277 = vrot.slane %v267, 5
        %v278 = vrot.slane %v268, 5
        %v279 = vrot.slane %v269, 5
        %v280 = vrot.slane %v270, 5
        %v281 = vrot.slane %v271, 5
        %v282 = vrot.slane %v272, 5
        %v283 = vrot.slane %v273, 5
        %v284 = vrot.slane %v274, 5
        %v285 = vrot.slane %v276, 5
        %286 = vrot.lane.b32.xlu0 %v277, 127
        %v287 = vpop.permute.xlu0 %286
        %288 = vrot.lane.b32.xlu0 %v278, 127
        %v289 = vpop.permute.xlu0 %288
        %290 = vrot.lane.b32.xlu0 %v279, 127
        %v291 = vpop.permute.xlu0 %290
        %292 = vrot.lane.b32.xlu0 %v280, 127
        %v293 = vpop.permute.xlu0 %292
        %294 = vrot.lane.b32.xlu0 %v281, 127
        %v295 = vpop.permute.xlu0 %294
        %296 = vrot.lane.b32.xlu0 %v282, 127
        %v297 = vpop.permute.xlu0 %296
        %298 = vrot.lane.b32.xlu0 %v283, 127
        %v299 = vpop.permute.xlu0 %298
        %300 = vrot.lane.b32.xlu0 %v284, 127
        %v301 = vpop.permute.xlu0 %300
        %302 = vrot.lane.b32.xlu0 %v285, 127
        %v303 = vpop.permute.xlu0 %302
        %vm304 = vcmask 1039360
        %v305 = vsel %vm304, %v287, %v289
        %v306 = vsel %vm304, %v289, %v291
        %v307 = vsel %vm304, %v291, %v293
        %v308 = vsel %vm304, %v293, %v295
        %v309 = vsel %vm304, %v295, %v297
        %v310 = vsel %vm304, %v297, %v299
        %v311 = vsel %vm304, %v299, %v301
        %v312 = vsel %vm304, %v301, %v303
        %321 = vst [vmem:[#allocation2] sm:$0x38] %v305
        %322 = vst [vmem:[#allocation2 + $0x8] sm:$0x38] %v306
        %323 = vst [vmem:[#allocation2 + $0x10] sm:$0x38] %v307
        %324 = vst [vmem:[#allocation2 + $0x18] sm:$0x38] %v308
        %325 = vst [vmem:[#allocation2 + $0x20] sm:$0x38] %v309
        %326 = vst [vmem:[#allocation2 + $0x28] sm:$0x38] %v310
        %327 = vst [vmem:[#allocation2 + $0x30] sm:$0x38] %v311
        %328 = vst [vmem:[#allocation2 + $0x38] sm:$0x38] %v312
        %329 = vst [vmem:[#allocation1] ss:$2 sm:$0xff] %v219
        %s330 = scalar_lea.vmem [#allocation1], 16
        %331 = vst [vmem:[%s330] ss:$2 sm:$0xff] %v220
        %s332 = scalar_lea.vmem [#allocation1], 32
        %333 = vst [vmem:[%s332] ss:$2 sm:$0xff] %v221
        %s334 = scalar_lea.vmem [#allocation1], 48
        %335 = vst [vmem:[%s334] ss:$2 sm:$0xff] %v222
        %v336 = vld.sshfl [vmem:[#allocation1] sm:$0xff pattern:$0x75316420]
        %v337 = vld.sshfl [vmem:[#allocation1 + $0x8] sm:$0xff pattern:$0x75316420]
        %v338 = vld.sshfl [vmem:[#allocation1 + $0x10] sm:$0xff pattern:$0x75316420]
        %v339 = vld.sshfl [vmem:[#allocation1 + $0x18] sm:$0xff pattern:$0x75316420]
        %v340 = vld.sshfl [vmem:[#allocation1 + $0x20] sm:$0xff pattern:$0x75316420]
        %v341 = vld.sshfl [vmem:[#allocation1 + $0x28] sm:$0xff pattern:$0x75316420]
        %v342 = vld.sshfl [vmem:[#allocation1 + $0x30] sm:$0xff pattern:$0x75316420]
        %v343 = vld.sshfl [vmem:[#allocation1 + $0x38] sm:$0xff pattern:$0x75316420]
        %344 = vst [vmem:[#allocation1] ss:$2 sm:$0xff] %v258
        %v345 = vld.sshfl [vmem:[#allocation1] sm:$0xff pattern:$0x75316420]
        %v346 = vrot.slane %v336, 2
        %v347 = vrot.slane %v337, 2
        %v348 = vrot.slane %v338, 2
        %v349 = vrot.slane %v339, 2
        %v350 = vrot.slane %v340, 2
        %v351 = vrot.slane %v341, 2
        %v352 = vrot.slane %v342, 2
        %v353 = vrot.slane %v343, 2
        %v354 = vrot.slane %v345, 2
        %355 = vrot.lane.b32.xlu0 %v346, 126
        %v356 = vpop.permute.xlu0 %355
        %357 = vrot.lane.b32.xlu0 %v347, 126
        %v358 = vpop.permute.xlu0 %357
        %359 = vrot.lane.b32.xlu0 %v348, 126
        %v360 = vpop.permute.xlu0 %359
        %361 = vrot.lane.b32.xlu0 %v349, 126
        %v362 = vpop.permute.xlu0 %361
        %363 = vrot.lane.b32.xlu0 %v350, 126
        %v364 = vpop.permute.xlu0 %363
        %365 = vrot.lane.b32.xlu0 %v351, 126
        %v366 = vpop.permute.xlu0 %365
        %367 = vrot.lane.b32.xlu0 %v352, 126
        %v368 = vpop.permute.xlu0 %367
        %369 = vrot.lane.b32.xlu0 %v353, 126
        %v370 = vpop.permute.xlu0 %369
        %371 = vrot.lane.b32.xlu0 %v354, 126
        %v372 = vpop.permute.xlu0 %371
        %vm373 = vcmask 1031168
        %v374 = vsel %vm373, %v356, %v358
        %v375 = vsel %vm373, %v358, %v360
        %v376 = vsel %vm373, %v360, %v362
        %v377 = vsel %vm373, %v362, %v364
        %v378 = vsel %vm373, %v364, %v366
        %v379 = vsel %vm373, %v366, %v368
        %v380 = vsel %vm373, %v368, %v370
        %v381 = vsel %vm373, %v370, %v372
        %390 = vst [vmem:[#allocation2] sm:$0xc0] %v374
        %391 = vst [vmem:[#allocation2 + $0x8] sm:$0xc0] %v375
        %392 = vst [vmem:[#allocation2 + $0x10] sm:$0xc0] %v376
        %393 = vst [vmem:[#allocation2 + $0x18] sm:$0xc0] %v377
        %394 = vst [vmem:[#allocation2 + $0x20] sm:$0xc0] %v378
        %395 = vst [vmem:[#allocation2 + $0x28] sm:$0xc0] %v379
        %396 = vst [vmem:[#allocation2 + $0x30] sm:$0xc0] %v380
        %397 = vst [vmem:[#allocation2 + $0x38] sm:$0xc0] %v381
        %398 = vst [vmem:[#allocation2 + $0x40] sm:$0x1] %v374
        %399 = vst [vmem:[#allocation2 + $0x48] sm:$0x1] %v375
        %400 = vst [vmem:[#allocation2 + $0x50] sm:$0x1] %v376
        %401 = vst [vmem:[#allocation2 + $0x58] sm:$0x1] %v377
        %402 = vst [vmem:[#allocation2 + $0x60] sm:$0x1] %v378
        %403 = vst [vmem:[#allocation2 + $0x68] sm:$0x1] %v379
        %404 = vst [vmem:[#allocation2 + $0x70] sm:$0x1] %v380
        %405 = vst [vmem:[#allocation2 + $0x78] sm:$0x1] %v381
        %406 = vst [vmem:[#allocation1] ss:$2 sm:$0xff] %v219
        %s407 = scalar_lea.vmem [#allocation1], 16
        %408 = vst [vmem:[%s407] ss:$2 sm:$0xff] %v220
        %s409 = scalar_lea.vmem [#allocation1], 32
        %410 = vst [vmem:[%s409] ss:$2 sm:$0xff] %v221
        %s411 = scalar_lea.vmem [#allocation1], 48
        %412 = vst [vmem:[%s411] ss:$2 sm:$0xff] %v222
        %v413 = vld.sshfl [vmem:[#allocation1] sm:$0xff pattern:$0x75316420]
        %v414 = vld.sshfl [vmem:[#allocation1 + $0x8] sm:$0xff pattern:$0x75316420]
        %v415 = vld.sshfl [vmem:[#allocation1 + $0x10] sm:$0xff pattern:$0x75316420]
        %v416 = vld.sshfl [vmem:[#allocation1 + $0x18] sm:$0xff pattern:$0x75316420]
        %v417 = vld.sshfl [vmem:[#allocation1 + $0x20] sm:$0xff pattern:$0x75316420]
        %v418 = vld.sshfl [vmem:[#allocation1 + $0x28] sm:$0xff pattern:$0x75316420]
        %v419 = vld.sshfl [vmem:[#allocation1 + $0x30] sm:$0xff pattern:$0x75316420]
        %v420 = vld.sshfl [vmem:[#allocation1 + $0x38] sm:$0xff pattern:$0x75316420]
        %421 = vst [vmem:[#allocation1] ss:$2 sm:$0xff] %v258
        %v422 = vld.sshfl [vmem:[#allocation1] sm:$0xff pattern:$0x75316420]
        %v423 = vrot.slane %v413, 7
        %v424 = vrot.slane %v414, 7
        %v425 = vrot.slane %v415, 7
        %v426 = vrot.slane %v416, 7
        %v427 = vrot.slane %v417, 7
        %v428 = vrot.slane %v418, 7
        %v429 = vrot.slane %v419, 7
        %v430 = vrot.slane %v420, 7
        %v431 = vrot.slane %v422, 7
        %432 = vrot.lane.b32.xlu0 %v423, 125
        %v433 = vpop.permute.xlu0 %432
        %434 = vrot.lane.b32.xlu0 %v424, 125
        %v435 = vpop.permute.xlu0 %434
        %436 = vrot.lane.b32.xlu0 %v425, 125
        %v437 = vpop.permute.xlu0 %436
        %438 = vrot.lane.b32.xlu0 %v426, 125
        %v439 = vpop.permute.xlu0 %438
        %440 = vrot.lane.b32.xlu0 %v427, 125
        %v441 = vpop.permute.xlu0 %440
        %442 = vrot.lane.b32.xlu0 %v428, 125
        %v443 = vpop.permute.xlu0 %442
        %444 = vrot.lane.b32.xlu0 %v429, 125
        %v445 = vpop.permute.xlu0 %444
        %446 = vrot.lane.b32.xlu0 %v430, 125
        %v447 = vpop.permute.xlu0 %446
        %448 = vrot.lane.b32.xlu0 %v431, 125
        %v449 = vpop.permute.xlu0 %448
        %vm450 = vcmask 1022976
        %v451 = vsel %vm450, %v433, %v435
        %v452 = vsel %vm450, %v435, %v437
        %v453 = vsel %vm450, %v437, %v439
        %v454 = vsel %vm450, %v439, %v441
        %v455 = vsel %vm450, %v441, %v443
        %v456 = vsel %vm450, %v443, %v445
        %v457 = vsel %vm450, %v445, %v447
        %v458 = vsel %vm450, %v447, %v449
        %467 = vst [vmem:[#allocation2 + $0x40] sm:$0xe] %v451
        %468 = vst [vmem:[#allocation2 + $0x48] sm:$0xe] %v452
        %469 = vst [vmem:[#allocation2 + $0x50] sm:$0xe] %v453
        %470 = vst [vmem:[#allocation2 + $0x58] sm:$0xe] %v454
        %471 = vst [vmem:[#allocation2 + $0x60] sm:$0xe] %v455
        %472 = vst [vmem:[#allocation2 + $0x68] sm:$0xe] %v456
        %473 = vst [vmem:[#allocation2 + $0x70] sm:$0xe] %v457
        %474 = vst [vmem:[#allocation2 + $0x78] sm:$0xe] %v458
        %s475 = scalar_lea.vmem [#allocation1], 1
        %476 = vst [vmem:[%s475] ss:$2 sm:$0xff] %v219
        %s477 = scalar_lea.vmem [#allocation1], 17
        %478 = vst [vmem:[%s477] ss:$2 sm:$0xff] %v220
        %s479 = scalar_lea.vmem [#allocation1], 33
        %480 = vst [vmem:[%s479] ss:$2 sm:$0xff] %v221
        %s481 = scalar_lea.vmem [#allocation1], 49
        %482 = vst [vmem:[%s481] ss:$2 sm:$0xff] %v222
        %v483 = vld.sshfl [vmem:[#allocation1] sm:$0xff pattern:$0x75316420]
        %v484 = vld.sshfl [vmem:[#allocation1 + $0x8] sm:$0xff pattern:$0x75316420]
        %v485 = vld.sshfl [vmem:[#allocation1 + $0x10] sm:$0xff pattern:$0x75316420]
        %v486 = vld.sshfl [vmem:[#allocation1 + $0x18] sm:$0xff pattern:$0x75316420]
        %v487 = vld.sshfl [vmem:[#allocation1 + $0x20] sm:$0xff pattern:$0x75316420]
        %v488 = vld.sshfl [vmem:[#allocation1 + $0x28] sm:$0xff pattern:$0x75316420]
        %v489 = vld.sshfl [vmem:[#allocation1 + $0x30] sm:$0xff pattern:$0x75316420]
        %v490 = vld.sshfl [vmem:[#allocation1 + $0x38] sm:$0xff pattern:$0x75316420]
        %491 = vst [vmem:[%s475] ss:$2 sm:$0xff] %v258
        %v492 = vld.sshfl [vmem:[#allocation1] sm:$0xff pattern:$0x75316420]
        %493 = vrot.lane.b32.xlu0 %v483, 124
        %v494 = vpop.permute.xlu0 %493
        %495 = vrot.lane.b32.xlu0 %v484, 124
        %v496 = vpop.permute.xlu0 %495
        %497 = vrot.lane.b32.xlu0 %v485, 124
        %v498 = vpop.permute.xlu0 %497
        %499 = vrot.lane.b32.xlu0 %v486, 124
        %v500 = vpop.permute.xlu0 %499
        %501 = vrot.lane.b32.xlu0 %v487, 124
        %v502 = vpop.permute.xlu0 %501
        %503 = vrot.lane.b32.xlu0 %v488, 124
        %v504 = vpop.permute.xlu0 %503
        %505 = vrot.lane.b32.xlu0 %v489, 124
        %v506 = vpop.permute.xlu0 %505
        %507 = vrot.lane.b32.xlu0 %v490, 124
        %v508 = vpop.permute.xlu0 %507
        %509 = vrot.lane.b32.xlu0 %v492, 124
        %v510 = vpop.permute.xlu0 %509
        %vm511 = vcmask 1014784
        %v512 = vsel %vm511, %v494, %v496
        %v513 = vsel %vm511, %v496, %v498
        %v514 = vsel %vm511, %v498, %v500
        %v515 = vsel %vm511, %v500, %v502
        %v516 = vsel %vm511, %v502, %v504
        %v517 = vsel %vm511, %v504, %v506
        %v518 = vsel %vm511, %v506, %v508
        %v519 = vsel %vm511, %v508, %v510
        %528 = vst [vmem:[#allocation2 + $0x40] sm:$0x70] %v512
        %529 = vst [vmem:[#allocation2 + $0x48] sm:$0x70] %v513
        %530 = vst [vmem:[#allocation2 + $0x50] sm:$0x70] %v514
        %531 = vst [vmem:[#allocation2 + $0x58] sm:$0x70] %v515
        %532 = vst [vmem:[#allocation2 + $0x60] sm:$0x70] %v516
        %533 = vst [vmem:[#allocation2 + $0x68] sm:$0x70] %v517
        %534 = vst [vmem:[#allocation2 + $0x70] sm:$0x70] %v518
        %535 = vst [vmem:[#allocation2 + $0x78] sm:$0x70] %v519
        %536 = vst [vmem:[#allocation1] ss:$2 sm:$0xff] %v219
        %s537 = scalar_lea.vmem [#allocation1], 16
        %538 = vst [vmem:[%s537] ss:$2 sm:$0xff] %v220
        %s539 = scalar_lea.vmem [#allocation1], 32
        %540 = vst [vmem:[%s539] ss:$2 sm:$0xff] %v221
        %s541 = scalar_lea.vmem [#allocation1], 48
        %542 = vst [vmem:[%s541] ss:$2 sm:$0xff] %v222
        %v543 = vld.sshfl [vmem:[#allocation1] sm:$0xff pattern:$0x75316420]
        %v544 = vld.sshfl [vmem:[#allocation1 + $0x8] sm:$0xff pattern:$0x75316420]
        %v545 = vld.sshfl [vmem:[#allocation1 + $0x10] sm:$0xff pattern:$0x75316420]
        %v546 = vld.sshfl [vmem:[#allocation1 + $0x18] sm:$0xff pattern:$0x75316420]
        %v547 = vld.sshfl [vmem:[#allocation1 + $0x20] sm:$0xff pattern:$0x75316420]
        %v548 = vld.sshfl [vmem:[#allocation1 + $0x28] sm:$0xff pattern:$0x75316420]
        %v549 = vld.sshfl [vmem:[#allocation1 + $0x30] sm:$0xff pattern:$0x75316420]
        %v550 = vld.sshfl [vmem:[#allocation1 + $0x38] sm:$0xff pattern:$0x75316420]
        %551 = vst [vmem:[#allocation1] ss:$2 sm:$0xff] %v258
        %v552 = vld.sshfl [vmem:[#allocation1] sm:$0xff pattern:$0x75316420]
        %v553 = vrot.slane %v543, 1
        %v554 = vrot.slane %v544, 1
        %v555 = vrot.slane %v545, 1
        %v556 = vrot.slane %v546, 1
        %v557 = vrot.slane %v547, 1
        %v558 = vrot.slane %v548, 1
        %v559 = vrot.slane %v549, 1
        %v560 = vrot.slane %v550, 1
        %v561 = vrot.slane %v552, 1
        %562 = vrot.lane.b32.xlu0 %v553, 96
        %v563 = vpop.permute.xlu0 %562
        %564 = vrot.lane.b32.xlu0 %v554, 96
        %v565 = vpop.permute.xlu0 %564
        %566 = vrot.lane.b32.xlu0 %v555, 96
        %v567 = vpop.permute.xlu0 %566
        %568 = vrot.lane.b32.xlu0 %v556, 96
        %v569 = vpop.permute.xlu0 %568
        %570 = vrot.lane.b32.xlu0 %v557, 96
        %v571 = vpop.permute.xlu0 %570
        %572 = vrot.lane.b32.xlu0 %v558, 96
        %v573 = vpop.permute.xlu0 %572
        %574 = vrot.lane.b32.xlu0 %v559, 96
        %v575 = vpop.permute.xlu0 %574
        %576 = vrot.lane.b32.xlu0 %v560, 96
        %v577 = vpop.permute.xlu0 %576
        %578 = vrot.lane.b32.xlu0 %v561, 96
        %v579 = vpop.permute.xlu0 %578
        %vm580 = vcmask 785408
        %v581 = vsel %vm580, %v563, %v565
        %v582 = vsel %vm580, %v565, %v567
        %v583 = vsel %vm580, %v567, %v569
        %v584 = vsel %vm580, %v569, %v571
        %v585 = vsel %vm580, %v571, %v573
        %v586 = vsel %vm580, %v573, %v575
        %v587 = vsel %vm580, %v575, %v577
        %v588 = vsel %vm580, %v577, %v579
        %597 = vst [vmem:[#allocation2 + $0x40] sm:$0x80] %v581
        %598 = vst [vmem:[#allocation2 + $0x48] sm:$0x80] %v582
        %599 = vst [vmem:[#allocation2 + $0x50] sm:$0x80] %v583
        %600 = vst [vmem:[#allocation2 + $0x58] sm:$0x80] %v584
        %601 = vst [vmem:[#allocation2 + $0x60] sm:$0x80] %v585
        %602 = vst [vmem:[#allocation2 + $0x68] sm:$0x80] %v586
        %603 = vst [vmem:[#allocation2 + $0x70] sm:$0x80] %v587
        %604 = vst [vmem:[#allocation2 + $0x78] sm:$0x80] %v588
        %605 = vst [vmem:[#allocation2 + $0x80] sm:$0x3] %v581
        %606 = vst [vmem:[#allocation2 + $0x88] sm:$0x3] %v582
        %607 = vst [vmem:[#allocation2 + $0x90] sm:$0x3] %v583
        %608 = vst [vmem:[#allocation2 + $0x98] sm:$0x3] %v584
        %609 = vst [vmem:[#allocation2 + $0xa0] sm:$0x3] %v585
        %610 = vst [vmem:[#allocation2 + $0xa8] sm:$0x3] %v586
        %611 = vst [vmem:[#allocation2 + $0xb0] sm:$0x3] %v587
        %612 = vst [vmem:[#allocation2 + $0xb8] sm:$0x3] %v588
        %613 = vst [vmem:[#allocation1] ss:$2 sm:$0xff] %v219
        %s614 = scalar_lea.vmem [#allocation1], 16
        %615 = vst [vmem:[%s614] ss:$2 sm:$0xff] %v220
        %s616 = scalar_lea.vmem [#allocation1], 32
        %617 = vst [vmem:[%s616] ss:$2 sm:$0xff] %v221
        %s618 = scalar_lea.vmem [#allocation1], 48
        %619 = vst [vmem:[%s618] ss:$2 sm:$0xff] %v222
        %v620 = vld.sshfl [vmem:[#allocation1] sm:$0xff pattern:$0x75316420]
        %v621 = vld.sshfl [vmem:[#allocation1 + $0x8] sm:$0xff pattern:$0x75316420]
        %v622 = vld.sshfl [vmem:[#allocation1 + $0x10] sm:$0xff pattern:$0x75316420]
        %v623 = vld.sshfl [vmem:[#allocation1 + $0x18] sm:$0xff pattern:$0x75316420]
        %v624 = vld.sshfl [vmem:[#allocation1 + $0x20] sm:$0xff pattern:$0x75316420]
        %v625 = vld.sshfl [vmem:[#allocation1 + $0x28] sm:$0xff pattern:$0x75316420]
        %v626 = vld.sshfl [vmem:[#allocation1 + $0x30] sm:$0xff pattern:$0x75316420]
        %v627 = vld.sshfl [vmem:[#allocation1 + $0x38] sm:$0xff pattern:$0x75316420]
        %628 = vst [vmem:[#allocation1] ss:$2 sm:$0xff] %v258
        %v629 = vld.sshfl [vmem:[#allocation1] sm:$0xff pattern:$0x75316420]
        %v630 = vrot.slane %v620, 6
        %v631 = vrot.slane %v621, 6
        %v632 = vrot.slane %v622, 6
        %v633 = vrot.slane %v623, 6
        %v634 = vrot.slane %v624, 6
        %v635 = vrot.slane %v625, 6
        %v636 = vrot.slane %v626, 6
        %v637 = vrot.slane %v627, 6
        %v638 = vrot.slane %v629, 6
        %639 = vrot.lane.b32.xlu0 %v630, 95
        %v640 = vpop.permute.xlu0 %639
        %641 = vrot.lane.b32.xlu0 %v631, 95
        %v642 = vpop.permute.xlu0 %641
        %643 = vrot.lane.b32.xlu0 %v632, 95
        %v644 = vpop.permute.xlu0 %643
        %645 = vrot.lane.b32.xlu0 %v633, 95
        %v646 = vpop.permute.xlu0 %645
        %647 = vrot.lane.b32.xlu0 %v634, 95
        %v648 = vpop.permute.xlu0 %647
        %649 = vrot.lane.b32.xlu0 %v635, 95
        %v650 = vpop.permute.xlu0 %649
        %651 = vrot.lane.b32.xlu0 %v636, 95
        %v652 = vpop.permute.xlu0 %651
        %653 = vrot.lane.b32.xlu0 %v637, 95
        %v654 = vpop.permute.xlu0 %653
        %655 = vrot.lane.b32.xlu0 %v638, 95
        %v656 = vpop.permute.xlu0 %655
        %vm657 = vcmask 777216
        %v658 = vsel %vm657, %v640, %v642
        %v659 = vsel %vm657, %v642, %v644
        %v660 = vsel %vm657, %v644, %v646
        %v661 = vsel %vm657, %v646, %v648
        %v662 = vsel %vm657, %v648, %v650
        %v663 = vsel %vm657, %v650, %v652
        %v664 = vsel %vm657, %v652, %v654
        %v665 = vsel %vm657, %v654, %v656
        %674 = vst [vmem:[#allocation2 + $0x80] sm:$0x1c] %v658
        %675 = vst [vmem:[#allocation2 + $0x88] sm:$0x1c] %v659
        %676 = vst [vmem:[#allocation2 + $0x90] sm:$0x1c] %v660
        %677 = vst [vmem:[#allocation2 + $0x98] sm:$0x1c] %v661
        %678 = vst [vmem:[#allocation2 + $0xa0] sm:$0x1c] %v662
        %679 = vst [vmem:[#allocation2 + $0xa8] sm:$0x1c] %v663
        %680 = vst [vmem:[#allocation2 + $0xb0] sm:$0x1c] %v664
        %681 = vst [vmem:[#allocation2 + $0xb8] sm:$0x1c] %v665
        %682 = vst [vmem:[#allocation1] ss:$2 sm:$0xff] %v219
        %s683 = scalar_lea.vmem [#allocation1], 16
        %684 = vst [vmem:[%s683] ss:$2 sm:$0xff] %v220
        %s685 = scalar_lea.vmem [#allocation1], 32
        %686 = vst [vmem:[%s685] ss:$2 sm:$0xff] %v221
        %s687 = scalar_lea.vmem [#allocation1], 48
        %688 = vst [vmem:[%s687] ss:$2 sm:$0xff] %v222
        %v689 = vld.sshfl [vmem:[#allocation1] sm:$0xff pattern:$0x75316420]
        %v690 = vld.sshfl [vmem:[#allocation1 + $0x8] sm:$0xff pattern:$0x75316420]
        %v691 = vld.sshfl [vmem:[#allocation1 + $0x10] sm:$0xff pattern:$0x75316420]
        %v692 = vld.sshfl [vmem:[#allocation1 + $0x18] sm:$0xff pattern:$0x75316420]
        %v693 = vld.sshfl [vmem:[#allocation1 + $0x20] sm:$0xff pattern:$0x75316420]
        %v694 = vld.sshfl [vmem:[#allocation1 + $0x28] sm:$0xff pattern:$0x75316420]
        %v695 = vld.sshfl [vmem:[#allocation1 + $0x30] sm:$0xff pattern:$0x75316420]
        %v696 = vld.sshfl [vmem:[#allocation1 + $0x38] sm:$0xff pattern:$0x75316420]
        %697 = vst [vmem:[#allocation1] ss:$2 sm:$0xff] %v258
        %v698 = vld.sshfl [vmem:[#allocation1] sm:$0xff pattern:$0x75316420]
        %v699 = vrot.slane %v689, 3
        %v700 = vrot.slane %v690, 3
        %v701 = vrot.slane %v691, 3
        %v702 = vrot.slane %v692, 3
        %v703 = vrot.slane %v693, 3
        %v704 = vrot.slane %v694, 3
        %v705 = vrot.slane %v695, 3
        %v706 = vrot.slane %v696, 3
        %v707 = vrot.slane %v698, 3
        %708 = vrot.lane.b32.xlu0 %v699, 94
        %v709 = vpop.permute.xlu0 %708
        %710 = vrot.lane.b32.xlu0 %v700, 94
        %v711 = vpop.permute.xlu0 %710
        %712 = vrot.lane.b32.xlu0 %v701, 94
        %v713 = vpop.permute.xlu0 %712
        %714 = vrot.lane.b32.xlu0 %v702, 94
        %v715 = vpop.permute.xlu0 %714
        %716 = vrot.lane.b32.xlu0 %v703, 94
        %v717 = vpop.permute.xlu0 %716
        %718 = vrot.lane.b32.xlu0 %v704, 94
        %v719 = vpop.permute.xlu0 %718
        %720 = vrot.lane.b32.xlu0 %v705, 94
        %v721 = vpop.permute.xlu0 %720
        %722 = vrot.lane.b32.xlu0 %v706, 94
        %v723 = vpop.permute.xlu0 %722
        %724 = vrot.lane.b32.xlu0 %v707, 94
        %v725 = vpop.permute.xlu0 %724
        %vm726 = vcmask 769024
        %v727 = vsel %vm726, %v709, %v711
        %v728 = vsel %vm726, %v711, %v713
        %v729 = vsel %vm726, %v713, %v715
        %v730 = vsel %vm726, %v715, %v717
        %v731 = vsel %vm726, %v717, %v719
        %v732 = vsel %vm726, %v719, %v721
        %v733 = vsel %vm726, %v721, %v723
        %v734 = vsel %vm726, %v723, %v725
        %743 = vst [vmem:[#allocation2 + $0x80] sm:$0xe0] %v727
        %744 = vst [vmem:[#allocation2 + $0x88] sm:$0xe0] %v728
        %745 = vst [vmem:[#allocation2 + $0x90] sm:$0xe0] %v729
        %746 = vst [vmem:[#allocation2 + $0x98] sm:$0xe0] %v730
        %747 = vst [vmem:[#allocation2 + $0xa0] sm:$0xe0] %v731
        %748 = vst [vmem:[#allocation2 + $0xa8] sm:$0xe0] %v732
        %749 = vst [vmem:[#allocation2 + $0xb0] sm:$0xe0] %v733
        %750 = vst [vmem:[#allocation2 + $0xb8] sm:$0xe0] %v734
        %751 = vst [vmem:[#allocation1] ss:$2 sm:$0xff] %v219
        %s752 = scalar_lea.vmem [#allocation1], 16
        %753 = vst [vmem:[%s752] ss:$2 sm:$0xff] %v220
        %s754 = scalar_lea.vmem [#allocation1], 32
        %755 = vst [vmem:[%s754] ss:$2 sm:$0xff] %v221
        %s756 = scalar_lea.vmem [#allocation1], 48
        %757 = vst [vmem:[%s756] ss:$2 sm:$0xff] %v222
        %v758 = vld.sshfl [vmem:[#allocation1] sm:$0xff pattern:$0x75316420]
        %v759 = vld.sshfl [vmem:[#allocation1 + $0x8] sm:$0xff pattern:$0x75316420]
        %v760 = vld.sshfl [vmem:[#allocation1 + $0x10] sm:$0xff pattern:$0x75316420]
        %v761 = vld.sshfl [vmem:[#allocation1 + $0x18] sm:$0xff pattern:$0x75316420]
        %v762 = vld.sshfl [vmem:[#allocation1 + $0x20] sm:$0xff pattern:$0x75316420]
        %v763 = vld.sshfl [vmem:[#allocation1 + $0x28] sm:$0xff pattern:$0x75316420]
        %v764 = vld.sshfl [vmem:[#allocation1 + $0x30] sm:$0xff pattern:$0x75316420]
        %v765 = vld.sshfl [vmem:[#allocation1 + $0x38] sm:$0xff pattern:$0x75316420]
        %766 = vst [vmem:[#allocation1] ss:$2 sm:$0xff] %v258
        %v767 = vld.sshfl [vmem:[#allocation1] sm:$0xff pattern:$0x75316420]
        %768 = vrot.lane.b32.xlu0 %v758, 93
        %v769 = vpop.permute.xlu0 %768
        %770 = vrot.lane.b32.xlu0 %v759, 93
        %v771 = vpop.permute.xlu0 %770
        %772 = vrot.lane.b32.xlu0 %v760, 93
        %v773 = vpop.permute.xlu0 %772
        %774 = vrot.lane.b32.xlu0 %v761, 93
        %v775 = vpop.permute.xlu0 %774
        %776 = vrot.lane.b32.xlu0 %v762, 93
        %v777 = vpop.permute.xlu0 %776
        %778 = vrot.lane.b32.xlu0 %v763, 93
        %v779 = vpop.permute.xlu0 %778
        %780 = vrot.lane.b32.xlu0 %v764, 93
        %v781 = vpop.permute.xlu0 %780
        %782 = vrot.lane.b32.xlu0 %v765, 93
        %v783 = vpop.permute.xlu0 %782
        %784 = vrot.lane.b32.xlu0 %v767, 93
        %v785 = vpop.permute.xlu0 %784
        %vm786 = vcmask 760832
        %v787 = vsel %vm786, %v769, %v771
        %v788 = vsel %vm786, %v771, %v773
        %v789 = vsel %vm786, %v773, %v775
        %v790 = vsel %vm786, %v775, %v777
        %v791 = vsel %vm786, %v777, %v779
        %v792 = vsel %vm786, %v779, %v781
        %v793 = vsel %vm786, %v781, %v783
        %v794 = vsel %vm786, %v783, %v785
        %803 = vst [vmem:[#allocation2 + $0xc0] sm:$0x7] %v787
        %804 = vst [vmem:[#allocation2 + $0xc8] sm:$0x7] %v788
        %805 = vst [vmem:[#allocation2 + $0xd0] sm:$0x7] %v789
        %806 = vst [vmem:[#allocation2 + $0xd8] sm:$0x7] %v790
        %807 = vst [vmem:[#allocation2 + $0xe0] sm:$0x7] %v791
        %808 = vst [vmem:[#allocation2 + $0xe8] sm:$0x7] %v792
        %809 = vst [vmem:[#allocation2 + $0xf0] sm:$0x7] %v793
        %810 = vst [vmem:[#allocation2 + $0xf8] sm:$0x7] %v794
        %811 = vst [vmem:[#allocation1] ss:$2 sm:$0xff] %v219
        %s812 = scalar_lea.vmem [#allocation1], 16
        %813 = vst [vmem:[%s812] ss:$2 sm:$0xff] %v220
        %s814 = scalar_lea.vmem [#allocation1], 32
        %815 = vst [vmem:[%s814] ss:$2 sm:$0xff] %v221
        %s816 = scalar_lea.vmem [#allocation1], 48
        %817 = vst [vmem:[%s816] ss:$2 sm:$0xff] %v222
        %v818 = vld.sshfl [vmem:[#allocation1] sm:$0xff pattern:$0x75316420]
        %v819 = vld.sshfl [vmem:[#allocation1 + $0x8] sm:$0xff pattern:$0x75316420]
        %v820 = vld.sshfl [vmem:[#allocation1 + $0x10] sm:$0xff pattern:$0x75316420]
        %v821 = vld.sshfl [vmem:[#allocation1 + $0x18] sm:$0xff pattern:$0x75316420]
        %v822 = vld.sshfl [vmem:[#allocation1 + $0x20] sm:$0xff pattern:$0x75316420]
        %v823 = vld.sshfl [vmem:[#allocation1 + $0x28] sm:$0xff pattern:$0x75316420]
        %v824 = vld.sshfl [vmem:[#allocation1 + $0x30] sm:$0xff pattern:$0x75316420]
        %v825 = vld.sshfl [vmem:[#allocation1 + $0x38] sm:$0xff pattern:$0x75316420]
        %826 = vst [vmem:[#allocation1] ss:$2 sm:$0xff] %v258
        %v827 = vld.sshfl [vmem:[#allocation1] sm:$0xff pattern:$0x75316420]
        %v828 = vrot.slane %v818, 5
        %v829 = vrot.slane %v819, 5
        %v830 = vrot.slane %v820, 5
        %v831 = vrot.slane %v821, 5
        %v832 = vrot.slane %v822, 5
        %v833 = vrot.slane %v823, 5
        %v834 = vrot.slane %v824, 5
        %v835 = vrot.slane %v825, 5
        %v836 = vrot.slane %v827, 5
        %837 = vrot.lane.b32.xlu0 %v828, 92
        %v838 = vpop.permute.xlu0 %837
        %839 = vrot.lane.b32.xlu0 %v829, 92
        %v840 = vpop.permute.xlu0 %839
        %841 = vrot.lane.b32.xlu0 %v830, 92
        %v842 = vpop.permute.xlu0 %841
        %843 = vrot.lane.b32.xlu0 %v831, 92
        %v844 = vpop.permute.xlu0 %843
        %845 = vrot.lane.b32.xlu0 %v832, 92
        %v846 = vpop.permute.xlu0 %845
        %847 = vrot.lane.b32.xlu0 %v833, 92
        %v848 = vpop.permute.xlu0 %847
        %849 = vrot.lane.b32.xlu0 %v834, 92
        %v850 = vpop.permute.xlu0 %849
        %851 = vrot.lane.b32.xlu0 %v835, 92
        %v852 = vpop.permute.xlu0 %851
        %853 = vrot.lane.b32.xlu0 %v836, 92
        %v854 = vpop.permute.xlu0 %853
        %vm855 = vcmask 752640
        %v856 = vsel %vm855, %v838, %v840
        %v857 = vsel %vm855, %v840, %v842
        %v858 = vsel %vm855, %v842, %v844
        %v859 = vsel %vm855, %v844, %v846
        %v860 = vsel %vm855, %v846, %v848
        %v861 = vsel %vm855, %v848, %v850
        %v862 = vsel %vm855, %v850, %v852
        %v863 = vsel %vm855, %v852, %v854
        %872 = vst [vmem:[#allocation2 + $0xc0] sm:$0x38] %v856
        %873 = vst [vmem:[#allocation2 + $0xc8] sm:$0x38] %v857
        %874 = vst [vmem:[#allocation2 + $0xd0] sm:$0x38] %v858
        %875 = vst [vmem:[#allocation2 + $0xd8] sm:$0x38] %v859
        %876 = vst [vmem:[#allocation2 + $0xe0] sm:$0x38] %v860
        %877 = vst [vmem:[#allocation2 + $0xe8] sm:$0x38] %v861
        %878 = vst [vmem:[#allocation2 + $0xf0] sm:$0x38] %v862
        %879 = vst [vmem:[#allocation2 + $0xf8] sm:$0x38] %v863
        %880 = vst [vmem:[#allocation1] ss:$2 sm:$0xff] %v219
        %s881 = scalar_lea.vmem [#allocation1], 16
        %882 = vst [vmem:[%s881] ss:$2 sm:$0xff] %v220
        %s883 = scalar_lea.vmem [#allocation1], 32
        %884 = vst [vmem:[%s883] ss:$2 sm:$0xff] %v221
        %s885 = scalar_lea.vmem [#allocation1], 48
        %886 = vst [vmem:[%s885] ss:$2 sm:$0xff] %v222
        %v887 = vld.sshfl [vmem:[#allocation1] sm:$0xff pattern:$0x75316420]
        %v888 = vld.sshfl [vmem:[#allocation1 + $0x8] sm:$0xff pattern:$0x75316420]
        %v889 = vld.sshfl [vmem:[#allocation1 + $0x10] sm:$0xff pattern:$0x75316420]
        %v890 = vld.sshfl [vmem:[#allocation1 + $0x18] sm:$0xff pattern:$0x75316420]
        %v891 = vld.sshfl [vmem:[#allocation1 + $0x20] sm:$0xff pattern:$0x75316420]
        %v892 = vld.sshfl [vmem:[#allocation1 + $0x28] sm:$0xff pattern:$0x75316420]
        %v893 = vld.sshfl [vmem:[#allocation1 + $0x30] sm:$0xff pattern:$0x75316420]
        %v894 = vld.sshfl [vmem:[#allocation1 + $0x38] sm:$0xff pattern:$0x75316420]
        %895 = vst [vmem:[#allocation1] ss:$2 sm:$0xff] %v258
        %v896 = vld.sshfl [vmem:[#allocation1] sm:$0xff pattern:$0x75316420]
        %v897 = vrot.slane %v887, 2
        %v898 = vrot.slane %v888, 2
        %v899 = vrot.slane %v889, 2
        %v900 = vrot.slane %v890, 2
        %v901 = vrot.slane %v891, 2
        %v902 = vrot.slane %v892, 2
        %v903 = vrot.slane %v893, 2
        %v904 = vrot.slane %v894, 2
        %v905 = vrot.slane %v896, 2
        %906 = vrot.lane.b32.xlu0 %v897, 64
        %v907 = vpop.permute.xlu0 %906
        %908 = vrot.lane.b32.xlu0 %v898, 64
        %v909 = vpop.permute.xlu0 %908
        %910 = vrot.lane.b32.xlu0 %v899, 64
        %v911 = vpop.permute.xlu0 %910
        %912 = vrot.lane.b32.xlu0 %v900, 64
        %v913 = vpop.permute.xlu0 %912
        %914 = vrot.lane.b32.xlu0 %v901, 64
        %v915 = vpop.permute.xlu0 %914
        %916 = vrot.lane.b32.xlu0 %v902, 64
        %v917 = vpop.permute.xlu0 %916
        %918 = vrot.lane.b32.xlu0 %v903, 64
        %v919 = vpop.permute.xlu0 %918
        %920 = vrot.lane.b32.xlu0 %v904, 64
        %v921 = vpop.permute.xlu0 %920
        %922 = vrot.lane.b32.xlu0 %v905, 64
        %v923 = vpop.permute.xlu0 %922
        %vm924 = vcmask 523264
        %v925 = vsel %vm924, %v907, %v909
        %v926 = vsel %vm924, %v909, %v911
        %v927 = vsel %vm924, %v911, %v913
        %v928 = vsel %vm924, %v913, %v915
        %v929 = vsel %vm924, %v915, %v917
        %v930 = vsel %vm924, %v917, %v919
        %v931 = vsel %vm924, %v919, %v921
        %v932 = vsel %vm924, %v921, %v923
        %941 = vst [vmem:[#allocation2 + $0xc0] sm:$0xc0] %v925
        %942 = vst [vmem:[#allocation2 + $0xc8] sm:$0xc0] %v926
        %943 = vst [vmem:[#allocation2 + $0xd0] sm:$0xc0] %v927
        %944 = vst [vmem:[#allocation2 + $0xd8] sm:$0xc0] %v928
        %945 = vst [vmem:[#allocation2 + $0xe0] sm:$0xc0] %v929
        %946 = vst [vmem:[#allocation2 + $0xe8] sm:$0xc0] %v930
        %947 = vst [vmem:[#allocation2 + $0xf0] sm:$0xc0] %v931
        %948 = vst [vmem:[#allocation2 + $0xf8] sm:$0xc0] %v932
        %949 = vst [vmem:[#allocation2 + $0x100] sm:$0x1] %v925
        %950 = vst [vmem:[#allocation2 + $0x108] sm:$0x1] %v926
        %951 = vst [vmem:[#allocation2 + $0x110] sm:$0x1] %v927
        %952 = vst [vmem:[#allocation2 + $0x118] sm:$0x1] %v928
        %953 = vst [vmem:[#allocation2 + $0x120] sm:$0x1] %v929
        %954 = vst [vmem:[#allocation2 + $0x128] sm:$0x1] %v930
        %955 = vst [vmem:[#allocation2 + $0x130] sm:$0x1] %v931
        %956 = vst [vmem:[#allocation2 + $0x138] sm:$0x1] %v932
        %957 = vst [vmem:[#allocation1] ss:$2 sm:$0xff] %v219
        %s958 = scalar_lea.vmem [#allocation1], 16
        %959 = vst [vmem:[%s958] ss:$2 sm:$0xff] %v220
        %s960 = scalar_lea.vmem [#allocation1], 32
        %961 = vst [vmem:[%s960] ss:$2 sm:$0xff] %v221
        %s962 = scalar_lea.vmem [#allocation1], 48
        %963 = vst [vmem:[%s962] ss:$2 sm:$0xff] %v222
        %v964 = vld.sshfl [vmem:[#allocation1] sm:$0xff pattern:$0x75316420]
        %v965 = vld.sshfl [vmem:[#allocation1 + $0x8] sm:$0xff pattern:$0x75316420]
        %v966 = vld.sshfl [vmem:[#allocation1 + $0x10] sm:$0xff pattern:$0x75316420]
        %v967 = vld.sshfl [vmem:[#allocation1 + $0x18] sm:$0xff pattern:$0x75316420]
        %v968 = vld.sshfl [vmem:[#allocation1 + $0x20] sm:$0xff pattern:$0x75316420]
        %v969 = vld.sshfl [vmem:[#allocation1 + $0x28] sm:$0xff pattern:$0x75316420]
        %v970 = vld.sshfl [vmem:[#allocation1 + $0x30] sm:$0xff pattern:$0x75316420]
        %v971 = vld.sshfl [vmem:[#allocation1 + $0x38] sm:$0xff pattern:$0x75316420]
        %972 = vst [vmem:[#allocation1] ss:$2 sm:$0xff] %v258
        %v973 = vld.sshfl [vmem:[#allocation1] sm:$0xff pattern:$0x75316420]
        %v974 = vrot.slane %v964, 7
        %v975 = vrot.slane %v965, 7
        %v976 = vrot.slane %v966, 7
        %v977 = vrot.slane %v967, 7
        %v978 = vrot.slane %v968, 7
        %v979 = vrot.slane %v969, 7
        %v980 = vrot.slane %v970, 7
        %v981 = vrot.slane %v971, 7
        %v982 = vrot.slane %v973, 7
        %983 = vrot.lane.b32.xlu0 %v974, 63
        %v984 = vpop.permute.xlu0 %983
        %985 = vrot.lane.b32.xlu0 %v975, 63
        %v986 = vpop.permute.xlu0 %985
        %987 = vrot.lane.b32.xlu0 %v976, 63
        %v988 = vpop.permute.xlu0 %987
        %989 = vrot.lane.b32.xlu0 %v977, 63
        %v990 = vpop.permute.xlu0 %989
        %991 = vrot.lane.b32.xlu0 %v978, 63
        %v992 = vpop.permute.xlu0 %991
        %993 = vrot.lane.b32.xlu0 %v979, 63
        %v994 = vpop.permute.xlu0 %993
        %995 = vrot.lane.b32.xlu0 %v980, 63
        %v996 = vpop.permute.xlu0 %995
        %997 = vrot.lane.b32.xlu0 %v981, 63
        %v998 = vpop.permute.xlu0 %997
        %999 = vrot.lane.b32.xlu0 %v982, 63
        %v1000 = vpop.permute.xlu0 %999
        %vm1001 = vcmask 515072
        %v1002 = vsel %vm1001, %v984, %v986
        %v1003 = vsel %vm1001, %v986, %v988
        %v1004 = vsel %vm1001, %v988, %v990
        %v1005 = vsel %vm1001, %v990, %v992
        %v1006 = vsel %vm1001, %v992, %v994
        %v1007 = vsel %vm1001, %v994, %v996
        %v1008 = vsel %vm1001, %v996, %v998
        %v1009 = vsel %vm1001, %v998, %v1000
        %1018 = vst [vmem:[#allocation2 + $0x100] sm:$0xe] %v1002
        %1019 = vst [vmem:[#allocation2 + $0x108] sm:$0xe] %v1003
        %1020 = vst [vmem:[#allocation2 + $0x110] sm:$0xe] %v1004
        %1021 = vst [vmem:[#allocation2 + $0x118] sm:$0xe] %v1005
        %1022 = vst [vmem:[#allocation2 + $0x120] sm:$0xe] %v1006
        %1023 = vst [vmem:[#allocation2 + $0x128] sm:$0xe] %v1007
        %1024 = vst [vmem:[#allocation2 + $0x130] sm:$0xe] %v1008
        %1025 = vst [vmem:[#allocation2 + $0x138] sm:$0xe] %v1009
        %s1026 = scalar_lea.vmem [#allocation1], 1
        %1027 = vst [vmem:[%s1026] ss:$2 sm:$0xff] %v219
        %s1028 = scalar_lea.vmem [#allocation1], 17
        %1029 = vst [vmem:[%s1028] ss:$2 sm:$0xff] %v220
        %s1030 = scalar_lea.vmem [#allocation1], 33
        %1031 = vst [vmem:[%s1030] ss:$2 sm:$0xff] %v221
        %s1032 = scalar_lea.vmem [#allocation1], 49
        %1033 = vst [vmem:[%s1032] ss:$2 sm:$0xff] %v222
        %v1034 = vld.sshfl [vmem:[#allocation1] sm:$0xff pattern:$0x75316420]
        %v1035 = vld.sshfl [vmem:[#allocation1 + $0x8] sm:$0xff pattern:$0x75316420]
        %v1036 = vld.sshfl [vmem:[#allocation1 + $0x10] sm:$0xff pattern:$0x75316420]
        %v1037 = vld.sshfl [vmem:[#allocation1 + $0x18] sm:$0xff pattern:$0x75316420]
        %v1038 = vld.sshfl [vmem:[#allocation1 + $0x20] sm:$0xff pattern:$0x75316420]
        %v1039 = vld.sshfl [vmem:[#allocation1 + $0x28] sm:$0xff pattern:$0x75316420]
        %v1040 = vld.sshfl [vmem:[#allocation1 + $0x30] sm:$0xff pattern:$0x75316420]
        %v1041 = vld.sshfl [vmem:[#allocation1 + $0x38] sm:$0xff pattern:$0x75316420]
        %1042 = vst [vmem:[%s1026] ss:$2 sm:$0xff] %v258
        %v1043 = vld.sshfl [vmem:[#allocation1] sm:$0xff pattern:$0x75316420]
        %1044 = vrot.lane.b32.xlu0 %v1034, 62
        %v1045 = vpop.permute.xlu0 %1044
        %1046 = vrot.lane.b32.xlu0 %v1035, 62
        %v1047 = vpop.permute.xlu0 %1046
        %1048 = vrot.lane.b32.xlu0 %v1036, 62
        %v1049 = vpop.permute.xlu0 %1048
        %1050 = vrot.lane.b32.xlu0 %v1037, 62
        %v1051 = vpop.permute.xlu0 %1050
        %1052 = vrot.lane.b32.xlu0 %v1038, 62
        %v1053 = vpop.permute.xlu0 %1052
        %1054 = vrot.lane.b32.xlu0 %v1039, 62
        %v1055 = vpop.permute.xlu0 %1054
        %1056 = vrot.lane.b32.xlu0 %v1040, 62
        %v1057 = vpop.permute.xlu0 %1056
        %1058 = vrot.lane.b32.xlu0 %v1041, 62
        %v1059 = vpop.permute.xlu0 %1058
        %1060 = vrot.lane.b32.xlu0 %v1043, 62
        %v1061 = vpop.permute.xlu0 %1060
        %vm1062 = vcmask 506880
        %v1063 = vsel %vm1062, %v1045, %v1047
        %v1064 = vsel %vm1062, %v1047, %v1049
        %v1065 = vsel %vm1062, %v1049, %v1051
        %v1066 = vsel %vm1062, %v1051, %v1053
        %v1067 = vsel %vm1062, %v1053, %v1055
        %v1068 = vsel %vm1062, %v1055, %v1057
        %v1069 = vsel %vm1062, %v1057, %v1059
        %v1070 = vsel %vm1062, %v1059, %v1061
        %1079 = vst [vmem:[#allocation2 + $0x100] sm:$0x70] %v1063
        %1080 = vst [vmem:[#allocation2 + $0x108] sm:$0x70] %v1064
        %1081 = vst [vmem:[#allocation2 + $0x110] sm:$0x70] %v1065
        %1082 = vst [vmem:[#allocation2 + $0x118] sm:$0x70] %v1066
        %1083 = vst [vmem:[#allocation2 + $0x120] sm:$0x70] %v1067
        %1084 = vst [vmem:[#allocation2 + $0x128] sm:$0x70] %v1068
        %1085 = vst [vmem:[#allocation2 + $0x130] sm:$0x70] %v1069
        %1086 = vst [vmem:[#allocation2 + $0x138] sm:$0x70] %v1070
        %1087 = vst [vmem:[#allocation1] ss:$2 sm:$0xff] %v219
        %s1088 = scalar_lea.vmem [#allocation1], 16
        %1089 = vst [vmem:[%s1088] ss:$2 sm:$0xff] %v220
        %s1090 = scalar_lea.vmem [#allocation1], 32
        %1091 = vst [vmem:[%s1090] ss:$2 sm:$0xff] %v221
        %s1092 = scalar_lea.vmem [#allocation1], 48
        %1093 = vst [vmem:[%s1092] ss:$2 sm:$0xff] %v222
        %v1094 = vld.sshfl [vmem:[#allocation1] sm:$0xff pattern:$0x75316420]
        %v1095 = vld.sshfl [vmem:[#allocation1 + $0x8] sm:$0xff pattern:$0x75316420]
        %v1096 = vld.sshfl [vmem:[#allocation1 + $0x10] sm:$0xff pattern:$0x75316420]
        %v1097 = vld.sshfl [vmem:[#allocation1 + $0x18] sm:$0xff pattern:$0x75316420]
        %v1098 = vld.sshfl [vmem:[#allocation1 + $0x20] sm:$0xff pattern:$0x75316420]
        %v1099 = vld.sshfl [vmem:[#allocation1 + $0x28] sm:$0xff pattern:$0x75316420]
        %v1100 = vld.sshfl [vmem:[#allocation1 + $0x30] sm:$0xff pattern:$0x75316420]
        %v1101 = vld.sshfl [vmem:[#allocation1 + $0x38] sm:$0xff pattern:$0x75316420]
        %1102 = vst [vmem:[#allocation1] ss:$2 sm:$0xff] %v258
        %v1103 = vld.sshfl [vmem:[#allocation1] sm:$0xff pattern:$0x75316420]
        %v1104 = vrot.slane %v1094, 1
        %v1105 = vrot.slane %v1095, 1
        %v1106 = vrot.slane %v1096, 1
        %v1107 = vrot.slane %v1097, 1
        %v1108 = vrot.slane %v1098, 1
        %v1109 = vrot.slane %v1099, 1
        %v1110 = vrot.slane %v1100, 1
        %v1111 = vrot.slane %v1101, 1
        %v1112 = vrot.slane %v1103, 1
        %1113 = vrot.lane.b32.xlu0 %v1104, 61
        %v1114 = vpop.permute.xlu0 %1113
        %1115 = vrot.lane.b32.xlu0 %v1105, 61
        %v1116 = vpop.permute.xlu0 %1115
        %1117 = vrot.lane.b32.xlu0 %v1106, 61
        %v1118 = vpop.permute.xlu0 %1117
        %1119 = vrot.lane.b32.xlu0 %v1107, 61
        %v1120 = vpop.permute.xlu0 %1119
        %1121 = vrot.lane.b32.xlu0 %v1108, 61
        %v1122 = vpop.permute.xlu0 %1121
        %1123 = vrot.lane.b32.xlu0 %v1109, 61
        %v1124 = vpop.permute.xlu0 %1123
        %1125 = vrot.lane.b32.xlu0 %v1110, 61
        %v1126 = vpop.permute.xlu0 %1125
        %1127 = vrot.lane.b32.xlu0 %v1111, 61
        %v1128 = vpop.permute.xlu0 %1127
        %1129 = vrot.lane.b32.xlu0 %v1112, 61
        %v1130 = vpop.permute.xlu0 %1129
        %vm1131 = vcmask 498688
        %v1132 = vsel %vm1131, %v1114, %v1116
        %v1133 = vsel %vm1131, %v1116, %v1118
        %v1134 = vsel %vm1131, %v1118, %v1120
        %v1135 = vsel %vm1131, %v1120, %v1122
        %v1136 = vsel %vm1131, %v1122, %v1124
        %v1137 = vsel %vm1131, %v1124, %v1126
        %v1138 = vsel %vm1131, %v1126, %v1128
        %v1139 = vsel %vm1131, %v1128, %v1130
        %1148 = vst [vmem:[#allocation2 + $0x100] sm:$0x80] %v1132
        %1149 = vst [vmem:[#allocation2 + $0x108] sm:$0x80] %v1133
        %1150 = vst [vmem:[#allocation2 + $0x110] sm:$0x80] %v1134
        %1151 = vst [vmem:[#allocation2 + $0x118] sm:$0x80] %v1135
        %1152 = vst [vmem:[#allocation2 + $0x120] sm:$0x80] %v1136
        %1153 = vst [vmem:[#allocation2 + $0x128] sm:$0x80] %v1137
        %1154 = vst [vmem:[#allocation2 + $0x130] sm:$0x80] %v1138
        %1155 = vst [vmem:[#allocation2 + $0x138] sm:$0x80] %v1139
        %1156 = vst [vmem:[#allocation2 + $0x140] sm:$0x3] %v1132
        %1157 = vst [vmem:[#allocation2 + $0x148] sm:$0x3] %v1133
        %1158 = vst [vmem:[#allocation2 + $0x150] sm:$0x3] %v1134
        %1159 = vst [vmem:[#allocation2 + $0x158] sm:$0x3] %v1135
        %1160 = vst [vmem:[#allocation2 + $0x160] sm:$0x3] %v1136
        %1161 = vst [vmem:[#allocation2 + $0x168] sm:$0x3] %v1137
        %1162 = vst [vmem:[#allocation2 + $0x170] sm:$0x3] %v1138
        %1163 = vst [vmem:[#allocation2 + $0x178] sm:$0x3] %v1139
        %1164 = vst [vmem:[#allocation1] ss:$2 sm:$0xff] %v219
        %s1165 = scalar_lea.vmem [#allocation1], 16
        %1166 = vst [vmem:[%s1165] ss:$2 sm:$0xff] %v220
        %s1167 = scalar_lea.vmem [#allocation1], 32
        %1168 = vst [vmem:[%s1167] ss:$2 sm:$0xff] %v221
        %s1169 = scalar_lea.vmem [#allocation1], 48
        %1170 = vst [vmem:[%s1169] ss:$2 sm:$0xff] %v222
        %v1171 = vld.sshfl [vmem:[#allocation1] sm:$0xff pattern:$0x75316420]
        %v1172 = vld.sshfl [vmem:[#allocation1 + $0x8] sm:$0xff pattern:$0x75316420]
        %v1173 = vld.sshfl [vmem:[#allocation1 + $0x10] sm:$0xff pattern:$0x75316420]
        %v1174 = vld.sshfl [vmem:[#allocation1 + $0x18] sm:$0xff pattern:$0x75316420]
        %v1175 = vld.sshfl [vmem:[#allocation1 + $0x20] sm:$0xff pattern:$0x75316420]
        %v1176 = vld.sshfl [vmem:[#allocation1 + $0x28] sm:$0xff pattern:$0x75316420]
        %v1177 = vld.sshfl [vmem:[#allocation1 + $0x30] sm:$0xff pattern:$0x75316420]
        %v1178 = vld.sshfl [vmem:[#allocation1 + $0x38] sm:$0xff pattern:$0x75316420]
        %1179 = vst [vmem:[#allocation1] ss:$2 sm:$0xff] %v258
        %v1180 = vld.sshfl [vmem:[#allocation1] sm:$0xff pattern:$0x75316420]
        %v1181 = vrot.slane %v1171, 6
        %v1182 = vrot.slane %v1172, 6
        %v1183 = vrot.slane %v1173, 6
        %v1184 = vrot.slane %v1174, 6
        %v1185 = vrot.slane %v1175, 6
        %v1186 = vrot.slane %v1176, 6
        %v1187 = vrot.slane %v1177, 6
        %v1188 = vrot.slane %v1178, 6
        %v1189 = vrot.slane %v1180, 6
        %1190 = vrot.lane.b32.xlu0 %v1181, 60
        %v1191 = vpop.permute.xlu0 %1190
        %1192 = vrot.lane.b32.xlu0 %v1182, 60
        %v1193 = vpop.permute.xlu0 %1192
        %1194 = vrot.lane.b32.xlu0 %v1183, 60
        %v1195 = vpop.permute.xlu0 %1194
        %1196 = vrot.lane.b32.xlu0 %v1184, 60
        %v1197 = vpop.permute.xlu0 %1196
        %1198 = vrot.lane.b32.xlu0 %v1185, 60
        %v1199 = vpop.permute.xlu0 %1198
        %1200 = vrot.lane.b32.xlu0 %v1186, 60
        %v1201 = vpop.permute.xlu0 %1200
        %1202 = vrot.lane.b32.xlu0 %v1187, 60
        %v1203 = vpop.permute.xlu0 %1202
        %1204 = vrot.lane.b32.xlu0 %v1188, 60
        %v1205 = vpop.permute.xlu0 %1204
        %1206 = vrot.lane.b32.xlu0 %v1189, 60
        %v1207 = vpop.permute.xlu0 %1206
        %vm1208 = vcmask 490496
        %v1209 = vsel %vm1208, %v1191, %v1193
        %v1210 = vsel %vm1208, %v1193, %v1195
        %v1211 = vsel %vm1208, %v1195, %v1197
        %v1212 = vsel %vm1208, %v1197, %v1199
        %v1213 = vsel %vm1208, %v1199, %v1201
        %v1214 = vsel %vm1208, %v1201, %v1203
        %v1215 = vsel %vm1208, %v1203, %v1205
        %v1216 = vsel %vm1208, %v1205, %v1207
        %1225 = vst [vmem:[#allocation2 + $0x140] sm:$0x1c] %v1209
        %1226 = vst [vmem:[#allocation2 + $0x148] sm:$0x1c] %v1210
        %1227 = vst [vmem:[#allocation2 + $0x150] sm:$0x1c] %v1211
        %1228 = vst [vmem:[#allocation2 + $0x158] sm:$0x1c] %v1212
        %1229 = vst [vmem:[#allocation2 + $0x160] sm:$0x1c] %v1213
        %1230 = vst [vmem:[#allocation2 + $0x168] sm:$0x1c] %v1214
        %1231 = vst [vmem:[#allocation2 + $0x170] sm:$0x1c] %v1215
        %1232 = vst [vmem:[#allocation2 + $0x178] sm:$0x1c] %v1216
        %1233 = vst [vmem:[#allocation1] ss:$2 sm:$0xff] %v219
        %s1234 = scalar_lea.vmem [#allocation1], 16
        %1235 = vst [vmem:[%s1234] ss:$2 sm:$0xff] %v220
        %s1236 = scalar_lea.vmem [#allocation1], 32
        %1237 = vst [vmem:[%s1236] ss:$2 sm:$0xff] %v221
        %s1238 = scalar_lea.vmem [#allocation1], 48
        %1239 = vst [vmem:[%s1238] ss:$2 sm:$0xff] %v222
        %v1240 = vld.sshfl [vmem:[#allocation1] sm:$0xff pattern:$0x75316420]
        %v1241 = vld.sshfl [vmem:[#allocation1 + $0x8] sm:$0xff pattern:$0x75316420]
        %v1242 = vld.sshfl [vmem:[#allocation1 + $0x10] sm:$0xff pattern:$0x75316420]
        %v1243 = vld.sshfl [vmem:[#allocation1 + $0x18] sm:$0xff pattern:$0x75316420]
        %v1244 = vld.sshfl [vmem:[#allocation1 + $0x20] sm:$0xff pattern:$0x75316420]
        %v1245 = vld.sshfl [vmem:[#allocation1 + $0x28] sm:$0xff pattern:$0x75316420]
        %v1246 = vld.sshfl [vmem:[#allocation1 + $0x30] sm:$0xff pattern:$0x75316420]
        %v1247 = vld.sshfl [vmem:[#allocation1 + $0x38] sm:$0xff pattern:$0x75316420]
        %1248 = vst [vmem:[#allocation1] ss:$2 sm:$0xff] %v258
        %v1249 = vld.sshfl [vmem:[#allocation1] sm:$0xff pattern:$0x75316420]
        %v1250 = vrot.slane %v1240, 3
        %v1251 = vrot.slane %v1241, 3
        %v1252 = vrot.slane %v1242, 3
        %v1253 = vrot.slane %v1243, 3
        %v1254 = vrot.slane %v1244, 3
        %v1255 = vrot.slane %v1245, 3
        %v1256 = vrot.slane %v1246, 3
        %v1257 = vrot.slane %v1247, 3
        %v1258 = vrot.slane %v1249, 3
        %1259 = vrot.lane.b32.xlu0 %v1250, 32
        %v1260 = vpop.permute.xlu0 %1259
        %1261 = vrot.lane.b32.xlu0 %v1251, 32
        %v1262 = vpop.permute.xlu0 %1261
        %1263 = vrot.lane.b32.xlu0 %v1252, 32
        %v1264 = vpop.permute.xlu0 %1263
        %1265 = vrot.lane.b32.xlu0 %v1253, 32
        %v1266 = vpop.permute.xlu0 %1265
        %1267 = vrot.lane.b32.xlu0 %v1254, 32
        %v1268 = vpop.permute.xlu0 %1267
        %1269 = vrot.lane.b32.xlu0 %v1255, 32
        %v1270 = vpop.permute.xlu0 %1269
        %1271 = vrot.lane.b32.xlu0 %v1256, 32
        %v1272 = vpop.permute.xlu0 %1271
        %1273 = vrot.lane.b32.xlu0 %v1257, 32
        %v1274 = vpop.permute.xlu0 %1273
        %1275 = vrot.lane.b32.xlu0 %v1258, 32
        %v1276 = vpop.permute.xlu0 %1275
        %vm1277 = vcmask 261120
        %v1278 = vsel %vm1277, %v1260, %v1262
        %v1279 = vsel %vm1277, %v1262, %v1264
        %v1280 = vsel %vm1277, %v1264, %v1266
        %v1281 = vsel %vm1277, %v1266, %v1268
        %v1282 = vsel %vm1277, %v1268, %v1270
        %v1283 = vsel %vm1277, %v1270, %v1272
        %v1284 = vsel %vm1277, %v1272, %v1274
        %v1285 = vsel %vm1277, %v1274, %v1276
        %1294 = vst [vmem:[#allocation2 + $0x140] sm:$0xe0] %v1278
        %1295 = vst [vmem:[#allocation2 + $0x148] sm:$0xe0] %v1279
        %1296 = vst [vmem:[#allocation2 + $0x150] sm:$0xe0] %v1280
        %1297 = vst [vmem:[#allocation2 + $0x158] sm:$0xe0] %v1281
        %1298 = vst [vmem:[#allocation2 + $0x160] sm:$0xe0] %v1282
        %1299 = vst [vmem:[#allocation2 + $0x168] sm:$0xe0] %v1283
        %1300 = vst [vmem:[#allocation2 + $0x170] sm:$0xe0] %v1284
        %1301 = vst [vmem:[#allocation2 + $0x178] sm:$0xe0] %v1285
        %1302 = vst [vmem:[#allocation1] ss:$2 sm:$0xff] %v219
        %s1303 = scalar_lea.vmem [#allocation1], 16
        %1304 = vst [vmem:[%s1303] ss:$2 sm:$0xff] %v220
        %s1305 = scalar_lea.vmem [#allocation1], 32
        %1306 = vst [vmem:[%s1305] ss:$2 sm:$0xff] %v221
        %s1307 = scalar_lea.vmem [#allocation1], 48
        %1308 = vst [vmem:[%s1307] ss:$2 sm:$0xff] %v222
        %v1309 = vld.sshfl [vmem:[#allocation1] sm:$0xff pattern:$0x75316420]
        %v1310 = vld.sshfl [vmem:[#allocation1 + $0x8] sm:$0xff pattern:$0x75316420]
        %v1311 = vld.sshfl [vmem:[#allocation1 + $0x10] sm:$0xff pattern:$0x75316420]
        %v1312 = vld.sshfl [vmem:[#allocation1 + $0x18] sm:$0xff pattern:$0x75316420]
        %v1313 = vld.sshfl [vmem:[#allocation1 + $0x20] sm:$0xff pattern:$0x75316420]
        %v1314 = vld.sshfl [vmem:[#allocation1 + $0x28] sm:$0xff pattern:$0x75316420]
        %v1315 = vld.sshfl [vmem:[#allocation1 + $0x30] sm:$0xff pattern:$0x75316420]
        %v1316 = vld.sshfl [vmem:[#allocation1 + $0x38] sm:$0xff pattern:$0x75316420]
        %1317 = vst [vmem:[#allocation1] ss:$2 sm:$0xff] %v258
        %v1318 = vld.sshfl [vmem:[#allocation1] sm:$0xff pattern:$0x75316420]
        %1319 = vrot.lane.b32.xlu0 %v1309, 31
        %v1320 = vpop.permute.xlu0 %1319
        %1321 = vrot.lane.b32.xlu0 %v1310, 31
        %v1322 = vpop.permute.xlu0 %1321
        %1323 = vrot.lane.b32.xlu0 %v1311, 31
        %v1324 = vpop.permute.xlu0 %1323
        %1325 = vrot.lane.b32.xlu0 %v1312, 31
        %v1326 = vpop.permute.xlu0 %1325
        %1327 = vrot.lane.b32.xlu0 %v1313, 31
        %v1328 = vpop.permute.xlu0 %1327
        %1329 = vrot.lane.b32.xlu0 %v1314, 31
        %v1330 = vpop.permute.xlu0 %1329
        %1331 = vrot.lane.b32.xlu0 %v1315, 31
        %v1332 = vpop.permute.xlu0 %1331
        %1333 = vrot.lane.b32.xlu0 %v1316, 31
        %v1334 = vpop.permute.xlu0 %1333
        %1335 = vrot.lane.b32.xlu0 %v1318, 31
        %v1336 = vpop.permute.xlu0 %1335
        %vm1337 = vcmask 252928
        %v1338 = vsel %vm1337, %v1320, %v1322
        %v1339 = vsel %vm1337, %v1322, %v1324
        %v1340 = vsel %vm1337, %v1324, %v1326
        %v1341 = vsel %vm1337, %v1326, %v1328
        %v1342 = vsel %vm1337, %v1328, %v1330
        %v1343 = vsel %vm1337, %v1330, %v1332
        %v1344 = vsel %vm1337, %v1332, %v1334
        %v1345 = vsel %vm1337, %v1334, %v1336
        %1354 = vst [vmem:[#allocation2 + $0x180] sm:$0x7] %v1338
        %1355 = vst [vmem:[#allocation2 + $0x188] sm:$0x7] %v1339
        %1356 = vst [vmem:[#allocation2 + $0x190] sm:$0x7] %v1340
        %1357 = vst [vmem:[#allocation2 + $0x198] sm:$0x7] %v1341
        %1358 = vst [vmem:[#allocation2 + $0x1a0] sm:$0x7] %v1342
        %1359 = vst [vmem:[#allocation2 + $0x1a8] sm:$0x7] %v1343
        %1360 = vst [vmem:[#allocation2 + $0x1b0] sm:$0x7] %v1344
        %1361 = vst [vmem:[#allocation2 + $0x1b8] sm:$0x7] %v1345
        %1362 = vst [vmem:[#allocation1] ss:$2 sm:$0xff] %v219
        %s1363 = scalar_lea.vmem [#allocation1], 16
        %1364 = vst [vmem:[%s1363] ss:$2 sm:$0xff] %v220
        %s1365 = scalar_lea.vmem [#allocation1], 32
        %1366 = vst [vmem:[%s1365] ss:$2 sm:$0xff] %v221
        %s1367 = scalar_lea.vmem [#allocation1], 48
        %1368 = vst [vmem:[%s1367] ss:$2 sm:$0xff] %v222
        %v1369 = vld.sshfl [vmem:[#allocation1] sm:$0xff pattern:$0x75316420]
        %v1370 = vld.sshfl [vmem:[#allocation1 + $0x8] sm:$0xff pattern:$0x75316420]
        %v1371 = vld.sshfl [vmem:[#allocation1 + $0x10] sm:$0xff pattern:$0x75316420]
        %v1372 = vld.sshfl [vmem:[#allocation1 + $0x18] sm:$0xff pattern:$0x75316420]
        %v1373 = vld.sshfl [vmem:[#allocation1 + $0x20] sm:$0xff pattern:$0x75316420]
        %v1374 = vld.sshfl [vmem:[#allocation1 + $0x28] sm:$0xff pattern:$0x75316420]
        %v1375 = vld.sshfl [vmem:[#allocation1 + $0x30] sm:$0xff pattern:$0x75316420]
        %v1376 = vld.sshfl [vmem:[#allocation1 + $0x38] sm:$0xff pattern:$0x75316420]
        %1377 = vst [vmem:[#allocation1] ss:$2 sm:$0xff] %v258
        %v1378 = vld.sshfl [vmem:[#allocation1] sm:$0xff pattern:$0x75316420]
        %v1379 = vrot.slane %v1369, 5
        %v1380 = vrot.slane %v1370, 5
        %v1381 = vrot.slane %v1371, 5
        %v1382 = vrot.slane %v1372, 5
        %v1383 = vrot.slane %v1373, 5
        %v1384 = vrot.slane %v1374, 5
        %v1385 = vrot.slane %v1375, 5
        %v1386 = vrot.slane %v1376, 5
        %v1387 = vrot.slane %v1378, 5
        %1388 = vrot.lane.b32.xlu0 %v1379, 30
        %v1389 = vpop.permute.xlu0 %1388
        %1390 = vrot.lane.b32.xlu0 %v1380, 30
        %v1391 = vpop.permute.xlu0 %1390
        %1392 = vrot.lane.b32.xlu0 %v1381, 30
        %v1393 = vpop.permute.xlu0 %1392
        %1394 = vrot.lane.b32.xlu0 %v1382, 30
        %v1395 = vpop.permute.xlu0 %1394
        %1396 = vrot.lane.b32.xlu0 %v1383, 30
        %v1397 = vpop.permute.xlu0 %1396
        %1398 = vrot.lane.b32.xlu0 %v1384, 30
        %v1399 = vpop.permute.xlu0 %1398
        %1400 = vrot.lane.b32.xlu0 %v1385, 30
        %v1401 = vpop.permute.xlu0 %1400
        %1402 = vrot.lane.b32.xlu0 %v1386, 30
        %v1403 = vpop.permute.xlu0 %1402
        %1404 = vrot.lane.b32.xlu0 %v1387, 30
        %v1405 = vpop.permute.xlu0 %1404
        %vm1406 = vcmask 244736
        %v1407 = vsel %vm1406, %v1389, %v1391
        %v1408 = vsel %vm1406, %v1391, %v1393
        %v1409 = vsel %vm1406, %v1393, %v1395
        %v1410 = vsel %vm1406, %v1395, %v1397
        %v1411 = vsel %vm1406, %v1397, %v1399
        %v1412 = vsel %vm1406, %v1399, %v1401
        %v1413 = vsel %vm1406, %v1401, %v1403
        %v1414 = vsel %vm1406, %v1403, %v1405
        %1423 = vst [vmem:[#allocation2 + $0x180] sm:$0x38] %v1407
        %1424 = vst [vmem:[#allocation2 + $0x188] sm:$0x38] %v1408
        %1425 = vst [vmem:[#allocation2 + $0x190] sm:$0x38] %v1409
        %1426 = vst [vmem:[#allocation2 + $0x198] sm:$0x38] %v1410
        %1427 = vst [vmem:[#allocation2 + $0x1a0] sm:$0x38] %v1411
        %1428 = vst [vmem:[#allocation2 + $0x1a8] sm:$0x38] %v1412
        %1429 = vst [vmem:[#allocation2 + $0x1b0] sm:$0x38] %v1413
        %1430 = vst [vmem:[#allocation2 + $0x1b8] sm:$0x38] %v1414
        %1431 = vst [vmem:[#allocation1] ss:$2 sm:$0xff] %v219
        %s1432 = scalar_lea.vmem [#allocation1], 16
        %1433 = vst [vmem:[%s1432] ss:$2 sm:$0xff] %v220
        %s1434 = scalar_lea.vmem [#allocation1], 32
        %1435 = vst [vmem:[%s1434] ss:$2 sm:$0xff] %v221
        %s1436 = scalar_lea.vmem [#allocation1], 48
        %1437 = vst [vmem:[%s1436] ss:$2 sm:$0xff] %v222
        %v1438 = vld.sshfl [vmem:[#allocation1] sm:$0xff pattern:$0x75316420]
        %v1439 = vld.sshfl [vmem:[#allocation1 + $0x8] sm:$0xff pattern:$0x75316420]
        %v1440 = vld.sshfl [vmem:[#allocation1 + $0x10] sm:$0xff pattern:$0x75316420]
        %v1441 = vld.sshfl [vmem:[#allocation1 + $0x18] sm:$0xff pattern:$0x75316420]
        %v1442 = vld.sshfl [vmem:[#allocation1 + $0x20] sm:$0xff pattern:$0x75316420]
        %v1443 = vld.sshfl [vmem:[#allocation1 + $0x28] sm:$0xff pattern:$0x75316420]
        %v1444 = vld.sshfl [vmem:[#allocation1 + $0x30] sm:$0xff pattern:$0x75316420]
        %v1445 = vld.sshfl [vmem:[#allocation1 + $0x38] sm:$0xff pattern:$0x75316420]
        %1446 = vst [vmem:[#allocation1] ss:$2 sm:$0xff] %v258
        %v1447 = vld.sshfl [vmem:[#allocation1] sm:$0xff pattern:$0x75316420]
        %v1448 = vrot.slane %v1438, 2
        %v1449 = vrot.slane %v1439, 2
        %v1450 = vrot.slane %v1440, 2
        %v1451 = vrot.slane %v1441, 2
        %v1452 = vrot.slane %v1442, 2
        %v1453 = vrot.slane %v1443, 2
        %v1454 = vrot.slane %v1444, 2
        %v1455 = vrot.slane %v1445, 2
        %v1456 = vrot.slane %v1447, 2
        %1457 = vrot.lane.b32.xlu0 %v1448, 29
        %v1458 = vpop.permute.xlu0 %1457
        %1459 = vrot.lane.b32.xlu0 %v1449, 29
        %v1460 = vpop.permute.xlu0 %1459
        %1461 = vrot.lane.b32.xlu0 %v1450, 29
        %v1462 = vpop.permute.xlu0 %1461
        %1463 = vrot.lane.b32.xlu0 %v1451, 29
        %v1464 = vpop.permute.xlu0 %1463
        %1465 = vrot.lane.b32.xlu0 %v1452, 29
        %v1466 = vpop.permute.xlu0 %1465
        %1467 = vrot.lane.b32.xlu0 %v1453, 29
        %v1468 = vpop.permute.xlu0 %1467
        %1469 = vrot.lane.b32.xlu0 %v1454, 29
        %v1470 = vpop.permute.xlu0 %1469
        %1471 = vrot.lane.b32.xlu0 %v1455, 29
        %v1472 = vpop.permute.xlu0 %1471
        %1473 = vrot.lane.b32.xlu0 %v1456, 29
        %v1474 = vpop.permute.xlu0 %1473
        %vm1475 = vcmask 236544
        %v1476 = vsel %vm1475, %v1458, %v1460
        %v1477 = vsel %vm1475, %v1460, %v1462
        %v1478 = vsel %vm1475, %v1462, %v1464
        %v1479 = vsel %vm1475, %v1464, %v1466
        %v1480 = vsel %vm1475, %v1466, %v1468
        %v1481 = vsel %vm1475, %v1468, %v1470
        %v1482 = vsel %vm1475, %v1470, %v1472
        %v1483 = vsel %vm1475, %v1472, %v1474
        %1492 = vst [vmem:[#allocation2 + $0x180] sm:$0xc0] %v1476
        %1493 = vst [vmem:[#allocation2 + $0x188] sm:$0xc0] %v1477
        %1494 = vst [vmem:[#allocation2 + $0x190] sm:$0xc0] %v1478
        %1495 = vst [vmem:[#allocation2 + $0x198] sm:$0xc0] %v1479
        %1496 = vst [vmem:[#allocation2 + $0x1a0] sm:$0xc0] %v1480
        %1497 = vst [vmem:[#allocation2 + $0x1a8] sm:$0xc0] %v1481
        %1498 = vst [vmem:[#allocation2 + $0x1b0] sm:$0xc0] %v1482
        %1499 = vst [vmem:[#allocation2 + $0x1b8] sm:$0xc0] %v1483
        %1500 = vst [vmem:[#allocation2 + $0x1c0] sm:$0x1] %v1476
        %1501 = vst [vmem:[#allocation2 + $0x1c8] sm:$0x1] %v1477
        %1502 = vst [vmem:[#allocation2 + $0x1d0] sm:$0x1] %v1478
        %1503 = vst [vmem:[#allocation2 + $0x1d8] sm:$0x1] %v1479
        %1504 = vst [vmem:[#allocation2 + $0x1e0] sm:$0x1] %v1480
        %1505 = vst [vmem:[#allocation2 + $0x1e8] sm:$0x1] %v1481
        %1506 = vst [vmem:[#allocation2 + $0x1f0] sm:$0x1] %v1482
        %1507 = vst [vmem:[#allocation2 + $0x1f8] sm:$0x1] %v1483
        %1508 = vst [vmem:[#allocation1] ss:$2 sm:$0xff] %v219
        %s1509 = scalar_lea.vmem [#allocation1], 16
        %1510 = vst [vmem:[%s1509] ss:$2 sm:$0xff] %v220
        %s1511 = scalar_lea.vmem [#allocation1], 32
        %1512 = vst [vmem:[%s1511] ss:$2 sm:$0xff] %v221
        %s1513 = scalar_lea.vmem [#allocation1], 48
        %1514 = vst [vmem:[%s1513] ss:$2 sm:$0xff] %v222
        %v1515 = vld.sshfl [vmem:[#allocation1] sm:$0xff pattern:$0x75316420]
        %v1516 = vld.sshfl [vmem:[#allocation1 + $0x8] sm:$0xff pattern:$0x75316420]
        %v1517 = vld.sshfl [vmem:[#allocation1 + $0x10] sm:$0xff pattern:$0x75316420]
        %v1518 = vld.sshfl [vmem:[#allocation1 + $0x18] sm:$0xff pattern:$0x75316420]
        %v1519 = vld.sshfl [vmem:[#allocation1 + $0x20] sm:$0xff pattern:$0x75316420]
        %v1520 = vld.sshfl [vmem:[#allocation1 + $0x28] sm:$0xff pattern:$0x75316420]
        %v1521 = vld.sshfl [vmem:[#allocation1 + $0x30] sm:$0xff pattern:$0x75316420]
        %v1522 = vld.sshfl [vmem:[#allocation1 + $0x38] sm:$0xff pattern:$0x75316420]
        %1523 = vst [vmem:[#allocation1] ss:$2 sm:$0xff] %v258
        %v1524 = vld.sshfl [vmem:[#allocation1] sm:$0xff pattern:$0x75316420]
        %v1525 = vrot.slane %v1515, 7
        %v1526 = vrot.slane %v1516, 7
        %v1527 = vrot.slane %v1517, 7
        %v1528 = vrot.slane %v1518, 7
        %v1529 = vrot.slane %v1519, 7
        %v1530 = vrot.slane %v1520, 7
        %v1531 = vrot.slane %v1521, 7
        %v1532 = vrot.slane %v1522, 7
        %v1533 = vrot.slane %v1524, 7
        %1534 = vrot.lane.b32.xlu0 %v1525, 28
        %v1535 = vpop.permute.xlu0 %1534
        %1536 = vrot.lane.b32.xlu0 %v1526, 28
        %v1537 = vpop.permute.xlu0 %1536
        %1538 = vrot.lane.b32.xlu0 %v1527, 28
        %v1539 = vpop.permute.xlu0 %1538
        %1540 = vrot.lane.b32.xlu0 %v1528, 28
        %v1541 = vpop.permute.xlu0 %1540
        %1542 = vrot.lane.b32.xlu0 %v1529, 28
        %v1543 = vpop.permute.xlu0 %1542
        %1544 = vrot.lane.b32.xlu0 %v1530, 28
        %v1545 = vpop.permute.xlu0 %1544
        %1546 = vrot.lane.b32.xlu0 %v1531, 28
        %v1547 = vpop.permute.xlu0 %1546
        %1548 = vrot.lane.b32.xlu0 %v1532, 28
        %v1549 = vpop.permute.xlu0 %1548
        %1550 = vrot.lane.b32.xlu0 %v1533, 28
        %v1551 = vpop.permute.xlu0 %1550
        %vm1552 = vcmask 228352
        %v1553 = vsel %vm1552, %v1535, %v1537
        %v1554 = vsel %vm1552, %v1537, %v1539
        %v1555 = vsel %vm1552, %v1539, %v1541
        %v1556 = vsel %vm1552, %v1541, %v1543
        %v1557 = vsel %vm1552, %v1543, %v1545
        %v1558 = vsel %vm1552, %v1545, %v1547
        %v1559 = vsel %vm1552, %v1547, %v1549
        %v1560 = vsel %vm1552, %v1549, %v1551
        %1569 = vst [vmem:[#allocation2 + $0x1c0] sm:$0xe] %v1553
        %1570 = vst [vmem:[#allocation2 + $0x1c8] sm:$0xe] %v1554
        %1571 = vst [vmem:[#allocation2 + $0x1d0] sm:$0xe] %v1555
        %1572 = vst [vmem:[#allocation2 + $0x1d8] sm:$0xe] %v1556
        %1573 = vst [vmem:[#allocation2 + $0x1e0] sm:$0xe] %v1557
        %1574 = vst [vmem:[#allocation2 + $0x1e8] sm:$0xe] %v1558
        %1575 = vst [vmem:[#allocation2 + $0x1f0] sm:$0xe] %v1559
        %1576 = vst [vmem:[#allocation2 + $0x1f8] sm:$0xe] %v1560
        %v1580 = vrot.slane %v216, 2
        %v1581 = vrot.slane %v217, 2
        %v1582 = vrot.slane %v218, 2
        %vm1583 = vcmask 1045504
        %v1584 = vsel %vm1583, %v1580, %v1581
        %v1585 = vsel %vm1583, %v1581, %v1582
        %v1588 = vunpack.c.l.bf16 %v1584
        %v1589 = vunpack.c.h.bf16 %v1584
        %v1590 = vunpack.c.l.bf16 %v1585
        %v1591 = vunpack.c.h.bf16 %v1585
        %s1596 = scalar_lea.vmem [#allocation1], 1
        %1597 = vst [vmem:[%s1596] ss:$2 sm:$0xff] %v1588
        %s1598 = scalar_lea.vmem [#allocation1], 17
        %1599 = vst [vmem:[%s1598] ss:$2 sm:$0xff] %v1589
        %s1600 = scalar_lea.vmem [#allocation1], 33
        %1601 = vst [vmem:[%s1600] ss:$2 sm:$0xff] %v1590
        %s1602 = scalar_lea.vmem [#allocation1], 49
        %1603 = vst [vmem:[%s1602] ss:$2 sm:$0xff] %v1591
        %v1604 = vld.sshfl [vmem:[#allocation1] sm:$0xff pattern:$0x75316420]
        %v1605 = vld.sshfl [vmem:[#allocation1 + $0x8] sm:$0xff pattern:$0x75316420]
        %v1606 = vld.sshfl [vmem:[#allocation1 + $0x10] sm:$0xff pattern:$0x75316420]
        %v1607 = vld.sshfl [vmem:[#allocation1 + $0x18] sm:$0xff pattern:$0x75316420]
        %v1608 = vld.sshfl [vmem:[#allocation1 + $0x20] sm:$0xff pattern:$0x75316420]
        %v1609 = vld.sshfl [vmem:[#allocation1 + $0x28] sm:$0xff pattern:$0x75316420]
        %v1610 = vld.sshfl [vmem:[#allocation1 + $0x30] sm:$0xff pattern:$0x75316420]
        %v1611 = vld.sshfl [vmem:[#allocation1 + $0x38] sm:$0xff pattern:$0x75316420]
        %1620 = vst [vmem:[#allocation2 + $0x1c0] sm:$0x70] %v1604
        %1621 = vst [vmem:[#allocation2 + $0x1c8] sm:$0x70] %v1605
        %1622 = vst [vmem:[#allocation2 + $0x1d0] sm:$0x70] %v1606
        %1623 = vst [vmem:[#allocation2 + $0x1d8] sm:$0x70] %v1607
        %1624 = vst [vmem:[#allocation2 + $0x1e0] sm:$0x70] %v1608
        %1625 = vst [vmem:[#allocation2 + $0x1e8] sm:$0x70] %v1609
        %1626 = vst [vmem:[#allocation2 + $0x1f0] sm:$0x70] %v1610
        %1627 = vst [vmem:[#allocation2 + $0x1f8] sm:$0x70] %v1611
        %1628 = vrot.lane.b32.xlu0 %v216, 127
        %v1629 = vpop.permute.xlu0 %1628
        %1630 = vrot.lane.b32.xlu0 %v217, 127
        %v1631 = vpop.permute.xlu0 %1630
        %1632 = vrot.lane.b32.xlu0 %v218, 127
        %v1633 = vpop.permute.xlu0 %1632
        %v1634 = vrot.slane %v1629, 2
        %v1635 = vrot.slane %v1631, 2
        %v1636 = vrot.slane %v1633, 2
        %v1637 = vrot.slane %v1629, 4
        %v1638 = vrot.slane %v1631, 4
        %v1639 = vrot.slane %v1633, 4
        %v1640 = vsel %vm1583, %v1634, %v1635
        %vm1641 = vcmask 1043456
        %v1642 = vsel %vm1641, %v1637, %v1638
        %vm1643 = vcmask 1039360
        %v1644 = vsel %vm1643, %v1640, %v1642
        %v1645 = vsel %vm1583, %v1635, %v1636
        %v1646 = vsel %vm1641, %v1638, %v1639
        %v1647 = vsel %vm1643, %v1645, %v1646
        %v1650 = vunpack.c.l.bf16 %v1644
        %v1651 = vunpack.c.h.bf16 %v1644
        %v1652 = vunpack.c.l.bf16 %v1647
        %v1653 = vunpack.c.h.bf16 %v1647
        %1658 = vst [vmem:[#allocation1] ss:$2 sm:$0xff] %v1650
        %s1659 = scalar_lea.vmem [#allocation1], 16
        %1660 = vst [vmem:[%s1659] ss:$2 sm:$0xff] %v1651
        %s1661 = scalar_lea.vmem [#allocation1], 32
        %1662 = vst [vmem:[%s1661] ss:$2 sm:$0xff] %v1652
        %s1663 = scalar_lea.vmem [#allocation1], 48
        %1664 = vst [vmem:[%s1663] ss:$2 sm:$0xff] %v1653
        %v1665 = vld.sshfl [vmem:[#allocation1] sm:$0xff pattern:$0x75316420]
        %v1666 = vld.sshfl [vmem:[#allocation1 + $0x8] sm:$0xff pattern:$0x75316420]
        %v1667 = vld.sshfl [vmem:[#allocation1 + $0x10] sm:$0xff pattern:$0x75316420]
        %v1668 = vld.sshfl [vmem:[#allocation1 + $0x18] sm:$0xff pattern:$0x75316420]
        %v1669 = vld.sshfl [vmem:[#allocation1 + $0x20] sm:$0xff pattern:$0x75316420]
        %v1670 = vld.sshfl [vmem:[#allocation1 + $0x28] sm:$0xff pattern:$0x75316420]
        %v1671 = vld.sshfl [vmem:[#allocation1 + $0x30] sm:$0xff pattern:$0x75316420]
        %v1672 = vld.sshfl [vmem:[#allocation1 + $0x38] sm:$0xff pattern:$0x75316420]
        %v1673 = vrot.slane %v1665, 1
        %v1674 = vrot.slane %v1666, 1
        %v1675 = vrot.slane %v1667, 1
        %v1676 = vrot.slane %v1668, 1
        %v1677 = vrot.slane %v1669, 1
        %v1678 = vrot.slane %v1670, 1
        %v1679 = vrot.slane %v1671, 1
        %v1680 = vrot.slane %v1672, 1
        %1689 = vst [vmem:[#allocation2 + $0x1c0] sm:$0x80] %v1673
        %1690 = vst [vmem:[#allocation2 + $0x1c8] sm:$0x80] %v1674
        %1691 = vst [vmem:[#allocation2 + $0x1d0] sm:$0x80] %v1675
        %1692 = vst [vmem:[#allocation2 + $0x1d8] sm:$0x80] %v1676
        %1693 = vst [vmem:[#allocation2 + $0x1e0] sm:$0x80] %v1677
        %1694 = vst [vmem:[#allocation2 + $0x1e8] sm:$0x80] %v1678
        %1695 = vst [vmem:[#allocation2 + $0x1f0] sm:$0x80] %v1679
        %1696 = vst [vmem:[#allocation2 + $0x1f8] sm:$0x80] %v1680
        %1697 = vst [vmem:[#allocation2 + $0x200] sm:$0x3] %v1673
        %1698 = vst [vmem:[#allocation2 + $0x208] sm:$0x3] %v1674
        %1699 = vst [vmem:[#allocation2 + $0x210] sm:$0x3] %v1675
        %1700 = vst [vmem:[#allocation2 + $0x218] sm:$0x3] %v1676
        %1701 = vst [vmem:[#allocation2 + $0x220] sm:$0x3] %v1677
        %1702 = vst [vmem:[#allocation2 + $0x228] sm:$0x3] %v1678
        %1703 = vst [vmem:[#allocation2 + $0x230] sm:$0x3] %v1679
        %1704 = vst [vmem:[#allocation2 + $0x238] sm:$0x3] %v1680
        %1705 = vrot.lane.b32.xlu0 %v216, 126
        %v1706 = vpop.permute.xlu0 %1705
        %1707 = vrot.lane.b32.xlu0 %v217, 126
        %v1708 = vpop.permute.xlu0 %1707
        %1709 = vrot.lane.b32.xlu0 %v218, 126
        %v1710 = vpop.permute.xlu0 %1709
        %v1711 = vrot.slane %v1706, 2
        %v1712 = vrot.slane %v1708, 2
        %v1713 = vrot.slane %v1710, 2
        %v1714 = vrot.slane %v1706, 4
        %v1715 = vrot.slane %v1708, 4
        %v1716 = vrot.slane %v1710, 4
        %v1717 = vsel %vm1583, %v1711, %v1712
        %v1718 = vsel %vm1641, %v1714, %v1715
        %vm1719 = vcmask 1031168
        %v1720 = vsel %vm1719, %v1717, %v1718
        %v1721 = vsel %vm1583, %v1712, %v1713
        %v1722 = vsel %vm1641, %v1715, %v1716
        %v1723 = vsel %vm1719, %v1721, %v1722
        %v1726 = vunpack.c.l.bf16 %v1720
        %v1727 = vunpack.c.h.bf16 %v1720
        %v1728 = vunpack.c.l.bf16 %v1723
        %v1729 = vunpack.c.h.bf16 %v1723
        %1734 = vst [vmem:[#allocation1] ss:$2 sm:$0xff] %v1726
        %s1735 = scalar_lea.vmem [#allocation1], 16
        %1736 = vst [vmem:[%s1735] ss:$2 sm:$0xff] %v1727
        %s1737 = scalar_lea.vmem [#allocation1], 32
        %1738 = vst [vmem:[%s1737] ss:$2 sm:$0xff] %v1728
        %s1739 = scalar_lea.vmem [#allocation1], 48
        %1740 = vst [vmem:[%s1739] ss:$2 sm:$0xff] %v1729
        %v1741 = vld.sshfl [vmem:[#allocation1] sm:$0xff pattern:$0x75316420]
        %v1742 = vld.sshfl [vmem:[#allocation1 + $0x8] sm:$0xff pattern:$0x75316420]
        %v1743 = vld.sshfl [vmem:[#allocation1 + $0x10] sm:$0xff pattern:$0x75316420]
        %v1744 = vld.sshfl [vmem:[#allocation1 + $0x18] sm:$0xff pattern:$0x75316420]
        %v1745 = vld.sshfl [vmem:[#allocation1 + $0x20] sm:$0xff pattern:$0x75316420]
        %v1746 = vld.sshfl [vmem:[#allocation1 + $0x28] sm:$0xff pattern:$0x75316420]
        %v1747 = vld.sshfl [vmem:[#allocation1 + $0x30] sm:$0xff pattern:$0x75316420]
        %v1748 = vld.sshfl [vmem:[#allocation1 + $0x38] sm:$0xff pattern:$0x75316420]
        %v1749 = vrot.slane %v1741, 6
        %v1750 = vrot.slane %v1742, 6
        %v1751 = vrot.slane %v1743, 6
        %v1752 = vrot.slane %v1744, 6
        %v1753 = vrot.slane %v1745, 6
        %v1754 = vrot.slane %v1746, 6
        %v1755 = vrot.slane %v1747, 6
        %v1756 = vrot.slane %v1748, 6
        %1765 = vst [vmem:[#allocation2 + $0x200] sm:$0x1c] %v1749
        %1766 = vst [vmem:[#allocation2 + $0x208] sm:$0x1c] %v1750
        %1767 = vst [vmem:[#allocation2 + $0x210] sm:$0x1c] %v1751
        %1768 = vst [vmem:[#allocation2 + $0x218] sm:$0x1c] %v1752
        %1769 = vst [vmem:[#allocation2 + $0x220] sm:$0x1c] %v1753
        %1770 = vst [vmem:[#allocation2 + $0x228] sm:$0x1c] %v1754
        %1771 = vst [vmem:[#allocation2 + $0x230] sm:$0x1c] %v1755
        %1772 = vst [vmem:[#allocation2 + $0x238] sm:$0x1c] %v1756
        %1773 = vrot.lane.b32.xlu0 %v216, 125
        %v1774 = vpop.permute.xlu0 %1773
        %1775 = vrot.lane.b32.xlu0 %v217, 125
        %v1776 = vpop.permute.xlu0 %1775
        %1777 = vrot.lane.b32.xlu0 %v218, 125
        %v1778 = vpop.permute.xlu0 %1777
        %v1779 = vrot.slane %v1774, 2
        %v1780 = vrot.slane %v1776, 2
        %v1781 = vrot.slane %v1778, 2
        %v1782 = vrot.slane %v1774, 4
        %v1783 = vrot.slane %v1776, 4
        %v1784 = vrot.slane %v1778, 4
        %v1785 = vsel %vm1583, %v1779, %v1780
        %v1786 = vsel %vm1641, %v1782, %v1783
        %vm1787 = vcmask 1022976
        %v1788 = vsel %vm1787, %v1785, %v1786
        %v1789 = vsel %vm1583, %v1780, %v1781
        %v1790 = vsel %vm1641, %v1783, %v1784
        %v1791 = vsel %vm1787, %v1789, %v1790
        %v1794 = vunpack.c.l.bf16 %v1788
        %v1795 = vunpack.c.h.bf16 %v1788
        %v1796 = vunpack.c.l.bf16 %v1791
        %v1797 = vunpack.c.h.bf16 %v1791
        %1802 = vst [vmem:[#allocation1] ss:$2 sm:$0xff] %v1794
        %s1803 = scalar_lea.vmem [#allocation1], 16
        %1804 = vst [vmem:[%s1803] ss:$2 sm:$0xff] %v1795
        %s1805 = scalar_lea.vmem [#allocation1], 32
        %1806 = vst [vmem:[%s1805] ss:$2 sm:$0xff] %v1796
        %s1807 = scalar_lea.vmem [#allocation1], 48
        %1808 = vst [vmem:[%s1807] ss:$2 sm:$0xff] %v1797
        %v1809 = vld.sshfl [vmem:[#allocation1] sm:$0xff pattern:$0x75316420]
        %v1810 = vld.sshfl [vmem:[#allocation1 + $0x8] sm:$0xff pattern:$0x75316420]
        %v1811 = vld.sshfl [vmem:[#allocation1 + $0x10] sm:$0xff pattern:$0x75316420]
        %v1812 = vld.sshfl [vmem:[#allocation1 + $0x18] sm:$0xff pattern:$0x75316420]
        %v1813 = vld.sshfl [vmem:[#allocation1 + $0x20] sm:$0xff pattern:$0x75316420]
        %v1814 = vld.sshfl [vmem:[#allocation1 + $0x28] sm:$0xff pattern:$0x75316420]
        %v1815 = vld.sshfl [vmem:[#allocation1 + $0x30] sm:$0xff pattern:$0x75316420]
        %v1816 = vld.sshfl [vmem:[#allocation1 + $0x38] sm:$0xff pattern:$0x75316420]
        %v1817 = vrot.slane %v1809, 3
        %v1818 = vrot.slane %v1810, 3
        %v1819 = vrot.slane %v1811, 3
        %v1820 = vrot.slane %v1812, 3
        %v1821 = vrot.slane %v1813, 3
        %v1822 = vrot.slane %v1814, 3
        %v1823 = vrot.slane %v1815, 3
        %v1824 = vrot.slane %v1816, 3
        %1833 = vst [vmem:[#allocation2 + $0x200] sm:$0xe0] %v1817
        %1834 = vst [vmem:[#allocation2 + $0x208] sm:$0xe0] %v1818
        %1835 = vst [vmem:[#allocation2 + $0x210] sm:$0xe0] %v1819
        %1836 = vst [vmem:[#allocation2 + $0x218] sm:$0xe0] %v1820
        %1837 = vst [vmem:[#allocation2 + $0x220] sm:$0xe0] %v1821
        %1838 = vst [vmem:[#allocation2 + $0x228] sm:$0xe0] %v1822
        %1839 = vst [vmem:[#allocation2 + $0x230] sm:$0xe0] %v1823
        %1840 = vst [vmem:[#allocation2 + $0x238] sm:$0xe0] %v1824
        %1841 = vrot.lane.b32.xlu0 %v216, 124
        %v1842 = vpop.permute.xlu0 %1841
        %1843 = vrot.lane.b32.xlu0 %v217, 124
        %v1844 = vpop.permute.xlu0 %1843
        %1845 = vrot.lane.b32.xlu0 %v218, 124
        %v1846 = vpop.permute.xlu0 %1845
        %v1847 = vrot.slane %v1842, 2
        %v1848 = vrot.slane %v1844, 2
        %v1849 = vrot.slane %v1846, 2
        %v1850 = vrot.slane %v1842, 4
        %v1851 = vrot.slane %v1844, 4
        %v1852 = vrot.slane %v1846, 4
        %v1853 = vsel %vm1583, %v1847, %v1848
        %v1854 = vsel %vm1641, %v1850, %v1851
        %vm1855 = vcmask 1014784
        %v1856 = vsel %vm1855, %v1853, %v1854
        %v1857 = vsel %vm1583, %v1848, %v1849
        %v1858 = vsel %vm1641, %v1851, %v1852
        %v1859 = vsel %vm1855, %v1857, %v1858
        %v1862 = vunpack.c.l.bf16 %v1856
        %v1863 = vunpack.c.h.bf16 %v1856
        %v1864 = vunpack.c.l.bf16 %v1859
        %v1865 = vunpack.c.h.bf16 %v1859
        %1870 = vst [vmem:[#allocation1] ss:$2 sm:$0xff] %v1862
        %s1871 = scalar_lea.vmem [#allocation1], 16
        %1872 = vst [vmem:[%s1871] ss:$2 sm:$0xff] %v1863
        %s1873 = scalar_lea.vmem [#allocation1], 32
        %1874 = vst [vmem:[%s1873] ss:$2 sm:$0xff] %v1864
        %s1875 = scalar_lea.vmem [#allocation1], 48
        %1876 = vst [vmem:[%s1875] ss:$2 sm:$0xff] %v1865
        %v1877 = vld.sshfl [vmem:[#allocation1] sm:$0xff pattern:$0x75316420]
        %v1878 = vld.sshfl [vmem:[#allocation1 + $0x8] sm:$0xff pattern:$0x75316420]
        %v1879 = vld.sshfl [vmem:[#allocation1 + $0x10] sm:$0xff pattern:$0x75316420]
        %v1880 = vld.sshfl [vmem:[#allocation1 + $0x18] sm:$0xff pattern:$0x75316420]
        %v1881 = vld.sshfl [vmem:[#allocation1 + $0x20] sm:$0xff pattern:$0x75316420]
        %v1882 = vld.sshfl [vmem:[#allocation1 + $0x28] sm:$0xff pattern:$0x75316420]
        %v1883 = vld.sshfl [vmem:[#allocation1 + $0x30] sm:$0xff pattern:$0x75316420]
        %v1884 = vld.sshfl [vmem:[#allocation1 + $0x38] sm:$0xff pattern:$0x75316420]
        %1893 = vst [vmem:[#allocation2 + $0x240] sm:$0x7] %v1877
        %1894 = vst [vmem:[#allocation2 + $0x248] sm:$0x7] %v1878
        %1895 = vst [vmem:[#allocation2 + $0x250] sm:$0x7] %v1879
        %1896 = vst [vmem:[#allocation2 + $0x258] sm:$0x7] %v1880
        %1897 = vst [vmem:[#allocation2 + $0x260] sm:$0x7] %v1881
        %1898 = vst [vmem:[#allocation2 + $0x268] sm:$0x7] %v1882
        %1899 = vst [vmem:[#allocation2 + $0x270] sm:$0x7] %v1883
        %1900 = vst [vmem:[#allocation2 + $0x278] sm:$0x7] %v1884
        %v1901 = vld [vmem:[%s1] sm:$0xf]
        %v1902 = vld [vmem:[%s1 + $0x4] sm:$0xf]
        %v1903 = vld [vmem:[#allocation2] sm:$0xff]
        %v1904 = vld [vmem:[#allocation2 + $0x8] sm:$0xff]
        %v1905 = vld [vmem:[#allocation2 + $0x10] sm:$0xff]
        %v1906 = vld [vmem:[#allocation2 + $0x18] sm:$0xff]
        %v1907 = vld [vmem:[#allocation2 + $0x20] sm:$0xff]
        %v1908 = vld [vmem:[#allocation2 + $0x28] sm:$0xff]
        %v1909 = vld [vmem:[#allocation2 + $0x30] sm:$0xff]
        %v1910 = vld [vmem:[#allocation2 + $0x38] sm:$0xff]
        %v1911 = vld [vmem:[#allocation2 + $0x40] sm:$0xff]
        %v1912 = vld [vmem:[#allocation2 + $0x48] sm:$0xff]
        %v1913 = vld [vmem:[#allocation2 + $0x50] sm:$0xff]
        %v1914 = vld [vmem:[#allocation2 + $0x58] sm:$0xff]
        %v1915 = vld [vmem:[#allocation2 + $0x60] sm:$0xff]
        %v1916 = vld [vmem:[#allocation2 + $0x68] sm:$0xff]
        %v1917 = vld [vmem:[#allocation2 + $0x70] sm:$0xff]
        %v1918 = vld [vmem:[#allocation2 + $0x78] sm:$0xff]
        %v1919 = vld [vmem:[#allocation2 + $0x80] sm:$0xff]
        %v1920 = vld [vmem:[#allocation2 + $0x88] sm:$0xff]
        %v1921 = vld [vmem:[#allocation2 + $0x90] sm:$0xff]
        %v1922 = vld [vmem:[#allocation2 + $0x98] sm:$0xff]
        %v1923 = vld [vmem:[#allocation2 + $0xa0] sm:$0xff]
        %v1924 = vld [vmem:[#allocation2 + $0xa8] sm:$0xff]
        %v1925 = vld [vmem:[#allocation2 + $0xb0] sm:$0xff]
        %v1926 = vld [vmem:[#allocation2 + $0xb8] sm:$0xff]
        %v1927 = vld [vmem:[#allocation2 + $0xc0] sm:$0xff]
        %v1928 = vld [vmem:[#allocation2 + $0xc8] sm:$0xff]
        %v1929 = vld [vmem:[#allocation2 + $0xd0] sm:$0xff]
        %v1930 = vld [vmem:[#allocation2 + $0xd8] sm:$0xff]
        %v1931 = vld [vmem:[#allocation2 + $0xe0] sm:$0xff]
        %v1932 = vld [vmem:[#allocation2 + $0xe8] sm:$0xff]
        %v1933 = vld [vmem:[#allocation2 + $0xf0] sm:$0xff]
        %v1934 = vld [vmem:[#allocation2 + $0xf8] sm:$0xff]
        %v1935 = vld [vmem:[#allocation2 + $0x100] sm:$0xff]
        %v1936 = vld [vmem:[#allocation2 + $0x108] sm:$0xff]
        %v1937 = vld [vmem:[#allocation2 + $0x110] sm:$0xff]
        %v1938 = vld [vmem:[#allocation2 + $0x118] sm:$0xff]
        %v1939 = vld [vmem:[#allocation2 + $0x120] sm:$0xff]
        %v1940 = vld [vmem:[#allocation2 + $0x128] sm:$0xff]
        %v1941 = vld [vmem:[#allocation2 + $0x130] sm:$0xff]
        %v1942 = vld [vmem:[#allocation2 + $0x138] sm:$0xff]
        %v1943 = vld [vmem:[#allocation2 + $0x140] sm:$0xff]
        %v1944 = vld [vmem:[#allocation2 + $0x148] sm:$0xff]
        %v1945 = vld [vmem:[#allocation2 + $0x150] sm:$0xff]
        %v1946 = vld [vmem:[#allocation2 + $0x158] sm:$0xff]
        %v1947 = vld [vmem:[#allocation2 + $0x160] sm:$0xff]
        %v1948 = vld [vmem:[#allocation2 + $0x168] sm:$0xff]
        %v1949 = vld [vmem:[#allocation2 + $0x170] sm:$0xff]
        %v1950 = vld [vmem:[#allocation2 + $0x178] sm:$0xff]
        %v1951 = vld [vmem:[#allocation2 + $0x180] sm:$0xff]
        %v1952 = vld [vmem:[#allocation2 + $0x188] sm:$0xff]
        %v1953 = vld [vmem:[#allocation2 + $0x190] sm:$0xff]
        %v1954 = vld [vmem:[#allocation2 + $0x198] sm:$0xff]
        %v1955 = vld [vmem:[#allocation2 + $0x1a0] sm:$0xff]
        %v1956 = vld [vmem:[#allocation2 + $0x1a8] sm:$0xff]
        %v1957 = vld [vmem:[#allocation2 + $0x1b0] sm:$0xff]
        %v1958 = vld [vmem:[#allocation2 + $0x1b8] sm:$0xff]
        %v1959 = vld [vmem:[#allocation2 + $0x1c0] sm:$0xff]
        %v1960 = vld [vmem:[#allocation2 + $0x1c8] sm:$0xff]
        %v1961 = vld [vmem:[#allocation2 + $0x1d0] sm:$0xff]
        %v1962 = vld [vmem:[#allocation2 + $0x1d8] sm:$0xff]
        %v1963 = vld [vmem:[#allocation2 + $0x1e0] sm:$0xff]
        %v1964 = vld [vmem:[#allocation2 + $0x1e8] sm:$0xff]
        %v1965 = vld [vmem:[#allocation2 + $0x1f0] sm:$0xff]
        %v1966 = vld [vmem:[#allocation2 + $0x1f8] sm:$0xff]
        %v1967 = vld [vmem:[#allocation2 + $0x200] sm:$0xff]
        %v1968 = vld [vmem:[#allocation2 + $0x208] sm:$0xff]
        %v1969 = vld [vmem:[#allocation2 + $0x210] sm:$0xff]
        %v1970 = vld [vmem:[#allocation2 + $0x218] sm:$0xff]
        %v1971 = vld [vmem:[#allocation2 + $0x220] sm:$0xff]
        %v1972 = vld [vmem:[#allocation2 + $0x228] sm:$0xff]
        %v1973 = vld [vmem:[#allocation2 + $0x230] sm:$0xff]
        %v1974 = vld [vmem:[#allocation2 + $0x238] sm:$0xff]
        %v1975 = vld [vmem:[#allocation2 + $0x240] sm:$0x7]
        %v1976 = vld [vmem:[#allocation2 + $0x248] sm:$0x7]
        %v1977 = vld [vmem:[#allocation2 + $0x250] sm:$0x7]
        %v1978 = vld [vmem:[#allocation2 + $0x258] sm:$0x7]
        %v1979 = vld [vmem:[#allocation2 + $0x260] sm:$0x7]
        %v1980 = vld [vmem:[#allocation2 + $0x268] sm:$0x7]
        %v1981 = vld [vmem:[#allocation2 + $0x270] sm:$0x7]
        %v1982 = vld [vmem:[#allocation2 + $0x278] sm:$0x7]
        %v1983 = vld [vmem:[%s2] sm:$0xff]
        %v1984 = vld [vmem:[%s2 + $0x8] sm:$0xff]
        %1986 = vset.pattern.permute.xlu0 0
        %1987 = vperm.xlu0 %1986, %v1983
        %v1988 = vpop.permute.xlu0 %1987
        %1991 = vset.pattern.permute.xlu0 0
        %1992 = vperm.xlu0 %1991, %v1984
        %v1993 = vpop.permute.xlu0 %1992
        %v1997 = vunpack.c.l.b16 %v1901
        %v1998 = vunpack.c.l.b16 %v1902
        %v1999 = vpack.c.b16 %v1998, %v1997
        %vm2000 = vcmask 613376
        %v2002 = vsel %vm2000, %v1999, 0
        %vm2004 = vcmask 1042432
        %v2006 = vsel %vm2004, %v1975, 0
        %v2009 = vsel %vm2004, %v1976, 0
        %v2012 = vsel %vm2004, %v1977, 0
        %v2015 = vsel %vm2004, %v1978, 0
        %v2018 = vsel %vm2004, %v1979, 0
        %v2021 = vsel %vm2004, %v1980, 0
        %v2024 = vsel %vm2004, %v1981, 0
        %v2027 = vsel %vm2004, %v1982, 0
        %2029 = vmatpush.msra.mxu0 0.0
        %2030 = vmatpush.msra.mxu0 0.0
        %2031 = vmatpush.msra.mxu0 0.0
        %2032 = vmatpush.msra.mxu0 0.0
        %2033 = vmatpush.msra.mxu0 0.0
        %2034 = vmatpush.msra.mxu0 0.0
        %2035 = vmatpush.msra.mxu0 %v2006
        %2036 = vmatpush.msra.mxu0 %v1967
        %2037 = vmatpush.msra.mxu0 %v1959
        %2038 = vmatpush.msra.mxu0 %v1951
        %2039 = vmatpush.msra.mxu0 %v1943
        %2040 = vmatpush.msra.mxu0 %v1935
        %2041 = vmatpush.msra.mxu0 %v1927
        %2042 = vmatpush.msra.mxu0 %v1919
        %2043 = vmatpush.msra.mxu0 %v1911
        %2044 = vmatpush.msra.mxu0 %v1903
        %2045 = vmatmul.bf16.gmra.mxu0 %v2002
        %v2046 = vpop.f32.mrf.mxu0
        %v2047 = vadd.f32 %v1988, %v2046
        %v2048 = vpop.f32.mrf.mxu0
        %v2049 = vadd.f32 %v1993, %v2048
        %2050 = vdwg.mxu0
        %2051 = vmatpush.msra.mxu0 0.0
        %2052 = vmatpush.msra.mxu0 0.0
        %2053 = vmatpush.msra.mxu0 0.0
        %2054 = vmatpush.msra.mxu0 0.0
        %2055 = vmatpush.msra.mxu0 0.0
        %2056 = vmatpush.msra.mxu0 0.0
        %2057 = vmatpush.msra.mxu0 %v2009
        %2058 = vmatpush.msra.mxu0 %v1968
        %2059 = vmatpush.msra.mxu0 %v1960
        %2060 = vmatpush.msra.mxu0 %v1952
        %2061 = vmatpush.msra.mxu0 %v1944
        %2062 = vmatpush.msra.mxu0 %v1936
        %2063 = vmatpush.msra.mxu0 %v1928
        %2064 = vmatpush.msra.mxu0 %v1920
        %2065 = vmatpush.msra.mxu0 %v1912
        %2066 = vmatpush.msra.mxu0 %v1904
        %2067 = vmatmul.bf16.gmra.mxu0 %v2002
        %v2068 = vpop.f32.mrf.mxu0
        %v2069 = vadd.f32 %v1988, %v2068
        %v2070 = vpop.f32.mrf.mxu0
        %v2071 = vadd.f32 %v1993, %v2070
        %2072 = vdwg.mxu0
        %2073 = vmatpush.msra.mxu0 0.0
        %2074 = vmatpush.msra.mxu0 0.0
        %2075 = vmatpush.msra.mxu0 0.0
        %2076 = vmatpush.msra.mxu0 0.0
        %2077 = vmatpush.msra.mxu0 0.0
        %2078 = vmatpush.msra.mxu0 0.0
        %2079 = vmatpush.msra.mxu0 %v2012
        %2080 = vmatpush.msra.mxu0 %v1969
        %2081 = vmatpush.msra.mxu0 %v1961
        %2082 = vmatpush.msra.mxu0 %v1953
        %2083 = vmatpush.msra.mxu0 %v1945
        %2084 = vmatpush.msra.mxu0 %v1937
        %2085 = vmatpush.msra.mxu0 %v1929
        %2086 = vmatpush.msra.mxu0 %v1921
        %2087 = vmatpush.msra.mxu0 %v1913
        %2088 = vmatpush.msra.mxu0 %v1905
        %2089 = vmatmul.bf16.gmra.mxu0 %v2002
        %v2090 = vpop.f32.mrf.mxu0
        %v2091 = vadd.f32 %v1988, %v2090
        %v2092 = vpop.f32.mrf.mxu0
        %v2093 = vadd.f32 %v1993, %v2092
        %2094 = vdwg.mxu0
        %2095 = vmatpush.msra.mxu0 0.0
        %2096 = vmatpush.msra.mxu0 0.0
        %2097 = vmatpush.msra.mxu0 0.0
        %2098 = vmatpush.msra.mxu0 0.0
        %2099 = vmatpush.msra.mxu0 0.0
        %2100 = vmatpush.msra.mxu0 0.0
        %2101 = vmatpush.msra.mxu0 %v2015
        %2102 = vmatpush.msra.mxu0 %v1970
        %2103 = vmatpush.msra.mxu0 %v1962
        %2104 = vmatpush.msra.mxu0 %v1954
        %2105 = vmatpush.msra.mxu0 %v1946
        %2106 = vmatpush.msra.mxu0 %v1938
        %2107 = vmatpush.msra.mxu0 %v1930
        %2108 = vmatpush.msra.mxu0 %v1922
        %2109 = vmatpush.msra.mxu0 %v1914
        %2110 = vmatpush.msra.mxu0 %v1906
        %2111 = vmatmul.bf16.gmra.mxu0 %v2002
        %v2112 = vpop.f32.mrf.mxu0
        %v2113 = vadd.f32 %v1988, %v2112
        %v2114 = vpop.f32.mrf.mxu0
        %v2115 = vadd.f32 %v1993, %v2114
        %2116 = vdwg.mxu0
        %2117 = vmatpush.msra.mxu0 0.0
        %2118 = vmatpush.msra.mxu0 0.0
        %2119 = vmatpush.msra.mxu0 0.0
        %2120 = vmatpush.msra.mxu0 0.0
        %2121 = vmatpush.msra.mxu0 0.0
        %2122 = vmatpush.msra.mxu0 0.0
        %2123 = vmatpush.msra.mxu0 %v2018
        %2124 = vmatpush.msra.mxu0 %v1971
        %2125 = vmatpush.msra.mxu0 %v1963
        %2126 = vmatpush.msra.mxu0 %v1955
        %2127 = vmatpush.msra.mxu0 %v1947
        %2128 = vmatpush.msra.mxu0 %v1939
        %2129 = vmatpush.msra.mxu0 %v1931
        %2130 = vmatpush.msra.mxu0 %v1923
        %2131 = vmatpush.msra.mxu0 %v1915
        %2132 = vmatpush.msra.mxu0 %v1907
        %2133 = vmatmul.bf16.gmra.mxu0 %v2002
        %v2134 = vpop.f32.mrf.mxu0
        %v2135 = vadd.f32 %v1988, %v2134
        %v2136 = vpop.f32.mrf.mxu0
        %v2137 = vadd.f32 %v1993, %v2136
        %2138 = vdwg.mxu0
        %2139 = vmatpush.msra.mxu0 0.0
        %2140 = vmatpush.msra.mxu0 0.0
        %2141 = vmatpush.msra.mxu0 0.0
        %2142 = vmatpush.msra.mxu0 0.0
        %2143 = vmatpush.msra.mxu0 0.0
        %2144 = vmatpush.msra.mxu0 0.0
        %2145 = vmatpush.msra.mxu0 %v2021
        %2146 = vmatpush.msra.mxu0 %v1972
        %2147 = vmatpush.msra.mxu0 %v1964
        %2148 = vmatpush.msra.mxu0 %v1956
        %2149 = vmatpush.msra.mxu0 %v1948
        %2150 = vmatpush.msra.mxu0 %v1940
        %2151 = vmatpush.msra.mxu0 %v1932
        %2152 = vmatpush.msra.mxu0 %v1924
        %2153 = vmatpush.msra.mxu0 %v1916
        %2154 = vmatpush.msra.mxu0 %v1908
        %2155 = vmatmul.bf16.gmra.mxu0 %v2002
        %v2156 = vpop.f32.mrf.mxu0
        %v2157 = vadd.f32 %v1988, %v2156
        %v2158 = vpop.f32.mrf.mxu0
        %v2159 = vadd.f32 %v1993, %v2158
        %2160 = vdwg.mxu0
        %2161 = vmatpush.msra.mxu0 0.0
        %2162 = vmatpush.msra.mxu0 0.0
        %2163 = vmatpush.msra.mxu0 0.0
        %2164 = vmatpush.msra.mxu0 0.0
        %2165 = vmatpush.msra.mxu0 0.0
        %2166 = vmatpush.msra.mxu0 0.0
        %2167 = vmatpush.msra.mxu0 %v2024
        %2168 = vmatpush.msra.mxu0 %v1973
        %2169 = vmatpush.msra.mxu0 %v1965
        %2170 = vmatpush.msra.mxu0 %v1957
        %2171 = vmatpush.msra.mxu0 %v1949
        %2172 = vmatpush.msra.mxu0 %v1941
        %2173 = vmatpush.msra.mxu0 %v1933
        %2174 = vmatpush.msra.mxu0 %v1925
        %2175 = vmatpush.msra.mxu0 %v1917
        %2176 = vmatpush.msra.mxu0 %v1909
        %2177 = vmatmul.bf16.gmra.mxu0 %v2002
        %v2178 = vpop.f32.mrf.mxu0
        %v2179 = vadd.f32 %v1988, %v2178
        %v2180 = vpop.f32.mrf.mxu0
        %v2181 = vadd.f32 %v1993, %v2180
        %2182 = vdwg.mxu0
        %2183 = vmatpush.msra.mxu0 0.0
        %2184 = vmatpush.msra.mxu0 0.0
        %2185 = vmatpush.msra.mxu0 0.0
        %2186 = vmatpush.msra.mxu0 0.0
        %2187 = vmatpush.msra.mxu0 0.0
        %2188 = vmatpush.msra.mxu0 0.0
        %2189 = vmatpush.msra.mxu0 %v2027
        %2190 = vmatpush.msra.mxu0 %v1974
        %2191 = vmatpush.msra.mxu0 %v1966
        %2192 = vmatpush.msra.mxu0 %v1958
        %2193 = vmatpush.msra.mxu0 %v1950
        %2194 = vmatpush.msra.mxu0 %v1942
        %2195 = vmatpush.msra.mxu0 %v1934
        %2196 = vmatpush.msra.mxu0 %v1926
        %2197 = vmatpush.msra.mxu0 %v1918
        %2198 = vmatpush.msra.mxu0 %v1910
        %2199 = vmatmul.bf16.gmra.mxu0 %v2002
        %v2200 = vpop.f32.mrf.mxu0
        %v2201 = vadd.f32 %v1988, %v2200
        %v2202 = vpop.f32.mrf.mxu0
        %v2203 = vadd.f32 %v1993, %v2202
        %2204 = vdwg.mxu0
        %v2205 = vmax.f32 %v2047, 0.0
        %v2206 = vmax.f32 %v2069, 0.0
        %v2207 = vmax.f32 %v2091, 0.0
        %v2208 = vmax.f32 %v2113, 0.0
        %v2209 = vmax.f32 %v2135, 0.0
        %v2210 = vmax.f32 %v2157, 0.0
        %v2211 = vmax.f32 %v2179, 0.0
        %v2212 = vmax.f32 %v2201, 0.0
        %v2213 = vmax.f32 %v2049, 0.0
        %v2214 = vmax.f32 %v2071, 0.0
        %v2215 = vmax.f32 %v2093, 0.0
        %v2216 = vmax.f32 %v2115, 0.0
        %v2217 = vmax.f32 %v2137, 0.0
        %v2218 = vmax.f32 %v2159, 0.0
        %v2219 = vmax.f32 %v2181, 0.0
        %v2220 = vmax.f32 %v2203, 0.0
        %2237 = vrot.lane.b32.xlu0 %v2205, 127
        %v2238 = vpop.permute.xlu0 %2237
        %2239 = vrot.lane.b32.xlu0 %v2206, 127
        %v2240 = vpop.permute.xlu0 %2239
        %2241 = vrot.lane.b32.xlu0 %v2207, 127
        %v2242 = vpop.permute.xlu0 %2241
        %2243 = vrot.lane.b32.xlu0 %v2208, 127
        %v2244 = vpop.permute.xlu0 %2243
        %2245 = vrot.lane.b32.xlu0 %v2209, 127
        %v2246 = vpop.permute.xlu0 %2245
        %2247 = vrot.lane.b32.xlu0 %v2210, 127
        %v2248 = vpop.permute.xlu0 %2247
        %2249 = vrot.lane.b32.xlu0 %v2211, 127
        %v2250 = vpop.permute.xlu0 %2249
        %2251 = vrot.lane.b32.xlu0 %v2212, 127
        %v2252 = vpop.permute.xlu0 %2251
        %2253 = vrot.lane.b32.xlu0 %v2213, 127
        %v2254 = vpop.permute.xlu0 %2253
        %2255 = vrot.lane.b32.xlu0 %v2214, 127
        %v2256 = vpop.permute.xlu0 %2255
        %2257 = vrot.lane.b32.xlu0 %v2215, 127
        %v2258 = vpop.permute.xlu0 %2257
        %2259 = vrot.lane.b32.xlu0 %v2216, 127
        %v2260 = vpop.permute.xlu0 %2259
        %2261 = vrot.lane.b32.xlu0 %v2217, 127
        %v2262 = vpop.permute.xlu0 %2261
        %2263 = vrot.lane.b32.xlu0 %v2218, 127
        %v2264 = vpop.permute.xlu0 %2263
        %2265 = vrot.lane.b32.xlu0 %v2219, 127
        %v2266 = vpop.permute.xlu0 %2265
        %2267 = vrot.lane.b32.xlu0 %v2220, 127
        %v2268 = vpop.permute.xlu0 %2267
        %v2269 = vsel %vm304, %v2238, %v2240
        %v2270 = vsel %vm304, %v2240, %v2242
        %v2271 = vsel %vm304, %v2242, %v2244
        %v2272 = vsel %vm304, %v2244, %v2246
        %v2273 = vsel %vm304, %v2246, %v2248
        %v2274 = vsel %vm304, %v2248, %v2250
        %v2275 = vsel %vm304, %v2250, %v2252
        %v2276 = vsel %vm304, %v2254, %v2256
        %v2277 = vsel %vm304, %v2256, %v2258
        %v2278 = vsel %vm304, %v2258, %v2260
        %v2279 = vsel %vm304, %v2260, %v2262
        %v2280 = vsel %vm304, %v2262, %v2264
        %v2281 = vsel %vm304, %v2264, %v2266
        %v2282 = vsel %vm304, %v2266, %v2268
        %v2299 = vmax.f32 %v2205, %v2269
        %v2300 = vmax.f32 %v2206, %v2270
        %v2301 = vmax.f32 %v2207, %v2271
        %v2302 = vmax.f32 %v2208, %v2272
        %v2303 = vmax.f32 %v2209, %v2273
        %v2304 = vmax.f32 %v2210, %v2274
        %v2305 = vmax.f32 %v2211, %v2275
        %v2306 = vmax.f32 %v2212, %v2252
        %v2307 = vmax.f32 %v2213, %v2276
        %v2308 = vmax.f32 %v2214, %v2277
        %v2309 = vmax.f32 %v2215, %v2278
        %v2310 = vmax.f32 %v2216, %v2279
        %v2311 = vmax.f32 %v2217, %v2280
        %v2312 = vmax.f32 %v2218, %v2281
        %v2313 = vmax.f32 %v2219, %v2282
        %v2314 = vmax.f32 %v2220, %v2268
        %2331 = vrot.lane.b32.xlu0 %v2299, 96
        %v2332 = vpop.permute.xlu0 %2331
        %2333 = vrot.lane.b32.xlu0 %v2300, 96
        %v2334 = vpop.permute.xlu0 %2333
        %2335 = vrot.lane.b32.xlu0 %v2301, 96
        %v2336 = vpop.permute.xlu0 %2335
        %2337 = vrot.lane.b32.xlu0 %v2302, 96
        %v2338 = vpop.permute.xlu0 %2337
        %2339 = vrot.lane.b32.xlu0 %v2303, 96
        %v2340 = vpop.permute.xlu0 %2339
        %2341 = vrot.lane.b32.xlu0 %v2304, 96
        %v2342 = vpop.permute.xlu0 %2341
        %2343 = vrot.lane.b32.xlu0 %v2305, 96
        %v2344 = vpop.permute.xlu0 %2343
        %2345 = vrot.lane.b32.xlu0 %v2306, 96
        %v2346 = vpop.permute.xlu0 %2345
        %2347 = vrot.lane.b32.xlu0 %v2307, 96
        %v2348 = vpop.permute.xlu0 %2347
        %2349 = vrot.lane.b32.xlu0 %v2308, 96
        %v2350 = vpop.permute.xlu0 %2349
        %2351 = vrot.lane.b32.xlu0 %v2309, 96
        %v2352 = vpop.permute.xlu0 %2351
        %2353 = vrot.lane.b32.xlu0 %v2310, 96
        %v2354 = vpop.permute.xlu0 %2353
        %2355 = vrot.lane.b32.xlu0 %v2311, 96
        %v2356 = vpop.permute.xlu0 %2355
        %2357 = vrot.lane.b32.xlu0 %v2312, 96
        %v2358 = vpop.permute.xlu0 %2357
        %2359 = vrot.lane.b32.xlu0 %v2313, 96
        %v2360 = vpop.permute.xlu0 %2359
        %2361 = vrot.lane.b32.xlu0 %v2314, 96
        %v2362 = vpop.permute.xlu0 %2361
        %v2363 = vsel %vm580, %v2332, %v2334
        %v2364 = vsel %vm580, %v2334, %v2336
        %v2365 = vsel %vm580, %v2336, %v2338
        %v2366 = vsel %vm580, %v2338, %v2340
        %v2367 = vsel %vm580, %v2340, %v2342
        %v2368 = vsel %vm580, %v2342, %v2344
        %v2369 = vsel %vm580, %v2344, %v2346
        %v2370 = vsel %vm580, %v2348, %v2350
        %v2371 = vsel %vm580, %v2350, %v2352
        %v2372 = vsel %vm580, %v2352, %v2354
        %v2373 = vsel %vm580, %v2354, %v2356
        %v2374 = vsel %vm580, %v2356, %v2358
        %v2375 = vsel %vm580, %v2358, %v2360
        %v2376 = vsel %vm580, %v2360, %v2362
        %v2393 = vmax.f32 %v2299, %v2363
        %v2394 = vmax.f32 %v2300, %v2364
        %v2395 = vmax.f32 %v2301, %v2365
        %v2396 = vmax.f32 %v2302, %v2366
        %v2397 = vmax.f32 %v2303, %v2367
        %v2398 = vmax.f32 %v2304, %v2368
        %v2399 = vmax.f32 %v2305, %v2369
        %v2400 = vmax.f32 %v2306, %v2346
        %v2401 = vmax.f32 %v2307, %v2370
        %v2402 = vmax.f32 %v2308, %v2371
        %v2403 = vmax.f32 %v2309, %v2372
        %v2404 = vmax.f32 %v2310, %v2373
        %v2405 = vmax.f32 %v2311, %v2374
        %v2406 = vmax.f32 %v2312, %v2375
        %v2407 = vmax.f32 %v2313, %v2376
        %v2408 = vmax.f32 %v2314, %v2362
        %v2409 = vpack.c.bf16 %v2401, %v2393
        %v2410 = vpack.c.bf16 %v2402, %v2394
        %v2411 = vpack.c.bf16 %v2403, %v2395
        %v2412 = vpack.c.bf16 %v2404, %v2396
        %v2413 = vpack.c.bf16 %v2405, %v2397
        %v2414 = vpack.c.bf16 %v2406, %v2398
        %v2415 = vpack.c.bf16 %v2407, %v2399
        %v2416 = vpack.c.bf16 %v2408, %v2400
        %v2417 = vld [vmem:[#allocation3] sm:$0xff]
        %v2418 = vld [vmem:[#allocation3 + $0x8] sm:$0xff]
        %v2419 = vld [vmem:[#allocation3 + $0x10] sm:$0xff]
        %v2420 = vld [vmem:[#allocation3 + $0x18] sm:$0xff]
        %v2421 = vld [vmem:[#allocation3 + $0x20] sm:$0xff]
        %v2422 = vld [vmem:[#allocation3 + $0x28] sm:$0xff]
        %v2423 = vld [vmem:[#allocation3 + $0x30] sm:$0xff]
        %v2424 = vld [vmem:[#allocation3 + $0x38] sm:$0xff]
        %v2425 = vld [vmem:[#allocation3 + $0x40] sm:$0xff]
        %v2426 = vld [vmem:[#allocation3 + $0x48] sm:$0xff]
        %v2427 = vld [vmem:[#allocation3 + $0x50] sm:$0xff]
        %v2428 = vld [vmem:[#allocation3 + $0x58] sm:$0xff]
        %v2429 = vld [vmem:[#allocation3 + $0x60] sm:$0xff]
        %v2430 = vld [vmem:[#allocation3 + $0x68] sm:$0xff]
        %v2431 = vld [vmem:[#allocation3 + $0x70] sm:$0xff]
        %v2432 = vld [vmem:[#allocation3 + $0x78] sm:$0xff]
        %v2433 = vld [vmem:[#allocation3 + $0x80] sm:$0xff]
        %v2434 = vld [vmem:[#allocation3 + $0x88] sm:$0xff]
        %v2435 = vld [vmem:[#allocation3 + $0x90] sm:$0xff]
        %v2436 = vld [vmem:[#allocation3 + $0x98] sm:$0xff]
        %v2437 = vld [vmem:[#allocation3 + $0xa0] sm:$0xff]
        %v2438 = vld [vmem:[#allocation3 + $0xa8] sm:$0xff]
        %v2439 = vld [vmem:[#allocation3 + $0xb0] sm:$0xff]
        %v2440 = vld [vmem:[#allocation3 + $0xb8] sm:$0xff]
        %v2441 = vld [vmem:[#allocation3 + $0xc0] sm:$0xff]
        %v2442 = vld [vmem:[#allocation3 + $0xc8] sm:$0xff]
        %v2443 = vld [vmem:[#allocation3 + $0xd0] sm:$0xff]
        %v2444 = vld [vmem:[#allocation3 + $0xd8] sm:$0xff]
        %v2445 = vld [vmem:[#allocation3 + $0xe0] sm:$0xff]
        %v2446 = vld [vmem:[#allocation3 + $0xe8] sm:$0xff]
        %v2447 = vld [vmem:[#allocation3 + $0xf0] sm:$0xff]
        %v2448 = vld [vmem:[#allocation3 + $0xf8] sm:$0xff]
        %v2449 = vld [vmem:[#allocation3 + $0x100] sm:$0xff]
        %v2450 = vld [vmem:[#allocation3 + $0x108] sm:$0xff]
        %v2451 = vld [vmem:[#allocation3 + $0x110] sm:$0xff]
        %v2452 = vld [vmem:[#allocation3 + $0x118] sm:$0xff]
        %v2453 = vld [vmem:[#allocation3 + $0x120] sm:$0xff]
        %v2454 = vld [vmem:[#allocation3 + $0x128] sm:$0xff]
        %v2455 = vld [vmem:[#allocation3 + $0x130] sm:$0xff]
        %v2456 = vld [vmem:[#allocation3 + $0x138] sm:$0xff]
        %v2457 = vld [vmem:[#allocation3 + $0x140] sm:$0xff]
        %v2458 = vld [vmem:[#allocation3 + $0x148] sm:$0xff]
        %v2459 = vld [vmem:[#allocation3 + $0x150] sm:$0xff]
        %v2460 = vld [vmem:[#allocation3 + $0x158] sm:$0xff]
        %v2461 = vld [vmem:[#allocation3 + $0x160] sm:$0xff]
        %v2462 = vld [vmem:[#allocation3 + $0x168] sm:$0xff]
        %v2463 = vld [vmem:[#allocation3 + $0x170] sm:$0xff]
        %v2464 = vld [vmem:[#allocation3 + $0x178] sm:$0xff]
        %v2465 = vld [vmem:[#allocation3 + $0x180] sm:$0xff]
        %v2466 = vld [vmem:[#allocation3 + $0x188] sm:$0xff]
        %v2467 = vld [vmem:[#allocation3 + $0x190] sm:$0xff]
        %v2468 = vld [vmem:[#allocation3 + $0x198] sm:$0xff]
        %v2469 = vld [vmem:[#allocation3 + $0x1a0] sm:$0xff]
        %v2470 = vld [vmem:[#allocation3 + $0x1a8] sm:$0xff]
        %v2471 = vld [vmem:[#allocation3 + $0x1b0] sm:$0xff]
        %v2472 = vld [vmem:[#allocation3 + $0x1b8] sm:$0xff]
        %v2473 = vld [vmem:[#allocation3 + $0x1c0] sm:$0xff]
        %v2474 = vld [vmem:[#allocation3 + $0x1c8] sm:$0xff]
        %v2475 = vld [vmem:[#allocation3 + $0x1d0] sm:$0xff]
        %v2476 = vld [vmem:[#allocation3 + $0x1d8] sm:$0xff]
        %v2477 = vld [vmem:[#allocation3 + $0x1e0] sm:$0xff]
        %v2478 = vld [vmem:[#allocation3 + $0x1e8] sm:$0xff]
        %v2479 = vld [vmem:[#allocation3 + $0x1f0] sm:$0xff]
        %v2480 = vld [vmem:[#allocation3 + $0x1f8] sm:$0xff]
        %v2481 = vld [vmem:[#allocation3 + $0x200] sm:$0xff]
        %v2482 = vld [vmem:[#allocation3 + $0x208] sm:$0xff]
        %v2483 = vld [vmem:[#allocation3 + $0x210] sm:$0xff]
        %v2484 = vld [vmem:[#allocation3 + $0x218] sm:$0xff]
        %v2485 = vld [vmem:[#allocation3 + $0x220] sm:$0xff]
        %v2486 = vld [vmem:[#allocation3 + $0x228] sm:$0xff]
        %v2487 = vld [vmem:[#allocation3 + $0x230] sm:$0xff]
        %v2488 = vld [vmem:[#allocation3 + $0x238] sm:$0xff]
        %v2489 = vld [vmem:[#allocation3 + $0x240] sm:$0xff]
        %v2490 = vld [vmem:[#allocation3 + $0x248] sm:$0xff]
        %v2491 = vld [vmem:[#allocation3 + $0x250] sm:$0xff]
        %v2492 = vld [vmem:[#allocation3 + $0x258] sm:$0xff]
        %v2493 = vld [vmem:[#allocation3 + $0x260] sm:$0xff]
        %v2494 = vld [vmem:[#allocation3 + $0x268] sm:$0xff]
        %v2495 = vld [vmem:[#allocation3 + $0x270] sm:$0xff]
        %v2496 = vld [vmem:[#allocation3 + $0x278] sm:$0xff]
        %v2497 = vld [vmem:[#allocation3 + $0x280] sm:$0xff]
        %v2498 = vld [vmem:[#allocation3 + $0x288] sm:$0xff]
        %v2499 = vld [vmem:[#allocation3 + $0x290] sm:$0xff]
        %v2500 = vld [vmem:[#allocation3 + $0x298] sm:$0xff]
        %v2501 = vld [vmem:[#allocation3 + $0x2a0] sm:$0xff]
        %v2502 = vld [vmem:[#allocation3 + $0x2a8] sm:$0xff]
        %v2503 = vld [vmem:[#allocation3 + $0x2b0] sm:$0xff]
        %v2504 = vld [vmem:[#allocation3 + $0x2b8] sm:$0xff]
        %v2505 = vld [vmem:[#allocation3 + $0x2c0] sm:$0xff]
        %v2506 = vld [vmem:[#allocation3 + $0x2c8] sm:$0xff]
        %v2507 = vld [vmem:[#allocation3 + $0x2d0] sm:$0xff]
        %v2508 = vld [vmem:[#allocation3 + $0x2d8] sm:$0xff]
        %v2509 = vld [vmem:[#allocation3 + $0x2e0] sm:$0xff]
        %v2510 = vld [vmem:[#allocation3 + $0x2e8] sm:$0xff]
        %v2511 = vld [vmem:[#allocation3 + $0x2f0] sm:$0xff]
        %v2512 = vld [vmem:[#allocation3 + $0x2f8] sm:$0xff]
        %v2513 = vld [vmem:[#allocation3 + $0x300] sm:$0xff]
        %v2514 = vld [vmem:[#allocation3 + $0x308] sm:$0xff]
        %v2515 = vld [vmem:[#allocation3 + $0x310] sm:$0xff]
        %v2516 = vld [vmem:[#allocation3 + $0x318] sm:$0xff]
        %v2517 = vld [vmem:[#allocation3 + $0x320] sm:$0xff]
        %v2518 = vld [vmem:[#allocation3 + $0x328] sm:$0xff]
        %v2519 = vld [vmem:[#allocation3 + $0x330] sm:$0xff]
        %v2520 = vld [vmem:[#allocation3 + $0x338] sm:$0xff]
        %v2521 = vld [vmem:[#allocation3 + $0x340] sm:$0xff]
        %v2522 = vld [vmem:[#allocation3 + $0x348] sm:$0xff]
        %v2523 = vld [vmem:[#allocation3 + $0x350] sm:$0xff]
        %v2524 = vld [vmem:[#allocation3 + $0x358] sm:$0xff]
        %v2525 = vld [vmem:[#allocation3 + $0x360] sm:$0xff]
        %v2526 = vld [vmem:[#allocation3 + $0x368] sm:$0xff]
        %v2527 = vld [vmem:[#allocation3 + $0x370] sm:$0xff]
        %v2528 = vld [vmem:[#allocation3 + $0x378] sm:$0xff]
        %v2529 = vld [vmem:[#allocation3 + $0x380] sm:$0xff]
        %v2530 = vld [vmem:[#allocation3 + $0x388] sm:$0xff]
        %v2531 = vld [vmem:[#allocation3 + $0x390] sm:$0xff]
        %v2532 = vld [vmem:[#allocation3 + $0x398] sm:$0xff]
        %v2533 = vld [vmem:[#allocation3 + $0x3a0] sm:$0xff]
        %v2534 = vld [vmem:[#allocation3 + $0x3a8] sm:$0xff]
        %v2535 = vld [vmem:[#allocation3 + $0x3b0] sm:$0xff]
        %v2536 = vld [vmem:[#allocation3 + $0x3b8] sm:$0xff]
        %v2537 = vld [vmem:[#allocation3 + $0x3c0] sm:$0xff]
        %v2538 = vld [vmem:[#allocation3 + $0x3c8] sm:$0xff]
        %v2539 = vld [vmem:[#allocation3 + $0x3d0] sm:$0xff]
        %v2540 = vld [vmem:[#allocation3 + $0x3d8] sm:$0xff]
        %v2665 = vunpack.c.l.b16 %v2417
        %v2666 = vunpack.c.h.b16 %v2417
        %v2667 = vunpack.c.l.b16 %v2418
        %v2668 = vunpack.c.h.b16 %v2418
        %v2669 = vunpack.c.l.b16 %v2419
        %v2670 = vunpack.c.h.b16 %v2419
        %v2671 = vunpack.c.l.b16 %v2420
        %v2672 = vunpack.c.h.b16 %v2420
        %v2673 = vunpack.c.l.b16 %v2421
        %v2674 = vunpack.c.h.b16 %v2421
        %v2675 = vunpack.c.l.b16 %v2422
        %v2676 = vunpack.c.h.b16 %v2422
        %v2677 = vunpack.c.l.b16 %v2423
        %v2678 = vunpack.c.h.b16 %v2423
        %v2679 = vunpack.c.l.b16 %v2424
        %v2680 = vunpack.c.h.b16 %v2424
        %v2681 = vunpack.c.l.b16 %v2425
        %v2682 = vunpack.c.h.b16 %v2425
        %v2683 = vunpack.c.l.b16 %v2426
        %v2684 = vunpack.c.h.b16 %v2426
        %v2685 = vunpack.c.l.b16 %v2427
        %v2686 = vunpack.c.h.b16 %v2427
        %v2687 = vunpack.c.l.b16 %v2428
        %v2688 = vunpack.c.h.b16 %v2428
        %v2689 = vunpack.c.l.b16 %v2429
        %v2690 = vunpack.c.h.b16 %v2429
        %v2691 = vunpack.c.l.b16 %v2430
        %v2692 = vunpack.c.h.b16 %v2430
        %v2693 = vunpack.c.l.b16 %v2431
        %v2694 = vunpack.c.h.b16 %v2431
        %v2695 = vunpack.c.l.b16 %v2432
        %v2696 = vunpack.c.h.b16 %v2432
        %v2697 = vunpack.c.l.b16 %v2433
        %v2698 = vunpack.c.h.b16 %v2433
        %v2699 = vunpack.c.l.b16 %v2434
        %v2700 = vunpack.c.h.b16 %v2434
        %v2701 = vunpack.c.l.b16 %v2435
        %v2702 = vunpack.c.h.b16 %v2435
        %v2703 = vunpack.c.l.b16 %v2436
        %v2704 = vunpack.c.h.b16 %v2436
        %v2705 = vunpack.c.l.b16 %v2437
        %v2706 = vunpack.c.h.b16 %v2437
        %v2707 = vunpack.c.l.b16 %v2438
        %v2708 = vunpack.c.h.b16 %v2438
        %v2709 = vunpack.c.l.b16 %v2439
        %v2710 = vunpack.c.h.b16 %v2439
        %v2711 = vunpack.c.l.b16 %v2440
        %v2712 = vunpack.c.h.b16 %v2440
        %v2713 = vunpack.c.l.b16 %v2441
        %v2714 = vunpack.c.h.b16 %v2441
        %v2715 = vunpack.c.l.b16 %v2442
        %v2716 = vunpack.c.h.b16 %v2442
        %v2717 = vunpack.c.l.b16 %v2443
        %v2718 = vunpack.c.h.b16 %v2443
        %v2719 = vunpack.c.l.b16 %v2444
        %v2720 = vunpack.c.h.b16 %v2444
        %v2721 = vunpack.c.l.b16 %v2445
        %v2722 = vunpack.c.h.b16 %v2445
        %v2723 = vunpack.c.l.b16 %v2446
        %v2724 = vunpack.c.h.b16 %v2446
        %v2725 = vunpack.c.l.b16 %v2447
        %v2726 = vunpack.c.h.b16 %v2447
        %v2727 = vunpack.c.l.b16 %v2448
        %v2728 = vunpack.c.h.b16 %v2448
        %v2729 = vunpack.c.l.b16 %v2449
        %v2730 = vunpack.c.h.b16 %v2449
        %v2731 = vunpack.c.l.b16 %v2450
        %v2732 = vunpack.c.h.b16 %v2450
        %v2733 = vunpack.c.l.b16 %v2451
        %v2734 = vunpack.c.h.b16 %v2451
        %v2735 = vunpack.c.l.b16 %v2452
        %v2736 = vunpack.c.h.b16 %v2452
        %v2737 = vunpack.c.l.b16 %v2453
        %v2738 = vunpack.c.h.b16 %v2453
        %v2739 = vunpack.c.l.b16 %v2454
        %v2740 = vunpack.c.h.b16 %v2454
        %v2741 = vunpack.c.l.b16 %v2455
        %v2742 = vunpack.c.h.b16 %v2455
        %v2743 = vunpack.c.l.b16 %v2456
        %v2744 = vunpack.c.h.b16 %v2456
        %v2745 = vunpack.c.l.b16 %v2457
        %v2746 = vunpack.c.h.b16 %v2457
        %v2747 = vunpack.c.l.b16 %v2458
        %v2748 = vunpack.c.h.b16 %v2458
        %v2749 = vunpack.c.l.b16 %v2459
        %v2750 = vunpack.c.h.b16 %v2459
        %v2751 = vunpack.c.l.b16 %v2460
        %v2752 = vunpack.c.h.b16 %v2460
        %v2753 = vunpack.c.l.b16 %v2461
        %v2754 = vunpack.c.h.b16 %v2461
        %v2755 = vunpack.c.l.b16 %v2462
        %v2756 = vunpack.c.h.b16 %v2462
        %v2757 = vunpack.c.l.b16 %v2463
        %v2758 = vunpack.c.h.b16 %v2463
        %v2759 = vunpack.c.l.b16 %v2464
        %v2760 = vunpack.c.h.b16 %v2464
        %v2761 = vunpack.c.l.b16 %v2465
        %v2762 = vunpack.c.h.b16 %v2465
        %v2763 = vunpack.c.l.b16 %v2466
        %v2764 = vunpack.c.h.b16 %v2466
        %v2765 = vunpack.c.l.b16 %v2467
        %v2766 = vunpack.c.h.b16 %v2467
        %v2767 = vunpack.c.l.b16 %v2468
        %v2768 = vunpack.c.h.b16 %v2468
        %v2769 = vunpack.c.l.b16 %v2469
        %v2770 = vunpack.c.h.b16 %v2469
        %v2771 = vunpack.c.l.b16 %v2470
        %v2772 = vunpack.c.h.b16 %v2470
        %v2773 = vunpack.c.l.b16 %v2471
        %v2774 = vunpack.c.h.b16 %v2471
        %v2775 = vunpack.c.l.b16 %v2472
        %v2776 = vunpack.c.h.b16 %v2472
        %v2777 = vunpack.c.l.b16 %v2473
        %v2778 = vunpack.c.h.b16 %v2473
        %v2779 = vunpack.c.l.b16 %v2474
        %v2780 = vunpack.c.h.b16 %v2474
        %v2781 = vunpack.c.l.b16 %v2475
        %v2782 = vunpack.c.h.b16 %v2475
        %v2783 = vunpack.c.l.b16 %v2476
        %v2784 = vunpack.c.h.b16 %v2476
        %v2785 = vunpack.c.l.b16 %v2477
        %v2786 = vunpack.c.h.b16 %v2477
        %v2787 = vunpack.c.l.b16 %v2478
        %v2788 = vunpack.c.h.b16 %v2478
        %v2789 = vunpack.c.l.b16 %v2479
        %v2790 = vunpack.c.h.b16 %v2479
        %v2791 = vunpack.c.l.b16 %v2480
        %v2792 = vunpack.c.h.b16 %v2480
        %v2793 = vunpack.c.l.b16 %v2481
        %v2794 = vunpack.c.h.b16 %v2481
        %v2795 = vunpack.c.l.b16 %v2482
        %v2796 = vunpack.c.h.b16 %v2482
        %v2797 = vunpack.c.l.b16 %v2483
        %v2798 = vunpack.c.h.b16 %v2483
        %v2799 = vunpack.c.l.b16 %v2484
        %v2800 = vunpack.c.h.b16 %v2484
        %v2801 = vunpack.c.l.b16 %v2485
        %v2802 = vunpack.c.h.b16 %v2485
        %v2803 = vunpack.c.l.b16 %v2486
        %v2804 = vunpack.c.h.b16 %v2486
        %v2805 = vunpack.c.l.b16 %v2487
        %v2806 = vunpack.c.h.b16 %v2487
        %v2807 = vunpack.c.l.b16 %v2488
        %v2808 = vunpack.c.h.b16 %v2488
        %v2809 = vunpack.c.l.b16 %v2489
        %v2810 = vunpack.c.h.b16 %v2489
        %v2811 = vunpack.c.l.b16 %v2490
        %v2812 = vunpack.c.h.b16 %v2490
        %v2813 = vunpack.c.l.b16 %v2491
        %v2814 = vunpack.c.h.b16 %v2491
        %v2815 = vunpack.c.l.b16 %v2492
        %v2816 = vunpack.c.h.b16 %v2492
        %v2817 = vunpack.c.l.b16 %v2493
        %v2818 = vunpack.c.h.b16 %v2493
        %v2819 = vunpack.c.l.b16 %v2494
        %v2820 = vunpack.c.h.b16 %v2494
        %v2821 = vunpack.c.l.b16 %v2495
        %v2822 = vunpack.c.h.b16 %v2495
        %v2823 = vunpack.c.l.b16 %v2496
        %v2824 = vunpack.c.h.b16 %v2496
        %v2825 = vunpack.c.l.b16 %v2497
        %v2826 = vunpack.c.h.b16 %v2497
        %v2827 = vunpack.c.l.b16 %v2498
        %v2828 = vunpack.c.h.b16 %v2498
        %v2829 = vunpack.c.l.b16 %v2499
        %v2830 = vunpack.c.h.b16 %v2499
        %v2831 = vunpack.c.l.b16 %v2500
        %v2832 = vunpack.c.h.b16 %v2500
        %v2833 = vunpack.c.l.b16 %v2501
        %v2834 = vunpack.c.h.b16 %v2501
        %v2835 = vunpack.c.l.b16 %v2502
        %v2836 = vunpack.c.h.b16 %v2502
        %v2837 = vunpack.c.l.b16 %v2503
        %v2838 = vunpack.c.h.b16 %v2503
        %v2839 = vunpack.c.l.b16 %v2504
        %v2840 = vunpack.c.h.b16 %v2504
        %v2841 = vunpack.c.l.b16 %v2505
        %v2842 = vunpack.c.h.b16 %v2505
        %v2843 = vunpack.c.l.b16 %v2506
        %v2844 = vunpack.c.h.b16 %v2506
        %v2845 = vunpack.c.l.b16 %v2507
        %v2846 = vunpack.c.h.b16 %v2507
        %v2847 = vunpack.c.l.b16 %v2508
        %v2848 = vunpack.c.h.b16 %v2508
        %v2849 = vunpack.c.l.b16 %v2509
        %v2850 = vunpack.c.h.b16 %v2509
        %v2851 = vunpack.c.l.b16 %v2510
        %v2852 = vunpack.c.h.b16 %v2510
        %v2853 = vunpack.c.l.b16 %v2511
        %v2854 = vunpack.c.h.b16 %v2511
        %v2855 = vunpack.c.l.b16 %v2512
        %v2856 = vunpack.c.h.b16 %v2512
        %v2857 = vunpack.c.l.b16 %v2513
        %v2858 = vunpack.c.h.b16 %v2513
        %v2859 = vunpack.c.l.b16 %v2514
        %v2860 = vunpack.c.h.b16 %v2514
        %v2861 = vunpack.c.l.b16 %v2515
        %v2862 = vunpack.c.h.b16 %v2515
        %v2863 = vunpack.c.l.b16 %v2516
        %v2864 = vunpack.c.h.b16 %v2516
        %v2865 = vunpack.c.l.b16 %v2517
        %v2866 = vunpack.c.h.b16 %v2517
        %v2867 = vunpack.c.l.b16 %v2518
        %v2868 = vunpack.c.h.b16 %v2518
        %v2869 = vunpack.c.l.b16 %v2519
        %v2870 = vunpack.c.h.b16 %v2519
        %v2871 = vunpack.c.l.b16 %v2520
        %v2872 = vunpack.c.h.b16 %v2520
        %v2873 = vunpack.c.l.b16 %v2521
        %v2874 = vunpack.c.h.b16 %v2521
        %v2875 = vunpack.c.l.b16 %v2522
        %v2876 = vunpack.c.h.b16 %v2522
        %v2877 = vunpack.c.l.b16 %v2523
        %v2878 = vunpack.c.h.b16 %v2523
        %v2879 = vunpack.c.l.b16 %v2524
        %v2880 = vunpack.c.h.b16 %v2524
        %v2881 = vunpack.c.l.b16 %v2525
        %v2882 = vunpack.c.h.b16 %v2525
        %v2883 = vunpack.c.l.b16 %v2526
        %v2884 = vunpack.c.h.b16 %v2526
        %v2885 = vunpack.c.l.b16 %v2527
        %v2886 = vunpack.c.h.b16 %v2527
        %v2887 = vunpack.c.l.b16 %v2528
        %v2888 = vunpack.c.h.b16 %v2528
        %v2889 = vunpack.c.l.b16 %v2529
        %v2890 = vunpack.c.h.b16 %v2529
        %v2891 = vunpack.c.l.b16 %v2530
        %v2892 = vunpack.c.h.b16 %v2530
        %v2893 = vunpack.c.l.b16 %v2531
        %v2894 = vunpack.c.h.b16 %v2531
        %v2895 = vunpack.c.l.b16 %v2532
        %v2896 = vunpack.c.h.b16 %v2532
        %v2897 = vunpack.c.l.b16 %v2533
        %v2898 = vunpack.c.h.b16 %v2533
        %v2899 = vunpack.c.l.b16 %v2534
        %v2900 = vunpack.c.h.b16 %v2534
        %v2901 = vunpack.c.l.b16 %v2535
        %v2902 = vunpack.c.h.b16 %v2535
        %v2903 = vunpack.c.l.b16 %v2536
        %v2904 = vunpack.c.h.b16 %v2536
        %v2905 = vunpack.c.l.b16 %v2537
        %v2906 = vunpack.c.h.b16 %v2537
        %v2907 = vunpack.c.l.b16 %v2538
        %v2908 = vunpack.c.h.b16 %v2538
        %v2909 = vunpack.c.l.b16 %v2539
        %v2910 = vunpack.c.h.b16 %v2539
        %v2911 = vunpack.c.l.b16 %v2540
        %v2912 = vunpack.c.h.b16 %v2540
        %v2913 = vpack.c.b16 %v2667, %v2665
        %v2914 = vpack.c.b16 %v2668, %v2666
        %v2915 = vpack.c.b16 %v2671, %v2669
        %v2916 = vpack.c.b16 %v2672, %v2670
        %v2917 = vpack.c.b16 %v2675, %v2673
        %v2918 = vpack.c.b16 %v2676, %v2674
        %v2919 = vpack.c.b16 %v2679, %v2677
        %v2920 = vpack.c.b16 %v2680, %v2678
        %v2921 = vpack.c.b16 %v2683, %v2681
        %v2922 = vpack.c.b16 %v2684, %v2682
        %v2923 = vpack.c.b16 %v2687, %v2685
        %v2924 = vpack.c.b16 %v2688, %v2686
        %v2925 = vpack.c.b16 %v2691, %v2689
        %v2926 = vpack.c.b16 %v2692, %v2690
        %v2927 = vpack.c.b16 %v2695, %v2693
        %v2928 = vpack.c.b16 %v2696, %v2694
        %v2929 = vpack.c.b16 %v2699, %v2697
        %v2930 = vpack.c.b16 %v2700, %v2698
        %v2931 = vpack.c.b16 %v2703, %v2701
        %v2932 = vpack.c.b16 %v2704, %v2702
        %v2933 = vpack.c.b16 %v2707, %v2705
        %v2934 = vpack.c.b16 %v2708, %v2706
        %v2935 = vpack.c.b16 %v2711, %v2709
        %v2936 = vpack.c.b16 %v2712, %v2710
        %v2937 = vpack.c.b16 %v2715, %v2713
        %v2938 = vpack.c.b16 %v2716, %v2714
        %v2939 = vpack.c.b16 %v2719, %v2717
        %v2940 = vpack.c.b16 %v2720, %v2718
        %v2941 = vpack.c.b16 %v2723, %v2721
        %v2942 = vpack.c.b16 %v2724, %v2722
        %v2943 = vpack.c.b16 %v2727, %v2725
        %v2944 = vpack.c.b16 %v2728, %v2726
        %v2945 = vpack.c.b16 %v2731, %v2729
        %v2946 = vpack.c.b16 %v2732, %v2730
        %v2947 = vpack.c.b16 %v2735, %v2733
        %v2948 = vpack.c.b16 %v2736, %v2734
        %v2949 = vpack.c.b16 %v2739, %v2737
        %v2950 = vpack.c.b16 %v2740, %v2738
        %v2951 = vpack.c.b16 %v2743, %v2741
        %v2952 = vpack.c.b16 %v2744, %v2742
        %v2953 = vpack.c.b16 %v2747, %v2745
        %v2954 = vpack.c.b16 %v2748, %v2746
        %v2955 = vpack.c.b16 %v2751, %v2749
        %v2956 = vpack.c.b16 %v2752, %v2750
        %v2957 = vpack.c.b16 %v2755, %v2753
        %v2958 = vpack.c.b16 %v2756, %v2754
        %v2959 = vpack.c.b16 %v2759, %v2757
        %v2960 = vpack.c.b16 %v2760, %v2758
        %v2961 = vpack.c.b16 %v2763, %v2761
        %v2962 = vpack.c.b16 %v2764, %v2762
        %v2963 = vpack.c.b16 %v2767, %v2765
        %v2964 = vpack.c.b16 %v2768, %v2766
        %v2965 = vpack.c.b16 %v2771, %v2769
        %v2966 = vpack.c.b16 %v2772, %v2770
        %v2967 = vpack.c.b16 %v2775, %v2773
        %v2968 = vpack.c.b16 %v2776, %v2774
        %v2969 = vpack.c.b16 %v2779, %v2777
        %v2970 = vpack.c.b16 %v2780, %v2778
        %v2971 = vpack.c.b16 %v2783, %v2781
        %v2972 = vpack.c.b16 %v2784, %v2782
        %v2973 = vpack.c.b16 %v2787, %v2785
        %v2974 = vpack.c.b16 %v2788, %v2786
        %v2975 = vpack.c.b16 %v2791, %v2789
        %v2976 = vpack.c.b16 %v2792, %v2790
        %v2977 = vpack.c.b16 %v2795, %v2793
        %v2978 = vpack.c.b16 %v2796, %v2794
        %v2979 = vpack.c.b16 %v2799, %v2797
        %v2980 = vpack.c.b16 %v2800, %v2798
        %v2981 = vpack.c.b16 %v2803, %v2801
        %v2982 = vpack.c.b16 %v2804, %v2802
        %v2983 = vpack.c.b16 %v2807, %v2805
        %v2984 = vpack.c.b16 %v2808, %v2806
        %v2985 = vpack.c.b16 %v2811, %v2809
        %v2986 = vpack.c.b16 %v2812, %v2810
        %v2987 = vpack.c.b16 %v2815, %v2813
        %v2988 = vpack.c.b16 %v2816, %v2814
        %v2989 = vpack.c.b16 %v2819, %v2817
        %v2990 = vpack.c.b16 %v2820, %v2818
        %v2991 = vpack.c.b16 %v2823, %v2821
        %v2992 = vpack.c.b16 %v2824, %v2822
        %v2993 = vpack.c.b16 %v2827, %v2825
        %v2994 = vpack.c.b16 %v2828, %v2826
        %v2995 = vpack.c.b16 %v2831, %v2829
        %v2996 = vpack.c.b16 %v2832, %v2830
        %v2997 = vpack.c.b16 %v2835, %v2833
        %v2998 = vpack.c.b16 %v2836, %v2834
        %v2999 = vpack.c.b16 %v2839, %v2837
        %v3000 = vpack.c.b16 %v2840, %v2838
        %v3001 = vpack.c.b16 %v2843, %v2841
        %v3002 = vpack.c.b16 %v2844, %v2842
        %v3003 = vpack.c.b16 %v2847, %v2845
        %v3004 = vpack.c.b16 %v2848, %v2846
        %v3005 = vpack.c.b16 %v2851, %v2849
        %v3006 = vpack.c.b16 %v2852, %v2850
        %v3007 = vpack.c.b16 %v2855, %v2853
        %v3008 = vpack.c.b16 %v2856, %v2854
        %v3009 = vpack.c.b16 %v2859, %v2857
        %v3010 = vpack.c.b16 %v2860, %v2858
        %v3011 = vpack.c.b16 %v2863, %v2861
        %v3012 = vpack.c.b16 %v2864, %v2862
        %v3013 = vpack.c.b16 %v2867, %v2865
        %v3014 = vpack.c.b16 %v2868, %v2866
        %v3015 = vpack.c.b16 %v2871, %v2869
        %v3016 = vpack.c.b16 %v2872, %v2870
        %v3017 = vpack.c.b16 %v2875, %v2873
        %v3018 = vpack.c.b16 %v2876, %v2874
        %v3019 = vpack.c.b16 %v2879, %v2877
        %v3020 = vpack.c.b16 %v2880, %v2878
        %v3021 = vpack.c.b16 %v2883, %v2881
        %v3022 = vpack.c.b16 %v2884, %v2882
        %v3023 = vpack.c.b16 %v2887, %v2885
        %v3024 = vpack.c.b16 %v2888, %v2886
        %v3025 = vpack.c.b16 %v2891, %v2889
        %v3026 = vpack.c.b16 %v2892, %v2890
        %v3027 = vpack.c.b16 %v2895, %v2893
        %v3028 = vpack.c.b16 %v2896, %v2894
        %v3029 = vpack.c.b16 %v2899, %v2897
        %v3030 = vpack.c.b16 %v2900, %v2898
        %v3031 = vpack.c.b16 %v2903, %v2901
        %v3032 = vpack.c.b16 %v2904, %v2902
        %v3033 = vpack.c.b16 %v2907, %v2905
        %v3034 = vpack.c.b16 %v2908, %v2906
        %v3035 = vpack.c.b16 %v2911, %v2909
        %v3036 = vpack.c.b16 %v2912, %v2910
        %v3160 = vsel %vm657, %v2416, 0
        %vm3162 = vcmask 1046528
        %vm3163 = vcmask 1047552
        %v3164 = vsel %vm3162, 4294967295, 65535
        %v3165 = vsel %vm3163, %v3164, 0
        %v3167 = vand.u32 %v3035, %v3165
        %v3170 = vand.u32 %v3036, %v3165
        %3172 = vmatpush.bf16.msra.mxu0 %v2927
        %3173 = vmatpush.bf16.msra.mxu0 %v2925
        %3174 = vmatpush.bf16.msra.mxu0 %v2923
        %3175 = vmatpush.bf16.msra.mxu0 %v2921
        %3176 = vmatpush.bf16.msra.mxu0 %v2919
        %3177 = vmatpush.bf16.msra.mxu0 %v2917
        %3178 = vmatpush.bf16.msra.mxu0 %v2915
        %3179 = vmatpush.bf16.msra.mxu0 %v2913
        %3180 = vmatmul.bf16.gmra.mxu0 %v2409
        %v3181 = vpop.f32.mrf.mxu0
        %v3182 = vadd.f32 0.0, %v3181
        %v3183 = vpop.f32.mrf.mxu0
        %v3184 = vadd.f32 0.0, %v3183
        %3185 = vdwg.mxu0
        %3186 = vmatpush.bf16.msra.mxu0 %v2943
        %3187 = vmatpush.bf16.msra.mxu0 %v2941
        %3188 = vmatpush.bf16.msra.mxu0 %v2939
        %3189 = vmatpush.bf16.msra.mxu0 %v2937
        %3190 = vmatpush.bf16.msra.mxu0 %v2935
        %3191 = vmatpush.bf16.msra.mxu0 %v2933
        %3192 = vmatpush.bf16.msra.mxu0 %v2931
        %3193 = vmatpush.bf16.msra.mxu0 %v2929
        %3194 = vmatmul.bf16.gmra.mxu0 %v2410
        %v3195 = vpop.f32.mrf.mxu0
        %v3196 = vadd.f32 %v3182, %v3195
        %v3197 = vpop.f32.mrf.mxu0
        %v3198 = vadd.f32 %v3184, %v3197
        %3199 = vdwg.mxu0
        %3200 = vmatpush.bf16.msra.mxu0 %v2959
        %3201 = vmatpush.bf16.msra.mxu0 %v2957
        %3202 = vmatpush.bf16.msra.mxu0 %v2955
        %3203 = vmatpush.bf16.msra.mxu0 %v2953
        %3204 = vmatpush.bf16.msra.mxu0 %v2951
        %3205 = vmatpush.bf16.msra.mxu0 %v2949
        %3206 = vmatpush.bf16.msra.mxu0 %v2947
        %3207 = vmatpush.bf16.msra.mxu0 %v2945
        %3208 = vmatmul.bf16.gmra.mxu0 %v2411
        %v3209 = vpop.f32.mrf.mxu0
        %v3210 = vadd.f32 %v3196, %v3209
        %v3211 = vpop.f32.mrf.mxu0
        %v3212 = vadd.f32 %v3198, %v3211
        %3213 = vdwg.mxu0
        %3214 = vmatpush.bf16.msra.mxu0 %v2975
        %3215 = vmatpush.bf16.msra.mxu0 %v2973
        %3216 = vmatpush.bf16.msra.mxu0 %v2971
        %3217 = vmatpush.bf16.msra.mxu0 %v2969
        %3218 = vmatpush.bf16.msra.mxu0 %v2967
        %3219 = vmatpush.bf16.msra.mxu0 %v2965
        %3220 = vmatpush.bf16.msra.mxu0 %v2963
        %3221 = vmatpush.bf16.msra.mxu0 %v2961
        %3222 = vmatmul.bf16.gmra.mxu0 %v2412
        %v3223 = vpop.f32.mrf.mxu0
        %v3224 = vadd.f32 %v3210, %v3223
        %v3225 = vpop.f32.mrf.mxu0
        %v3226 = vadd.f32 %v3212, %v3225
        %3227 = vdwg.mxu0
        %3228 = vmatpush.bf16.msra.mxu0 %v2991
        %3229 = vmatpush.bf16.msra.mxu0 %v2989
        %3230 = vmatpush.bf16.msra.mxu0 %v2987
        %3231 = vmatpush.bf16.msra.mxu0 %v2985
        %3232 = vmatpush.bf16.msra.mxu0 %v2983
        %3233 = vmatpush.bf16.msra.mxu0 %v2981
        %3234 = vmatpush.bf16.msra.mxu0 %v2979
        %3235 = vmatpush.bf16.msra.mxu0 %v2977
        %3236 = vmatmul.bf16.gmra.mxu0 %v2413
        %v3237 = vpop.f32.mrf.mxu0
        %v3238 = vadd.f32 %v3224, %v3237
        %v3239 = vpop.f32.mrf.mxu0
        %v3240 = vadd.f32 %v3226, %v3239
        %3241 = vdwg.mxu0
        %3242 = vmatpush.bf16.msra.mxu0 %v3007
        %3243 = vmatpush.bf16.msra.mxu0 %v3005
        %3244 = vmatpush.bf16.msra.mxu0 %v3003
        %3245 = vmatpush.bf16.msra.mxu0 %v3001
        %3246 = vmatpush.bf16.msra.mxu0 %v2999
        %3247 = vmatpush.bf16.msra.mxu0 %v2997
        %3248 = vmatpush.bf16.msra.mxu0 %v2995
        %3249 = vmatpush.bf16.msra.mxu0 %v2993
        %3250 = vmatmul.bf16.gmra.mxu0 %v2414
        %v3251 = vpop.f32.mrf.mxu0
        %v3252 = vadd.f32 %v3238, %v3251
        %v3253 = vpop.f32.mrf.mxu0
        %v3254 = vadd.f32 %v3240, %v3253
        %3255 = vdwg.mxu0
        %3256 = vmatpush.bf16.msra.mxu0 %v3023
        %3257 = vmatpush.bf16.msra.mxu0 %v3021
        %3258 = vmatpush.bf16.msra.mxu0 %v3019
        %3259 = vmatpush.bf16.msra.mxu0 %v3017
        %3260 = vmatpush.bf16.msra.mxu0 %v3015
        %3261 = vmatpush.bf16.msra.mxu0 %v3013
        %3262 = vmatpush.bf16.msra.mxu0 %v3011
        %3263 = vmatpush.bf16.msra.mxu0 %v3009
        %3264 = vmatmul.bf16.gmra.mxu0 %v2415
        %v3265 = vpop.f32.mrf.mxu0
        %v3266 = vadd.f32 %v3252, %v3265
        %v3267 = vpop.f32.mrf.mxu0
        %v3268 = vadd.f32 %v3254, %v3267
        %3269 = vdwg.mxu0
        %3270 = vmatpush.bf16.msra.mxu0 0
        %3271 = vmatpush.bf16.msra.mxu0 0
        %3272 = vmatpush.bf16.msra.mxu0 %v3167
        %3273 = vmatpush.bf16.msra.mxu0 %v3033
        %3274 = vmatpush.bf16.msra.mxu0 %v3031
        %3275 = vmatpush.bf16.msra.mxu0 %v3029
        %3276 = vmatpush.bf16.msra.mxu0 %v3027
        %3277 = vmatpush.bf16.msra.mxu0 %v3025
        %3278 = vmatmul.bf16.gmra.mxu0 %v3160
        %v3279 = vpop.f32.mrf.mxu0
        %v3280 = vadd.f32 %v3266, %v3279
        %v3281 = vpop.f32.mrf.mxu0
        %v3282 = vadd.f32 %v3268, %v3281
        %3283 = vdwg.mxu0
        %3284 = vmatpush.bf16.msra.mxu0 %v2928
        %3285 = vmatpush.bf16.msra.mxu0 %v2926
        %3286 = vmatpush.bf16.msra.mxu0 %v2924
        %3287 = vmatpush.bf16.msra.mxu0 %v2922
        %3288 = vmatpush.bf16.msra.mxu0 %v2920
        %3289 = vmatpush.bf16.msra.mxu0 %v2918
        %3290 = vmatpush.bf16.msra.mxu0 %v2916
        %3291 = vmatpush.bf16.msra.mxu0 %v2914
        %3292 = vmatmul.bf16.gmra.mxu0 %v2409
        %v3293 = vpop.f32.mrf.mxu0
        %v3294 = vadd.f32 0.0, %v3293
        %v3295 = vpop.f32.mrf.mxu0
        %v3296 = vadd.f32 0.0, %v3295
        %3297 = vdwg.mxu0
        %3298 = vmatpush.bf16.msra.mxu0 %v2944
        %3299 = vmatpush.bf16.msra.mxu0 %v2942
        %3300 = vmatpush.bf16.msra.mxu0 %v2940
        %3301 = vmatpush.bf16.msra.mxu0 %v2938
        %3302 = vmatpush.bf16.msra.mxu0 %v2936
        %3303 = vmatpush.bf16.msra.mxu0 %v2934
        %3304 = vmatpush.bf16.msra.mxu0 %v2932
        %3305 = vmatpush.bf16.msra.mxu0 %v2930
        %3306 = vmatmul.bf16.gmra.mxu0 %v2410
        %v3307 = vpop.f32.mrf.mxu0
        %v3308 = vadd.f32 %v3294, %v3307
        %v3309 = vpop.f32.mrf.mxu0
        %v3310 = vadd.f32 %v3296, %v3309
        %3311 = vdwg.mxu0
        %3312 = vmatpush.bf16.msra.mxu0 %v2960
        %3313 = vmatpush.bf16.msra.mxu0 %v2958
        %3314 = vmatpush.bf16.msra.mxu0 %v2956
        %3315 = vmatpush.bf16.msra.mxu0 %v2954
        %3316 = vmatpush.bf16.msra.mxu0 %v2952
        %3317 = vmatpush.bf16.msra.mxu0 %v2950
        %3318 = vmatpush.bf16.msra.mxu0 %v2948
        %3319 = vmatpush.bf16.msra.mxu0 %v2946
        %3320 = vmatmul.bf16.gmra.mxu0 %v2411
        %v3321 = vpop.f32.mrf.mxu0
        %v3322 = vadd.f32 %v3308, %v3321
        %v3323 = vpop.f32.mrf.mxu0
        %v3324 = vadd.f32 %v3310, %v3323
        %3325 = vdwg.mxu0
        %3326 = vmatpush.bf16.msra.mxu0 %v2976
        %3327 = vmatpush.bf16.msra.mxu0 %v2974
        %3328 = vmatpush.bf16.msra.mxu0 %v2972
        %3329 = vmatpush.bf16.msra.mxu0 %v2970
        %3330 = vmatpush.bf16.msra.mxu0 %v2968
        %3331 = vmatpush.bf16.msra.mxu0 %v2966
        %3332 = vmatpush.bf16.msra.mxu0 %v2964
        %3333 = vmatpush.bf16.msra.mxu0 %v2962
        %3334 = vmatmul.bf16.gmra.mxu0 %v2412
        %v3335 = vpop.f32.mrf.mxu0
        %v3336 = vadd.f32 %v3322, %v3335
        %v3337 = vpop.f32.mrf.mxu0
        %v3338 = vadd.f32 %v3324, %v3337
        %3339 = vdwg.mxu0
        %3340 = vmatpush.bf16.msra.mxu0 %v2992
        %3341 = vmatpush.bf16.msra.mxu0 %v2990
        %3342 = vmatpush.bf16.msra.mxu0 %v2988
        %3343 = vmatpush.bf16.msra.mxu0 %v2986
        %3344 = vmatpush.bf16.msra.mxu0 %v2984
        %3345 = vmatpush.bf16.msra.mxu0 %v2982
        %3346 = vmatpush.bf16.msra.mxu0 %v2980
        %3347 = vmatpush.bf16.msra.mxu0 %v2978
        %3348 = vmatmul.bf16.gmra.mxu0 %v2413
        %v3349 = vpop.f32.mrf.mxu0
        %v3350 = vadd.f32 %v3336, %v3349
        %v3351 = vpop.f32.mrf.mxu0
        %v3352 = vadd.f32 %v3338, %v3351
        %3353 = vdwg.mxu0
        %3354 = vmatpush.bf16.msra.mxu0 %v3008
        %3355 = vmatpush.bf16.msra.mxu0 %v3006
        %3356 = vmatpush.bf16.msra.mxu0 %v3004
        %3357 = vmatpush.bf16.msra.mxu0 %v3002
        %3358 = vmatpush.bf16.msra.mxu0 %v3000
        %3359 = vmatpush.bf16.msra.mxu0 %v2998
        %3360 = vmatpush.bf16.msra.mxu0 %v2996
        %3361 = vmatpush.bf16.msra.mxu0 %v2994
        %3362 = vmatmul.bf16.gmra.mxu0 %v2414
        %v3363 = vpop.f32.mrf.mxu0
        %v3364 = vadd.f32 %v3350, %v3363
        %v3365 = vpop.f32.mrf.mxu0
        %v3366 = vadd.f32 %v3352, %v3365
        %3367 = vdwg.mxu0
        %3368 = vmatpush.bf16.msra.mxu0 %v3024
        %3369 = vmatpush.bf16.msra.mxu0 %v3022
        %3370 = vmatpush.bf16.msra.mxu0 %v3020
        %3371 = vmatpush.bf16.msra.mxu0 %v3018
        %3372 = vmatpush.bf16.msra.mxu0 %v3016
        %3373 = vmatpush.bf16.msra.mxu0 %v3014
        %3374 = vmatpush.bf16.msra.mxu0 %v3012
        %3375 = vmatpush.bf16.msra.mxu0 %v3010
        %3376 = vmatmul.bf16.gmra.mxu0 %v2415
        %v3377 = vpop.f32.mrf.mxu0
        %v3378 = vadd.f32 %v3364, %v3377
        %v3379 = vpop.f32.mrf.mxu0
        %v3380 = vadd.f32 %v3366, %v3379
        %3381 = vdwg.mxu0
        %3382 = vmatpush.bf16.msra.mxu0 0
        %3383 = vmatpush.bf16.msra.mxu0 0
        %3384 = vmatpush.bf16.msra.mxu0 %v3170
        %3385 = vmatpush.bf16.msra.mxu0 %v3034
        %3386 = vmatpush.bf16.msra.mxu0 %v3032
        %3387 = vmatpush.bf16.msra.mxu0 %v3030
        %3388 = vmatpush.bf16.msra.mxu0 %v3028
        %3389 = vmatpush.bf16.msra.mxu0 %v3026
        %3390 = vmatmul.bf16.gmra.mxu0 %v3160
        %v3391 = vpop.f32.mrf.mxu0
        %v3392 = vadd.f32 %v3378, %v3391
        %v3393 = vpop.f32.mrf.mxu0
        %v3394 = vadd.f32 %v3380, %v3393
        %3395 = vdwg.mxu0
        %3396 = vst [vmem:[%s214] sm:$0xff] %v3280
        %vm3397 = vcmask 556032
        %3398 = vst.msk [vmem:[%s214 + $0x8] sm:$0xff] %vm3397, %v3392
        %3399 = vst [vmem:[%s214 + $0x10] sm:$0xff] %v3282
        %3400 = vst.msk [vmem:[%s214 + $0x18] sm:$0xff] %vm3397, %v3394
        %p3401 = scmp.lt.s32.totalorder %s16, 1
        %s3402 = scalar_select %p3401, %s16, 1
        %s3403 = smul.addr %s3402, 4
        %s3404 = smul.addr %s3403, 8
        %s3405 = scalar_lea.vmem %s4, %s3404
        // Predicated region
        $region41: #{cnn_forward.3} parent=35 // pred_check
          %p3406 = pneg %p123
        $region42: #{cnn_forward.3} parent=35 // pred_check_branch
          %3408 = sbr.rel (%p3406) target = $region44
        $region43: #{cnn_forward.3} parent=35 // pred_region
          _
        $region44: #{cnn_forward.3} parent=35 // pred_fallthru
          _
      $region36: #{cnn_forward.3} parent=5 // pred_fallthru
        _
      %p3409 = scmp.le.s32.totalorder 2, %s11
      // Predicated region
      $region45: #{cnn_forward.3} parent=5 // pred_check
        %p3410 = pneg %p3409
      $region46: #{cnn_forward.3} parent=5 // pred_check_branch
        %3412 = sbr.rel (%p3410) target = $region48
      $region47: #{cnn_forward.3} parent=5 // pred_region
        %s3413 = ssub.s32 %s11, 2
        // Predicated region
        $region49: #{cnn_forward.3} parent=47 // pred_check
          %p3414 = pneg %p129
        $region50: #{cnn_forward.3} parent=47 // pred_check_branch
          %3416 = sbr.rel (%p3414) target = $region52
        $region51: #{cnn_forward.3} parent=47 // pred_region
          %p3417 = scmp.lt.s32.totalorder %s17, 1
          %s3418 = scalar_select %p3417, %s17, 1
          %s3419 = smul.addr %s3418, 4
          %s3420 = smul.addr %s3419, 8
          %s3421 = scalar_lea.vmem %s4, %s3420
        $region52: #{cnn_forward.3} parent=47 // pred_fallthru
          _
      $region48: #{cnn_forward.3} parent=5 // pred_fallthru
        _
    $region6: #{cnn_forward.3} parent=1 // loop_footer
      %s15 = sadd.s32 1, %s11
    $region7: #{cnn_forward.3} parent=1 // loop_footer_branch
      %10 = sbr.rel target = $region3
    $region8: #{cnn_forward.3} parent=1 // loop_exit
      _
    %3422 = vsyncpa [#allocation4], 1
    %s3423 = scalar_lea.sflag [#allocation4], 1
    %3424 = vsyncpa %s3423, 1

</llo_original>
